<compile_context>
chip_gen: v6e
topology: v6e:2x2x1
jax: 0.10.0
libtpu: 0.0.40
codegen_flags: <defaults>
</compile_context>

<pallas_src>
import jax
import jax.numpy as jnp
from jax.experimental import pallas as pl


# ----------------------------------------------------------------------------
# Fused kernel builder.
#
# Per-branch ref layout (n_per_branch = 4 + 4*num_layers refs):
#   [tok (T*B,1) i32, emb (V,E),
#    per layer: w_ih_t (in,3H), w_hh_t (H,3H), b_eff (1,3H), b_hn (1,H),
#    lin_w_t (H,H), lin_b (1,H)]
# followed by the second branch, then fc_w_t (2H,4), fc_b (1,4), out (B,4).
#
# GRU gate math (PyTorch order r, z, n), with b_eff = [b_ir+b_hr, b_iz+b_hz, b_in]:
#   gi = x W_ih^T + b_eff            (batched over all time steps)
#   gh = h W_hh^T                    (per step, no bias)
#   r  = sigmoid(gi_r + gh_r)
#   z  = sigmoid(gi_z + gh_z)
#   n  = tanh(gi_n + r * (gh_n + b_hn))
#   h  = (1 - z) * n + z * h_prev
# ----------------------------------------------------------------------------
def _make_fused_kernel(batch, num_layers, t_head, t_body):
    n_per_branch = 4 + 4 * num_layers

    def _gru_branch(refs, seq_len):
        tok_ref, emb_ref = refs[0], refs[1]
        lin_w_ref = refs[2 + 4 * num_layers]
        lin_b_ref = refs[3 + 4 * num_layers]
        vocab = emb_ref.shape[0]
        tb = seq_len * batch

        # In-kernel embedding gather as a one-hot matmul (exact: a single 1.0
        # per row).  Rows are time-major: row t*batch + b  <->  (t, b).
        tok = tok_ref[...]                                           # (tb, 1) i32
        onehot = (jax.lax.broadcasted_iota(jnp.int32, (tb, vocab), 1) == tok)
        seq = jnp.dot(onehot.astype(jnp.float32), emb_ref[...],
                      preferred_element_type=jnp.float32)            # (tb, E)

        h = None
        for layer in range(num_layers):
            w_ih_ref, w_hh_ref, b_eff_ref, b_hn_ref = refs[2 + 4 * layer: 6 + 4 * layer]
            hidden = w_hh_ref.shape[0]

            # Input-to-hidden matmul batched over all time steps.
            gi_all = jnp.dot(seq, w_ih_ref[...],
                             preferred_element_type=jnp.float32) + b_eff_ref[...]

            w_hh = w_hh_ref[...]
            b_hn = b_hn_ref[...]
            h = jnp.zeros((batch, hidden), jnp.float32)
            last_layer = layer == num_layers - 1
            outs = []
            for t in range(seq_len):                 # static unroll: T is tiny
                gi = gi_all[t * batch:(t + 1) * batch, :]
                gh = jnp.dot(h, w_hh, preferred_element_type=jnp.float32)
                r = jax.nn.sigmoid(gi[:, 0:hidden] + gh[:, 0:hidden])
                z = jax.nn.sigmoid(gi[:, hidden:2 * hidden] + gh[:, hidden:2 * hidden])
                n = jnp.tanh(gi[:, 2 * hidden:] + r * (gh[:, 2 * hidden:] + b_hn))
                h = (1.0 - z) * n + z * h
                if not last_layer:                   # last layer: only h is consumed
                    outs.append(h)
            if not last_layer:
                seq = jnp.concatenate(outs, axis=0)  # (tb, H): next layer's input

        # Per-branch Linear on the final hidden state of the last layer.
        return jnp.dot(h, lin_w_ref[...],
                       preferred_element_type=jnp.float32) + lin_b_ref[...]

    def kernel(*refs):
        out_ref = refs[-1]
        head_refs = refs[:n_per_branch]
        body_refs = refs[n_per_branch:2 * n_per_branch]
        fc_w_ref = refs[2 * n_per_branch]
        fc_b_ref = refs[2 * n_per_branch + 1]

        head_feat = _gru_branch(head_refs, t_head)                   # (B, H)
        body_feat = _gru_branch(body_refs, t_body)                   # (B, H)
        feats = jnp.concatenate([head_feat, body_feat], axis=-1)     # (B, 2H)
        out_ref[...] = jnp.dot(feats, fc_w_ref[...],
                               preferred_element_type=jnp.float32) + fc_b_ref[...]

    return kernel


# ----------------------------------------------------------------------------
# Parameter init (PyTorch layout) + one-time preparation (transpose / bias
# pre-sum), so no transposes/converts are emitted per forward call.
# ----------------------------------------------------------------------------
def init_branch_params(key, vocab_size, embed_size, hidden_size, num_layers):
    keys = jax.random.split(key, 3 + 4 * num_layers)
    scale = 0.1
    params = {
        "emb": scale * jax.random.normal(keys[0], (vocab_size, embed_size), jnp.float32),
        "lin_w": scale * jax.random.normal(keys[1], (hidden_size, hidden_size), jnp.float32),
        "lin_b": scale * jax.random.normal(keys[2], (hidden_size,), jnp.float32),
        "gru": [],
    }
    for l in range(num_layers):
        in_dim = embed_size if l == 0 else hidden_size
        k = keys[3 + 4 * l: 3 + 4 * (l + 1)]
        params["gru"].append({
            "w_ih": scale * jax.random.normal(k[0], (3 * hidden_size, in_dim), jnp.float32),
            "w_hh": scale * jax.random.normal(k[1], (3 * hidden_size, hidden_size), jnp.float32),
            "b_ih": scale * jax.random.normal(k[2], (3 * hidden_size,), jnp.float32),
            "b_hh": scale * jax.random.normal(k[3], (3 * hidden_size,), jnp.float32),
        })
    return params


def init_classifier_params(key, embed_size, hidden_size, head_vocab, body_vocab, num_layers):
    k_head, k_body, k_fc_w, k_fc_b = jax.random.split(key, 4)
    return {
        "head": init_branch_params(k_head, head_vocab, embed_size, hidden_size, num_layers),
        "body": init_branch_params(k_body, body_vocab, embed_size, hidden_size, num_layers),
        "fc_w": 0.1 * jax.random.normal(k_fc_w, (4, 2 * hidden_size), jnp.float32),
        "fc_b": 0.1 * jax.random.normal(k_fc_b, (4,), jnp.float32),
    }


def prepare_params(raw):
    """One-time weight prep: transpose to (in, out), pre-sum r/z gate biases."""
    def prep_branch(bp):
        layers = []
        for lp in bp["gru"]:
            hidden = lp["w_hh"].shape[1]
            b_eff = jnp.concatenate(
                [lp["b_ih"][:2 * hidden] + lp["b_hh"][:2 * hidden],
                 lp["b_ih"][2 * hidden:]]).reshape(1, 3 * hidden)
            layers.append({
                "w_ih_t": jnp.asarray(lp["w_ih"].T, jnp.float32),
                "w_hh_t": jnp.asarray(lp["w_hh"].T, jnp.float32),
                "b_eff": jnp.asarray(b_eff, jnp.float32),
                "b_hn": jnp.asarray(lp["b_hh"][2 * hidden:].reshape(1, hidden), jnp.float32),
            })
        return {
            "emb": jnp.asarray(bp["emb"], jnp.float32),
            "layers": layers,
            "lin_w_t": jnp.asarray(bp["lin_w"].T, jnp.float32),
            "lin_b": jnp.asarray(bp["lin_b"].reshape(1, -1), jnp.float32),
        }
    return {
        "head": prep_branch(raw["head"]),
        "body": prep_branch(raw["body"]),
        "fc_w_t": jnp.asarray(raw["fc_w"].T, jnp.float32),
        "fc_b": jnp.asarray(raw["fc_b"].reshape(1, -1), jnp.float32),
    }


# ----------------------------------------------------------------------------
# Forward: one pallas_call per call (single launch, everything VMEM-resident).
# ----------------------------------------------------------------------------
def _branch_args(tokens, bp):
    batch, seq_len = tokens.shape
    # Time-major token column: row t*batch + b  <->  (t, b).
    tok = tokens.astype(jnp.int32).T.reshape(seq_len * batch, 1)
    args = [tok, bp["emb"]]
    for lp in bp["layers"]:
        args += [lp["w_ih_t"], lp["w_hh_t"], lp["b_eff"], lp["b_hn"]]
    args += [bp["lin_w_t"], bp["lin_b"]]
    return args


@jax.jit
def classifier_forward(headings, bodies, params):
    batch, t_head = headings.shape
    _, t_body = bodies.shape
    num_layers = len(params["head"]["layers"])
    n_classes = params["fc_b"].shape[-1]

    kernel = _make_fused_kernel(batch, num_layers, t_head, t_body)
    args = (_branch_args(headings, params["head"])
            + _branch_args(bodies, params["body"])
            + [params["fc_w_t"], params["fc_b"]])

    return pl.pallas_call(
        kernel,
        out_shape=jax.ShapeDtypeStruct((batch, n_classes), jnp.float32),
    )(*args)


# ----------------------------------------------------------------------------
# Pure-JAX reference (PyTorch-faithful formulation on the RAW params).
# ----------------------------------------------------------------------------
def _reference_forward(headings, bodies, raw):
    hp = jax.lax.Precision.HIGHEST

    def branch(tokens, bp):
        x = bp["emb"][tokens]                        # (B, T, E)
        x = jnp.transpose(x, (1, 0, 2))              # (T, B, E)
        h_last = None
        for lp in bp["gru"]:
            hidden = lp["w_hh"].shape[1]
            h = jnp.zeros((tokens.shape[0], hidden), jnp.float32)
            ys = []
            for t in range(x.shape[0]):
                gi = jnp.dot(x[t], lp["w_ih"].T, precision=hp) + lp["b_ih"]
                gh = jnp.dot(h, lp["w_hh"].T, precision=hp) + lp["b_hh"]
                r = jax.nn.sigmoid(gi[:, :hidden] + gh[:, :hidden])
                z = jax.nn.sigmoid(gi[:, hidden:2 * hidden] + gh[:, hidden:2 * hidden])
                n = jnp.tanh(gi[:, 2 * hidden:] + r * gh[:, 2 * hidden:])
                h = (1.0 - z) * n + z * h
                ys.append(h)
            x = jnp.stack(ys, axis=0)
            h_last = h
        return jnp.dot(h_last, bp["lin_w"].T, precision=hp) + bp["lin_b"]

    hf = branch(headings, raw["head"])
    bf = branch(bodies, raw["body"])
    feats = jnp.concatenate([hf, bf], axis=-1)
    return jnp.dot(feats, raw["fc_w"].T, precision=hp) + raw["fc_b"]


if __name__ == "__main__":
    embed_size = 32
    hidden_size = 32
    head_vocab_size = 50
    body_vocab_size = 80
    num_layers = 2
    batch, t_head, t_body = 2, 8, 12

    key = jax.random.PRNGKey(0)
    k_params, k_head_tok, k_body_tok = jax.random.split(key, 3)

    raw_params = init_classifier_params(k_params, embed_size, hidden_size,
                                        head_vocab_size, body_vocab_size, num_layers)
    params = prepare_params(raw_params)      # one-time weight prep

    headings = jax.random.randint(k_head_tok, (batch, t_head), 0, head_vocab_size, jnp.int32)
    bodies = jax.random.randint(k_body_tok, (batch, t_body), 0, body_vocab_size, jnp.int32)

    logits = classifier_forward(headings, bodies, params)
    jax.block_until_ready(logits)
    assert logits.shape == (batch, 4), logits.shape

    ref = _reference_forward(headings, bodies, raw_params)
    max_err = float(jnp.max(jnp.abs(logits - ref)))
    assert jnp.allclose(logits, ref, atol=2e-3, rtol=2e-3), max_err

    print("KERNEL_OK")
</pallas_src>

<mosaic_0001>
module attributes {stable_mosaic.version = 11 : i64} {
  func.func @kernel(%arg0: memref<16x1xi32, #tpu.memory_space<vmem>>, %arg1: memref<50x32xf32, #tpu.memory_space<vmem>>, %arg2: memref<32x96xf32, #tpu.memory_space<vmem>>, %arg3: memref<32x96xf32, #tpu.memory_space<vmem>>, %arg4: memref<1x96xf32, #tpu.memory_space<vmem>>, %arg5: memref<1x32xf32, #tpu.memory_space<vmem>>, %arg6: memref<32x96xf32, #tpu.memory_space<vmem>>, %arg7: memref<32x96xf32, #tpu.memory_space<vmem>>, %arg8: memref<1x96xf32, #tpu.memory_space<vmem>>, %arg9: memref<1x32xf32, #tpu.memory_space<vmem>>, %arg10: memref<32x32xf32, #tpu.memory_space<vmem>>, %arg11: memref<1x32xf32, #tpu.memory_space<vmem>>, %arg12: memref<24x1xi32, #tpu.memory_space<vmem>>, %arg13: memref<80x32xf32, #tpu.memory_space<vmem>>, %arg14: memref<32x96xf32, #tpu.memory_space<vmem>>, %arg15: memref<32x96xf32, #tpu.memory_space<vmem>>, %arg16: memref<1x96xf32, #tpu.memory_space<vmem>>, %arg17: memref<1x32xf32, #tpu.memory_space<vmem>>, %arg18: memref<32x96xf32, #tpu.memory_space<vmem>>, %arg19: memref<32x96xf32, #tpu.memory_space<vmem>>, %arg20: memref<1x96xf32, #tpu.memory_space<vmem>>, %arg21: memref<1x32xf32, #tpu.memory_space<vmem>>, %arg22: memref<32x32xf32, #tpu.memory_space<vmem>>, %arg23: memref<1x32xf32, #tpu.memory_space<vmem>>, %arg24: memref<64x4xf32, #tpu.memory_space<vmem>>, %arg25: memref<1x4xf32, #tpu.memory_space<vmem>>, %arg26: memref<2x4xf32, #tpu.memory_space<vmem>>) attributes {dimension_semantics = [], scalar_prefetch = 0 : i64, scratch_operands = 0 : i64, tpu.core_type = #tpu.core_type<tc>} {
    %c0 = arith.constant 0 : index
    %c0_0 = arith.constant 0 : index
    %0 = vector.load %arg0[%c0, %c0_0] : memref<16x1xi32, #tpu.memory_space<vmem>>, vector<16x1xi32>
    %1 = tpu.iota {dimensions = array<i32: 1>} : vector<16x50xi32>
    %2 = vector.broadcast %0 : vector<16x1xi32> to vector<16x50xi32>
    %3 = arith.cmpi eq, %1, %2 : vector<16x50xi32>
    %4 = arith.extui %3 : vector<16x50xi1> to vector<16x50xi32>
    %5 = arith.sitofp %4 : vector<16x50xi32> to vector<16x50xf32>
    %c0_1 = arith.constant 0 : index
    %c0_2 = arith.constant 0 : index
    %6 = vector.load %arg1[%c0_1, %c0_2] : memref<50x32xf32, #tpu.memory_space<vmem>>, vector<50x32xf32>
    %cst = arith.constant dense<0.000000e+00> : vector<16x32xf32>
    %7 = tpu.matmul %5, %6, %cst {dimension_numbers = #tpu.dot_dimension_numbers<[1], [0], [0], [1], [0, 0, 1, 1], [], []>} : vector<16x50xf32>, vector<50x32xf32>, vector<16x32xf32> -> vector<16x32xf32>
    %c0_3 = arith.constant 0 : index
    %c0_4 = arith.constant 0 : index
    %8 = vector.load %arg2[%c0_3, %c0_4] : memref<32x96xf32, #tpu.memory_space<vmem>>, vector<32x96xf32>
    %cst_5 = arith.constant dense<0.000000e+00> : vector<16x96xf32>
    %9 = tpu.matmul %7, %8, %cst_5 {dimension_numbers = #tpu.dot_dimension_numbers<[1], [0], [0], [1], [0, 0, 1, 1], [], []>} : vector<16x32xf32>, vector<32x96xf32>, vector<16x96xf32> -> vector<16x96xf32>
    %c0_6 = arith.constant 0 : index
    %c0_7 = arith.constant 0 : index
    %10 = vector.load %arg4[%c0_6, %c0_7] : memref<1x96xf32, #tpu.memory_space<vmem>>, vector<1x96xf32>
    %11 = vector.broadcast %10 : vector<1x96xf32> to vector<16x96xf32>
    %12 = arith.addf %9, %11 : vector<16x96xf32>
    %c0_8 = arith.constant 0 : index
    %c0_9 = arith.constant 0 : index
    %13 = vector.load %arg3[%c0_8, %c0_9] : memref<32x96xf32, #tpu.memory_space<vmem>>, vector<32x96xf32>
    %c0_10 = arith.constant 0 : index
    %c0_11 = arith.constant 0 : index
    %14 = vector.load %arg5[%c0_10, %c0_11] : memref<1x32xf32, #tpu.memory_space<vmem>>, vector<1x32xf32>
    %cst_12 = arith.constant 0.000000e+00 : f32
    %15 = vector.broadcast %cst_12 : f32 to vector<2x32xf32>
    %16 = vector.extract_strided_slice %12 {offsets = [0, 0], sizes = [2, 96], strides = [1, 1]} : vector<16x96xf32> to vector<2x96xf32>
    %cst_13 = arith.constant dense<0.000000e+00> : vector<2x96xf32>
    %17 = tpu.matmul %15, %13, %cst_13 {dimension_numbers = #tpu.dot_dimension_numbers<[1], [0], [0], [1], [0, 0, 1, 1], [], []>} : vector<2x32xf32>, vector<32x96xf32>, vector<2x96xf32> -> vector<2x96xf32>
    %18 = vector.extract_strided_slice %16 {offsets = [0, 0], sizes = [2, 32], strides = [1, 1]} : vector<2x96xf32> to vector<2x32xf32>
    %19 = vector.extract_strided_slice %17 {offsets = [0, 0], sizes = [2, 32], strides = [1, 1]} : vector<2x96xf32> to vector<2x32xf32>
    %20 = arith.addf %18, %19 : vector<2x32xf32>
    %21 = arith.negf %20 : vector<2x32xf32>
    %22 = math.exp %21 : vector<2x32xf32>
    %cst_14 = arith.constant 1.000000e+00 : f32
    %23 = vector.broadcast %cst_14 : f32 to vector<2x32xf32>
    %24 = arith.addf %23, %22 : vector<2x32xf32>
    %25 = arith.divf %23, %24 : vector<2x32xf32>
    %26 = vector.extract_strided_slice %16 {offsets = [0, 32], sizes = [2, 32], strides = [1, 1]} : vector<2x96xf32> to vector<2x32xf32>
    %27 = vector.extract_strided_slice %17 {offsets = [0, 32], sizes = [2, 32], strides = [1, 1]} : vector<2x96xf32> to vector<2x32xf32>
    %28 = arith.addf %26, %27 : vector<2x32xf32>
    %29 = arith.negf %28 : vector<2x32xf32>
    %30 = math.exp %29 : vector<2x32xf32>
    %cst_15 = arith.constant 1.000000e+00 : f32
    %31 = vector.broadcast %cst_15 : f32 to vector<2x32xf32>
    %32 = arith.addf %31, %30 : vector<2x32xf32>
    %33 = arith.divf %31, %32 : vector<2x32xf32>
    %34 = vector.extract_strided_slice %16 {offsets = [0, 64], sizes = [2, 32], strides = [1, 1]} : vector<2x96xf32> to vector<2x32xf32>
    %35 = vector.extract_strided_slice %17 {offsets = [0, 64], sizes = [2, 32], strides = [1, 1]} : vector<2x96xf32> to vector<2x32xf32>
    %36 = vector.broadcast %14 : vector<1x32xf32> to vector<2x32xf32>
    %37 = arith.addf %35, %36 : vector<2x32xf32>
    %38 = arith.mulf %25, %37 : vector<2x32xf32>
    %39 = arith.addf %34, %38 : vector<2x32xf32>
    %40 = math.tanh %39 : vector<2x32xf32>
    %cst_16 = arith.constant 1.000000e+00 : f32
    %41 = vector.broadcast %cst_16 : f32 to vector<2x32xf32>
    %42 = arith.subf %41, %33 : vector<2x32xf32>
    %43 = arith.mulf %42, %40 : vector<2x32xf32>
    %44 = arith.mulf %33, %15 : vector<2x32xf32>
    %45 = arith.addf %43, %44 : vector<2x32xf32>
    %46 = vector.extract_strided_slice %12 {offsets = [2, 0], sizes = [2, 96], strides = [1, 1]} : vector<16x96xf32> to vector<2x96xf32>
    %cst_17 = arith.constant dense<0.000000e+00> : vector<2x96xf32>
    %47 = tpu.matmul %45, %13, %cst_17 {dimension_numbers = #tpu.dot_dimension_numbers<[1], [0], [0], [1], [0, 0, 1, 1], [], []>} : vector<2x32xf32>, vector<32x96xf32>, vector<2x96xf32> -> vector<2x96xf32>
    %48 = vector.extract_strided_slice %46 {offsets = [0, 0], sizes = [2, 32], strides = [1, 1]} : vector<2x96xf32> to vector<2x32xf32>
    %49 = vector.extract_strided_slice %47 {offsets = [0, 0], sizes = [2, 32], strides = [1, 1]} : vector<2x96xf32> to vector<2x32xf32>
    %50 = arith.addf %48, %49 : vector<2x32xf32>
    %51 = arith.negf %50 : vector<2x32xf32>
    %52 = math.exp %51 : vector<2x32xf32>
    %cst_18 = arith.constant 1.000000e+00 : f32
    %53 = vector.broadcast %cst_18 : f32 to vector<2x32xf32>
    %54 = arith.addf %53, %52 : vector<2x32xf32>
    %55 = arith.divf %53, %54 : vector<2x32xf32>
    %56 = vector.extract_strided_slice %46 {offsets = [0, 32], sizes = [2, 32], strides = [1, 1]} : vector<2x96xf32> to vector<2x32xf32>
    %57 = vector.extract_strided_slice %47 {offsets = [0, 32], sizes = [2, 32], strides = [1, 1]} : vector<2x96xf32> to vector<2x32xf32>
    %58 = arith.addf %56, %57 : vector<2x32xf32>
    %59 = arith.negf %58 : vector<2x32xf32>
    %60 = math.exp %59 : vector<2x32xf32>
    %cst_19 = arith.constant 1.000000e+00 : f32
    %61 = vector.broadcast %cst_19 : f32 to vector<2x32xf32>
    %62 = arith.addf %61, %60 : vector<2x32xf32>
    %63 = arith.divf %61, %62 : vector<2x32xf32>
    %64 = vector.extract_strided_slice %46 {offsets = [0, 64], sizes = [2, 32], strides = [1, 1]} : vector<2x96xf32> to vector<2x32xf32>
    %65 = vector.extract_strided_slice %47 {offsets = [0, 64], sizes = [2, 32], strides = [1, 1]} : vector<2x96xf32> to vector<2x32xf32>
    %66 = vector.broadcast %14 : vector<1x32xf32> to vector<2x32xf32>
    %67 = arith.addf %65, %66 : vector<2x32xf32>
    %68 = arith.mulf %55, %67 : vector<2x32xf32>
    %69 = arith.addf %64, %68 : vector<2x32xf32>
    %70 = math.tanh %69 : vector<2x32xf32>
    %cst_20 = arith.constant 1.000000e+00 : f32
    %71 = vector.broadcast %cst_20 : f32 to vector<2x32xf32>
    %72 = arith.subf %71, %63 : vector<2x32xf32>
    %73 = arith.mulf %72, %70 : vector<2x32xf32>
    %74 = arith.mulf %63, %45 : vector<2x32xf32>
    %75 = arith.addf %73, %74 : vector<2x32xf32>
    %76 = vector.extract_strided_slice %12 {offsets = [4, 0], sizes = [2, 96], strides = [1, 1]} : vector<16x96xf32> to vector<2x96xf32>
    %cst_21 = arith.constant dense<0.000000e+00> : vector<2x96xf32>
    %77 = tpu.matmul %75, %13, %cst_21 {dimension_numbers = #tpu.dot_dimension_numbers<[1], [0], [0], [1], [0, 0, 1, 1], [], []>} : vector<2x32xf32>, vector<32x96xf32>, vector<2x96xf32> -> vector<2x96xf32>
    %78 = vector.extract_strided_slice %76 {offsets = [0, 0], sizes = [2, 32], strides = [1, 1]} : vector<2x96xf32> to vector<2x32xf32>
    %79 = vector.extract_strided_slice %77 {offsets = [0, 0], sizes = [2, 32], strides = [1, 1]} : vector<2x96xf32> to vector<2x32xf32>
    %80 = arith.addf %78, %79 : vector<2x32xf32>
    %81 = arith.negf %80 : vector<2x32xf32>
    %82 = math.exp %81 : vector<2x32xf32>
    %cst_22 = arith.constant 1.000000e+00 : f32
    %83 = vector.broadcast %cst_22 : f32 to vector<2x32xf32>
    %84 = arith.addf %83, %82 : vector<2x32xf32>
    %85 = arith.divf %83, %84 : vector<2x32xf32>
    %86 = vector.extract_strided_slice %76 {offsets = [0, 32], sizes = [2, 32], strides = [1, 1]} : vector<2x96xf32> to vector<2x32xf32>
    %87 = vector.extract_strided_slice %77 {offsets = [0, 32], sizes = [2, 32], strides = [1, 1]} : vector<2x96xf32> to vector<2x32xf32>
    %88 = arith.addf %86, %87 : vector<2x32xf32>
    %89 = arith.negf %88 : vector<2x32xf32>
    %90 = math.exp %89 : vector<2x32xf32>
    %cst_23 = arith.constant 1.000000e+00 : f32
    %91 = vector.broadcast %cst_23 : f32 to vector<2x32xf32>
    %92 = arith.addf %91, %90 : vector<2x32xf32>
    %93 = arith.divf %91, %92 : vector<2x32xf32>
    %94 = vector.extract_strided_slice %76 {offsets = [0, 64], sizes = [2, 32], strides = [1, 1]} : vector<2x96xf32> to vector<2x32xf32>
    %95 = vector.extract_strided_slice %77 {offsets = [0, 64], sizes = [2, 32], strides = [1, 1]} : vector<2x96xf32> to vector<2x32xf32>
    %96 = vector.broadcast %14 : vector<1x32xf32> to vector<2x32xf32>
    %97 = arith.addf %95, %96 : vector<2x32xf32>
    %98 = arith.mulf %85, %97 : vector<2x32xf32>
    %99 = arith.addf %94, %98 : vector<2x32xf32>
    %100 = math.tanh %99 : vector<2x32xf32>
    %cst_24 = arith.constant 1.000000e+00 : f32
    %101 = vector.broadcast %cst_24 : f32 to vector<2x32xf32>
    %102 = arith.subf %101, %93 : vector<2x32xf32>
    %103 = arith.mulf %102, %100 : vector<2x32xf32>
    %104 = arith.mulf %93, %75 : vector<2x32xf32>
    %105 = arith.addf %103, %104 : vector<2x32xf32>
    %106 = vector.extract_strided_slice %12 {offsets = [6, 0], sizes = [2, 96], strides = [1, 1]} : vector<16x96xf32> to vector<2x96xf32>
    %cst_25 = arith.constant dense<0.000000e+00> : vector<2x96xf32>
    %107 = tpu.matmul %105, %13, %cst_25 {dimension_numbers = #tpu.dot_dimension_numbers<[1], [0], [0], [1], [0, 0, 1, 1], [], []>} : vector<2x32xf32>, vector<32x96xf32>, vector<2x96xf32> -> vector<2x96xf32>
    %108 = vector.extract_strided_slice %106 {offsets = [0, 0], sizes = [2, 32], strides = [1, 1]} : vector<2x96xf32> to vector<2x32xf32>
    %109 = vector.extract_strided_slice %107 {offsets = [0, 0], sizes = [2, 32], strides = [1, 1]} : vector<2x96xf32> to vector<2x32xf32>
    %110 = arith.addf %108, %109 : vector<2x32xf32>
    %111 = arith.negf %110 : vector<2x32xf32>
    %112 = math.exp %111 : vector<2x32xf32>
    %cst_26 = arith.constant 1.000000e+00 : f32
    %113 = vector.broadcast %cst_26 : f32 to vector<2x32xf32>
    %114 = arith.addf %113, %112 : vector<2x32xf32>
    %115 = arith.divf %113, %114 : vector<2x32xf32>
    %116 = vector.extract_strided_slice %106 {offsets = [0, 32], sizes = [2, 32], strides = [1, 1]} : vector<2x96xf32> to vector<2x32xf32>
    %117 = vector.extract_strided_slice %107 {offsets = [0, 32], sizes = [2, 32], strides = [1, 1]} : vector<2x96xf32> to vector<2x32xf32>
    %118 = arith.addf %116, %117 : vector<2x32xf32>
    %119 = arith.negf %118 : vector<2x32xf32>
    %120 = math.exp %119 : vector<2x32xf32>
    %cst_27 = arith.constant 1.000000e+00 : f32
    %121 = vector.broadcast %cst_27 : f32 to vector<2x32xf32>
    %122 = arith.addf %121, %120 : vector<2x32xf32>
    %123 = arith.divf %121, %122 : vector<2x32xf32>
    %124 = vector.extract_strided_slice %106 {offsets = [0, 64], sizes = [2, 32], strides = [1, 1]} : vector<2x96xf32> to vector<2x32xf32>
    %125 = vector.extract_strided_slice %107 {offsets = [0, 64], sizes = [2, 32], strides = [1, 1]} : vector<2x96xf32> to vector<2x32xf32>
    %126 = vector.broadcast %14 : vector<1x32xf32> to vector<2x32xf32>
    %127 = arith.addf %125, %126 : vector<2x32xf32>
    %128 = arith.mulf %115, %127 : vector<2x32xf32>
    %129 = arith.addf %124, %128 : vector<2x32xf32>
    %130 = math.tanh %129 : vector<2x32xf32>
    %cst_28 = arith.constant 1.000000e+00 : f32
    %131 = vector.broadcast %cst_28 : f32 to vector<2x32xf32>
    %132 = arith.subf %131, %123 : vector<2x32xf32>
    %133 = arith.mulf %132, %130 : vector<2x32xf32>
    %134 = arith.mulf %123, %105 : vector<2x32xf32>
    %135 = arith.addf %133, %134 : vector<2x32xf32>
    %136 = vector.extract_strided_slice %12 {offsets = [8, 0], sizes = [2, 96], strides = [1, 1]} : vector<16x96xf32> to vector<2x96xf32>
    %cst_29 = arith.constant dense<0.000000e+00> : vector<2x96xf32>
    %137 = tpu.matmul %135, %13, %cst_29 {dimension_numbers = #tpu.dot_dimension_numbers<[1], [0], [0], [1], [0, 0, 1, 1], [], []>} : vector<2x32xf32>, vector<32x96xf32>, vector<2x96xf32> -> vector<2x96xf32>
    %138 = vector.extract_strided_slice %136 {offsets = [0, 0], sizes = [2, 32], strides = [1, 1]} : vector<2x96xf32> to vector<2x32xf32>
    %139 = vector.extract_strided_slice %137 {offsets = [0, 0], sizes = [2, 32], strides = [1, 1]} : vector<2x96xf32> to vector<2x32xf32>
    %140 = arith.addf %138, %139 : vector<2x32xf32>
    %141 = arith.negf %140 : vector<2x32xf32>
    %142 = math.exp %141 : vector<2x32xf32>
    %cst_30 = arith.constant 1.000000e+00 : f32
    %143 = vector.broadcast %cst_30 : f32 to vector<2x32xf32>
    %144 = arith.addf %143, %142 : vector<2x32xf32>
    %145 = arith.divf %143, %144 : vector<2x32xf32>
    %146 = vector.extract_strided_slice %136 {offsets = [0, 32], sizes = [2, 32], strides = [1, 1]} : vector<2x96xf32> to vector<2x32xf32>
    %147 = vector.extract_strided_slice %137 {offsets = [0, 32], sizes = [2, 32], strides = [1, 1]} : vector<2x96xf32> to vector<2x32xf32>
    %148 = arith.addf %146, %147 : vector<2x32xf32>
    %149 = arith.negf %148 : vector<2x32xf32>
    %150 = math.exp %149 : vector<2x32xf32>
    %cst_31 = arith.constant 1.000000e+00 : f32
    %151 = vector.broadcast %cst_31 : f32 to vector<2x32xf32>
    %152 = arith.addf %151, %150 : vector<2x32xf32>
    %153 = arith.divf %151, %152 : vector<2x32xf32>
    %154 = vector.extract_strided_slice %136 {offsets = [0, 64], sizes = [2, 32], strides = [1, 1]} : vector<2x96xf32> to vector<2x32xf32>
    %155 = vector.extract_strided_slice %137 {offsets = [0, 64], sizes = [2, 32], strides = [1, 1]} : vector<2x96xf32> to vector<2x32xf32>
    %156 = vector.broadcast %14 : vector<1x32xf32> to vector<2x32xf32>
    %157 = arith.addf %155, %156 : vector<2x32xf32>
    %158 = arith.mulf %145, %157 : vector<2x32xf32>
    %159 = arith.addf %154, %158 : vector<2x32xf32>
    %160 = math.tanh %159 : vector<2x32xf32>
    %cst_32 = arith.constant 1.000000e+00 : f32
    %161 = vector.broadcast %cst_32 : f32 to vector<2x32xf32>
    %162 = arith.subf %161, %153 : vector<2x32xf32>
    %163 = arith.mulf %162, %160 : vector<2x32xf32>
    %164 = arith.mulf %153, %135 : vector<2x32xf32>
    %165 = arith.addf %163, %164 : vector<2x32xf32>
    %166 = vector.extract_strided_slice %12 {offsets = [10, 0], sizes = [2, 96], strides = [1, 1]} : vector<16x96xf32> to vector<2x96xf32>
    %cst_33 = arith.constant dense<0.000000e+00> : vector<2x96xf32>
    %167 = tpu.matmul %165, %13, %cst_33 {dimension_numbers = #tpu.dot_dimension_numbers<[1], [0], [0], [1], [0, 0, 1, 1], [], []>} : vector<2x32xf32>, vector<32x96xf32>, vector<2x96xf32> -> vector<2x96xf32>
    %168 = vector.extract_strided_slice %166 {offsets = [0, 0], sizes = [2, 32], strides = [1, 1]} : vector<2x96xf32> to vector<2x32xf32>
    %169 = vector.extract_strided_slice %167 {offsets = [0, 0], sizes = [2, 32], strides = [1, 1]} : vector<2x96xf32> to vector<2x32xf32>
    %170 = arith.addf %168, %169 : vector<2x32xf32>
    %171 = arith.negf %170 : vector<2x32xf32>
    %172 = math.exp %171 : vector<2x32xf32>
    %cst_34 = arith.constant 1.000000e+00 : f32
    %173 = vector.broadcast %cst_34 : f32 to vector<2x32xf32>
    %174 = arith.addf %173, %172 : vector<2x32xf32>
    %175 = arith.divf %173, %174 : vector<2x32xf32>
    %176 = vector.extract_strided_slice %166 {offsets = [0, 32], sizes = [2, 32], strides = [1, 1]} : vector<2x96xf32> to vector<2x32xf32>
    %177 = vector.extract_strided_slice %167 {offsets = [0, 32], sizes = [2, 32], strides = [1, 1]} : vector<2x96xf32> to vector<2x32xf32>
    %178 = arith.addf %176, %177 : vector<2x32xf32>
    %179 = arith.negf %178 : vector<2x32xf32>
    %180 = math.exp %179 : vector<2x32xf32>
    %cst_35 = arith.constant 1.000000e+00 : f32
    %181 = vector.broadcast %cst_35 : f32 to vector<2x32xf32>
    %182 = arith.addf %181, %180 : vector<2x32xf32>
    %183 = arith.divf %181, %182 : vector<2x32xf32>
    %184 = vector.extract_strided_slice %166 {offsets = [0, 64], sizes = [2, 32], strides = [1, 1]} : vector<2x96xf32> to vector<2x32xf32>
    %185 = vector.extract_strided_slice %167 {offsets = [0, 64], sizes = [2, 32], strides = [1, 1]} : vector<2x96xf32> to vector<2x32xf32>
    %186 = vector.broadcast %14 : vector<1x32xf32> to vector<2x32xf32>
    %187 = arith.addf %185, %186 : vector<2x32xf32>
    %188 = arith.mulf %175, %187 : vector<2x32xf32>
    %189 = arith.addf %184, %188 : vector<2x32xf32>
    %190 = math.tanh %189 : vector<2x32xf32>
    %cst_36 = arith.constant 1.000000e+00 : f32
    %191 = vector.broadcast %cst_36 : f32 to vector<2x32xf32>
    %192 = arith.subf %191, %183 : vector<2x32xf32>
    %193 = arith.mulf %192, %190 : vector<2x32xf32>
    %194 = arith.mulf %183, %165 : vector<2x32xf32>
    %195 = arith.addf %193, %194 : vector<2x32xf32>
    %196 = vector.extract_strided_slice %12 {offsets = [12, 0], sizes = [2, 96], strides = [1, 1]} : vector<16x96xf32> to vector<2x96xf32>
    %cst_37 = arith.constant dense<0.000000e+00> : vector<2x96xf32>
    %197 = tpu.matmul %195, %13, %cst_37 {dimension_numbers = #tpu.dot_dimension_numbers<[1], [0], [0], [1], [0, 0, 1, 1], [], []>} : vector<2x32xf32>, vector<32x96xf32>, vector<2x96xf32> -> vector<2x96xf32>
    %198 = vector.extract_strided_slice %196 {offsets = [0, 0], sizes = [2, 32], strides = [1, 1]} : vector<2x96xf32> to vector<2x32xf32>
    %199 = vector.extract_strided_slice %197 {offsets = [0, 0], sizes = [2, 32], strides = [1, 1]} : vector<2x96xf32> to vector<2x32xf32>
    %200 = arith.addf %198, %199 : vector<2x32xf32>
    %201 = arith.negf %200 : vector<2x32xf32>
    %202 = math.exp %201 : vector<2x32xf32>
    %cst_38 = arith.constant 1.000000e+00 : f32
    %203 = vector.broadcast %cst_38 : f32 to vector<2x32xf32>
    %204 = arith.addf %203, %202 : vector<2x32xf32>
    %205 = arith.divf %203, %204 : vector<2x32xf32>
    %206 = vector.extract_strided_slice %196 {offsets = [0, 32], sizes = [2, 32], strides = [1, 1]} : vector<2x96xf32> to vector<2x32xf32>
    %207 = vector.extract_strided_slice %197 {offsets = [0, 32], sizes = [2, 32], strides = [1, 1]} : vector<2x96xf32> to vector<2x32xf32>
    %208 = arith.addf %206, %207 : vector<2x32xf32>
    %209 = arith.negf %208 : vector<2x32xf32>
    %210 = math.exp %209 : vector<2x32xf32>
    %cst_39 = arith.constant 1.000000e+00 : f32
    %211 = vector.broadcast %cst_39 : f32 to vector<2x32xf32>
    %212 = arith.addf %211, %210 : vector<2x32xf32>
    %213 = arith.divf %211, %212 : vector<2x32xf32>
    %214 = vector.extract_strided_slice %196 {offsets = [0, 64], sizes = [2, 32], strides = [1, 1]} : vector<2x96xf32> to vector<2x32xf32>
    %215 = vector.extract_strided_slice %197 {offsets = [0, 64], sizes = [2, 32], strides = [1, 1]} : vector<2x96xf32> to vector<2x32xf32>
    %216 = vector.broadcast %14 : vector<1x32xf32> to vector<2x32xf32>
    %217 = arith.addf %215, %216 : vector<2x32xf32>
    %218 = arith.mulf %205, %217 : vector<2x32xf32>
    %219 = arith.addf %214, %218 : vector<2x32xf32>
    %220 = math.tanh %219 : vector<2x32xf32>
    %cst_40 = arith.constant 1.000000e+00 : f32
    %221 = vector.broadcast %cst_40 : f32 to vector<2x32xf32>
    %222 = arith.subf %221, %213 : vector<2x32xf32>
    %223 = arith.mulf %222, %220 : vector<2x32xf32>
    %224 = arith.mulf %213, %195 : vector<2x32xf32>
    %225 = arith.addf %223, %224 : vector<2x32xf32>
    %226 = vector.extract_strided_slice %12 {offsets = [14, 0], sizes = [2, 96], strides = [1, 1]} : vector<16x96xf32> to vector<2x96xf32>
    %cst_41 = arith.constant dense<0.000000e+00> : vector<2x96xf32>
    %227 = tpu.matmul %225, %13, %cst_41 {dimension_numbers = #tpu.dot_dimension_numbers<[1], [0], [0], [1], [0, 0, 1, 1], [], []>} : vector<2x32xf32>, vector<32x96xf32>, vector<2x96xf32> -> vector<2x96xf32>
    %228 = vector.extract_strided_slice %226 {offsets = [0, 0], sizes = [2, 32], strides = [1, 1]} : vector<2x96xf32> to vector<2x32xf32>
    %229 = vector.extract_strided_slice %227 {offsets = [0, 0], sizes = [2, 32], strides = [1, 1]} : vector<2x96xf32> to vector<2x32xf32>
    %230 = arith.addf %228, %229 : vector<2x32xf32>
    %231 = arith.negf %230 : vector<2x32xf32>
    %232 = math.exp %231 : vector<2x32xf32>
    %cst_42 = arith.constant 1.000000e+00 : f32
    %233 = vector.broadcast %cst_42 : f32 to vector<2x32xf32>
    %234 = arith.addf %233, %232 : vector<2x32xf32>
    %235 = arith.divf %233, %234 : vector<2x32xf32>
    %236 = vector.extract_strided_slice %226 {offsets = [0, 32], sizes = [2, 32], strides = [1, 1]} : vector<2x96xf32> to vector<2x32xf32>
    %237 = vector.extract_strided_slice %227 {offsets = [0, 32], sizes = [2, 32], strides = [1, 1]} : vector<2x96xf32> to vector<2x32xf32>
    %238 = arith.addf %236, %237 : vector<2x32xf32>
    %239 = arith.negf %238 : vector<2x32xf32>
    %240 = math.exp %239 : vector<2x32xf32>
    %cst_43 = arith.constant 1.000000e+00 : f32
    %241 = vector.broadcast %cst_43 : f32 to vector<2x32xf32>
    %242 = arith.addf %241, %240 : vector<2x32xf32>
    %243 = arith.divf %241, %242 : vector<2x32xf32>
    %244 = vector.extract_strided_slice %226 {offsets = [0, 64], sizes = [2, 32], strides = [1, 1]} : vector<2x96xf32> to vector<2x32xf32>
    %245 = vector.extract_strided_slice %227 {offsets = [0, 64], sizes = [2, 32], strides = [1, 1]} : vector<2x96xf32> to vector<2x32xf32>
    %246 = vector.broadcast %14 : vector<1x32xf32> to vector<2x32xf32>
    %247 = arith.addf %245, %246 : vector<2x32xf32>
    %248 = arith.mulf %235, %247 : vector<2x32xf32>
    %249 = arith.addf %244, %248 : vector<2x32xf32>
    %250 = math.tanh %249 : vector<2x32xf32>
    %cst_44 = arith.constant 1.000000e+00 : f32
    %251 = vector.broadcast %cst_44 : f32 to vector<2x32xf32>
    %252 = arith.subf %251, %243 : vector<2x32xf32>
    %253 = arith.mulf %252, %250 : vector<2x32xf32>
    %254 = arith.mulf %243, %225 : vector<2x32xf32>
    %255 = arith.addf %253, %254 : vector<2x32xf32>
    %256 = tpu.concatenate %45, %75, %105, %135, %165, %195, %225, %255 in 0 : vector<2x32xf32>, vector<2x32xf32>, vector<2x32xf32>, vector<2x32xf32>, vector<2x32xf32>, vector<2x32xf32>, vector<2x32xf32>, vector<2x32xf32> -> vector<16x32xf32>
    %c0_45 = arith.constant 0 : index
    %c0_46 = arith.constant 0 : index
    %257 = vector.load %arg6[%c0_45, %c0_46] : memref<32x96xf32, #tpu.memory_space<vmem>>, vector<32x96xf32>
    %cst_47 = arith.constant dense<0.000000e+00> : vector<16x96xf32>
    %258 = tpu.matmul %256, %257, %cst_47 {dimension_numbers = #tpu.dot_dimension_numbers<[1], [0], [0], [1], [0, 0, 1, 1], [], []>} : vector<16x32xf32>, vector<32x96xf32>, vector<16x96xf32> -> vector<16x96xf32>
    %c0_48 = arith.constant 0 : index
    %c0_49 = arith.constant 0 : index
    %259 = vector.load %arg8[%c0_48, %c0_49] : memref<1x96xf32, #tpu.memory_space<vmem>>, vector<1x96xf32>
    %260 = vector.broadcast %259 : vector<1x96xf32> to vector<16x96xf32>
    %261 = arith.addf %258, %260 : vector<16x96xf32>
    %c0_50 = arith.constant 0 : index
    %c0_51 = arith.constant 0 : index
    %262 = vector.load %arg7[%c0_50, %c0_51] : memref<32x96xf32, #tpu.memory_space<vmem>>, vector<32x96xf32>
    %c0_52 = arith.constant 0 : index
    %c0_53 = arith.constant 0 : index
    %263 = vector.load %arg9[%c0_52, %c0_53] : memref<1x32xf32, #tpu.memory_space<vmem>>, vector<1x32xf32>
    %cst_54 = arith.constant 0.000000e+00 : f32
    %264 = vector.broadcast %cst_54 : f32 to vector<2x32xf32>
    %265 = vector.extract_strided_slice %261 {offsets = [0, 0], sizes = [2, 96], strides = [1, 1]} : vector<16x96xf32> to vector<2x96xf32>
    %cst_55 = arith.constant dense<0.000000e+00> : vector<2x96xf32>
    %266 = tpu.matmul %264, %262, %cst_55 {dimension_numbers = #tpu.dot_dimension_numbers<[1], [0], [0], [1], [0, 0, 1, 1], [], []>} : vector<2x32xf32>, vector<32x96xf32>, vector<2x96xf32> -> vector<2x96xf32>
    %267 = vector.extract_strided_slice %265 {offsets = [0, 0], sizes = [2, 32], strides = [1, 1]} : vector<2x96xf32> to vector<2x32xf32>
    %268 = vector.extract_strided_slice %266 {offsets = [0, 0], sizes = [2, 32], strides = [1, 1]} : vector<2x96xf32> to vector<2x32xf32>
    %269 = arith.addf %267, %268 : vector<2x32xf32>
    %270 = arith.negf %269 : vector<2x32xf32>
    %271 = math.exp %270 : vector<2x32xf32>
    %cst_56 = arith.constant 1.000000e+00 : f32
    %272 = vector.broadcast %cst_56 : f32 to vector<2x32xf32>
    %273 = arith.addf %272, %271 : vector<2x32xf32>
    %274 = arith.divf %272, %273 : vector<2x32xf32>
    %275 = vector.extract_strided_slice %265 {offsets = [0, 32], sizes = [2, 32], strides = [1, 1]} : vector<2x96xf32> to vector<2x32xf32>
    %276 = vector.extract_strided_slice %266 {offsets = [0, 32], sizes = [2, 32], strides = [1, 1]} : vector<2x96xf32> to vector<2x32xf32>
    %277 = arith.addf %275, %276 : vector<2x32xf32>
    %278 = arith.negf %277 : vector<2x32xf32>
    %279 = math.exp %278 : vector<2x32xf32>
    %cst_57 = arith.constant 1.000000e+00 : f32
    %280 = vector.broadcast %cst_57 : f32 to vector<2x32xf32>
    %281 = arith.addf %280, %279 : vector<2x32xf32>
    %282 = arith.divf %280, %281 : vector<2x32xf32>
    %283 = vector.extract_strided_slice %265 {offsets = [0, 64], sizes = [2, 32], strides = [1, 1]} : vector<2x96xf32> to vector<2x32xf32>
    %284 = vector.extract_strided_slice %266 {offsets = [0, 64], sizes = [2, 32], strides = [1, 1]} : vector<2x96xf32> to vector<2x32xf32>
    %285 = vector.broadcast %263 : vector<1x32xf32> to vector<2x32xf32>
    %286 = arith.addf %284, %285 : vector<2x32xf32>
    %287 = arith.mulf %274, %286 : vector<2x32xf32>
    %288 = arith.addf %283, %287 : vector<2x32xf32>
    %289 = math.tanh %288 : vector<2x32xf32>
    %cst_58 = arith.constant 1.000000e+00 : f32
    %290 = vector.broadcast %cst_58 : f32 to vector<2x32xf32>
    %291 = arith.subf %290, %282 : vector<2x32xf32>
    %292 = arith.mulf %291, %289 : vector<2x32xf32>
    %293 = arith.mulf %282, %264 : vector<2x32xf32>
    %294 = arith.addf %292, %293 : vector<2x32xf32>
    %295 = vector.extract_strided_slice %261 {offsets = [2, 0], sizes = [2, 96], strides = [1, 1]} : vector<16x96xf32> to vector<2x96xf32>
    %cst_59 = arith.constant dense<0.000000e+00> : vector<2x96xf32>
    %296 = tpu.matmul %294, %262, %cst_59 {dimension_numbers = #tpu.dot_dimension_numbers<[1], [0], [0], [1], [0, 0, 1, 1], [], []>} : vector<2x32xf32>, vector<32x96xf32>, vector<2x96xf32> -> vector<2x96xf32>
    %297 = vector.extract_strided_slice %295 {offsets = [0, 0], sizes = [2, 32], strides = [1, 1]} : vector<2x96xf32> to vector<2x32xf32>
    %298 = vector.extract_strided_slice %296 {offsets = [0, 0], sizes = [2, 32], strides = [1, 1]} : vector<2x96xf32> to vector<2x32xf32>
    %299 = arith.addf %297, %298 : vector<2x32xf32>
    %300 = arith.negf %299 : vector<2x32xf32>
    %301 = math.exp %300 : vector<2x32xf32>
    %cst_60 = arith.constant 1.000000e+00 : f32
    %302 = vector.broadcast %cst_60 : f32 to vector<2x32xf32>
    %303 = arith.addf %302, %301 : vector<2x32xf32>
    %304 = arith.divf %302, %303 : vector<2x32xf32>
    %305 = vector.extract_strided_slice %295 {offsets = [0, 32], sizes = [2, 32], strides = [1, 1]} : vector<2x96xf32> to vector<2x32xf32>
    %306 = vector.extract_strided_slice %296 {offsets = [0, 32], sizes = [2, 32], strides = [1, 1]} : vector<2x96xf32> to vector<2x32xf32>
    %307 = arith.addf %305, %306 : vector<2x32xf32>
    %308 = arith.negf %307 : vector<2x32xf32>
    %309 = math.exp %308 : vector<2x32xf32>
    %cst_61 = arith.constant 1.000000e+00 : f32
    %310 = vector.broadcast %cst_61 : f32 to vector<2x32xf32>
    %311 = arith.addf %310, %309 : vector<2x32xf32>
    %312 = arith.divf %310, %311 : vector<2x32xf32>
    %313 = vector.extract_strided_slice %295 {offsets = [0, 64], sizes = [2, 32], strides = [1, 1]} : vector<2x96xf32> to vector<2x32xf32>
    %314 = vector.extract_strided_slice %296 {offsets = [0, 64], sizes = [2, 32], strides = [1, 1]} : vector<2x96xf32> to vector<2x32xf32>
    %315 = vector.broadcast %263 : vector<1x32xf32> to vector<2x32xf32>
    %316 = arith.addf %314, %315 : vector<2x32xf32>
    %317 = arith.mulf %304, %316 : vector<2x32xf32>
    %318 = arith.addf %313, %317 : vector<2x32xf32>
    %319 = math.tanh %318 : vector<2x32xf32>
    %cst_62 = arith.constant 1.000000e+00 : f32
    %320 = vector.broadcast %cst_62 : f32 to vector<2x32xf32>
    %321 = arith.subf %320, %312 : vector<2x32xf32>
    %322 = arith.mulf %321, %319 : vector<2x32xf32>
    %323 = arith.mulf %312, %294 : vector<2x32xf32>
    %324 = arith.addf %322, %323 : vector<2x32xf32>
    %325 = vector.extract_strided_slice %261 {offsets = [4, 0], sizes = [2, 96], strides = [1, 1]} : vector<16x96xf32> to vector<2x96xf32>
    %cst_63 = arith.constant dense<0.000000e+00> : vector<2x96xf32>
    %326 = tpu.matmul %324, %262, %cst_63 {dimension_numbers = #tpu.dot_dimension_numbers<[1], [0], [0], [1], [0, 0, 1, 1], [], []>} : vector<2x32xf32>, vector<32x96xf32>, vector<2x96xf32> -> vector<2x96xf32>
    %327 = vector.extract_strided_slice %325 {offsets = [0, 0], sizes = [2, 32], strides = [1, 1]} : vector<2x96xf32> to vector<2x32xf32>
    %328 = vector.extract_strided_slice %326 {offsets = [0, 0], sizes = [2, 32], strides = [1, 1]} : vector<2x96xf32> to vector<2x32xf32>
    %329 = arith.addf %327, %328 : vector<2x32xf32>
    %330 = arith.negf %329 : vector<2x32xf32>
    %331 = math.exp %330 : vector<2x32xf32>
    %cst_64 = arith.constant 1.000000e+00 : f32
    %332 = vector.broadcast %cst_64 : f32 to vector<2x32xf32>
    %333 = arith.addf %332, %331 : vector<2x32xf32>
    %334 = arith.divf %332, %333 : vector<2x32xf32>
    %335 = vector.extract_strided_slice %325 {offsets = [0, 32], sizes = [2, 32], strides = [1, 1]} : vector<2x96xf32> to vector<2x32xf32>
    %336 = vector.extract_strided_slice %326 {offsets = [0, 32], sizes = [2, 32], strides = [1, 1]} : vector<2x96xf32> to vector<2x32xf32>
    %337 = arith.addf %335, %336 : vector<2x32xf32>
    %338 = arith.negf %337 : vector<2x32xf32>
    %339 = math.exp %338 : vector<2x32xf32>
    %cst_65 = arith.constant 1.000000e+00 : f32
    %340 = vector.broadcast %cst_65 : f32 to vector<2x32xf32>
    %341 = arith.addf %340, %339 : vector<2x32xf32>
    %342 = arith.divf %340, %341 : vector<2x32xf32>
    %343 = vector.extract_strided_slice %325 {offsets = [0, 64], sizes = [2, 32], strides = [1, 1]} : vector<2x96xf32> to vector<2x32xf32>
    %344 = vector.extract_strided_slice %326 {offsets = [0, 64], sizes = [2, 32], strides = [1, 1]} : vector<2x96xf32> to vector<2x32xf32>
    %345 = vector.broadcast %263 : vector<1x32xf32> to vector<2x32xf32>
    %346 = arith.addf %344, %345 : vector<2x32xf32>
    %347 = arith.mulf %334, %346 : vector<2x32xf32>
    %348 = arith.addf %343, %347 : vector<2x32xf32>
    %349 = math.tanh %348 : vector<2x32xf32>
    %cst_66 = arith.constant 1.000000e+00 : f32
    %350 = vector.broadcast %cst_66 : f32 to vector<2x32xf32>
    %351 = arith.subf %350, %342 : vector<2x32xf32>
    %352 = arith.mulf %351, %349 : vector<2x32xf32>
    %353 = arith.mulf %342, %324 : vector<2x32xf32>
    %354 = arith.addf %352, %353 : vector<2x32xf32>
    %355 = vector.extract_strided_slice %261 {offsets = [6, 0], sizes = [2, 96], strides = [1, 1]} : vector<16x96xf32> to vector<2x96xf32>
    %cst_67 = arith.constant dense<0.000000e+00> : vector<2x96xf32>
    %356 = tpu.matmul %354, %262, %cst_67 {dimension_numbers = #tpu.dot_dimension_numbers<[1], [0], [0], [1], [0, 0, 1, 1], [], []>} : vector<2x32xf32>, vector<32x96xf32>, vector<2x96xf32> -> vector<2x96xf32>
    %357 = vector.extract_strided_slice %355 {offsets = [0, 0], sizes = [2, 32], strides = [1, 1]} : vector<2x96xf32> to vector<2x32xf32>
    %358 = vector.extract_strided_slice %356 {offsets = [0, 0], sizes = [2, 32], strides = [1, 1]} : vector<2x96xf32> to vector<2x32xf32>
    %359 = arith.addf %357, %358 : vector<2x32xf32>
    %360 = arith.negf %359 : vector<2x32xf32>
    %361 = math.exp %360 : vector<2x32xf32>
    %cst_68 = arith.constant 1.000000e+00 : f32
    %362 = vector.broadcast %cst_68 : f32 to vector<2x32xf32>
    %363 = arith.addf %362, %361 : vector<2x32xf32>
    %364 = arith.divf %362, %363 : vector<2x32xf32>
    %365 = vector.extract_strided_slice %355 {offsets = [0, 32], sizes = [2, 32], strides = [1, 1]} : vector<2x96xf32> to vector<2x32xf32>
    %366 = vector.extract_strided_slice %356 {offsets = [0, 32], sizes = [2, 32], strides = [1, 1]} : vector<2x96xf32> to vector<2x32xf32>
    %367 = arith.addf %365, %366 : vector<2x32xf32>
    %368 = arith.negf %367 : vector<2x32xf32>
    %369 = math.exp %368 : vector<2x32xf32>
    %cst_69 = arith.constant 1.000000e+00 : f32
    %370 = vector.broadcast %cst_69 : f32 to vector<2x32xf32>
    %371 = arith.addf %370, %369 : vector<2x32xf32>
    %372 = arith.divf %370, %371 : vector<2x32xf32>
    %373 = vector.extract_strided_slice %355 {offsets = [0, 64], sizes = [2, 32], strides = [1, 1]} : vector<2x96xf32> to vector<2x32xf32>
    %374 = vector.extract_strided_slice %356 {offsets = [0, 64], sizes = [2, 32], strides = [1, 1]} : vector<2x96xf32> to vector<2x32xf32>
    %375 = vector.broadcast %263 : vector<1x32xf32> to vector<2x32xf32>
    %376 = arith.addf %374, %375 : vector<2x32xf32>
    %377 = arith.mulf %364, %376 : vector<2x32xf32>
    %378 = arith.addf %373, %377 : vector<2x32xf32>
    %379 = math.tanh %378 : vector<2x32xf32>
    %cst_70 = arith.constant 1.000000e+00 : f32
    %380 = vector.broadcast %cst_70 : f32 to vector<2x32xf32>
    %381 = arith.subf %380, %372 : vector<2x32xf32>
    %382 = arith.mulf %381, %379 : vector<2x32xf32>
    %383 = arith.mulf %372, %354 : vector<2x32xf32>
    %384 = arith.addf %382, %383 : vector<2x32xf32>
    %385 = vector.extract_strided_slice %261 {offsets = [8, 0], sizes = [2, 96], strides = [1, 1]} : vector<16x96xf32> to vector<2x96xf32>
    %cst_71 = arith.constant dense<0.000000e+00> : vector<2x96xf32>
    %386 = tpu.matmul %384, %262, %cst_71 {dimension_numbers = #tpu.dot_dimension_numbers<[1], [0], [0], [1], [0, 0, 1, 1], [], []>} : vector<2x32xf32>, vector<32x96xf32>, vector<2x96xf32> -> vector<2x96xf32>
    %387 = vector.extract_strided_slice %385 {offsets = [0, 0], sizes = [2, 32], strides = [1, 1]} : vector<2x96xf32> to vector<2x32xf32>
    %388 = vector.extract_strided_slice %386 {offsets = [0, 0], sizes = [2, 32], strides = [1, 1]} : vector<2x96xf32> to vector<2x32xf32>
    %389 = arith.addf %387, %388 : vector<2x32xf32>
    %390 = arith.negf %389 : vector<2x32xf32>
    %391 = math.exp %390 : vector<2x32xf32>
    %cst_72 = arith.constant 1.000000e+00 : f32
    %392 = vector.broadcast %cst_72 : f32 to vector<2x32xf32>
    %393 = arith.addf %392, %391 : vector<2x32xf32>
    %394 = arith.divf %392, %393 : vector<2x32xf32>
    %395 = vector.extract_strided_slice %385 {offsets = [0, 32], sizes = [2, 32], strides = [1, 1]} : vector<2x96xf32> to vector<2x32xf32>
    %396 = vector.extract_strided_slice %386 {offsets = [0, 32], sizes = [2, 32], strides = [1, 1]} : vector<2x96xf32> to vector<2x32xf32>
    %397 = arith.addf %395, %396 : vector<2x32xf32>
    %398 = arith.negf %397 : vector<2x32xf32>
    %399 = math.exp %398 : vector<2x32xf32>
    %cst_73 = arith.constant 1.000000e+00 : f32
    %400 = vector.broadcast %cst_73 : f32 to vector<2x32xf32>
    %401 = arith.addf %400, %399 : vector<2x32xf32>
    %402 = arith.divf %400, %401 : vector<2x32xf32>
    %403 = vector.extract_strided_slice %385 {offsets = [0, 64], sizes = [2, 32], strides = [1, 1]} : vector<2x96xf32> to vector<2x32xf32>
    %404 = vector.extract_strided_slice %386 {offsets = [0, 64], sizes = [2, 32], strides = [1, 1]} : vector<2x96xf32> to vector<2x32xf32>
    %405 = vector.broadcast %263 : vector<1x32xf32> to vector<2x32xf32>
    %406 = arith.addf %404, %405 : vector<2x32xf32>
    %407 = arith.mulf %394, %406 : vector<2x32xf32>
    %408 = arith.addf %403, %407 : vector<2x32xf32>
    %409 = math.tanh %408 : vector<2x32xf32>
    %cst_74 = arith.constant 1.000000e+00 : f32
    %410 = vector.broadcast %cst_74 : f32 to vector<2x32xf32>
    %411 = arith.subf %410, %402 : vector<2x32xf32>
    %412 = arith.mulf %411, %409 : vector<2x32xf32>
    %413 = arith.mulf %402, %384 : vector<2x32xf32>
    %414 = arith.addf %412, %413 : vector<2x32xf32>
    %415 = vector.extract_strided_slice %261 {offsets = [10, 0], sizes = [2, 96], strides = [1, 1]} : vector<16x96xf32> to vector<2x96xf32>
    %cst_75 = arith.constant dense<0.000000e+00> : vector<2x96xf32>
    %416 = tpu.matmul %414, %262, %cst_75 {dimension_numbers = #tpu.dot_dimension_numbers<[1], [0], [0], [1], [0, 0, 1, 1], [], []>} : vector<2x32xf32>, vector<32x96xf32>, vector<2x96xf32> -> vector<2x96xf32>
    %417 = vector.extract_strided_slice %415 {offsets = [0, 0], sizes = [2, 32], strides = [1, 1]} : vector<2x96xf32> to vector<2x32xf32>
    %418 = vector.extract_strided_slice %416 {offsets = [0, 0], sizes = [2, 32], strides = [1, 1]} : vector<2x96xf32> to vector<2x32xf32>
    %419 = arith.addf %417, %418 : vector<2x32xf32>
    %420 = arith.negf %419 : vector<2x32xf32>
    %421 = math.exp %420 : vector<2x32xf32>
    %cst_76 = arith.constant 1.000000e+00 : f32
    %422 = vector.broadcast %cst_76 : f32 to vector<2x32xf32>
    %423 = arith.addf %422, %421 : vector<2x32xf32>
    %424 = arith.divf %422, %423 : vector<2x32xf32>
    %425 = vector.extract_strided_slice %415 {offsets = [0, 32], sizes = [2, 32], strides = [1, 1]} : vector<2x96xf32> to vector<2x32xf32>
    %426 = vector.extract_strided_slice %416 {offsets = [0, 32], sizes = [2, 32], strides = [1, 1]} : vector<2x96xf32> to vector<2x32xf32>
    %427 = arith.addf %425, %426 : vector<2x32xf32>
    %428 = arith.negf %427 : vector<2x32xf32>
    %429 = math.exp %428 : vector<2x32xf32>
    %cst_77 = arith.constant 1.000000e+00 : f32
    %430 = vector.broadcast %cst_77 : f32 to vector<2x32xf32>
    %431 = arith.addf %430, %429 : vector<2x32xf32>
    %432 = arith.divf %430, %431 : vector<2x32xf32>
    %433 = vector.extract_strided_slice %415 {offsets = [0, 64], sizes = [2, 32], strides = [1, 1]} : vector<2x96xf32> to vector<2x32xf32>
    %434 = vector.extract_strided_slice %416 {offsets = [0, 64], sizes = [2, 32], strides = [1, 1]} : vector<2x96xf32> to vector<2x32xf32>
    %435 = vector.broadcast %263 : vector<1x32xf32> to vector<2x32xf32>
    %436 = arith.addf %434, %435 : vector<2x32xf32>
    %437 = arith.mulf %424, %436 : vector<2x32xf32>
    %438 = arith.addf %433, %437 : vector<2x32xf32>
    %439 = math.tanh %438 : vector<2x32xf32>
    %cst_78 = arith.constant 1.000000e+00 : f32
    %440 = vector.broadcast %cst_78 : f32 to vector<2x32xf32>
    %441 = arith.subf %440, %432 : vector<2x32xf32>
    %442 = arith.mulf %441, %439 : vector<2x32xf32>
    %443 = arith.mulf %432, %414 : vector<2x32xf32>
    %444 = arith.addf %442, %443 : vector<2x32xf32>
    %445 = vector.extract_strided_slice %261 {offsets = [12, 0], sizes = [2, 96], strides = [1, 1]} : vector<16x96xf32> to vector<2x96xf32>
    %cst_79 = arith.constant dense<0.000000e+00> : vector<2x96xf32>
    %446 = tpu.matmul %444, %262, %cst_79 {dimension_numbers = #tpu.dot_dimension_numbers<[1], [0], [0], [1], [0, 0, 1, 1], [], []>} : vector<2x32xf32>, vector<32x96xf32>, vector<2x96xf32> -> vector<2x96xf32>
    %447 = vector.extract_strided_slice %445 {offsets = [0, 0], sizes = [2, 32], strides = [1, 1]} : vector<2x96xf32> to vector<2x32xf32>
    %448 = vector.extract_strided_slice %446 {offsets = [0, 0], sizes = [2, 32], strides = [1, 1]} : vector<2x96xf32> to vector<2x32xf32>
    %449 = arith.addf %447, %448 : vector<2x32xf32>
    %450 = arith.negf %449 : vector<2x32xf32>
    %451 = math.exp %450 : vector<2x32xf32>
    %cst_80 = arith.constant 1.000000e+00 : f32
    %452 = vector.broadcast %cst_80 : f32 to vector<2x32xf32>
    %453 = arith.addf %452, %451 : vector<2x32xf32>
    %454 = arith.divf %452, %453 : vector<2x32xf32>
    %455 = vector.extract_strided_slice %445 {offsets = [0, 32], sizes = [2, 32], strides = [1, 1]} : vector<2x96xf32> to vector<2x32xf32>
    %456 = vector.extract_strided_slice %446 {offsets = [0, 32], sizes = [2, 32], strides = [1, 1]} : vector<2x96xf32> to vector<2x32xf32>
    %457 = arith.addf %455, %456 : vector<2x32xf32>
    %458 = arith.negf %457 : vector<2x32xf32>
    %459 = math.exp %458 : vector<2x32xf32>
    %cst_81 = arith.constant 1.000000e+00 : f32
    %460 = vector.broadcast %cst_81 : f32 to vector<2x32xf32>
    %461 = arith.addf %460, %459 : vector<2x32xf32>
    %462 = arith.divf %460, %461 : vector<2x32xf32>
    %463 = vector.extract_strided_slice %445 {offsets = [0, 64], sizes = [2, 32], strides = [1, 1]} : vector<2x96xf32> to vector<2x32xf32>
    %464 = vector.extract_strided_slice %446 {offsets = [0, 64], sizes = [2, 32], strides = [1, 1]} : vector<2x96xf32> to vector<2x32xf32>
    %465 = vector.broadcast %263 : vector<1x32xf32> to vector<2x32xf32>
    %466 = arith.addf %464, %465 : vector<2x32xf32>
    %467 = arith.mulf %454, %466 : vector<2x32xf32>
    %468 = arith.addf %463, %467 : vector<2x32xf32>
    %469 = math.tanh %468 : vector<2x32xf32>
    %cst_82 = arith.constant 1.000000e+00 : f32
    %470 = vector.broadcast %cst_82 : f32 to vector<2x32xf32>
    %471 = arith.subf %470, %462 : vector<2x32xf32>
    %472 = arith.mulf %471, %469 : vector<2x32xf32>
    %473 = arith.mulf %462, %444 : vector<2x32xf32>
    %474 = arith.addf %472, %473 : vector<2x32xf32>
    %475 = vector.extract_strided_slice %261 {offsets = [14, 0], sizes = [2, 96], strides = [1, 1]} : vector<16x96xf32> to vector<2x96xf32>
    %cst_83 = arith.constant dense<0.000000e+00> : vector<2x96xf32>
    %476 = tpu.matmul %474, %262, %cst_83 {dimension_numbers = #tpu.dot_dimension_numbers<[1], [0], [0], [1], [0, 0, 1, 1], [], []>} : vector<2x32xf32>, vector<32x96xf32>, vector<2x96xf32> -> vector<2x96xf32>
    %477 = vector.extract_strided_slice %475 {offsets = [0, 0], sizes = [2, 32], strides = [1, 1]} : vector<2x96xf32> to vector<2x32xf32>
    %478 = vector.extract_strided_slice %476 {offsets = [0, 0], sizes = [2, 32], strides = [1, 1]} : vector<2x96xf32> to vector<2x32xf32>
    %479 = arith.addf %477, %478 : vector<2x32xf32>
    %480 = arith.negf %479 : vector<2x32xf32>
    %481 = math.exp %480 : vector<2x32xf32>
    %cst_84 = arith.constant 1.000000e+00 : f32
    %482 = vector.broadcast %cst_84 : f32 to vector<2x32xf32>
    %483 = arith.addf %482, %481 : vector<2x32xf32>
    %484 = arith.divf %482, %483 : vector<2x32xf32>
    %485 = vector.extract_strided_slice %475 {offsets = [0, 32], sizes = [2, 32], strides = [1, 1]} : vector<2x96xf32> to vector<2x32xf32>
    %486 = vector.extract_strided_slice %476 {offsets = [0, 32], sizes = [2, 32], strides = [1, 1]} : vector<2x96xf32> to vector<2x32xf32>
    %487 = arith.addf %485, %486 : vector<2x32xf32>
    %488 = arith.negf %487 : vector<2x32xf32>
    %489 = math.exp %488 : vector<2x32xf32>
    %cst_85 = arith.constant 1.000000e+00 : f32
    %490 = vector.broadcast %cst_85 : f32 to vector<2x32xf32>
    %491 = arith.addf %490, %489 : vector<2x32xf32>
    %492 = arith.divf %490, %491 : vector<2x32xf32>
    %493 = vector.extract_strided_slice %475 {offsets = [0, 64], sizes = [2, 32], strides = [1, 1]} : vector<2x96xf32> to vector<2x32xf32>
    %494 = vector.extract_strided_slice %476 {offsets = [0, 64], sizes = [2, 32], strides = [1, 1]} : vector<2x96xf32> to vector<2x32xf32>
    %495 = vector.broadcast %263 : vector<1x32xf32> to vector<2x32xf32>
    %496 = arith.addf %494, %495 : vector<2x32xf32>
    %497 = arith.mulf %484, %496 : vector<2x32xf32>
    %498 = arith.addf %493, %497 : vector<2x32xf32>
    %499 = math.tanh %498 : vector<2x32xf32>
    %cst_86 = arith.constant 1.000000e+00 : f32
    %500 = vector.broadcast %cst_86 : f32 to vector<2x32xf32>
    %501 = arith.subf %500, %492 : vector<2x32xf32>
    %502 = arith.mulf %501, %499 : vector<2x32xf32>
    %503 = arith.mulf %492, %474 : vector<2x32xf32>
    %504 = arith.addf %502, %503 : vector<2x32xf32>
    %c0_87 = arith.constant 0 : index
    %c0_88 = arith.constant 0 : index
    %505 = vector.load %arg10[%c0_87, %c0_88] : memref<32x32xf32, #tpu.memory_space<vmem>>, vector<32x32xf32>
    %cst_89 = arith.constant dense<0.000000e+00> : vector<2x32xf32>
    %506 = tpu.matmul %504, %505, %cst_89 {dimension_numbers = #tpu.dot_dimension_numbers<[1], [0], [0], [1], [0, 0, 1, 1], [], []>} : vector<2x32xf32>, vector<32x32xf32>, vector<2x32xf32> -> vector<2x32xf32>
    %c0_90 = arith.constant 0 : index
    %c0_91 = arith.constant 0 : index
    %507 = vector.load %arg11[%c0_90, %c0_91] : memref<1x32xf32, #tpu.memory_space<vmem>>, vector<1x32xf32>
    %508 = vector.broadcast %507 : vector<1x32xf32> to vector<2x32xf32>
    %509 = arith.addf %506, %508 : vector<2x32xf32>
    %c0_92 = arith.constant 0 : index
    %c0_93 = arith.constant 0 : index
    %510 = vector.load %arg12[%c0_92, %c0_93] : memref<24x1xi32, #tpu.memory_space<vmem>>, vector<24x1xi32>
    %511 = tpu.iota {dimensions = array<i32: 1>} : vector<24x80xi32>
    %512 = vector.broadcast %510 : vector<24x1xi32> to vector<24x80xi32>
    %513 = arith.cmpi eq, %511, %512 : vector<24x80xi32>
    %514 = arith.extui %513 : vector<24x80xi1> to vector<24x80xi32>
    %515 = arith.sitofp %514 : vector<24x80xi32> to vector<24x80xf32>
    %c0_94 = arith.constant 0 : index
    %c0_95 = arith.constant 0 : index
    %516 = vector.load %arg13[%c0_94, %c0_95] : memref<80x32xf32, #tpu.memory_space<vmem>>, vector<80x32xf32>
    %cst_96 = arith.constant dense<0.000000e+00> : vector<24x32xf32>
    %517 = tpu.matmul %515, %516, %cst_96 {dimension_numbers = #tpu.dot_dimension_numbers<[1], [0], [0], [1], [0, 0, 1, 1], [], []>} : vector<24x80xf32>, vector<80x32xf32>, vector<24x32xf32> -> vector<24x32xf32>
    %c0_97 = arith.constant 0 : index
    %c0_98 = arith.constant 0 : index
    %518 = vector.load %arg14[%c0_97, %c0_98] : memref<32x96xf32, #tpu.memory_space<vmem>>, vector<32x96xf32>
    %cst_99 = arith.constant dense<0.000000e+00> : vector<24x96xf32>
    %519 = tpu.matmul %517, %518, %cst_99 {dimension_numbers = #tpu.dot_dimension_numbers<[1], [0], [0], [1], [0, 0, 1, 1], [], []>} : vector<24x32xf32>, vector<32x96xf32>, vector<24x96xf32> -> vector<24x96xf32>
    %c0_100 = arith.constant 0 : index
    %c0_101 = arith.constant 0 : index
    %520 = vector.load %arg16[%c0_100, %c0_101] : memref<1x96xf32, #tpu.memory_space<vmem>>, vector<1x96xf32>
    %521 = vector.broadcast %520 : vector<1x96xf32> to vector<24x96xf32>
    %522 = arith.addf %519, %521 : vector<24x96xf32>
    %c0_102 = arith.constant 0 : index
    %c0_103 = arith.constant 0 : index
    %523 = vector.load %arg15[%c0_102, %c0_103] : memref<32x96xf32, #tpu.memory_space<vmem>>, vector<32x96xf32>
    %c0_104 = arith.constant 0 : index
    %c0_105 = arith.constant 0 : index
    %524 = vector.load %arg17[%c0_104, %c0_105] : memref<1x32xf32, #tpu.memory_space<vmem>>, vector<1x32xf32>
    %cst_106 = arith.constant 0.000000e+00 : f32
    %525 = vector.broadcast %cst_106 : f32 to vector<2x32xf32>
    %526 = vector.extract_strided_slice %522 {offsets = [0, 0], sizes = [2, 96], strides = [1, 1]} : vector<24x96xf32> to vector<2x96xf32>
    %cst_107 = arith.constant dense<0.000000e+00> : vector<2x96xf32>
    %527 = tpu.matmul %525, %523, %cst_107 {dimension_numbers = #tpu.dot_dimension_numbers<[1], [0], [0], [1], [0, 0, 1, 1], [], []>} : vector<2x32xf32>, vector<32x96xf32>, vector<2x96xf32> -> vector<2x96xf32>
    %528 = vector.extract_strided_slice %526 {offsets = [0, 0], sizes = [2, 32], strides = [1, 1]} : vector<2x96xf32> to vector<2x32xf32>
    %529 = vector.extract_strided_slice %527 {offsets = [0, 0], sizes = [2, 32], strides = [1, 1]} : vector<2x96xf32> to vector<2x32xf32>
    %530 = arith.addf %528, %529 : vector<2x32xf32>
    %531 = arith.negf %530 : vector<2x32xf32>
    %532 = math.exp %531 : vector<2x32xf32>
    %cst_108 = arith.constant 1.000000e+00 : f32
    %533 = vector.broadcast %cst_108 : f32 to vector<2x32xf32>
    %534 = arith.addf %533, %532 : vector<2x32xf32>
    %535 = arith.divf %533, %534 : vector<2x32xf32>
    %536 = vector.extract_strided_slice %526 {offsets = [0, 32], sizes = [2, 32], strides = [1, 1]} : vector<2x96xf32> to vector<2x32xf32>
    %537 = vector.extract_strided_slice %527 {offsets = [0, 32], sizes = [2, 32], strides = [1, 1]} : vector<2x96xf32> to vector<2x32xf32>
    %538 = arith.addf %536, %537 : vector<2x32xf32>
    %539 = arith.negf %538 : vector<2x32xf32>
    %540 = math.exp %539 : vector<2x32xf32>
    %cst_109 = arith.constant 1.000000e+00 : f32
    %541 = vector.broadcast %cst_109 : f32 to vector<2x32xf32>
    %542 = arith.addf %541, %540 : vector<2x32xf32>
    %543 = arith.divf %541, %542 : vector<2x32xf32>
    %544 = vector.extract_strided_slice %526 {offsets = [0, 64], sizes = [2, 32], strides = [1, 1]} : vector<2x96xf32> to vector<2x32xf32>
    %545 = vector.extract_strided_slice %527 {offsets = [0, 64], sizes = [2, 32], strides = [1, 1]} : vector<2x96xf32> to vector<2x32xf32>
    %546 = vector.broadcast %524 : vector<1x32xf32> to vector<2x32xf32>
    %547 = arith.addf %545, %546 : vector<2x32xf32>
    %548 = arith.mulf %535, %547 : vector<2x32xf32>
    %549 = arith.addf %544, %548 : vector<2x32xf32>
    %550 = math.tanh %549 : vector<2x32xf32>
    %cst_110 = arith.constant 1.000000e+00 : f32
    %551 = vector.broadcast %cst_110 : f32 to vector<2x32xf32>
    %552 = arith.subf %551, %543 : vector<2x32xf32>
    %553 = arith.mulf %552, %550 : vector<2x32xf32>
    %554 = arith.mulf %543, %525 : vector<2x32xf32>
    %555 = arith.addf %553, %554 : vector<2x32xf32>
    %556 = vector.extract_strided_slice %522 {offsets = [2, 0], sizes = [2, 96], strides = [1, 1]} : vector<24x96xf32> to vector<2x96xf32>
    %cst_111 = arith.constant dense<0.000000e+00> : vector<2x96xf32>
    %557 = tpu.matmul %555, %523, %cst_111 {dimension_numbers = #tpu.dot_dimension_numbers<[1], [0], [0], [1], [0, 0, 1, 1], [], []>} : vector<2x32xf32>, vector<32x96xf32>, vector<2x96xf32> -> vector<2x96xf32>
    %558 = vector.extract_strided_slice %556 {offsets = [0, 0], sizes = [2, 32], strides = [1, 1]} : vector<2x96xf32> to vector<2x32xf32>
    %559 = vector.extract_strided_slice %557 {offsets = [0, 0], sizes = [2, 32], strides = [1, 1]} : vector<2x96xf32> to vector<2x32xf32>
    %560 = arith.addf %558, %559 : vector<2x32xf32>
    %561 = arith.negf %560 : vector<2x32xf32>
    %562 = math.exp %561 : vector<2x32xf32>
    %cst_112 = arith.constant 1.000000e+00 : f32
    %563 = vector.broadcast %cst_112 : f32 to vector<2x32xf32>
    %564 = arith.addf %563, %562 : vector<2x32xf32>
    %565 = arith.divf %563, %564 : vector<2x32xf32>
    %566 = vector.extract_strided_slice %556 {offsets = [0, 32], sizes = [2, 32], strides = [1, 1]} : vector<2x96xf32> to vector<2x32xf32>
    %567 = vector.extract_strided_slice %557 {offsets = [0, 32], sizes = [2, 32], strides = [1, 1]} : vector<2x96xf32> to vector<2x32xf32>
    %568 = arith.addf %566, %567 : vector<2x32xf32>
    %569 = arith.negf %568 : vector<2x32xf32>
    %570 = math.exp %569 : vector<2x32xf32>
    %cst_113 = arith.constant 1.000000e+00 : f32
    %571 = vector.broadcast %cst_113 : f32 to vector<2x32xf32>
    %572 = arith.addf %571, %570 : vector<2x32xf32>
    %573 = arith.divf %571, %572 : vector<2x32xf32>
    %574 = vector.extract_strided_slice %556 {offsets = [0, 64], sizes = [2, 32], strides = [1, 1]} : vector<2x96xf32> to vector<2x32xf32>
    %575 = vector.extract_strided_slice %557 {offsets = [0, 64], sizes = [2, 32], strides = [1, 1]} : vector<2x96xf32> to vector<2x32xf32>
    %576 = vector.broadcast %524 : vector<1x32xf32> to vector<2x32xf32>
    %577 = arith.addf %575, %576 : vector<2x32xf32>
    %578 = arith.mulf %565, %577 : vector<2x32xf32>
    %579 = arith.addf %574, %578 : vector<2x32xf32>
    %580 = math.tanh %579 : vector<2x32xf32>
    %cst_114 = arith.constant 1.000000e+00 : f32
    %581 = vector.broadcast %cst_114 : f32 to vector<2x32xf32>
    %582 = arith.subf %581, %573 : vector<2x32xf32>
    %583 = arith.mulf %582, %580 : vector<2x32xf32>
    %584 = arith.mulf %573, %555 : vector<2x32xf32>
    %585 = arith.addf %583, %584 : vector<2x32xf32>
    %586 = vector.extract_strided_slice %522 {offsets = [4, 0], sizes = [2, 96], strides = [1, 1]} : vector<24x96xf32> to vector<2x96xf32>
    %cst_115 = arith.constant dense<0.000000e+00> : vector<2x96xf32>
    %587 = tpu.matmul %585, %523, %cst_115 {dimension_numbers = #tpu.dot_dimension_numbers<[1], [0], [0], [1], [0, 0, 1, 1], [], []>} : vector<2x32xf32>, vector<32x96xf32>, vector<2x96xf32> -> vector<2x96xf32>
    %588 = vector.extract_strided_slice %586 {offsets = [0, 0], sizes = [2, 32], strides = [1, 1]} : vector<2x96xf32> to vector<2x32xf32>
    %589 = vector.extract_strided_slice %587 {offsets = [0, 0], sizes = [2, 32], strides = [1, 1]} : vector<2x96xf32> to vector<2x32xf32>
    %590 = arith.addf %588, %589 : vector<2x32xf32>
    %591 = arith.negf %590 : vector<2x32xf32>
    %592 = math.exp %591 : vector<2x32xf32>
    %cst_116 = arith.constant 1.000000e+00 : f32
    %593 = vector.broadcast %cst_116 : f32 to vector<2x32xf32>
    %594 = arith.addf %593, %592 : vector<2x32xf32>
    %595 = arith.divf %593, %594 : vector<2x32xf32>
    %596 = vector.extract_strided_slice %586 {offsets = [0, 32], sizes = [2, 32], strides = [1, 1]} : vector<2x96xf32> to vector<2x32xf32>
    %597 = vector.extract_strided_slice %587 {offsets = [0, 32], sizes = [2, 32], strides = [1, 1]} : vector<2x96xf32> to vector<2x32xf32>
    %598 = arith.addf %596, %597 : vector<2x32xf32>
    %599 = arith.negf %598 : vector<2x32xf32>
    %600 = math.exp %599 : vector<2x32xf32>
    %cst_117 = arith.constant 1.000000e+00 : f32
    %601 = vector.broadcast %cst_117 : f32 to vector<2x32xf32>
    %602 = arith.addf %601, %600 : vector<2x32xf32>
    %603 = arith.divf %601, %602 : vector<2x32xf32>
    %604 = vector.extract_strided_slice %586 {offsets = [0, 64], sizes = [2, 32], strides = [1, 1]} : vector<2x96xf32> to vector<2x32xf32>
    %605 = vector.extract_strided_slice %587 {offsets = [0, 64], sizes = [2, 32], strides = [1, 1]} : vector<2x96xf32> to vector<2x32xf32>
    %606 = vector.broadcast %524 : vector<1x32xf32> to vector<2x32xf32>
    %607 = arith.addf %605, %606 : vector<2x32xf32>
    %608 = arith.mulf %595, %607 : vector<2x32xf32>
    %609 = arith.addf %604, %608 : vector<2x32xf32>
    %610 = math.tanh %609 : vector<2x32xf32>
    %cst_118 = arith.constant 1.000000e+00 : f32
    %611 = vector.broadcast %cst_118 : f32 to vector<2x32xf32>
    %612 = arith.subf %611, %603 : vector<2x32xf32>
    %613 = arith.mulf %612, %610 : vector<2x32xf32>
    %614 = arith.mulf %603, %585 : vector<2x32xf32>
    %615 = arith.addf %613, %614 : vector<2x32xf32>
    %616 = vector.extract_strided_slice %522 {offsets = [6, 0], sizes = [2, 96], strides = [1, 1]} : vector<24x96xf32> to vector<2x96xf32>
    %cst_119 = arith.constant dense<0.000000e+00> : vector<2x96xf32>
    %617 = tpu.matmul %615, %523, %cst_119 {dimension_numbers = #tpu.dot_dimension_numbers<[1], [0], [0], [1], [0, 0, 1, 1], [], []>} : vector<2x32xf32>, vector<32x96xf32>, vector<2x96xf32> -> vector<2x96xf32>
    %618 = vector.extract_strided_slice %616 {offsets = [0, 0], sizes = [2, 32], strides = [1, 1]} : vector<2x96xf32> to vector<2x32xf32>
    %619 = vector.extract_strided_slice %617 {offsets = [0, 0], sizes = [2, 32], strides = [1, 1]} : vector<2x96xf32> to vector<2x32xf32>
    %620 = arith.addf %618, %619 : vector<2x32xf32>
    %621 = arith.negf %620 : vector<2x32xf32>
    %622 = math.exp %621 : vector<2x32xf32>
    %cst_120 = arith.constant 1.000000e+00 : f32
    %623 = vector.broadcast %cst_120 : f32 to vector<2x32xf32>
    %624 = arith.addf %623, %622 : vector<2x32xf32>
    %625 = arith.divf %623, %624 : vector<2x32xf32>
    %626 = vector.extract_strided_slice %616 {offsets = [0, 32], sizes = [2, 32], strides = [1, 1]} : vector<2x96xf32> to vector<2x32xf32>
    %627 = vector.extract_strided_slice %617 {offsets = [0, 32], sizes = [2, 32], strides = [1, 1]} : vector<2x96xf32> to vector<2x32xf32>
    %628 = arith.addf %626, %627 : vector<2x32xf32>
    %629 = arith.negf %628 : vector<2x32xf32>
    %630 = math.exp %629 : vector<2x32xf32>
    %cst_121 = arith.constant 1.000000e+00 : f32
    %631 = vector.broadcast %cst_121 : f32 to vector<2x32xf32>
    %632 = arith.addf %631, %630 : vector<2x32xf32>
    %633 = arith.divf %631, %632 : vector<2x32xf32>
    %634 = vector.extract_strided_slice %616 {offsets = [0, 64], sizes = [2, 32], strides = [1, 1]} : vector<2x96xf32> to vector<2x32xf32>
    %635 = vector.extract_strided_slice %617 {offsets = [0, 64], sizes = [2, 32], strides = [1, 1]} : vector<2x96xf32> to vector<2x32xf32>
    %636 = vector.broadcast %524 : vector<1x32xf32> to vector<2x32xf32>
    %637 = arith.addf %635, %636 : vector<2x32xf32>
    %638 = arith.mulf %625, %637 : vector<2x32xf32>
    %639 = arith.addf %634, %638 : vector<2x32xf32>
    %640 = math.tanh %639 : vector<2x32xf32>
    %cst_122 = arith.constant 1.000000e+00 : f32
    %641 = vector.broadcast %cst_122 : f32 to vector<2x32xf32>
    %642 = arith.subf %641, %633 : vector<2x32xf32>
    %643 = arith.mulf %642, %640 : vector<2x32xf32>
    %644 = arith.mulf %633, %615 : vector<2x32xf32>
    %645 = arith.addf %643, %644 : vector<2x32xf32>
    %646 = vector.extract_strided_slice %522 {offsets = [8, 0], sizes = [2, 96], strides = [1, 1]} : vector<24x96xf32> to vector<2x96xf32>
    %cst_123 = arith.constant dense<0.000000e+00> : vector<2x96xf32>
    %647 = tpu.matmul %645, %523, %cst_123 {dimension_numbers = #tpu.dot_dimension_numbers<[1], [0], [0], [1], [0, 0, 1, 1], [], []>} : vector<2x32xf32>, vector<32x96xf32>, vector<2x96xf32> -> vector<2x96xf32>
    %648 = vector.extract_strided_slice %646 {offsets = [0, 0], sizes = [2, 32], strides = [1, 1]} : vector<2x96xf32> to vector<2x32xf32>
    %649 = vector.extract_strided_slice %647 {offsets = [0, 0], sizes = [2, 32], strides = [1, 1]} : vector<2x96xf32> to vector<2x32xf32>
    %650 = arith.addf %648, %649 : vector<2x32xf32>
    %651 = arith.negf %650 : vector<2x32xf32>
    %652 = math.exp %651 : vector<2x32xf32>
    %cst_124 = arith.constant 1.000000e+00 : f32
    %653 = vector.broadcast %cst_124 : f32 to vector<2x32xf32>
    %654 = arith.addf %653, %652 : vector<2x32xf32>
    %655 = arith.divf %653, %654 : vector<2x32xf32>
    %656 = vector.extract_strided_slice %646 {offsets = [0, 32], sizes = [2, 32], strides = [1, 1]} : vector<2x96xf32> to vector<2x32xf32>
    %657 = vector.extract_strided_slice %647 {offsets = [0, 32], sizes = [2, 32], strides = [1, 1]} : vector<2x96xf32> to vector<2x32xf32>
    %658 = arith.addf %656, %657 : vector<2x32xf32>
    %659 = arith.negf %658 : vector<2x32xf32>
    %660 = math.exp %659 : vector<2x32xf32>
    %cst_125 = arith.constant 1.000000e+00 : f32
    %661 = vector.broadcast %cst_125 : f32 to vector<2x32xf32>
    %662 = arith.addf %661, %660 : vector<2x32xf32>
    %663 = arith.divf %661, %662 : vector<2x32xf32>
    %664 = vector.extract_strided_slice %646 {offsets = [0, 64], sizes = [2, 32], strides = [1, 1]} : vector<2x96xf32> to vector<2x32xf32>
    %665 = vector.extract_strided_slice %647 {offsets = [0, 64], sizes = [2, 32], strides = [1, 1]} : vector<2x96xf32> to vector<2x32xf32>
    %666 = vector.broadcast %524 : vector<1x32xf32> to vector<2x32xf32>
    %667 = arith.addf %665, %666 : vector<2x32xf32>
    %668 = arith.mulf %655, %667 : vector<2x32xf32>
    %669 = arith.addf %664, %668 : vector<2x32xf32>
    %670 = math.tanh %669 : vector<2x32xf32>
    %cst_126 = arith.constant 1.000000e+00 : f32
    %671 = vector.broadcast %cst_126 : f32 to vector<2x32xf32>
    %672 = arith.subf %671, %663 : vector<2x32xf32>
    %673 = arith.mulf %672, %670 : vector<2x32xf32>
    %674 = arith.mulf %663, %645 : vector<2x32xf32>
    %675 = arith.addf %673, %674 : vector<2x32xf32>
    %676 = vector.extract_strided_slice %522 {offsets = [10, 0], sizes = [2, 96], strides = [1, 1]} : vector<24x96xf32> to vector<2x96xf32>
    %cst_127 = arith.constant dense<0.000000e+00> : vector<2x96xf32>
    %677 = tpu.matmul %675, %523, %cst_127 {dimension_numbers = #tpu.dot_dimension_numbers<[1], [0], [0], [1], [0, 0, 1, 1], [], []>} : vector<2x32xf32>, vector<32x96xf32>, vector<2x96xf32> -> vector<2x96xf32>
    %678 = vector.extract_strided_slice %676 {offsets = [0, 0], sizes = [2, 32], strides = [1, 1]} : vector<2x96xf32> to vector<2x32xf32>
    %679 = vector.extract_strided_slice %677 {offsets = [0, 0], sizes = [2, 32], strides = [1, 1]} : vector<2x96xf32> to vector<2x32xf32>
    %680 = arith.addf %678, %679 : vector<2x32xf32>
    %681 = arith.negf %680 : vector<2x32xf32>
    %682 = math.exp %681 : vector<2x32xf32>
    %cst_128 = arith.constant 1.000000e+00 : f32
    %683 = vector.broadcast %cst_128 : f32 to vector<2x32xf32>
    %684 = arith.addf %683, %682 : vector<2x32xf32>
    %685 = arith.divf %683, %684 : vector<2x32xf32>
    %686 = vector.extract_strided_slice %676 {offsets = [0, 32], sizes = [2, 32], strides = [1, 1]} : vector<2x96xf32> to vector<2x32xf32>
    %687 = vector.extract_strided_slice %677 {offsets = [0, 32], sizes = [2, 32], strides = [1, 1]} : vector<2x96xf32> to vector<2x32xf32>
    %688 = arith.addf %686, %687 : vector<2x32xf32>
    %689 = arith.negf %688 : vector<2x32xf32>
    %690 = math.exp %689 : vector<2x32xf32>
    %cst_129 = arith.constant 1.000000e+00 : f32
    %691 = vector.broadcast %cst_129 : f32 to vector<2x32xf32>
    %692 = arith.addf %691, %690 : vector<2x32xf32>
    %693 = arith.divf %691, %692 : vector<2x32xf32>
    %694 = vector.extract_strided_slice %676 {offsets = [0, 64], sizes = [2, 32], strides = [1, 1]} : vector<2x96xf32> to vector<2x32xf32>
    %695 = vector.extract_strided_slice %677 {offsets = [0, 64], sizes = [2, 32], strides = [1, 1]} : vector<2x96xf32> to vector<2x32xf32>
    %696 = vector.broadcast %524 : vector<1x32xf32> to vector<2x32xf32>
    %697 = arith.addf %695, %696 : vector<2x32xf32>
    %698 = arith.mulf %685, %697 : vector<2x32xf32>
    %699 = arith.addf %694, %698 : vector<2x32xf32>
    %700 = math.tanh %699 : vector<2x32xf32>
    %cst_130 = arith.constant 1.000000e+00 : f32
    %701 = vector.broadcast %cst_130 : f32 to vector<2x32xf32>
    %702 = arith.subf %701, %693 : vector<2x32xf32>
    %703 = arith.mulf %702, %700 : vector<2x32xf32>
    %704 = arith.mulf %693, %675 : vector<2x32xf32>
    %705 = arith.addf %703, %704 : vector<2x32xf32>
    %706 = vector.extract_strided_slice %522 {offsets = [12, 0], sizes = [2, 96], strides = [1, 1]} : vector<24x96xf32> to vector<2x96xf32>
    %cst_131 = arith.constant dense<0.000000e+00> : vector<2x96xf32>
    %707 = tpu.matmul %705, %523, %cst_131 {dimension_numbers = #tpu.dot_dimension_numbers<[1], [0], [0], [1], [0, 0, 1, 1], [], []>} : vector<2x32xf32>, vector<32x96xf32>, vector<2x96xf32> -> vector<2x96xf32>
    %708 = vector.extract_strided_slice %706 {offsets = [0, 0], sizes = [2, 32], strides = [1, 1]} : vector<2x96xf32> to vector<2x32xf32>
    %709 = vector.extract_strided_slice %707 {offsets = [0, 0], sizes = [2, 32], strides = [1, 1]} : vector<2x96xf32> to vector<2x32xf32>
    %710 = arith.addf %708, %709 : vector<2x32xf32>
    %711 = arith.negf %710 : vector<2x32xf32>
    %712 = math.exp %711 : vector<2x32xf32>
    %cst_132 = arith.constant 1.000000e+00 : f32
    %713 = vector.broadcast %cst_132 : f32 to vector<2x32xf32>
    %714 = arith.addf %713, %712 : vector<2x32xf32>
    %715 = arith.divf %713, %714 : vector<2x32xf32>
    %716 = vector.extract_strided_slice %706 {offsets = [0, 32], sizes = [2, 32], strides = [1, 1]} : vector<2x96xf32> to vector<2x32xf32>
    %717 = vector.extract_strided_slice %707 {offsets = [0, 32], sizes = [2, 32], strides = [1, 1]} : vector<2x96xf32> to vector<2x32xf32>
    %718 = arith.addf %716, %717 : vector<2x32xf32>
    %719 = arith.negf %718 : vector<2x32xf32>
    %720 = math.exp %719 : vector<2x32xf32>
    %cst_133 = arith.constant 1.000000e+00 : f32
    %721 = vector.broadcast %cst_133 : f32 to vector<2x32xf32>
    %722 = arith.addf %721, %720 : vector<2x32xf32>
    %723 = arith.divf %721, %722 : vector<2x32xf32>
    %724 = vector.extract_strided_slice %706 {offsets = [0, 64], sizes = [2, 32], strides = [1, 1]} : vector<2x96xf32> to vector<2x32xf32>
    %725 = vector.extract_strided_slice %707 {offsets = [0, 64], sizes = [2, 32], strides = [1, 1]} : vector<2x96xf32> to vector<2x32xf32>
    %726 = vector.broadcast %524 : vector<1x32xf32> to vector<2x32xf32>
    %727 = arith.addf %725, %726 : vector<2x32xf32>
    %728 = arith.mulf %715, %727 : vector<2x32xf32>
    %729 = arith.addf %724, %728 : vector<2x32xf32>
    %730 = math.tanh %729 : vector<2x32xf32>
    %cst_134 = arith.constant 1.000000e+00 : f32
    %731 = vector.broadcast %cst_134 : f32 to vector<2x32xf32>
    %732 = arith.subf %731, %723 : vector<2x32xf32>
    %733 = arith.mulf %732, %730 : vector<2x32xf32>
    %734 = arith.mulf %723, %705 : vector<2x32xf32>
    %735 = arith.addf %733, %734 : vector<2x32xf32>
    %736 = vector.extract_strided_slice %522 {offsets = [14, 0], sizes = [2, 96], strides = [1, 1]} : vector<24x96xf32> to vector<2x96xf32>
    %cst_135 = arith.constant dense<0.000000e+00> : vector<2x96xf32>
    %737 = tpu.matmul %735, %523, %cst_135 {dimension_numbers = #tpu.dot_dimension_numbers<[1], [0], [0], [1], [0, 0, 1, 1], [], []>} : vector<2x32xf32>, vector<32x96xf32>, vector<2x96xf32> -> vector<2x96xf32>
    %738 = vector.extract_strided_slice %736 {offsets = [0, 0], sizes = [2, 32], strides = [1, 1]} : vector<2x96xf32> to vector<2x32xf32>
    %739 = vector.extract_strided_slice %737 {offsets = [0, 0], sizes = [2, 32], strides = [1, 1]} : vector<2x96xf32> to vector<2x32xf32>
    %740 = arith.addf %738, %739 : vector<2x32xf32>
    %741 = arith.negf %740 : vector<2x32xf32>
    %742 = math.exp %741 : vector<2x32xf32>
    %cst_136 = arith.constant 1.000000e+00 : f32
    %743 = vector.broadcast %cst_136 : f32 to vector<2x32xf32>
    %744 = arith.addf %743, %742 : vector<2x32xf32>
    %745 = arith.divf %743, %744 : vector<2x32xf32>
    %746 = vector.extract_strided_slice %736 {offsets = [0, 32], sizes = [2, 32], strides = [1, 1]} : vector<2x96xf32> to vector<2x32xf32>
    %747 = vector.extract_strided_slice %737 {offsets = [0, 32], sizes = [2, 32], strides = [1, 1]} : vector<2x96xf32> to vector<2x32xf32>
    %748 = arith.addf %746, %747 : vector<2x32xf32>
    %749 = arith.negf %748 : vector<2x32xf32>
    %750 = math.exp %749 : vector<2x32xf32>
    %cst_137 = arith.constant 1.000000e+00 : f32
    %751 = vector.broadcast %cst_137 : f32 to vector<2x32xf32>
    %752 = arith.addf %751, %750 : vector<2x32xf32>
    %753 = arith.divf %751, %752 : vector<2x32xf32>
    %754 = vector.extract_strided_slice %736 {offsets = [0, 64], sizes = [2, 32], strides = [1, 1]} : vector<2x96xf32> to vector<2x32xf32>
    %755 = vector.extract_strided_slice %737 {offsets = [0, 64], sizes = [2, 32], strides = [1, 1]} : vector<2x96xf32> to vector<2x32xf32>
    %756 = vector.broadcast %524 : vector<1x32xf32> to vector<2x32xf32>
    %757 = arith.addf %755, %756 : vector<2x32xf32>
    %758 = arith.mulf %745, %757 : vector<2x32xf32>
    %759 = arith.addf %754, %758 : vector<2x32xf32>
    %760 = math.tanh %759 : vector<2x32xf32>
    %cst_138 = arith.constant 1.000000e+00 : f32
    %761 = vector.broadcast %cst_138 : f32 to vector<2x32xf32>
    %762 = arith.subf %761, %753 : vector<2x32xf32>
    %763 = arith.mulf %762, %760 : vector<2x32xf32>
    %764 = arith.mulf %753, %735 : vector<2x32xf32>
    %765 = arith.addf %763, %764 : vector<2x32xf32>
    %766 = vector.extract_strided_slice %522 {offsets = [16, 0], sizes = [2, 96], strides = [1, 1]} : vector<24x96xf32> to vector<2x96xf32>
    %cst_139 = arith.constant dense<0.000000e+00> : vector<2x96xf32>
    %767 = tpu.matmul %765, %523, %cst_139 {dimension_numbers = #tpu.dot_dimension_numbers<[1], [0], [0], [1], [0, 0, 1, 1], [], []>} : vector<2x32xf32>, vector<32x96xf32>, vector<2x96xf32> -> vector<2x96xf32>
    %768 = vector.extract_strided_slice %766 {offsets = [0, 0], sizes = [2, 32], strides = [1, 1]} : vector<2x96xf32> to vector<2x32xf32>
    %769 = vector.extract_strided_slice %767 {offsets = [0, 0], sizes = [2, 32], strides = [1, 1]} : vector<2x96xf32> to vector<2x32xf32>
    %770 = arith.addf %768, %769 : vector<2x32xf32>
    %771 = arith.negf %770 : vector<2x32xf32>
    %772 = math.exp %771 : vector<2x32xf32>
    %cst_140 = arith.constant 1.000000e+00 : f32
    %773 = vector.broadcast %cst_140 : f32 to vector<2x32xf32>
    %774 = arith.addf %773, %772 : vector<2x32xf32>
    %775 = arith.divf %773, %774 : vector<2x32xf32>
    %776 = vector.extract_strided_slice %766 {offsets = [0, 32], sizes = [2, 32], strides = [1, 1]} : vector<2x96xf32> to vector<2x32xf32>
    %777 = vector.extract_strided_slice %767 {offsets = [0, 32], sizes = [2, 32], strides = [1, 1]} : vector<2x96xf32> to vector<2x32xf32>
    %778 = arith.addf %776, %777 : vector<2x32xf32>
    %779 = arith.negf %778 : vector<2x32xf32>
    %780 = math.exp %779 : vector<2x32xf32>
    %cst_141 = arith.constant 1.000000e+00 : f32
    %781 = vector.broadcast %cst_141 : f32 to vector<2x32xf32>
    %782 = arith.addf %781, %780 : vector<2x32xf32>
    %783 = arith.divf %781, %782 : vector<2x32xf32>
    %784 = vector.extract_strided_slice %766 {offsets = [0, 64], sizes = [2, 32], strides = [1, 1]} : vector<2x96xf32> to vector<2x32xf32>
    %785 = vector.extract_strided_slice %767 {offsets = [0, 64], sizes = [2, 32], strides = [1, 1]} : vector<2x96xf32> to vector<2x32xf32>
    %786 = vector.broadcast %524 : vector<1x32xf32> to vector<2x32xf32>
    %787 = arith.addf %785, %786 : vector<2x32xf32>
    %788 = arith.mulf %775, %787 : vector<2x32xf32>
    %789 = arith.addf %784, %788 : vector<2x32xf32>
    %790 = math.tanh %789 : vector<2x32xf32>
    %cst_142 = arith.constant 1.000000e+00 : f32
    %791 = vector.broadcast %cst_142 : f32 to vector<2x32xf32>
    %792 = arith.subf %791, %783 : vector<2x32xf32>
    %793 = arith.mulf %792, %790 : vector<2x32xf32>
    %794 = arith.mulf %783, %765 : vector<2x32xf32>
    %795 = arith.addf %793, %794 : vector<2x32xf32>
    %796 = vector.extract_strided_slice %522 {offsets = [18, 0], sizes = [2, 96], strides = [1, 1]} : vector<24x96xf32> to vector<2x96xf32>
    %cst_143 = arith.constant dense<0.000000e+00> : vector<2x96xf32>
    %797 = tpu.matmul %795, %523, %cst_143 {dimension_numbers = #tpu.dot_dimension_numbers<[1], [0], [0], [1], [0, 0, 1, 1], [], []>} : vector<2x32xf32>, vector<32x96xf32>, vector<2x96xf32> -> vector<2x96xf32>
    %798 = vector.extract_strided_slice %796 {offsets = [0, 0], sizes = [2, 32], strides = [1, 1]} : vector<2x96xf32> to vector<2x32xf32>
    %799 = vector.extract_strided_slice %797 {offsets = [0, 0], sizes = [2, 32], strides = [1, 1]} : vector<2x96xf32> to vector<2x32xf32>
    %800 = arith.addf %798, %799 : vector<2x32xf32>
    %801 = arith.negf %800 : vector<2x32xf32>
    %802 = math.exp %801 : vector<2x32xf32>
    %cst_144 = arith.constant 1.000000e+00 : f32
    %803 = vector.broadcast %cst_144 : f32 to vector<2x32xf32>
    %804 = arith.addf %803, %802 : vector<2x32xf32>
    %805 = arith.divf %803, %804 : vector<2x32xf32>
    %806 = vector.extract_strided_slice %796 {offsets = [0, 32], sizes = [2, 32], strides = [1, 1]} : vector<2x96xf32> to vector<2x32xf32>
    %807 = vector.extract_strided_slice %797 {offsets = [0, 32], sizes = [2, 32], strides = [1, 1]} : vector<2x96xf32> to vector<2x32xf32>
    %808 = arith.addf %806, %807 : vector<2x32xf32>
    %809 = arith.negf %808 : vector<2x32xf32>
    %810 = math.exp %809 : vector<2x32xf32>
    %cst_145 = arith.constant 1.000000e+00 : f32
    %811 = vector.broadcast %cst_145 : f32 to vector<2x32xf32>
    %812 = arith.addf %811, %810 : vector<2x32xf32>
    %813 = arith.divf %811, %812 : vector<2x32xf32>
    %814 = vector.extract_strided_slice %796 {offsets = [0, 64], sizes = [2, 32], strides = [1, 1]} : vector<2x96xf32> to vector<2x32xf32>
    %815 = vector.extract_strided_slice %797 {offsets = [0, 64], sizes = [2, 32], strides = [1, 1]} : vector<2x96xf32> to vector<2x32xf32>
    %816 = vector.broadcast %524 : vector<1x32xf32> to vector<2x32xf32>
    %817 = arith.addf %815, %816 : vector<2x32xf32>
    %818 = arith.mulf %805, %817 : vector<2x32xf32>
    %819 = arith.addf %814, %818 : vector<2x32xf32>
    %820 = math.tanh %819 : vector<2x32xf32>
    %cst_146 = arith.constant 1.000000e+00 : f32
    %821 = vector.broadcast %cst_146 : f32 to vector<2x32xf32>
    %822 = arith.subf %821, %813 : vector<2x32xf32>
    %823 = arith.mulf %822, %820 : vector<2x32xf32>
    %824 = arith.mulf %813, %795 : vector<2x32xf32>
    %825 = arith.addf %823, %824 : vector<2x32xf32>
    %826 = vector.extract_strided_slice %522 {offsets = [20, 0], sizes = [2, 96], strides = [1, 1]} : vector<24x96xf32> to vector<2x96xf32>
    %cst_147 = arith.constant dense<0.000000e+00> : vector<2x96xf32>
    %827 = tpu.matmul %825, %523, %cst_147 {dimension_numbers = #tpu.dot_dimension_numbers<[1], [0], [0], [1], [0, 0, 1, 1], [], []>} : vector<2x32xf32>, vector<32x96xf32>, vector<2x96xf32> -> vector<2x96xf32>
    %828 = vector.extract_strided_slice %826 {offsets = [0, 0], sizes = [2, 32], strides = [1, 1]} : vector<2x96xf32> to vector<2x32xf32>
    %829 = vector.extract_strided_slice %827 {offsets = [0, 0], sizes = [2, 32], strides = [1, 1]} : vector<2x96xf32> to vector<2x32xf32>
    %830 = arith.addf %828, %829 : vector<2x32xf32>
    %831 = arith.negf %830 : vector<2x32xf32>
    %832 = math.exp %831 : vector<2x32xf32>
    %cst_148 = arith.constant 1.000000e+00 : f32
    %833 = vector.broadcast %cst_148 : f32 to vector<2x32xf32>
    %834 = arith.addf %833, %832 : vector<2x32xf32>
    %835 = arith.divf %833, %834 : vector<2x32xf32>
    %836 = vector.extract_strided_slice %826 {offsets = [0, 32], sizes = [2, 32], strides = [1, 1]} : vector<2x96xf32> to vector<2x32xf32>
    %837 = vector.extract_strided_slice %827 {offsets = [0, 32], sizes = [2, 32], strides = [1, 1]} : vector<2x96xf32> to vector<2x32xf32>
    %838 = arith.addf %836, %837 : vector<2x32xf32>
    %839 = arith.negf %838 : vector<2x32xf32>
    %840 = math.exp %839 : vector<2x32xf32>
    %cst_149 = arith.constant 1.000000e+00 : f32
    %841 = vector.broadcast %cst_149 : f32 to vector<2x32xf32>
    %842 = arith.addf %841, %840 : vector<2x32xf32>
    %843 = arith.divf %841, %842 : vector<2x32xf32>
    %844 = vector.extract_strided_slice %826 {offsets = [0, 64], sizes = [2, 32], strides = [1, 1]} : vector<2x96xf32> to vector<2x32xf32>
    %845 = vector.extract_strided_slice %827 {offsets = [0, 64], sizes = [2, 32], strides = [1, 1]} : vector<2x96xf32> to vector<2x32xf32>
    %846 = vector.broadcast %524 : vector<1x32xf32> to vector<2x32xf32>
    %847 = arith.addf %845, %846 : vector<2x32xf32>
    %848 = arith.mulf %835, %847 : vector<2x32xf32>
    %849 = arith.addf %844, %848 : vector<2x32xf32>
    %850 = math.tanh %849 : vector<2x32xf32>
    %cst_150 = arith.constant 1.000000e+00 : f32
    %851 = vector.broadcast %cst_150 : f32 to vector<2x32xf32>
    %852 = arith.subf %851, %843 : vector<2x32xf32>
    %853 = arith.mulf %852, %850 : vector<2x32xf32>
    %854 = arith.mulf %843, %825 : vector<2x32xf32>
    %855 = arith.addf %853, %854 : vector<2x32xf32>
    %856 = vector.extract_strided_slice %522 {offsets = [22, 0], sizes = [2, 96], strides = [1, 1]} : vector<24x96xf32> to vector<2x96xf32>
    %cst_151 = arith.constant dense<0.000000e+00> : vector<2x96xf32>
    %857 = tpu.matmul %855, %523, %cst_151 {dimension_numbers = #tpu.dot_dimension_numbers<[1], [0], [0], [1], [0, 0, 1, 1], [], []>} : vector<2x32xf32>, vector<32x96xf32>, vector<2x96xf32> -> vector<2x96xf32>
    %858 = vector.extract_strided_slice %856 {offsets = [0, 0], sizes = [2, 32], strides = [1, 1]} : vector<2x96xf32> to vector<2x32xf32>
    %859 = vector.extract_strided_slice %857 {offsets = [0, 0], sizes = [2, 32], strides = [1, 1]} : vector<2x96xf32> to vector<2x32xf32>
    %860 = arith.addf %858, %859 : vector<2x32xf32>
    %861 = arith.negf %860 : vector<2x32xf32>
    %862 = math.exp %861 : vector<2x32xf32>
    %cst_152 = arith.constant 1.000000e+00 : f32
    %863 = vector.broadcast %cst_152 : f32 to vector<2x32xf32>
    %864 = arith.addf %863, %862 : vector<2x32xf32>
    %865 = arith.divf %863, %864 : vector<2x32xf32>
    %866 = vector.extract_strided_slice %856 {offsets = [0, 32], sizes = [2, 32], strides = [1, 1]} : vector<2x96xf32> to vector<2x32xf32>
    %867 = vector.extract_strided_slice %857 {offsets = [0, 32], sizes = [2, 32], strides = [1, 1]} : vector<2x96xf32> to vector<2x32xf32>
    %868 = arith.addf %866, %867 : vector<2x32xf32>
    %869 = arith.negf %868 : vector<2x32xf32>
    %870 = math.exp %869 : vector<2x32xf32>
    %cst_153 = arith.constant 1.000000e+00 : f32
    %871 = vector.broadcast %cst_153 : f32 to vector<2x32xf32>
    %872 = arith.addf %871, %870 : vector<2x32xf32>
    %873 = arith.divf %871, %872 : vector<2x32xf32>
    %874 = vector.extract_strided_slice %856 {offsets = [0, 64], sizes = [2, 32], strides = [1, 1]} : vector<2x96xf32> to vector<2x32xf32>
    %875 = vector.extract_strided_slice %857 {offsets = [0, 64], sizes = [2, 32], strides = [1, 1]} : vector<2x96xf32> to vector<2x32xf32>
    %876 = vector.broadcast %524 : vector<1x32xf32> to vector<2x32xf32>
    %877 = arith.addf %875, %876 : vector<2x32xf32>
    %878 = arith.mulf %865, %877 : vector<2x32xf32>
    %879 = arith.addf %874, %878 : vector<2x32xf32>
    %880 = math.tanh %879 : vector<2x32xf32>
    %cst_154 = arith.constant 1.000000e+00 : f32
    %881 = vector.broadcast %cst_154 : f32 to vector<2x32xf32>
    %882 = arith.subf %881, %873 : vector<2x32xf32>
    %883 = arith.mulf %882, %880 : vector<2x32xf32>
    %884 = arith.mulf %873, %855 : vector<2x32xf32>
    %885 = arith.addf %883, %884 : vector<2x32xf32>
    %886 = tpu.concatenate %555, %585, %615, %645, %675, %705, %735, %765, %795, %825, %855, %885 in 0 : vector<2x32xf32>, vector<2x32xf32>, vector<2x32xf32>, vector<2x32xf32>, vector<2x32xf32>, vector<2x32xf32>, vector<2x32xf32>, vector<2x32xf32>, vector<2x32xf32>, vector<2x32xf32>, vector<2x32xf32>, vector<2x32xf32> -> vector<24x32xf32>
    %c0_155 = arith.constant 0 : index
    %c0_156 = arith.constant 0 : index
    %887 = vector.load %arg18[%c0_155, %c0_156] : memref<32x96xf32, #tpu.memory_space<vmem>>, vector<32x96xf32>
    %cst_157 = arith.constant dense<0.000000e+00> : vector<24x96xf32>
    %888 = tpu.matmul %886, %887, %cst_157 {dimension_numbers = #tpu.dot_dimension_numbers<[1], [0], [0], [1], [0, 0, 1, 1], [], []>} : vector<24x32xf32>, vector<32x96xf32>, vector<24x96xf32> -> vector<24x96xf32>
    %c0_158 = arith.constant 0 : index
    %c0_159 = arith.constant 0 : index
    %889 = vector.load %arg20[%c0_158, %c0_159] : memref<1x96xf32, #tpu.memory_space<vmem>>, vector<1x96xf32>
    %890 = vector.broadcast %889 : vector<1x96xf32> to vector<24x96xf32>
    %891 = arith.addf %888, %890 : vector<24x96xf32>
    %c0_160 = arith.constant 0 : index
    %c0_161 = arith.constant 0 : index
    %892 = vector.load %arg19[%c0_160, %c0_161] : memref<32x96xf32, #tpu.memory_space<vmem>>, vector<32x96xf32>
    %c0_162 = arith.constant 0 : index
    %c0_163 = arith.constant 0 : index
    %893 = vector.load %arg21[%c0_162, %c0_163] : memref<1x32xf32, #tpu.memory_space<vmem>>, vector<1x32xf32>
    %cst_164 = arith.constant 0.000000e+00 : f32
    %894 = vector.broadcast %cst_164 : f32 to vector<2x32xf32>
    %895 = vector.extract_strided_slice %891 {offsets = [0, 0], sizes = [2, 96], strides = [1, 1]} : vector<24x96xf32> to vector<2x96xf32>
    %cst_165 = arith.constant dense<0.000000e+00> : vector<2x96xf32>
    %896 = tpu.matmul %894, %892, %cst_165 {dimension_numbers = #tpu.dot_dimension_numbers<[1], [0], [0], [1], [0, 0, 1, 1], [], []>} : vector<2x32xf32>, vector<32x96xf32>, vector<2x96xf32> -> vector<2x96xf32>
    %897 = vector.extract_strided_slice %895 {offsets = [0, 0], sizes = [2, 32], strides = [1, 1]} : vector<2x96xf32> to vector<2x32xf32>
    %898 = vector.extract_strided_slice %896 {offsets = [0, 0], sizes = [2, 32], strides = [1, 1]} : vector<2x96xf32> to vector<2x32xf32>
    %899 = arith.addf %897, %898 : vector<2x32xf32>
    %900 = arith.negf %899 : vector<2x32xf32>
    %901 = math.exp %900 : vector<2x32xf32>
    %cst_166 = arith.constant 1.000000e+00 : f32
    %902 = vector.broadcast %cst_166 : f32 to vector<2x32xf32>
    %903 = arith.addf %902, %901 : vector<2x32xf32>
    %904 = arith.divf %902, %903 : vector<2x32xf32>
    %905 = vector.extract_strided_slice %895 {offsets = [0, 32], sizes = [2, 32], strides = [1, 1]} : vector<2x96xf32> to vector<2x32xf32>
    %906 = vector.extract_strided_slice %896 {offsets = [0, 32], sizes = [2, 32], strides = [1, 1]} : vector<2x96xf32> to vector<2x32xf32>
    %907 = arith.addf %905, %906 : vector<2x32xf32>
    %908 = arith.negf %907 : vector<2x32xf32>
    %909 = math.exp %908 : vector<2x32xf32>
    %cst_167 = arith.constant 1.000000e+00 : f32
    %910 = vector.broadcast %cst_167 : f32 to vector<2x32xf32>
    %911 = arith.addf %910, %909 : vector<2x32xf32>
    %912 = arith.divf %910, %911 : vector<2x32xf32>
    %913 = vector.extract_strided_slice %895 {offsets = [0, 64], sizes = [2, 32], strides = [1, 1]} : vector<2x96xf32> to vector<2x32xf32>
    %914 = vector.extract_strided_slice %896 {offsets = [0, 64], sizes = [2, 32], strides = [1, 1]} : vector<2x96xf32> to vector<2x32xf32>
    %915 = vector.broadcast %893 : vector<1x32xf32> to vector<2x32xf32>
    %916 = arith.addf %914, %915 : vector<2x32xf32>
    %917 = arith.mulf %904, %916 : vector<2x32xf32>
    %918 = arith.addf %913, %917 : vector<2x32xf32>
    %919 = math.tanh %918 : vector<2x32xf32>
    %cst_168 = arith.constant 1.000000e+00 : f32
    %920 = vector.broadcast %cst_168 : f32 to vector<2x32xf32>
    %921 = arith.subf %920, %912 : vector<2x32xf32>
    %922 = arith.mulf %921, %919 : vector<2x32xf32>
    %923 = arith.mulf %912, %894 : vector<2x32xf32>
    %924 = arith.addf %922, %923 : vector<2x32xf32>
    %925 = vector.extract_strided_slice %891 {offsets = [2, 0], sizes = [2, 96], strides = [1, 1]} : vector<24x96xf32> to vector<2x96xf32>
    %cst_169 = arith.constant dense<0.000000e+00> : vector<2x96xf32>
    %926 = tpu.matmul %924, %892, %cst_169 {dimension_numbers = #tpu.dot_dimension_numbers<[1], [0], [0], [1], [0, 0, 1, 1], [], []>} : vector<2x32xf32>, vector<32x96xf32>, vector<2x96xf32> -> vector<2x96xf32>
    %927 = vector.extract_strided_slice %925 {offsets = [0, 0], sizes = [2, 32], strides = [1, 1]} : vector<2x96xf32> to vector<2x32xf32>
    %928 = vector.extract_strided_slice %926 {offsets = [0, 0], sizes = [2, 32], strides = [1, 1]} : vector<2x96xf32> to vector<2x32xf32>
    %929 = arith.addf %927, %928 : vector<2x32xf32>
    %930 = arith.negf %929 : vector<2x32xf32>
    %931 = math.exp %930 : vector<2x32xf32>
    %cst_170 = arith.constant 1.000000e+00 : f32
    %932 = vector.broadcast %cst_170 : f32 to vector<2x32xf32>
    %933 = arith.addf %932, %931 : vector<2x32xf32>
    %934 = arith.divf %932, %933 : vector<2x32xf32>
    %935 = vector.extract_strided_slice %925 {offsets = [0, 32], sizes = [2, 32], strides = [1, 1]} : vector<2x96xf32> to vector<2x32xf32>
    %936 = vector.extract_strided_slice %926 {offsets = [0, 32], sizes = [2, 32], strides = [1, 1]} : vector<2x96xf32> to vector<2x32xf32>
    %937 = arith.addf %935, %936 : vector<2x32xf32>
    %938 = arith.negf %937 : vector<2x32xf32>
    %939 = math.exp %938 : vector<2x32xf32>
    %cst_171 = arith.constant 1.000000e+00 : f32
    %940 = vector.broadcast %cst_171 : f32 to vector<2x32xf32>
    %941 = arith.addf %940, %939 : vector<2x32xf32>
    %942 = arith.divf %940, %941 : vector<2x32xf32>
    %943 = vector.extract_strided_slice %925 {offsets = [0, 64], sizes = [2, 32], strides = [1, 1]} : vector<2x96xf32> to vector<2x32xf32>
    %944 = vector.extract_strided_slice %926 {offsets = [0, 64], sizes = [2, 32], strides = [1, 1]} : vector<2x96xf32> to vector<2x32xf32>
    %945 = vector.broadcast %893 : vector<1x32xf32> to vector<2x32xf32>
    %946 = arith.addf %944, %945 : vector<2x32xf32>
    %947 = arith.mulf %934, %946 : vector<2x32xf32>
    %948 = arith.addf %943, %947 : vector<2x32xf32>
    %949 = math.tanh %948 : vector<2x32xf32>
    %cst_172 = arith.constant 1.000000e+00 : f32
    %950 = vector.broadcast %cst_172 : f32 to vector<2x32xf32>
    %951 = arith.subf %950, %942 : vector<2x32xf32>
    %952 = arith.mulf %951, %949 : vector<2x32xf32>
    %953 = arith.mulf %942, %924 : vector<2x32xf32>
    %954 = arith.addf %952, %953 : vector<2x32xf32>
    %955 = vector.extract_strided_slice %891 {offsets = [4, 0], sizes = [2, 96], strides = [1, 1]} : vector<24x96xf32> to vector<2x96xf32>
    %cst_173 = arith.constant dense<0.000000e+00> : vector<2x96xf32>
    %956 = tpu.matmul %954, %892, %cst_173 {dimension_numbers = #tpu.dot_dimension_numbers<[1], [0], [0], [1], [0, 0, 1, 1], [], []>} : vector<2x32xf32>, vector<32x96xf32>, vector<2x96xf32> -> vector<2x96xf32>
    %957 = vector.extract_strided_slice %955 {offsets = [0, 0], sizes = [2, 32], strides = [1, 1]} : vector<2x96xf32> to vector<2x32xf32>
    %958 = vector.extract_strided_slice %956 {offsets = [0, 0], sizes = [2, 32], strides = [1, 1]} : vector<2x96xf32> to vector<2x32xf32>
    %959 = arith.addf %957, %958 : vector<2x32xf32>
    %960 = arith.negf %959 : vector<2x32xf32>
    %961 = math.exp %960 : vector<2x32xf32>
    %cst_174 = arith.constant 1.000000e+00 : f32
    %962 = vector.broadcast %cst_174 : f32 to vector<2x32xf32>
    %963 = arith.addf %962, %961 : vector<2x32xf32>
    %964 = arith.divf %962, %963 : vector<2x32xf32>
    %965 = vector.extract_strided_slice %955 {offsets = [0, 32], sizes = [2, 32], strides = [1, 1]} : vector<2x96xf32> to vector<2x32xf32>
    %966 = vector.extract_strided_slice %956 {offsets = [0, 32], sizes = [2, 32], strides = [1, 1]} : vector<2x96xf32> to vector<2x32xf32>
    %967 = arith.addf %965, %966 : vector<2x32xf32>
    %968 = arith.negf %967 : vector<2x32xf32>
    %969 = math.exp %968 : vector<2x32xf32>
    %cst_175 = arith.constant 1.000000e+00 : f32
    %970 = vector.broadcast %cst_175 : f32 to vector<2x32xf32>
    %971 = arith.addf %970, %969 : vector<2x32xf32>
    %972 = arith.divf %970, %971 : vector<2x32xf32>
    %973 = vector.extract_strided_slice %955 {offsets = [0, 64], sizes = [2, 32], strides = [1, 1]} : vector<2x96xf32> to vector<2x32xf32>
    %974 = vector.extract_strided_slice %956 {offsets = [0, 64], sizes = [2, 32], strides = [1, 1]} : vector<2x96xf32> to vector<2x32xf32>
    %975 = vector.broadcast %893 : vector<1x32xf32> to vector<2x32xf32>
    %976 = arith.addf %974, %975 : vector<2x32xf32>
    %977 = arith.mulf %964, %976 : vector<2x32xf32>
    %978 = arith.addf %973, %977 : vector<2x32xf32>
    %979 = math.tanh %978 : vector<2x32xf32>
    %cst_176 = arith.constant 1.000000e+00 : f32
    %980 = vector.broadcast %cst_176 : f32 to vector<2x32xf32>
    %981 = arith.subf %980, %972 : vector<2x32xf32>
    %982 = arith.mulf %981, %979 : vector<2x32xf32>
    %983 = arith.mulf %972, %954 : vector<2x32xf32>
    %984 = arith.addf %982, %983 : vector<2x32xf32>
    %985 = vector.extract_strided_slice %891 {offsets = [6, 0], sizes = [2, 96], strides = [1, 1]} : vector<24x96xf32> to vector<2x96xf32>
    %cst_177 = arith.constant dense<0.000000e+00> : vector<2x96xf32>
    %986 = tpu.matmul %984, %892, %cst_177 {dimension_numbers = #tpu.dot_dimension_numbers<[1], [0], [0], [1], [0, 0, 1, 1], [], []>} : vector<2x32xf32>, vector<32x96xf32>, vector<2x96xf32> -> vector<2x96xf32>
    %987 = vector.extract_strided_slice %985 {offsets = [0, 0], sizes = [2, 32], strides = [1, 1]} : vector<2x96xf32> to vector<2x32xf32>
    %988 = vector.extract_strided_slice %986 {offsets = [0, 0], sizes = [2, 32], strides = [1, 1]} : vector<2x96xf32> to vector<2x32xf32>
    %989 = arith.addf %987, %988 : vector<2x32xf32>
    %990 = arith.negf %989 : vector<2x32xf32>
    %991 = math.exp %990 : vector<2x32xf32>
    %cst_178 = arith.constant 1.000000e+00 : f32
    %992 = vector.broadcast %cst_178 : f32 to vector<2x32xf32>
    %993 = arith.addf %992, %991 : vector<2x32xf32>
    %994 = arith.divf %992, %993 : vector<2x32xf32>
    %995 = vector.extract_strided_slice %985 {offsets = [0, 32], sizes = [2, 32], strides = [1, 1]} : vector<2x96xf32> to vector<2x32xf32>
    %996 = vector.extract_strided_slice %986 {offsets = [0, 32], sizes = [2, 32], strides = [1, 1]} : vector<2x96xf32> to vector<2x32xf32>
    %997 = arith.addf %995, %996 : vector<2x32xf32>
    %998 = arith.negf %997 : vector<2x32xf32>
    %999 = math.exp %998 : vector<2x32xf32>
    %cst_179 = arith.constant 1.000000e+00 : f32
    %1000 = vector.broadcast %cst_179 : f32 to vector<2x32xf32>
    %1001 = arith.addf %1000, %999 : vector<2x32xf32>
    %1002 = arith.divf %1000, %1001 : vector<2x32xf32>
    %1003 = vector.extract_strided_slice %985 {offsets = [0, 64], sizes = [2, 32], strides = [1, 1]} : vector<2x96xf32> to vector<2x32xf32>
    %1004 = vector.extract_strided_slice %986 {offsets = [0, 64], sizes = [2, 32], strides = [1, 1]} : vector<2x96xf32> to vector<2x32xf32>
    %1005 = vector.broadcast %893 : vector<1x32xf32> to vector<2x32xf32>
    %1006 = arith.addf %1004, %1005 : vector<2x32xf32>
    %1007 = arith.mulf %994, %1006 : vector<2x32xf32>
    %1008 = arith.addf %1003, %1007 : vector<2x32xf32>
    %1009 = math.tanh %1008 : vector<2x32xf32>
    %cst_180 = arith.constant 1.000000e+00 : f32
    %1010 = vector.broadcast %cst_180 : f32 to vector<2x32xf32>
    %1011 = arith.subf %1010, %1002 : vector<2x32xf32>
    %1012 = arith.mulf %1011, %1009 : vector<2x32xf32>
    %1013 = arith.mulf %1002, %984 : vector<2x32xf32>
    %1014 = arith.addf %1012, %1013 : vector<2x32xf32>
    %1015 = vector.extract_strided_slice %891 {offsets = [8, 0], sizes = [2, 96], strides = [1, 1]} : vector<24x96xf32> to vector<2x96xf32>
    %cst_181 = arith.constant dense<0.000000e+00> : vector<2x96xf32>
    %1016 = tpu.matmul %1014, %892, %cst_181 {dimension_numbers = #tpu.dot_dimension_numbers<[1], [0], [0], [1], [0, 0, 1, 1], [], []>} : vector<2x32xf32>, vector<32x96xf32>, vector<2x96xf32> -> vector<2x96xf32>
    %1017 = vector.extract_strided_slice %1015 {offsets = [0, 0], sizes = [2, 32], strides = [1, 1]} : vector<2x96xf32> to vector<2x32xf32>
    %1018 = vector.extract_strided_slice %1016 {offsets = [0, 0], sizes = [2, 32], strides = [1, 1]} : vector<2x96xf32> to vector<2x32xf32>
    %1019 = arith.addf %1017, %1018 : vector<2x32xf32>
    %1020 = arith.negf %1019 : vector<2x32xf32>
    %1021 = math.exp %1020 : vector<2x32xf32>
    %cst_182 = arith.constant 1.000000e+00 : f32
    %1022 = vector.broadcast %cst_182 : f32 to vector<2x32xf32>
    %1023 = arith.addf %1022, %1021 : vector<2x32xf32>
    %1024 = arith.divf %1022, %1023 : vector<2x32xf32>
    %1025 = vector.extract_strided_slice %1015 {offsets = [0, 32], sizes = [2, 32], strides = [1, 1]} : vector<2x96xf32> to vector<2x32xf32>
    %1026 = vector.extract_strided_slice %1016 {offsets = [0, 32], sizes = [2, 32], strides = [1, 1]} : vector<2x96xf32> to vector<2x32xf32>
    %1027 = arith.addf %1025, %1026 : vector<2x32xf32>
    %1028 = arith.negf %1027 : vector<2x32xf32>
    %1029 = math.exp %1028 : vector<2x32xf32>
    %cst_183 = arith.constant 1.000000e+00 : f32
    %1030 = vector.broadcast %cst_183 : f32 to vector<2x32xf32>
    %1031 = arith.addf %1030, %1029 : vector<2x32xf32>
    %1032 = arith.divf %1030, %1031 : vector<2x32xf32>
    %1033 = vector.extract_strided_slice %1015 {offsets = [0, 64], sizes = [2, 32], strides = [1, 1]} : vector<2x96xf32> to vector<2x32xf32>
    %1034 = vector.extract_strided_slice %1016 {offsets = [0, 64], sizes = [2, 32], strides = [1, 1]} : vector<2x96xf32> to vector<2x32xf32>
    %1035 = vector.broadcast %893 : vector<1x32xf32> to vector<2x32xf32>
    %1036 = arith.addf %1034, %1035 : vector<2x32xf32>
    %1037 = arith.mulf %1024, %1036 : vector<2x32xf32>
    %1038 = arith.addf %1033, %1037 : vector<2x32xf32>
    %1039 = math.tanh %1038 : vector<2x32xf32>
    %cst_184 = arith.constant 1.000000e+00 : f32
    %1040 = vector.broadcast %cst_184 : f32 to vector<2x32xf32>
    %1041 = arith.subf %1040, %1032 : vector<2x32xf32>
    %1042 = arith.mulf %1041, %1039 : vector<2x32xf32>
    %1043 = arith.mulf %1032, %1014 : vector<2x32xf32>
    %1044 = arith.addf %1042, %1043 : vector<2x32xf32>
    %1045 = vector.extract_strided_slice %891 {offsets = [10, 0], sizes = [2, 96], strides = [1, 1]} : vector<24x96xf32> to vector<2x96xf32>
    %cst_185 = arith.constant dense<0.000000e+00> : vector<2x96xf32>
    %1046 = tpu.matmul %1044, %892, %cst_185 {dimension_numbers = #tpu.dot_dimension_numbers<[1], [0], [0], [1], [0, 0, 1, 1], [], []>} : vector<2x32xf32>, vector<32x96xf32>, vector<2x96xf32> -> vector<2x96xf32>
    %1047 = vector.extract_strided_slice %1045 {offsets = [0, 0], sizes = [2, 32], strides = [1, 1]} : vector<2x96xf32> to vector<2x32xf32>
    %1048 = vector.extract_strided_slice %1046 {offsets = [0, 0], sizes = [2, 32], strides = [1, 1]} : vector<2x96xf32> to vector<2x32xf32>
    %1049 = arith.addf %1047, %1048 : vector<2x32xf32>
    %1050 = arith.negf %1049 : vector<2x32xf32>
    %1051 = math.exp %1050 : vector<2x32xf32>
    %cst_186 = arith.constant 1.000000e+00 : f32
    %1052 = vector.broadcast %cst_186 : f32 to vector<2x32xf32>
    %1053 = arith.addf %1052, %1051 : vector<2x32xf32>
    %1054 = arith.divf %1052, %1053 : vector<2x32xf32>
    %1055 = vector.extract_strided_slice %1045 {offsets = [0, 32], sizes = [2, 32], strides = [1, 1]} : vector<2x96xf32> to vector<2x32xf32>
    %1056 = vector.extract_strided_slice %1046 {offsets = [0, 32], sizes = [2, 32], strides = [1, 1]} : vector<2x96xf32> to vector<2x32xf32>
    %1057 = arith.addf %1055, %1056 : vector<2x32xf32>
    %1058 = arith.negf %1057 : vector<2x32xf32>
    %1059 = math.exp %1058 : vector<2x32xf32>
    %cst_187 = arith.constant 1.000000e+00 : f32
    %1060 = vector.broadcast %cst_187 : f32 to vector<2x32xf32>
    %1061 = arith.addf %1060, %1059 : vector<2x32xf32>
    %1062 = arith.divf %1060, %1061 : vector<2x32xf32>
    %1063 = vector.extract_strided_slice %1045 {offsets = [0, 64], sizes = [2, 32], strides = [1, 1]} : vector<2x96xf32> to vector<2x32xf32>
    %1064 = vector.extract_strided_slice %1046 {offsets = [0, 64], sizes = [2, 32], strides = [1, 1]} : vector<2x96xf32> to vector<2x32xf32>
    %1065 = vector.broadcast %893 : vector<1x32xf32> to vector<2x32xf32>
    %1066 = arith.addf %1064, %1065 : vector<2x32xf32>
    %1067 = arith.mulf %1054, %1066 : vector<2x32xf32>
    %1068 = arith.addf %1063, %1067 : vector<2x32xf32>
    %1069 = math.tanh %1068 : vector<2x32xf32>
    %cst_188 = arith.constant 1.000000e+00 : f32
    %1070 = vector.broadcast %cst_188 : f32 to vector<2x32xf32>
    %1071 = arith.subf %1070, %1062 : vector<2x32xf32>
    %1072 = arith.mulf %1071, %1069 : vector<2x32xf32>
    %1073 = arith.mulf %1062, %1044 : vector<2x32xf32>
    %1074 = arith.addf %1072, %1073 : vector<2x32xf32>
    %1075 = vector.extract_strided_slice %891 {offsets = [12, 0], sizes = [2, 96], strides = [1, 1]} : vector<24x96xf32> to vector<2x96xf32>
    %cst_189 = arith.constant dense<0.000000e+00> : vector<2x96xf32>
    %1076 = tpu.matmul %1074, %892, %cst_189 {dimension_numbers = #tpu.dot_dimension_numbers<[1], [0], [0], [1], [0, 0, 1, 1], [], []>} : vector<2x32xf32>, vector<32x96xf32>, vector<2x96xf32> -> vector<2x96xf32>
    %1077 = vector.extract_strided_slice %1075 {offsets = [0, 0], sizes = [2, 32], strides = [1, 1]} : vector<2x96xf32> to vector<2x32xf32>
    %1078 = vector.extract_strided_slice %1076 {offsets = [0, 0], sizes = [2, 32], strides = [1, 1]} : vector<2x96xf32> to vector<2x32xf32>
    %1079 = arith.addf %1077, %1078 : vector<2x32xf32>
    %1080 = arith.negf %1079 : vector<2x32xf32>
    %1081 = math.exp %1080 : vector<2x32xf32>
    %cst_190 = arith.constant 1.000000e+00 : f32
    %1082 = vector.broadcast %cst_190 : f32 to vector<2x32xf32>
    %1083 = arith.addf %1082, %1081 : vector<2x32xf32>
    %1084 = arith.divf %1082, %1083 : vector<2x32xf32>
    %1085 = vector.extract_strided_slice %1075 {offsets = [0, 32], sizes = [2, 32], strides = [1, 1]} : vector<2x96xf32> to vector<2x32xf32>
    %1086 = vector.extract_strided_slice %1076 {offsets = [0, 32], sizes = [2, 32], strides = [1, 1]} : vector<2x96xf32> to vector<2x32xf32>
    %1087 = arith.addf %1085, %1086 : vector<2x32xf32>
    %1088 = arith.negf %1087 : vector<2x32xf32>
    %1089 = math.exp %1088 : vector<2x32xf32>
    %cst_191 = arith.constant 1.000000e+00 : f32
    %1090 = vector.broadcast %cst_191 : f32 to vector<2x32xf32>
    %1091 = arith.addf %1090, %1089 : vector<2x32xf32>
    %1092 = arith.divf %1090, %1091 : vector<2x32xf32>
    %1093 = vector.extract_strided_slice %1075 {offsets = [0, 64], sizes = [2, 32], strides = [1, 1]} : vector<2x96xf32> to vector<2x32xf32>
    %1094 = vector.extract_strided_slice %1076 {offsets = [0, 64], sizes = [2, 32], strides = [1, 1]} : vector<2x96xf32> to vector<2x32xf32>
    %1095 = vector.broadcast %893 : vector<1x32xf32> to vector<2x32xf32>
    %1096 = arith.addf %1094, %1095 : vector<2x32xf32>
    %1097 = arith.mulf %1084, %1096 : vector<2x32xf32>
    %1098 = arith.addf %1093, %1097 : vector<2x32xf32>
    %1099 = math.tanh %1098 : vector<2x32xf32>
    %cst_192 = arith.constant 1.000000e+00 : f32
    %1100 = vector.broadcast %cst_192 : f32 to vector<2x32xf32>
    %1101 = arith.subf %1100, %1092 : vector<2x32xf32>
    %1102 = arith.mulf %1101, %1099 : vector<2x32xf32>
    %1103 = arith.mulf %1092, %1074 : vector<2x32xf32>
    %1104 = arith.addf %1102, %1103 : vector<2x32xf32>
    %1105 = vector.extract_strided_slice %891 {offsets = [14, 0], sizes = [2, 96], strides = [1, 1]} : vector<24x96xf32> to vector<2x96xf32>
    %cst_193 = arith.constant dense<0.000000e+00> : vector<2x96xf32>
    %1106 = tpu.matmul %1104, %892, %cst_193 {dimension_numbers = #tpu.dot_dimension_numbers<[1], [0], [0], [1], [0, 0, 1, 1], [], []>} : vector<2x32xf32>, vector<32x96xf32>, vector<2x96xf32> -> vector<2x96xf32>
    %1107 = vector.extract_strided_slice %1105 {offsets = [0, 0], sizes = [2, 32], strides = [1, 1]} : vector<2x96xf32> to vector<2x32xf32>
    %1108 = vector.extract_strided_slice %1106 {offsets = [0, 0], sizes = [2, 32], strides = [1, 1]} : vector<2x96xf32> to vector<2x32xf32>
    %1109 = arith.addf %1107, %1108 : vector<2x32xf32>
    %1110 = arith.negf %1109 : vector<2x32xf32>
    %1111 = math.exp %1110 : vector<2x32xf32>
    %cst_194 = arith.constant 1.000000e+00 : f32
    %1112 = vector.broadcast %cst_194 : f32 to vector<2x32xf32>
    %1113 = arith.addf %1112, %1111 : vector<2x32xf32>
    %1114 = arith.divf %1112, %1113 : vector<2x32xf32>
    %1115 = vector.extract_strided_slice %1105 {offsets = [0, 32], sizes = [2, 32], strides = [1, 1]} : vector<2x96xf32> to vector<2x32xf32>
    %1116 = vector.extract_strided_slice %1106 {offsets = [0, 32], sizes = [2, 32], strides = [1, 1]} : vector<2x96xf32> to vector<2x32xf32>
    %1117 = arith.addf %1115, %1116 : vector<2x32xf32>
    %1118 = arith.negf %1117 : vector<2x32xf32>
    %1119 = math.exp %1118 : vector<2x32xf32>
    %cst_195 = arith.constant 1.000000e+00 : f32
    %1120 = vector.broadcast %cst_195 : f32 to vector<2x32xf32>
    %1121 = arith.addf %1120, %1119 : vector<2x32xf32>
    %1122 = arith.divf %1120, %1121 : vector<2x32xf32>
    %1123 = vector.extract_strided_slice %1105 {offsets = [0, 64], sizes = [2, 32], strides = [1, 1]} : vector<2x96xf32> to vector<2x32xf32>
    %1124 = vector.extract_strided_slice %1106 {offsets = [0, 64], sizes = [2, 32], strides = [1, 1]} : vector<2x96xf32> to vector<2x32xf32>
    %1125 = vector.broadcast %893 : vector<1x32xf32> to vector<2x32xf32>
    %1126 = arith.addf %1124, %1125 : vector<2x32xf32>
    %1127 = arith.mulf %1114, %1126 : vector<2x32xf32>
    %1128 = arith.addf %1123, %1127 : vector<2x32xf32>
    %1129 = math.tanh %1128 : vector<2x32xf32>
    %cst_196 = arith.constant 1.000000e+00 : f32
    %1130 = vector.broadcast %cst_196 : f32 to vector<2x32xf32>
    %1131 = arith.subf %1130, %1122 : vector<2x32xf32>
    %1132 = arith.mulf %1131, %1129 : vector<2x32xf32>
    %1133 = arith.mulf %1122, %1104 : vector<2x32xf32>
    %1134 = arith.addf %1132, %1133 : vector<2x32xf32>
    %1135 = vector.extract_strided_slice %891 {offsets = [16, 0], sizes = [2, 96], strides = [1, 1]} : vector<24x96xf32> to vector<2x96xf32>
    %cst_197 = arith.constant dense<0.000000e+00> : vector<2x96xf32>
    %1136 = tpu.matmul %1134, %892, %cst_197 {dimension_numbers = #tpu.dot_dimension_numbers<[1], [0], [0], [1], [0, 0, 1, 1], [], []>} : vector<2x32xf32>, vector<32x96xf32>, vector<2x96xf32> -> vector<2x96xf32>
    %1137 = vector.extract_strided_slice %1135 {offsets = [0, 0], sizes = [2, 32], strides = [1, 1]} : vector<2x96xf32> to vector<2x32xf32>
    %1138 = vector.extract_strided_slice %1136 {offsets = [0, 0], sizes = [2, 32], strides = [1, 1]} : vector<2x96xf32> to vector<2x32xf32>
    %1139 = arith.addf %1137, %1138 : vector<2x32xf32>
    %1140 = arith.negf %1139 : vector<2x32xf32>
    %1141 = math.exp %1140 : vector<2x32xf32>
    %cst_198 = arith.constant 1.000000e+00 : f32
    %1142 = vector.broadcast %cst_198 : f32 to vector<2x32xf32>
    %1143 = arith.addf %1142, %1141 : vector<2x32xf32>
    %1144 = arith.divf %1142, %1143 : vector<2x32xf32>
    %1145 = vector.extract_strided_slice %1135 {offsets = [0, 32], sizes = [2, 32], strides = [1, 1]} : vector<2x96xf32> to vector<2x32xf32>
    %1146 = vector.extract_strided_slice %1136 {offsets = [0, 32], sizes = [2, 32], strides = [1, 1]} : vector<2x96xf32> to vector<2x32xf32>
    %1147 = arith.addf %1145, %1146 : vector<2x32xf32>
    %1148 = arith.negf %1147 : vector<2x32xf32>
    %1149 = math.exp %1148 : vector<2x32xf32>
    %cst_199 = arith.constant 1.000000e+00 : f32
    %1150 = vector.broadcast %cst_199 : f32 to vector<2x32xf32>
    %1151 = arith.addf %1150, %1149 : vector<2x32xf32>
    %1152 = arith.divf %1150, %1151 : vector<2x32xf32>
    %1153 = vector.extract_strided_slice %1135 {offsets = [0, 64], sizes = [2, 32], strides = [1, 1]} : vector<2x96xf32> to vector<2x32xf32>
    %1154 = vector.extract_strided_slice %1136 {offsets = [0, 64], sizes = [2, 32], strides = [1, 1]} : vector<2x96xf32> to vector<2x32xf32>
    %1155 = vector.broadcast %893 : vector<1x32xf32> to vector<2x32xf32>
    %1156 = arith.addf %1154, %1155 : vector<2x32xf32>
    %1157 = arith.mulf %1144, %1156 : vector<2x32xf32>
    %1158 = arith.addf %1153, %1157 : vector<2x32xf32>
    %1159 = math.tanh %1158 : vector<2x32xf32>
    %cst_200 = arith.constant 1.000000e+00 : f32
    %1160 = vector.broadcast %cst_200 : f32 to vector<2x32xf32>
    %1161 = arith.subf %1160, %1152 : vector<2x32xf32>
    %1162 = arith.mulf %1161, %1159 : vector<2x32xf32>
    %1163 = arith.mulf %1152, %1134 : vector<2x32xf32>
    %1164 = arith.addf %1162, %1163 : vector<2x32xf32>
    %1165 = vector.extract_strided_slice %891 {offsets = [18, 0], sizes = [2, 96], strides = [1, 1]} : vector<24x96xf32> to vector<2x96xf32>
    %cst_201 = arith.constant dense<0.000000e+00> : vector<2x96xf32>
    %1166 = tpu.matmul %1164, %892, %cst_201 {dimension_numbers = #tpu.dot_dimension_numbers<[1], [0], [0], [1], [0, 0, 1, 1], [], []>} : vector<2x32xf32>, vector<32x96xf32>, vector<2x96xf32> -> vector<2x96xf32>
    %1167 = vector.extract_strided_slice %1165 {offsets = [0, 0], sizes = [2, 32], strides = [1, 1]} : vector<2x96xf32> to vector<2x32xf32>
    %1168 = vector.extract_strided_slice %1166 {offsets = [0, 0], sizes = [2, 32], strides = [1, 1]} : vector<2x96xf32> to vector<2x32xf32>
    %1169 = arith.addf %1167, %1168 : vector<2x32xf32>
    %1170 = arith.negf %1169 : vector<2x32xf32>
    %1171 = math.exp %1170 : vector<2x32xf32>
    %cst_202 = arith.constant 1.000000e+00 : f32
    %1172 = vector.broadcast %cst_202 : f32 to vector<2x32xf32>
    %1173 = arith.addf %1172, %1171 : vector<2x32xf32>
    %1174 = arith.divf %1172, %1173 : vector<2x32xf32>
    %1175 = vector.extract_strided_slice %1165 {offsets = [0, 32], sizes = [2, 32], strides = [1, 1]} : vector<2x96xf32> to vector<2x32xf32>
    %1176 = vector.extract_strided_slice %1166 {offsets = [0, 32], sizes = [2, 32], strides = [1, 1]} : vector<2x96xf32> to vector<2x32xf32>
    %1177 = arith.addf %1175, %1176 : vector<2x32xf32>
    %1178 = arith.negf %1177 : vector<2x32xf32>
    %1179 = math.exp %1178 : vector<2x32xf32>
    %cst_203 = arith.constant 1.000000e+00 : f32
    %1180 = vector.broadcast %cst_203 : f32 to vector<2x32xf32>
    %1181 = arith.addf %1180, %1179 : vector<2x32xf32>
    %1182 = arith.divf %1180, %1181 : vector<2x32xf32>
    %1183 = vector.extract_strided_slice %1165 {offsets = [0, 64], sizes = [2, 32], strides = [1, 1]} : vector<2x96xf32> to vector<2x32xf32>
    %1184 = vector.extract_strided_slice %1166 {offsets = [0, 64], sizes = [2, 32], strides = [1, 1]} : vector<2x96xf32> to vector<2x32xf32>
    %1185 = vector.broadcast %893 : vector<1x32xf32> to vector<2x32xf32>
    %1186 = arith.addf %1184, %1185 : vector<2x32xf32>
    %1187 = arith.mulf %1174, %1186 : vector<2x32xf32>
    %1188 = arith.addf %1183, %1187 : vector<2x32xf32>
    %1189 = math.tanh %1188 : vector<2x32xf32>
    %cst_204 = arith.constant 1.000000e+00 : f32
    %1190 = vector.broadcast %cst_204 : f32 to vector<2x32xf32>
    %1191 = arith.subf %1190, %1182 : vector<2x32xf32>
    %1192 = arith.mulf %1191, %1189 : vector<2x32xf32>
    %1193 = arith.mulf %1182, %1164 : vector<2x32xf32>
    %1194 = arith.addf %1192, %1193 : vector<2x32xf32>
    %1195 = vector.extract_strided_slice %891 {offsets = [20, 0], sizes = [2, 96], strides = [1, 1]} : vector<24x96xf32> to vector<2x96xf32>
    %cst_205 = arith.constant dense<0.000000e+00> : vector<2x96xf32>
    %1196 = tpu.matmul %1194, %892, %cst_205 {dimension_numbers = #tpu.dot_dimension_numbers<[1], [0], [0], [1], [0, 0, 1, 1], [], []>} : vector<2x32xf32>, vector<32x96xf32>, vector<2x96xf32> -> vector<2x96xf32>
    %1197 = vector.extract_strided_slice %1195 {offsets = [0, 0], sizes = [2, 32], strides = [1, 1]} : vector<2x96xf32> to vector<2x32xf32>
    %1198 = vector.extract_strided_slice %1196 {offsets = [0, 0], sizes = [2, 32], strides = [1, 1]} : vector<2x96xf32> to vector<2x32xf32>
    %1199 = arith.addf %1197, %1198 : vector<2x32xf32>
    %1200 = arith.negf %1199 : vector<2x32xf32>
    %1201 = math.exp %1200 : vector<2x32xf32>
    %cst_206 = arith.constant 1.000000e+00 : f32
    %1202 = vector.broadcast %cst_206 : f32 to vector<2x32xf32>
    %1203 = arith.addf %1202, %1201 : vector<2x32xf32>
    %1204 = arith.divf %1202, %1203 : vector<2x32xf32>
    %1205 = vector.extract_strided_slice %1195 {offsets = [0, 32], sizes = [2, 32], strides = [1, 1]} : vector<2x96xf32> to vector<2x32xf32>
    %1206 = vector.extract_strided_slice %1196 {offsets = [0, 32], sizes = [2, 32], strides = [1, 1]} : vector<2x96xf32> to vector<2x32xf32>
    %1207 = arith.addf %1205, %1206 : vector<2x32xf32>
    %1208 = arith.negf %1207 : vector<2x32xf32>
    %1209 = math.exp %1208 : vector<2x32xf32>
    %cst_207 = arith.constant 1.000000e+00 : f32
    %1210 = vector.broadcast %cst_207 : f32 to vector<2x32xf32>
    %1211 = arith.addf %1210, %1209 : vector<2x32xf32>
    %1212 = arith.divf %1210, %1211 : vector<2x32xf32>
    %1213 = vector.extract_strided_slice %1195 {offsets = [0, 64], sizes = [2, 32], strides = [1, 1]} : vector<2x96xf32> to vector<2x32xf32>
    %1214 = vector.extract_strided_slice %1196 {offsets = [0, 64], sizes = [2, 32], strides = [1, 1]} : vector<2x96xf32> to vector<2x32xf32>
    %1215 = vector.broadcast %893 : vector<1x32xf32> to vector<2x32xf32>
    %1216 = arith.addf %1214, %1215 : vector<2x32xf32>
    %1217 = arith.mulf %1204, %1216 : vector<2x32xf32>
    %1218 = arith.addf %1213, %1217 : vector<2x32xf32>
    %1219 = math.tanh %1218 : vector<2x32xf32>
    %cst_208 = arith.constant 1.000000e+00 : f32
    %1220 = vector.broadcast %cst_208 : f32 to vector<2x32xf32>
    %1221 = arith.subf %1220, %1212 : vector<2x32xf32>
    %1222 = arith.mulf %1221, %1219 : vector<2x32xf32>
    %1223 = arith.mulf %1212, %1194 : vector<2x32xf32>
    %1224 = arith.addf %1222, %1223 : vector<2x32xf32>
    %1225 = vector.extract_strided_slice %891 {offsets = [22, 0], sizes = [2, 96], strides = [1, 1]} : vector<24x96xf32> to vector<2x96xf32>
    %cst_209 = arith.constant dense<0.000000e+00> : vector<2x96xf32>
    %1226 = tpu.matmul %1224, %892, %cst_209 {dimension_numbers = #tpu.dot_dimension_numbers<[1], [0], [0], [1], [0, 0, 1, 1], [], []>} : vector<2x32xf32>, vector<32x96xf32>, vector<2x96xf32> -> vector<2x96xf32>
    %1227 = vector.extract_strided_slice %1225 {offsets = [0, 0], sizes = [2, 32], strides = [1, 1]} : vector<2x96xf32> to vector<2x32xf32>
    %1228 = vector.extract_strided_slice %1226 {offsets = [0, 0], sizes = [2, 32], strides = [1, 1]} : vector<2x96xf32> to vector<2x32xf32>
    %1229 = arith.addf %1227, %1228 : vector<2x32xf32>
    %1230 = arith.negf %1229 : vector<2x32xf32>
    %1231 = math.exp %1230 : vector<2x32xf32>
    %cst_210 = arith.constant 1.000000e+00 : f32
    %1232 = vector.broadcast %cst_210 : f32 to vector<2x32xf32>
    %1233 = arith.addf %1232, %1231 : vector<2x32xf32>
    %1234 = arith.divf %1232, %1233 : vector<2x32xf32>
    %1235 = vector.extract_strided_slice %1225 {offsets = [0, 32], sizes = [2, 32], strides = [1, 1]} : vector<2x96xf32> to vector<2x32xf32>
    %1236 = vector.extract_strided_slice %1226 {offsets = [0, 32], sizes = [2, 32], strides = [1, 1]} : vector<2x96xf32> to vector<2x32xf32>
    %1237 = arith.addf %1235, %1236 : vector<2x32xf32>
    %1238 = arith.negf %1237 : vector<2x32xf32>
    %1239 = math.exp %1238 : vector<2x32xf32>
    %cst_211 = arith.constant 1.000000e+00 : f32
    %1240 = vector.broadcast %cst_211 : f32 to vector<2x32xf32>
    %1241 = arith.addf %1240, %1239 : vector<2x32xf32>
    %1242 = arith.divf %1240, %1241 : vector<2x32xf32>
    %1243 = vector.extract_strided_slice %1225 {offsets = [0, 64], sizes = [2, 32], strides = [1, 1]} : vector<2x96xf32> to vector<2x32xf32>
    %1244 = vector.extract_strided_slice %1226 {offsets = [0, 64], sizes = [2, 32], strides = [1, 1]} : vector<2x96xf32> to vector<2x32xf32>
    %1245 = vector.broadcast %893 : vector<1x32xf32> to vector<2x32xf32>
    %1246 = arith.addf %1244, %1245 : vector<2x32xf32>
    %1247 = arith.mulf %1234, %1246 : vector<2x32xf32>
    %1248 = arith.addf %1243, %1247 : vector<2x32xf32>
    %1249 = math.tanh %1248 : vector<2x32xf32>
    %cst_212 = arith.constant 1.000000e+00 : f32
    %1250 = vector.broadcast %cst_212 : f32 to vector<2x32xf32>
    %1251 = arith.subf %1250, %1242 : vector<2x32xf32>
    %1252 = arith.mulf %1251, %1249 : vector<2x32xf32>
    %1253 = arith.mulf %1242, %1224 : vector<2x32xf32>
    %1254 = arith.addf %1252, %1253 : vector<2x32xf32>
    %c0_213 = arith.constant 0 : index
    %c0_214 = arith.constant 0 : index
    %1255 = vector.load %arg22[%c0_213, %c0_214] : memref<32x32xf32, #tpu.memory_space<vmem>>, vector<32x32xf32>
    %cst_215 = arith.constant dense<0.000000e+00> : vector<2x32xf32>
    %1256 = tpu.matmul %1254, %1255, %cst_215 {dimension_numbers = #tpu.dot_dimension_numbers<[1], [0], [0], [1], [0, 0, 1, 1], [], []>} : vector<2x32xf32>, vector<32x32xf32>, vector<2x32xf32> -> vector<2x32xf32>
    %c0_216 = arith.constant 0 : index
    %c0_217 = arith.constant 0 : index
    %1257 = vector.load %arg23[%c0_216, %c0_217] : memref<1x32xf32, #tpu.memory_space<vmem>>, vector<1x32xf32>
    %1258 = vector.broadcast %1257 : vector<1x32xf32> to vector<2x32xf32>
    %1259 = arith.addf %1256, %1258 : vector<2x32xf32>
    %1260 = tpu.concatenate %509, %1259 in 1 : vector<2x32xf32>, vector<2x32xf32> -> vector<2x64xf32>
    %c0_218 = arith.constant 0 : index
    %c0_219 = arith.constant 0 : index
    %1261 = vector.load %arg24[%c0_218, %c0_219] : memref<64x4xf32, #tpu.memory_space<vmem>>, vector<64x4xf32>
    %cst_220 = arith.constant dense<0.000000e+00> : vector<2x4xf32>
    %1262 = tpu.matmul %1260, %1261, %cst_220 {dimension_numbers = #tpu.dot_dimension_numbers<[1], [0], [0], [1], [0, 0, 1, 1], [], []>} : vector<2x64xf32>, vector<64x4xf32>, vector<2x4xf32> -> vector<2x4xf32>
    %c0_221 = arith.constant 0 : index
    %c0_222 = arith.constant 0 : index
    %1263 = vector.load %arg25[%c0_221, %c0_222] : memref<1x4xf32, #tpu.memory_space<vmem>>, vector<1x4xf32>
    %1264 = vector.broadcast %1263 : vector<1x4xf32> to vector<2x4xf32>
    %1265 = arith.addf %1262, %1264 : vector<2x4xf32>
    %c0_223 = arith.constant 0 : index
    %c0_224 = arith.constant 0 : index
    %1266 = vector.load %arg26[%c0_223, %c0_224] : memref<2x4xf32, #tpu.memory_space<vmem>>, vector<2x4xf32>
    tpu.vector_store %arg26[%c0_223, %c0_224], %1265 {strides = array<i32>} : memref<2x4xf32, #tpu.memory_space<vmem>>, vector<2x4xf32>,
    return
  }
}

</mosaic_0001>

<llo_original>
// kernel: classifier_forward.1
$region0: #{classifier_forward.1}
  #allocation0 [shape = 'u32[]', space=smem, size = 0x4, offset = 0x4, fixed_abs, tag = 'smem constant byte address 0x4 - core index']
  #allocation1 [shape = 'u32[144,128]{1,0:T(1,128)}', space=vmem, size = 0x12000, scoped, tag = 'internal scratch']
  %s0 = inlined_call_operand.vmem [shape: s32[16,1], index: 0, kind: input, shape index: {}]
  %s1 = inlined_call_operand.vmem [shape: f32[50,32], index: 1, kind: input, shape index: {}]
  %s2 = inlined_call_operand.vmem [shape: f32[32,96], index: 2, kind: input, shape index: {}]
  %s3 = inlined_call_operand.vmem [shape: f32[32,96], index: 3, kind: input, shape index: {}]
  %s4 = inlined_call_operand.vmem [shape: f32[1,96], index: 4, kind: input, shape index: {}]
  %s5 = inlined_call_operand.vmem [shape: f32[1,32], index: 5, kind: input, shape index: {}]
  %s6 = inlined_call_operand.vmem [shape: f32[32,96], index: 6, kind: input, shape index: {}]
  %s7 = inlined_call_operand.vmem [shape: f32[32,96], index: 7, kind: input, shape index: {}]
  %s8 = inlined_call_operand.vmem [shape: f32[1,96], index: 8, kind: input, shape index: {}]
  %s9 = inlined_call_operand.vmem [shape: f32[1,32], index: 9, kind: input, shape index: {}]
  %s10 = inlined_call_operand.vmem [shape: f32[32,32], index: 10, kind: input, shape index: {}]
  %s11 = inlined_call_operand.vmem [shape: f32[1,32], index: 11, kind: input, shape index: {}]
  %s12 = inlined_call_operand.vmem [shape: s32[24,1], index: 12, kind: input, shape index: {}]
  %s13 = inlined_call_operand.vmem [shape: f32[80,32], index: 13, kind: input, shape index: {}]
  %s14 = inlined_call_operand.vmem [shape: f32[32,96], index: 14, kind: input, shape index: {}]
  %s15 = inlined_call_operand.vmem [shape: f32[32,96], index: 15, kind: input, shape index: {}]
  %s16 = inlined_call_operand.hbm [shape: f32[1,96], index: 16, kind: input, shape index: {}]
  %s17 = inlined_call_operand.vmem [shape: f32[1,32], index: 17, kind: input, shape index: {}]
  %s18 = inlined_call_operand.vmem [shape: f32[32,96], index: 18, kind: input, shape index: {}]
  %s19 = inlined_call_operand.vmem [shape: f32[32,96], index: 19, kind: input, shape index: {}]
  %s20 = inlined_call_operand.vmem [shape: f32[1,96], index: 20, kind: input, shape index: {}]
  %s21 = inlined_call_operand.vmem [shape: f32[1,32], index: 21, kind: input, shape index: {}]
  %s22 = inlined_call_operand.hbm [shape: f32[32,32], index: 22, kind: input, shape index: {}]
  %s23 = inlined_call_operand.vmem [shape: f32[1,32], index: 23, kind: input, shape index: {}]
  %s24 = inlined_call_operand.vmem [shape: f32[64,4], index: 24, kind: input, shape index: {}]
  %s25 = inlined_call_operand.vmem [shape: f32[1,4], index: 25, kind: input, shape index: {}]
  %s26 = inlined_call_operand.hbm [shape: f32[2,4], index: 26, kind: output, shape index: {}]
  %s27 = sld [smem:[#allocation0]]
  $region122: #{classifier_forward.1} parent=0
    _
  %s29 = ssub.s32 1, %s27
  %s30 = scalar_select 0, %s29, %s27
  $region1: #{classifier_forward.1} parent=0
    #allocation2 [shape = 'u8[512]{0}', space=vmem, size = 0x400, scoped, tag = 'input window, operand 16, single buffered']
    #allocation3 [shape = 's32[1]{0}', space=sflag, size = 0x4, scoped, tag = 'scoped memory for classifier_forward.1']
    #allocation4 [shape = 's32[1]{0}', space=sflag, size = 0x4, scoped, tag = 'scoped memory for classifier_forward.1']
    #allocation5 [shape = 'u8[16384]{0}', space=vmem, size = 0x4000, scoped, tag = 'input window, operand 22, single buffered']
    #allocation6 [shape = 's32[1]{0}', space=sflag, size = 0x4, scoped, tag = 'scoped memory for classifier_forward.1']
    #allocation7 [shape = 'u8[1024]{0}', space=vmem, size = 0x400, scoped, tag = 'output window, operand 0, single buffered']
    %31 = vsyncpa [#allocation3], 0
    %32 = vsyncpa [#allocation6], 0
    %33 = vsyncpa [#allocation4], 0
    // Predicated region
    $region2: #{classifier_forward.1} parent=1 // pred_check
      _
    $region3: #{classifier_forward.1} parent=1 // pred_check_branch
      %35 = sbr.rel (0) target = $region5
    $region4: #{classifier_forward.1} parent=1 // pred_region
      _
    $region5: #{classifier_forward.1} parent=1 // pred_fallthru
      _
    // Predicated region
    $region6: #{classifier_forward.1} parent=1 // pred_check
      _
    $region7: #{classifier_forward.1} parent=1 // pred_check_branch
      %37 = sbr.rel (0) target = $region9
    $region8: #{classifier_forward.1} parent=1 // pred_region
      _
    $region9: #{classifier_forward.1} parent=1 // pred_fallthru
      _
    // Predicated region
    $region10: #{classifier_forward.1} parent=1 // pred_check
      _
    $region11: #{classifier_forward.1} parent=1 // pred_check_branch
      %39 = sbr.rel (0) target = $region13
    $region12: #{classifier_forward.1} parent=1 // pred_region
      _
    $region13: #{classifier_forward.1} parent=1 // pred_fallthru
      _
    // Predicated region
    $region14: #{classifier_forward.1} parent=1 // pred_check
      _
    $region15: #{classifier_forward.1} parent=1 // pred_check_branch
      %41 = sbr.rel (0) target = $region17
    $region16: #{classifier_forward.1} parent=1 // pred_region
      _
    $region17: #{classifier_forward.1} parent=1 // pred_fallthru
      _
    // Predicated region
    $region18: #{classifier_forward.1} parent=1 // pred_check
      _
    $region19: #{classifier_forward.1} parent=1 // pred_check_branch
      %43 = sbr.rel (0) target = $region21
    $region20: #{classifier_forward.1} parent=1 // pred_region
      _
    $region21: #{classifier_forward.1} parent=1 // pred_fallthru
      _
    // Predicated region
    $region22: #{classifier_forward.1} parent=1 // pred_check
      _
    $region23: #{classifier_forward.1} parent=1 // pred_check_branch
      %45 = sbr.rel (0) target = $region25
    $region24: #{classifier_forward.1} parent=1 // pred_region
      _
    $region25: #{classifier_forward.1} parent=1 // pred_fallthru
      _
    // Predicated region
    $region26: #{classifier_forward.1} parent=1 // pred_check
      _
    $region27: #{classifier_forward.1} parent=1 // pred_check_branch
      %47 = sbr.rel (0) target = $region29
    $region28: #{classifier_forward.1} parent=1 // pred_region
      _
    $region29: #{classifier_forward.1} parent=1 // pred_fallthru
      _
    // Predicated region
    $region30: #{classifier_forward.1} parent=1 // pred_check
      _
    $region31: #{classifier_forward.1} parent=1 // pred_check_branch
      %49 = sbr.rel (0) target = $region33
    $region32: #{classifier_forward.1} parent=1 // pred_region
      _
    $region33: #{classifier_forward.1} parent=1 // pred_fallthru
      _
    // Predicated region
    $region34: #{classifier_forward.1} parent=1 // pred_check
      _
    $region35: #{classifier_forward.1} parent=1 // pred_check_branch
      %51 = sbr.rel (0) target = $region37
    $region36: #{classifier_forward.1} parent=1 // pred_region
      _
    $region37: #{classifier_forward.1} parent=1 // pred_fallthru
      _
    // Predicated region
    $region38: #{classifier_forward.1} parent=1 // pred_check
      _
    $region39: #{classifier_forward.1} parent=1 // pred_check_branch
      %53 = sbr.rel (0) target = $region41
    $region40: #{classifier_forward.1} parent=1 // pred_region
      _
    $region41: #{classifier_forward.1} parent=1 // pred_fallthru
      _
    // Predicated region
    $region42: #{classifier_forward.1} parent=1 // pred_check
      _
    $region43: #{classifier_forward.1} parent=1 // pred_check_branch
      %55 = sbr.rel (0) target = $region45
    $region44: #{classifier_forward.1} parent=1 // pred_region
      _
    $region45: #{classifier_forward.1} parent=1 // pred_fallthru
      _
    // Predicated region
    $region46: #{classifier_forward.1} parent=1 // pred_check
      _
    $region47: #{classifier_forward.1} parent=1 // pred_check_branch
      %57 = sbr.rel (0) target = $region49
    $region48: #{classifier_forward.1} parent=1 // pred_region
      _
    $region49: #{classifier_forward.1} parent=1 // pred_fallthru
      _
    // Predicated region
    $region50: #{classifier_forward.1} parent=1 // pred_check
      _
    $region51: #{classifier_forward.1} parent=1 // pred_check_branch
      %59 = sbr.rel (0) target = $region53
    $region52: #{classifier_forward.1} parent=1 // pred_region
      _
    $region53: #{classifier_forward.1} parent=1 // pred_fallthru
      _
    // Predicated region
    $region54: #{classifier_forward.1} parent=1 // pred_check
      _
    $region55: #{classifier_forward.1} parent=1 // pred_check_branch
      %61 = sbr.rel (0) target = $region57
    $region56: #{classifier_forward.1} parent=1 // pred_region
      _
    $region57: #{classifier_forward.1} parent=1 // pred_fallthru
      _
    // Predicated region
    $region58: #{classifier_forward.1} parent=1 // pred_check
      _
    $region59: #{classifier_forward.1} parent=1 // pred_check_branch
      %63 = sbr.rel (0) target = $region61
    $region60: #{classifier_forward.1} parent=1 // pred_region
      _
    $region61: #{classifier_forward.1} parent=1 // pred_fallthru
      _
    // Predicated region
    $region62: #{classifier_forward.1} parent=1 // pred_check
      _
    $region63: #{classifier_forward.1} parent=1 // pred_check_branch
      %65 = sbr.rel (0) target = $region65
    $region64: #{classifier_forward.1} parent=1 // pred_region
      _
    $region65: #{classifier_forward.1} parent=1 // pred_fallthru
      _
    // Predicated region
    $region66: #{classifier_forward.1} parent=1 // pred_check
      _
    $region67: #{classifier_forward.1} parent=1 // pred_check_branch
      %67 = sbr.rel (0) target = $region69
    $region68: #{classifier_forward.1} parent=1 // pred_region
      %s69 = ssub.s32 16, 16
      %70 = vsyncadd [#allocation3], %s69
      %s72 = sshll.u32 [#allocation2], 4
      %s73 = int_to_ptr.vmem [resolvable:$true] %s72
      %75 = dma.hbm_to_vmem [thread:$0]  %s16, 16, %s73, [#allocation3]
    $region69: #{classifier_forward.1} parent=1 // pred_fallthru
      _
    // Predicated region
    $region70: #{classifier_forward.1} parent=1 // pred_check
      _
    $region71: #{classifier_forward.1} parent=1 // pred_check_branch
      %77 = sbr.rel (0) target = $region73
    $region72: #{classifier_forward.1} parent=1 // pred_region
      _
    $region73: #{classifier_forward.1} parent=1 // pred_fallthru
      _
    // Predicated region
    $region74: #{classifier_forward.1} parent=1 // pred_check
      _
    $region75: #{classifier_forward.1} parent=1 // pred_check_branch
      %79 = sbr.rel (0) target = $region77
    $region76: #{classifier_forward.1} parent=1 // pred_region
      _
    $region77: #{classifier_forward.1} parent=1 // pred_fallthru
      _
    // Predicated region
    $region78: #{classifier_forward.1} parent=1 // pred_check
      _
    $region79: #{classifier_forward.1} parent=1 // pred_check_branch
      %81 = sbr.rel (0) target = $region81
    $region80: #{classifier_forward.1} parent=1 // pred_region
      _
    $region81: #{classifier_forward.1} parent=1 // pred_fallthru
      _
    // Predicated region
    $region82: #{classifier_forward.1} parent=1 // pred_check
      _
    $region83: #{classifier_forward.1} parent=1 // pred_check_branch
      %83 = sbr.rel (0) target = $region85
    $region84: #{classifier_forward.1} parent=1 // pred_region
      _
    $region85: #{classifier_forward.1} parent=1 // pred_fallthru
      _
    // Predicated region
    $region86: #{classifier_forward.1} parent=1 // pred_check
      _
    $region87: #{classifier_forward.1} parent=1 // pred_check_branch
      %85 = sbr.rel (0) target = $region89
    $region88: #{classifier_forward.1} parent=1 // pred_region
      _
    $region89: #{classifier_forward.1} parent=1 // pred_fallthru
      _
    // Predicated region
    $region90: #{classifier_forward.1} parent=1 // pred_check
      _
    $region91: #{classifier_forward.1} parent=1 // pred_check_branch
      %87 = sbr.rel (0) target = $region93
    $region92: #{classifier_forward.1} parent=1 // pred_region
      %s89 = ssub.s32 512, 512
      %90 = vsyncadd [#allocation6], %s89
      %s91 = sshll.u32 [#allocation5], 4
      %s92 = int_to_ptr.vmem [resolvable:$true] %s91
      %97 = dma.hbm_to_vmem [thread:$0]  %s22, 512, %s92, [#allocation6], 128, 128, 8
    $region93: #{classifier_forward.1} parent=1 // pred_fallthru
      _
    // Predicated region
    $region94: #{classifier_forward.1} parent=1 // pred_check
      _
    $region95: #{classifier_forward.1} parent=1 // pred_check_branch
      %99 = sbr.rel (0) target = $region97
    $region96: #{classifier_forward.1} parent=1 // pred_region
      _
    $region97: #{classifier_forward.1} parent=1 // pred_fallthru
      _
    // Predicated region
    $region98: #{classifier_forward.1} parent=1 // pred_check
      _
    $region99: #{classifier_forward.1} parent=1 // pred_check_branch
      %101 = sbr.rel (0) target = $region101
    $region100: #{classifier_forward.1} parent=1 // pred_region
      _
    $region101: #{classifier_forward.1} parent=1 // pred_fallthru
      _
    // Predicated region
    $region102: #{classifier_forward.1} parent=1 // pred_check
      _
    $region103: #{classifier_forward.1} parent=1 // pred_check_branch
      %103 = sbr.rel (0) target = $region105
    $region104: #{classifier_forward.1} parent=1 // pred_region
      _
    $region105: #{classifier_forward.1} parent=1 // pred_fallthru
      _
    // Predicated region
    $region106: #{classifier_forward.1} parent=1 // pred_check
      _
    $region107: #{classifier_forward.1} parent=1 // pred_check_branch
      %105 = sbr.rel (0) target = $region109
    $region108: #{classifier_forward.1} parent=1 // pred_region
      %106 = dma.done [#allocation3], 16
    $region109: #{classifier_forward.1} parent=1 // pred_fallthru
      _
    // Predicated region
    $region110: #{classifier_forward.1} parent=1 // pred_check
      _
    $region111: #{classifier_forward.1} parent=1 // pred_check_branch
      %108 = sbr.rel (0) target = $region113
    $region112: #{classifier_forward.1} parent=1 // pred_region
      %109 = dma.done [#allocation6], 512
    $region113: #{classifier_forward.1} parent=1 // pred_fallthru
      _
    %v110 = vld [vmem:[%s0] sm:$0xff]
    %v111 = vld [vmem:[%s0 + $0x8] sm:$0xff]
    %v112 = vlaneseq
    %v113 = vand.u32 %v112, 127
    %114 = vset.pattern.permute.xlu0 0
    %115 = vperm.xlu0 %114, %v110
    %v116 = vpop.permute.xlu0 %115
    %117 = vset.pattern.permute.xlu0 0
    %118 = vperm.xlu0 %117, %v111
    %v119 = vpop.permute.xlu0 %118
    %vm120 = vcmp.eq.s32.totalorder %v113, %v116
    %vm121 = vcmp.eq.s32.totalorder %v113, %v119
    %v122 = vsel %vm120, 1, 0
    %v123 = vsel %vm121, 1, 0
    %v124 = vcvt.s32.f32 %v122
    %v125 = vcvt.s32.f32 %v123
    %v126 = vld [vmem:[%s1] sm:$0xff]
    %v127 = vld [vmem:[%s1 + $0x8] sm:$0xff]
    %v128 = vld [vmem:[%s1 + $0x10] sm:$0xff]
    %v129 = vld [vmem:[%s1 + $0x18] sm:$0xff]
    %v130 = vld [vmem:[%s1 + $0x20] sm:$0xff]
    %v131 = vld [vmem:[%s1 + $0x28] sm:$0xff]
    %v132 = vld [vmem:[%s1 + $0x30] sm:$0x3]
    %vm133 = vcmask 408576
    %v135 = vsel %vm133, %v124, 0
    %v138 = vsel %vm133, %v125, 0
    %vm140 = vcmask 1041408
    %v142 = vsel %vm140, %v132, 0
    %144 = vmatprep.subr.mxu0 0.0
    %145 = vmatpush1.msra.mxu0 0.0
    %146 = vmatprep.subr.mxu0 0.0
    %147 = vmatpush1.msra.mxu0 0.0
    %148 = vmatprep.subr.mxu0 0.0
    %149 = vmatpush1.msra.mxu0 0.0
    %150 = vmatprep.subr.mxu0 0.0
    %151 = vmatpush1.msra.mxu0 0.0
    %152 = vmatprep.subr.mxu0 0.0
    %153 = vmatpush1.msra.mxu0 0.0
    %154 = vmatprep.subr.mxu0 0.0
    %155 = vmatpush1.msra.mxu0 0.0
    %156 = vmatprep.subr.mxu0 0.0
    %157 = vmatpush1.msra.mxu0 0.0
    %158 = vmatprep.subr.mxu0 0.0
    %159 = vmatpush1.msra.mxu0 0.0
    %160 = vmatprep.subr.mxu0 0.0
    %161 = vmatpush1.msra.mxu0 0.0
    %162 = vmatprep.subr.mxu0 0.0
    %163 = vmatpush1.msra.mxu0 %v142
    %164 = vmatprep.subr.mxu0 0.0
    %165 = vmatpush1.msra.mxu0 %v131
    %166 = vmatprep.subr.mxu0 0.0
    %167 = vmatpush1.msra.mxu0 %v130
    %168 = vmatprep.subr.mxu0 0.0
    %169 = vmatpush1.msra.mxu0 %v129
    %170 = vmatprep.subr.mxu0 0.0
    %171 = vmatpush1.msra.mxu0 %v128
    %172 = vmatprep.subr.mxu0 0.0
    %173 = vmatpush1.msra.mxu0 %v127
    %174 = vmatprep.subr.mxu0 0.0
    %175 = vmatpush1.msra.mxu0 %v126
    %176 = vmatprep.subr.mxu0 0.0
    %177 = vmatpush2.msra.mxu0 0.0
    %178 = vmatprep.subr.mxu0 0.0
    %179 = vmatpush2.msra.mxu0 0.0
    %180 = vmatprep.subr.mxu0 0.0
    %181 = vmatpush2.msra.mxu0 0.0
    %182 = vmatprep.subr.mxu0 0.0
    %183 = vmatpush2.msra.mxu0 0.0
    %184 = vmatprep.subr.mxu0 0.0
    %185 = vmatpush2.msra.mxu0 0.0
    %186 = vmatprep.subr.mxu0 0.0
    %187 = vmatpush2.msra.mxu0 0.0
    %188 = vmatprep.subr.mxu0 0.0
    %189 = vmatpush2.msra.mxu0 0.0
    %190 = vmatprep.subr.mxu0 0.0
    %191 = vmatpush2.msra.mxu0 0.0
    %192 = vmatprep.subr.mxu0 0.0
    %193 = vmatpush2.msra.mxu0 0.0
    %194 = vmatprep.subr.mxu0 0.0
    %195 = vmatpush2.msra.mxu0 0.0
    %196 = vmatprep.subr.mxu0 0.0
    %197 = vmatpush2.msra.mxu0 0.0
    %198 = vmatprep.subr.mxu0 0.0
    %199 = vmatpush2.msra.mxu0 0.0
    %200 = vmatprep.subr.mxu0 0.0
    %201 = vmatpush2.msra.mxu0 0.0
    %202 = vmatprep.subr.mxu0 0.0
    %203 = vmatpush2.msra.mxu0 0.0
    %204 = vmatprep.subr.mxu0 0.0
    %205 = vmatpush2.msra.mxu0 0.0
    %206 = vmatprep.subr.mxu0 0.0
    %207 = vmatpush2.msra.mxu0 0.0
    %208 = vmatprep.mubr.f32.mxu0 0.0
    %209 = vmatmul.mubr.f32.gmra.mxu0 %v135
    %v210 = vpop.f32.mrf.mxu0
    %v211 = vadd.f32 0.0, %v210
    %v212 = vpop.f32.mrf.mxu0
    %213 = vmatprep.mubr.f32.mxu0 0.0
    %214 = vmatmul.mubr.f32.gmra.mxu0 %v138
    %v215 = vpop.f32.mrf.mxu0
    %v216 = vadd.f32 0.0, %v215
    %v217 = vpop.f32.mrf.mxu0
    %218 = vdwg.mxu0
    %v219 = vld [vmem:[%s2] sm:$0xff]
    %v220 = vld [vmem:[%s2 + $0x8] sm:$0xff]
    %v221 = vld [vmem:[%s2 + $0x10] sm:$0xff]
    %v222 = vld [vmem:[%s2 + $0x18] sm:$0xff]
    %v223 = vld [vmem:[%s4] sm:$0x1]
    %v225 = vlaneseq
    %v226 = vshrl.u32 %v225, 7
    %v227 = vsub.s32 0, %v226
    %v228 = vrot.slane %v223, %v227
    %vm230 = vcmask 261120
    %v232 = vsel %vm230, %v211, 0
    %v235 = vsel %vm230, %v216, 0
    %237 = vmatprep.subr.mxu0 0.0
    %238 = vmatpush1.msra.mxu0 0.0
    %239 = vmatprep.subr.mxu0 0.0
    %240 = vmatpush1.msra.mxu0 0.0
    %241 = vmatprep.subr.mxu0 0.0
    %242 = vmatpush1.msra.mxu0 0.0
    %243 = vmatprep.subr.mxu0 0.0
    %244 = vmatpush1.msra.mxu0 0.0
    %245 = vmatprep.subr.mxu0 0.0
    %246 = vmatpush1.msra.mxu0 0.0
    %247 = vmatprep.subr.mxu0 0.0
    %248 = vmatpush1.msra.mxu0 0.0
    %249 = vmatprep.subr.mxu0 0.0
    %250 = vmatpush1.msra.mxu0 0.0
    %251 = vmatprep.subr.mxu0 0.0
    %252 = vmatpush1.msra.mxu0 0.0
    %253 = vmatprep.subr.mxu0 0.0
    %254 = vmatpush1.msra.mxu0 0.0
    %255 = vmatprep.subr.mxu0 0.0
    %256 = vmatpush1.msra.mxu0 0.0
    %257 = vmatprep.subr.mxu0 0.0
    %258 = vmatpush1.msra.mxu0 0.0
    %259 = vmatprep.subr.mxu0 0.0
    %260 = vmatpush1.msra.mxu0 0.0
    %261 = vmatprep.subr.mxu0 0.0
    %262 = vmatpush1.msra.mxu0 %v222
    %263 = vmatprep.subr.mxu0 0.0
    %264 = vmatpush1.msra.mxu0 %v221
    %265 = vmatprep.subr.mxu0 0.0
    %266 = vmatpush1.msra.mxu0 %v220
    %267 = vmatprep.subr.mxu0 0.0
    %268 = vmatpush1.msra.mxu0 %v219
    %269 = vmatprep.subr.mxu0 0.0
    %270 = vmatpush2.msra.mxu0 0.0
    %271 = vmatprep.subr.mxu0 0.0
    %272 = vmatpush2.msra.mxu0 0.0
    %273 = vmatprep.subr.mxu0 0.0
    %274 = vmatpush2.msra.mxu0 0.0
    %275 = vmatprep.subr.mxu0 0.0
    %276 = vmatpush2.msra.mxu0 0.0
    %277 = vmatprep.subr.mxu0 0.0
    %278 = vmatpush2.msra.mxu0 0.0
    %279 = vmatprep.subr.mxu0 0.0
    %280 = vmatpush2.msra.mxu0 0.0
    %281 = vmatprep.subr.mxu0 0.0
    %282 = vmatpush2.msra.mxu0 0.0
    %283 = vmatprep.subr.mxu0 0.0
    %284 = vmatpush2.msra.mxu0 0.0
    %285 = vmatprep.subr.mxu0 0.0
    %286 = vmatpush2.msra.mxu0 0.0
    %287 = vmatprep.subr.mxu0 0.0
    %288 = vmatpush2.msra.mxu0 0.0
    %289 = vmatprep.subr.mxu0 0.0
    %290 = vmatpush2.msra.mxu0 0.0
    %291 = vmatprep.subr.mxu0 0.0
    %292 = vmatpush2.msra.mxu0 0.0
    %293 = vmatprep.subr.mxu0 0.0
    %294 = vmatpush2.msra.mxu0 0.0
    %295 = vmatprep.subr.mxu0 0.0
    %296 = vmatpush2.msra.mxu0 0.0
    %297 = vmatprep.subr.mxu0 0.0
    %298 = vmatpush2.msra.mxu0 0.0
    %299 = vmatprep.subr.mxu0 0.0
    %300 = vmatpush2.msra.mxu0 0.0
    %301 = vmatprep.mubr.f32.mxu0 0.0
    %302 = vmatmul.mubr.f32.gmra.mxu0 %v232
    %v303 = vpop.f32.mrf.mxu0
    %v304 = vadd.f32 %v228, %v303
    %v305 = vpop.f32.mrf.mxu0
    %306 = vmatprep.mubr.f32.mxu0 0.0
    %307 = vmatmul.mubr.f32.gmra.mxu0 %v235
    %v308 = vpop.f32.mrf.mxu0
    %v309 = vadd.f32 %v228, %v308
    %v310 = vpop.f32.mrf.mxu0
    %311 = vdwg.mxu0
    %v312 = vld [vmem:[%s3] sm:$0xff]
    %v313 = vld [vmem:[%s3 + $0x8] sm:$0xff]
    %v314 = vld [vmem:[%s3 + $0x10] sm:$0xff]
    %v315 = vld [vmem:[%s3 + $0x18] sm:$0xff]
    %v316 = vld [vmem:[%s5] sm:$0x1]
    %v318 = vsel %vm230, 0.0, 0
    %320 = vmatprep.subr.mxu0 0.0
    %321 = vmatpush1.msra.mxu0 0.0
    %322 = vmatprep.subr.mxu0 0.0
    %323 = vmatpush1.msra.mxu0 0.0
    %324 = vmatprep.subr.mxu0 0.0
    %325 = vmatpush1.msra.mxu0 0.0
    %326 = vmatprep.subr.mxu0 0.0
    %327 = vmatpush1.msra.mxu0 0.0
    %328 = vmatprep.subr.mxu0 0.0
    %329 = vmatpush1.msra.mxu0 0.0
    %330 = vmatprep.subr.mxu0 0.0
    %331 = vmatpush1.msra.mxu0 0.0
    %332 = vmatprep.subr.mxu0 0.0
    %333 = vmatpush1.msra.mxu0 0.0
    %334 = vmatprep.subr.mxu0 0.0
    %335 = vmatpush1.msra.mxu0 0.0
    %336 = vmatprep.subr.mxu0 0.0
    %337 = vmatpush1.msra.mxu0 0.0
    %338 = vmatprep.subr.mxu0 0.0
    %339 = vmatpush1.msra.mxu0 0.0
    %340 = vmatprep.subr.mxu0 0.0
    %341 = vmatpush1.msra.mxu0 0.0
    %342 = vmatprep.subr.mxu0 0.0
    %343 = vmatpush1.msra.mxu0 0.0
    %344 = vmatprep.subr.mxu0 0.0
    %345 = vmatpush1.msra.mxu0 %v315
    %346 = vmatprep.subr.mxu0 0.0
    %347 = vmatpush1.msra.mxu0 %v314
    %348 = vmatprep.subr.mxu0 0.0
    %349 = vmatpush1.msra.mxu0 %v313
    %350 = vmatprep.subr.mxu0 0.0
    %351 = vmatpush1.msra.mxu0 %v312
    %352 = vmatprep.subr.mxu0 0.0
    %353 = vmatpush2.msra.mxu0 0.0
    %354 = vmatprep.subr.mxu0 0.0
    %355 = vmatpush2.msra.mxu0 0.0
    %356 = vmatprep.subr.mxu0 0.0
    %357 = vmatpush2.msra.mxu0 0.0
    %358 = vmatprep.subr.mxu0 0.0
    %359 = vmatpush2.msra.mxu0 0.0
    %360 = vmatprep.subr.mxu0 0.0
    %361 = vmatpush2.msra.mxu0 0.0
    %362 = vmatprep.subr.mxu0 0.0
    %363 = vmatpush2.msra.mxu0 0.0
    %364 = vmatprep.subr.mxu0 0.0
    %365 = vmatpush2.msra.mxu0 0.0
    %366 = vmatprep.subr.mxu0 0.0
    %367 = vmatpush2.msra.mxu0 0.0
    %368 = vmatprep.subr.mxu0 0.0
    %369 = vmatpush2.msra.mxu0 0.0
    %370 = vmatprep.subr.mxu0 0.0
    %371 = vmatpush2.msra.mxu0 0.0
    %372 = vmatprep.subr.mxu0 0.0
    %373 = vmatpush2.msra.mxu0 0.0
    %374 = vmatprep.subr.mxu0 0.0
    %375 = vmatpush2.msra.mxu0 0.0
    %376 = vmatprep.subr.mxu0 0.0
    %377 = vmatpush2.msra.mxu0 0.0
    %378 = vmatprep.subr.mxu0 0.0
    %379 = vmatpush2.msra.mxu0 0.0
    %380 = vmatprep.subr.mxu0 0.0
    %381 = vmatpush2.msra.mxu0 0.0
    %382 = vmatprep.subr.mxu0 0.0
    %383 = vmatpush2.msra.mxu0 0.0
    %384 = vmatprep.mubr.f32.mxu0 0.0
    %385 = vmatmul.mubr.f32.gmra.mxu0 %v318
    %v386 = vpop.f32.mrf.mxu0
    %v387 = vadd.f32 0.0, %v386
    %v388 = vpop.f32.mrf.mxu0
    %389 = vdwg.mxu0
    %v390 = vadd.f32 %v304, %v387
    %v391 = vxor.u32 %v390, 2147483648
    %v392 = vmul.f32 %v391, 1.442695
    %v393 = vpow.pop %v392
    %v394 = vadd.f32 %v393, 1.0
    %v395 = vrcp.pop %v394
    %v396 = vmul.f32 1.0, %v395
    %v398 = vlaneseq
    %v399 = vshrl.u32 %v398, 7
    %v400 = vsub.s32 0, %v399
    %v401 = vrot.slane %v316, %v400
    %402 = vrot.lane.b32.xlu0 %v401, 64
    %v403 = vpop.permute.xlu0 %402
    %v405 = vadd.f32 %v387, %v403
    %407 = vrot.lane.b32.xlu0 %v405, 64
    %v408 = vpop.permute.xlu0 %407
    %v410 = vmul.f32 %v396, %v408
    %412 = vrot.lane.b32.xlu0 %v410, 64
    %v413 = vpop.permute.xlu0 %412
    %v415 = vadd.f32 %v304, %v413
    %v416 = vtanh.pop %v415
    %v417 = vsub.f32 1.0, %v396
    %419 = vrot.lane.b32.xlu0 %v416, 96
    %v420 = vpop.permute.xlu0 %419
    %v422 = vmul.f32 %v417, %v420
    %v423 = vmul.f32 %v396, 0.0
    %v424 = vadd.f32 %v422, %v423
    %426 = vrot.lane.b32.xlu0 %v424, 96
    %v427 = vpop.permute.xlu0 %426
    %v428 = vsel %vm230, %v427, 0
    %430 = vmatprep.subr.mxu0 0.0
    %431 = vmatpush1.msra.mxu0 0.0
    %432 = vmatprep.subr.mxu0 0.0
    %433 = vmatpush1.msra.mxu0 0.0
    %434 = vmatprep.subr.mxu0 0.0
    %435 = vmatpush1.msra.mxu0 0.0
    %436 = vmatprep.subr.mxu0 0.0
    %437 = vmatpush1.msra.mxu0 0.0
    %438 = vmatprep.subr.mxu0 0.0
    %439 = vmatpush1.msra.mxu0 0.0
    %440 = vmatprep.subr.mxu0 0.0
    %441 = vmatpush1.msra.mxu0 0.0
    %442 = vmatprep.subr.mxu0 0.0
    %443 = vmatpush1.msra.mxu0 0.0
    %444 = vmatprep.subr.mxu0 0.0
    %445 = vmatpush1.msra.mxu0 0.0
    %446 = vmatprep.subr.mxu0 0.0
    %447 = vmatpush1.msra.mxu0 0.0
    %448 = vmatprep.subr.mxu0 0.0
    %449 = vmatpush1.msra.mxu0 0.0
    %450 = vmatprep.subr.mxu0 0.0
    %451 = vmatpush1.msra.mxu0 0.0
    %452 = vmatprep.subr.mxu0 0.0
    %453 = vmatpush1.msra.mxu0 0.0
    %454 = vmatprep.subr.mxu0 0.0
    %455 = vmatpush1.msra.mxu0 %v315
    %456 = vmatprep.subr.mxu0 0.0
    %457 = vmatpush1.msra.mxu0 %v314
    %458 = vmatprep.subr.mxu0 0.0
    %459 = vmatpush1.msra.mxu0 %v313
    %460 = vmatprep.subr.mxu0 0.0
    %461 = vmatpush1.msra.mxu0 %v312
    %462 = vmatprep.subr.mxu0 0.0
    %463 = vmatpush2.msra.mxu0 0.0
    %464 = vmatprep.subr.mxu0 0.0
    %465 = vmatpush2.msra.mxu0 0.0
    %466 = vmatprep.subr.mxu0 0.0
    %467 = vmatpush2.msra.mxu0 0.0
    %468 = vmatprep.subr.mxu0 0.0
    %469 = vmatpush2.msra.mxu0 0.0
    %470 = vmatprep.subr.mxu0 0.0
    %471 = vmatpush2.msra.mxu0 0.0
    %472 = vmatprep.subr.mxu0 0.0
    %473 = vmatpush2.msra.mxu0 0.0
    %474 = vmatprep.subr.mxu0 0.0
    %475 = vmatpush2.msra.mxu0 0.0
    %476 = vmatprep.subr.mxu0 0.0
    %477 = vmatpush2.msra.mxu0 0.0
    %478 = vmatprep.subr.mxu0 0.0
    %479 = vmatpush2.msra.mxu0 0.0
    %480 = vmatprep.subr.mxu0 0.0
    %481 = vmatpush2.msra.mxu0 0.0
    %482 = vmatprep.subr.mxu0 0.0
    %483 = vmatpush2.msra.mxu0 0.0
    %484 = vmatprep.subr.mxu0 0.0
    %485 = vmatpush2.msra.mxu0 0.0
    %486 = vmatprep.subr.mxu0 0.0
    %487 = vmatpush2.msra.mxu0 0.0
    %488 = vmatprep.subr.mxu0 0.0
    %489 = vmatpush2.msra.mxu0 0.0
    %490 = vmatprep.subr.mxu0 0.0
    %491 = vmatpush2.msra.mxu0 0.0
    %492 = vmatprep.subr.mxu0 0.0
    %493 = vmatpush2.msra.mxu0 0.0
    %494 = vmatprep.mubr.f32.mxu0 0.0
    %495 = vmatmul.mubr.f32.gmra.mxu0 %v428
    %v496 = vpop.f32.mrf.mxu0
    %v497 = vadd.f32 0.0, %v496
    %v498 = vpop.f32.mrf.mxu0
    %499 = vdwg.mxu0
    %v501 = vrot.slane %v497, 6
    %v503 = vadd.f32 %v304, %v501
    %v504 = vxor.u32 %v503, 2147483648
    %v505 = vmul.f32 %v504, 1.442695
    %v506 = vpow.pop %v505
    %v507 = vadd.f32 %v506, 1.0
    %v508 = vrcp.pop %v507
    %v509 = vmul.f32 1.0, %v508
    %v510 = vadd.f32 %v497, %v403
    %v512 = vrot.slane %v510, 6
    %513 = vrot.lane.b32.xlu0 %v512, 64
    %v514 = vpop.permute.xlu0 %513
    %v516 = vmul.f32 %v509, %v514
    %518 = vrot.lane.b32.xlu0 %v516, 64
    %v519 = vpop.permute.xlu0 %518
    %v521 = vadd.f32 %v304, %v519
    %v522 = vtanh.pop %v521
    %v523 = vsub.f32 1.0, %v509
    %525 = vrot.lane.b32.xlu0 %v522, 96
    %v526 = vpop.permute.xlu0 %525
    %v528 = vmul.f32 %v523, %v526
    %v529 = vrot.slane %v424, 6
    %v531 = vmul.f32 %v509, %v529
    %v532 = vadd.f32 %v528, %v531
    %v534 = vrot.slane %v532, 2
    %535 = vrot.lane.b32.xlu0 %v534, 96
    %v536 = vpop.permute.xlu0 %535
    %v537 = vsel %vm230, %v536, 0
    %539 = vmatprep.subr.mxu0 0.0
    %540 = vmatpush1.msra.mxu0 0.0
    %541 = vmatprep.subr.mxu0 0.0
    %542 = vmatpush1.msra.mxu0 0.0
    %543 = vmatprep.subr.mxu0 0.0
    %544 = vmatpush1.msra.mxu0 0.0
    %545 = vmatprep.subr.mxu0 0.0
    %546 = vmatpush1.msra.mxu0 0.0
    %547 = vmatprep.subr.mxu0 0.0
    %548 = vmatpush1.msra.mxu0 0.0
    %549 = vmatprep.subr.mxu0 0.0
    %550 = vmatpush1.msra.mxu0 0.0
    %551 = vmatprep.subr.mxu0 0.0
    %552 = vmatpush1.msra.mxu0 0.0
    %553 = vmatprep.subr.mxu0 0.0
    %554 = vmatpush1.msra.mxu0 0.0
    %555 = vmatprep.subr.mxu0 0.0
    %556 = vmatpush1.msra.mxu0 0.0
    %557 = vmatprep.subr.mxu0 0.0
    %558 = vmatpush1.msra.mxu0 0.0
    %559 = vmatprep.subr.mxu0 0.0
    %560 = vmatpush1.msra.mxu0 0.0
    %561 = vmatprep.subr.mxu0 0.0
    %562 = vmatpush1.msra.mxu0 0.0
    %563 = vmatprep.subr.mxu0 0.0
    %564 = vmatpush1.msra.mxu0 %v315
    %565 = vmatprep.subr.mxu0 0.0
    %566 = vmatpush1.msra.mxu0 %v314
    %567 = vmatprep.subr.mxu0 0.0
    %568 = vmatpush1.msra.mxu0 %v313
    %569 = vmatprep.subr.mxu0 0.0
    %570 = vmatpush1.msra.mxu0 %v312
    %571 = vmatprep.subr.mxu0 0.0
    %572 = vmatpush2.msra.mxu0 0.0
    %573 = vmatprep.subr.mxu0 0.0
    %574 = vmatpush2.msra.mxu0 0.0
    %575 = vmatprep.subr.mxu0 0.0
    %576 = vmatpush2.msra.mxu0 0.0
    %577 = vmatprep.subr.mxu0 0.0
    %578 = vmatpush2.msra.mxu0 0.0
    %579 = vmatprep.subr.mxu0 0.0
    %580 = vmatpush2.msra.mxu0 0.0
    %581 = vmatprep.subr.mxu0 0.0
    %582 = vmatpush2.msra.mxu0 0.0
    %583 = vmatprep.subr.mxu0 0.0
    %584 = vmatpush2.msra.mxu0 0.0
    %585 = vmatprep.subr.mxu0 0.0
    %586 = vmatpush2.msra.mxu0 0.0
    %587 = vmatprep.subr.mxu0 0.0
    %588 = vmatpush2.msra.mxu0 0.0
    %589 = vmatprep.subr.mxu0 0.0
    %590 = vmatpush2.msra.mxu0 0.0
    %591 = vmatprep.subr.mxu0 0.0
    %592 = vmatpush2.msra.mxu0 0.0
    %593 = vmatprep.subr.mxu0 0.0
    %594 = vmatpush2.msra.mxu0 0.0
    %595 = vmatprep.subr.mxu0 0.0
    %596 = vmatpush2.msra.mxu0 0.0
    %597 = vmatprep.subr.mxu0 0.0
    %598 = vmatpush2.msra.mxu0 0.0
    %599 = vmatprep.subr.mxu0 0.0
    %600 = vmatpush2.msra.mxu0 0.0
    %601 = vmatprep.subr.mxu0 0.0
    %602 = vmatpush2.msra.mxu0 0.0
    %603 = vmatprep.mubr.f32.mxu0 0.0
    %604 = vmatmul.mubr.f32.gmra.mxu0 %v537
    %v605 = vpop.f32.mrf.mxu0
    %v606 = vadd.f32 0.0, %v605
    %v607 = vpop.f32.mrf.mxu0
    %608 = vdwg.mxu0
    %v610 = vrot.slane %v606, 4
    %v612 = vadd.f32 %v304, %v610
    %v613 = vxor.u32 %v612, 2147483648
    %v614 = vmul.f32 %v613, 1.442695
    %v615 = vpow.pop %v614
    %v616 = vadd.f32 %v615, 1.0
    %v617 = vrcp.pop %v616
    %v618 = vmul.f32 1.0, %v617
    %v619 = vadd.f32 %v606, %v403
    %v621 = vrot.slane %v619, 4
    %622 = vrot.lane.b32.xlu0 %v621, 64
    %v623 = vpop.permute.xlu0 %622
    %v625 = vmul.f32 %v618, %v623
    %627 = vrot.lane.b32.xlu0 %v625, 64
    %v628 = vpop.permute.xlu0 %627
    %v630 = vadd.f32 %v304, %v628
    %v631 = vtanh.pop %v630
    %v632 = vsub.f32 1.0, %v618
    %634 = vrot.lane.b32.xlu0 %v631, 96
    %v635 = vpop.permute.xlu0 %634
    %v637 = vmul.f32 %v632, %v635
    %v638 = vrot.slane %v532, 6
    %v640 = vmul.f32 %v618, %v638
    %v641 = vadd.f32 %v637, %v640
    %v643 = vrot.slane %v641, 4
    %644 = vrot.lane.b32.xlu0 %v643, 96
    %v645 = vpop.permute.xlu0 %644
    %v646 = vsel %vm230, %v645, 0
    %648 = vmatprep.subr.mxu0 0.0
    %649 = vmatpush1.msra.mxu0 0.0
    %650 = vmatprep.subr.mxu0 0.0
    %651 = vmatpush1.msra.mxu0 0.0
    %652 = vmatprep.subr.mxu0 0.0
    %653 = vmatpush1.msra.mxu0 0.0
    %654 = vmatprep.subr.mxu0 0.0
    %655 = vmatpush1.msra.mxu0 0.0
    %656 = vmatprep.subr.mxu0 0.0
    %657 = vmatpush1.msra.mxu0 0.0
    %658 = vmatprep.subr.mxu0 0.0
    %659 = vmatpush1.msra.mxu0 0.0
    %660 = vmatprep.subr.mxu0 0.0
    %661 = vmatpush1.msra.mxu0 0.0
    %662 = vmatprep.subr.mxu0 0.0
    %663 = vmatpush1.msra.mxu0 0.0
    %664 = vmatprep.subr.mxu0 0.0
    %665 = vmatpush1.msra.mxu0 0.0
    %666 = vmatprep.subr.mxu0 0.0
    %667 = vmatpush1.msra.mxu0 0.0
    %668 = vmatprep.subr.mxu0 0.0
    %669 = vmatpush1.msra.mxu0 0.0
    %670 = vmatprep.subr.mxu0 0.0
    %671 = vmatpush1.msra.mxu0 0.0
    %672 = vmatprep.subr.mxu0 0.0
    %673 = vmatpush1.msra.mxu0 %v315
    %674 = vmatprep.subr.mxu0 0.0
    %675 = vmatpush1.msra.mxu0 %v314
    %676 = vmatprep.subr.mxu0 0.0
    %677 = vmatpush1.msra.mxu0 %v313
    %678 = vmatprep.subr.mxu0 0.0
    %679 = vmatpush1.msra.mxu0 %v312
    %680 = vmatprep.subr.mxu0 0.0
    %681 = vmatpush2.msra.mxu0 0.0
    %682 = vmatprep.subr.mxu0 0.0
    %683 = vmatpush2.msra.mxu0 0.0
    %684 = vmatprep.subr.mxu0 0.0
    %685 = vmatpush2.msra.mxu0 0.0
    %686 = vmatprep.subr.mxu0 0.0
    %687 = vmatpush2.msra.mxu0 0.0
    %688 = vmatprep.subr.mxu0 0.0
    %689 = vmatpush2.msra.mxu0 0.0
    %690 = vmatprep.subr.mxu0 0.0
    %691 = vmatpush2.msra.mxu0 0.0
    %692 = vmatprep.subr.mxu0 0.0
    %693 = vmatpush2.msra.mxu0 0.0
    %694 = vmatprep.subr.mxu0 0.0
    %695 = vmatpush2.msra.mxu0 0.0
    %696 = vmatprep.subr.mxu0 0.0
    %697 = vmatpush2.msra.mxu0 0.0
    %698 = vmatprep.subr.mxu0 0.0
    %699 = vmatpush2.msra.mxu0 0.0
    %700 = vmatprep.subr.mxu0 0.0
    %701 = vmatpush2.msra.mxu0 0.0
    %702 = vmatprep.subr.mxu0 0.0
    %703 = vmatpush2.msra.mxu0 0.0
    %704 = vmatprep.subr.mxu0 0.0
    %705 = vmatpush2.msra.mxu0 0.0
    %706 = vmatprep.subr.mxu0 0.0
    %707 = vmatpush2.msra.mxu0 0.0
    %708 = vmatprep.subr.mxu0 0.0
    %709 = vmatpush2.msra.mxu0 0.0
    %710 = vmatprep.subr.mxu0 0.0
    %711 = vmatpush2.msra.mxu0 0.0
    %712 = vmatprep.mubr.f32.mxu0 0.0
    %713 = vmatmul.mubr.f32.gmra.mxu0 %v646
    %v714 = vpop.f32.mrf.mxu0
    %v715 = vadd.f32 0.0, %v714
    %v716 = vpop.f32.mrf.mxu0
    %717 = vdwg.mxu0
    %v719 = vrot.slane %v715, 2
    %v721 = vadd.f32 %v304, %v719
    %v722 = vxor.u32 %v721, 2147483648
    %v723 = vmul.f32 %v722, 1.442695
    %v724 = vpow.pop %v723
    %v725 = vadd.f32 %v724, 1.0
    %v726 = vrcp.pop %v725
    %v727 = vmul.f32 1.0, %v726
    %v728 = vadd.f32 %v715, %v403
    %v730 = vrot.slane %v728, 2
    %731 = vrot.lane.b32.xlu0 %v730, 64
    %v732 = vpop.permute.xlu0 %731
    %v734 = vmul.f32 %v727, %v732
    %736 = vrot.lane.b32.xlu0 %v734, 64
    %v737 = vpop.permute.xlu0 %736
    %v739 = vadd.f32 %v304, %v737
    %v740 = vtanh.pop %v739
    %v741 = vsub.f32 1.0, %v727
    %743 = vrot.lane.b32.xlu0 %v740, 96
    %v744 = vpop.permute.xlu0 %743
    %v746 = vmul.f32 %v741, %v744
    %v747 = vrot.slane %v641, 6
    %v749 = vmul.f32 %v727, %v747
    %v750 = vadd.f32 %v746, %v749
    %v752 = vrot.slane %v750, 6
    %753 = vrot.lane.b32.xlu0 %v752, 96
    %v754 = vpop.permute.xlu0 %753
    %v755 = vsel %vm230, %v754, 0
    %757 = vmatprep.subr.mxu0 0.0
    %758 = vmatpush1.msra.mxu0 0.0
    %759 = vmatprep.subr.mxu0 0.0
    %760 = vmatpush1.msra.mxu0 0.0
    %761 = vmatprep.subr.mxu0 0.0
    %762 = vmatpush1.msra.mxu0 0.0
    %763 = vmatprep.subr.mxu0 0.0
    %764 = vmatpush1.msra.mxu0 0.0
    %765 = vmatprep.subr.mxu0 0.0
    %766 = vmatpush1.msra.mxu0 0.0
    %767 = vmatprep.subr.mxu0 0.0
    %768 = vmatpush1.msra.mxu0 0.0
    %769 = vmatprep.subr.mxu0 0.0
    %770 = vmatpush1.msra.mxu0 0.0
    %771 = vmatprep.subr.mxu0 0.0
    %772 = vmatpush1.msra.mxu0 0.0
    %773 = vmatprep.subr.mxu0 0.0
    %774 = vmatpush1.msra.mxu0 0.0
    %775 = vmatprep.subr.mxu0 0.0
    %776 = vmatpush1.msra.mxu0 0.0
    %777 = vmatprep.subr.mxu0 0.0
    %778 = vmatpush1.msra.mxu0 0.0
    %779 = vmatprep.subr.mxu0 0.0
    %780 = vmatpush1.msra.mxu0 0.0
    %781 = vmatprep.subr.mxu0 0.0
    %782 = vmatpush1.msra.mxu0 %v315
    %783 = vmatprep.subr.mxu0 0.0
    %784 = vmatpush1.msra.mxu0 %v314
    %785 = vmatprep.subr.mxu0 0.0
    %786 = vmatpush1.msra.mxu0 %v313
    %787 = vmatprep.subr.mxu0 0.0
    %788 = vmatpush1.msra.mxu0 %v312
    %789 = vmatprep.subr.mxu0 0.0
    %790 = vmatpush2.msra.mxu0 0.0
    %791 = vmatprep.subr.mxu0 0.0
    %792 = vmatpush2.msra.mxu0 0.0
    %793 = vmatprep.subr.mxu0 0.0
    %794 = vmatpush2.msra.mxu0 0.0
    %795 = vmatprep.subr.mxu0 0.0
    %796 = vmatpush2.msra.mxu0 0.0
    %797 = vmatprep.subr.mxu0 0.0
    %798 = vmatpush2.msra.mxu0 0.0
    %799 = vmatprep.subr.mxu0 0.0
    %800 = vmatpush2.msra.mxu0 0.0
    %801 = vmatprep.subr.mxu0 0.0
    %802 = vmatpush2.msra.mxu0 0.0
    %803 = vmatprep.subr.mxu0 0.0
    %804 = vmatpush2.msra.mxu0 0.0
    %805 = vmatprep.subr.mxu0 0.0
    %806 = vmatpush2.msra.mxu0 0.0
    %807 = vmatprep.subr.mxu0 0.0
    %808 = vmatpush2.msra.mxu0 0.0
    %809 = vmatprep.subr.mxu0 0.0
    %810 = vmatpush2.msra.mxu0 0.0
    %811 = vmatprep.subr.mxu0 0.0
    %812 = vmatpush2.msra.mxu0 0.0
    %813 = vmatprep.subr.mxu0 0.0
    %814 = vmatpush2.msra.mxu0 0.0
    %815 = vmatprep.subr.mxu0 0.0
    %816 = vmatpush2.msra.mxu0 0.0
    %817 = vmatprep.subr.mxu0 0.0
    %818 = vmatpush2.msra.mxu0 0.0
    %819 = vmatprep.subr.mxu0 0.0
    %820 = vmatpush2.msra.mxu0 0.0
    %821 = vmatprep.mubr.f32.mxu0 0.0
    %822 = vmatmul.mubr.f32.gmra.mxu0 %v755
    %v823 = vpop.f32.mrf.mxu0
    %v824 = vadd.f32 0.0, %v823
    %v825 = vpop.f32.mrf.mxu0
    %826 = vdwg.mxu0
    %v827 = vadd.f32 %v309, %v824
    %v828 = vxor.u32 %v827, 2147483648
    %v829 = vmul.f32 %v828, 1.442695
    %v830 = vpow.pop %v829
    %v831 = vadd.f32 %v830, 1.0
    %v832 = vrcp.pop %v831
    %v833 = vmul.f32 1.0, %v832
    %v834 = vadd.f32 %v824, %v403
    %836 = vrot.lane.b32.xlu0 %v834, 64
    %v837 = vpop.permute.xlu0 %836
    %v839 = vmul.f32 %v833, %v837
    %841 = vrot.lane.b32.xlu0 %v839, 64
    %v842 = vpop.permute.xlu0 %841
    %v844 = vadd.f32 %v309, %v842
    %v845 = vtanh.pop %v844
    %v846 = vsub.f32 1.0, %v833
    %848 = vrot.lane.b32.xlu0 %v845, 96
    %v849 = vpop.permute.xlu0 %848
    %v851 = vmul.f32 %v846, %v849
    %v853 = vmul.f32 %v833, %v752
    %v854 = vadd.f32 %v851, %v853
    %856 = vrot.lane.b32.xlu0 %v854, 96
    %v857 = vpop.permute.xlu0 %856
    %v858 = vsel %vm230, %v857, 0
    %860 = vmatprep.subr.mxu0 0.0
    %861 = vmatpush1.msra.mxu0 0.0
    %862 = vmatprep.subr.mxu0 0.0
    %863 = vmatpush1.msra.mxu0 0.0
    %864 = vmatprep.subr.mxu0 0.0
    %865 = vmatpush1.msra.mxu0 0.0
    %866 = vmatprep.subr.mxu0 0.0
    %867 = vmatpush1.msra.mxu0 0.0
    %868 = vmatprep.subr.mxu0 0.0
    %869 = vmatpush1.msra.mxu0 0.0
    %870 = vmatprep.subr.mxu0 0.0
    %871 = vmatpush1.msra.mxu0 0.0
    %872 = vmatprep.subr.mxu0 0.0
    %873 = vmatpush1.msra.mxu0 0.0
    %874 = vmatprep.subr.mxu0 0.0
    %875 = vmatpush1.msra.mxu0 0.0
    %876 = vmatprep.subr.mxu0 0.0
    %877 = vmatpush1.msra.mxu0 0.0
    %878 = vmatprep.subr.mxu0 0.0
    %879 = vmatpush1.msra.mxu0 0.0
    %880 = vmatprep.subr.mxu0 0.0
    %881 = vmatpush1.msra.mxu0 0.0
    %882 = vmatprep.subr.mxu0 0.0
    %883 = vmatpush1.msra.mxu0 0.0
    %884 = vmatprep.subr.mxu0 0.0
    %885 = vmatpush1.msra.mxu0 %v315
    %886 = vmatprep.subr.mxu0 0.0
    %887 = vmatpush1.msra.mxu0 %v314
    %888 = vmatprep.subr.mxu0 0.0
    %889 = vmatpush1.msra.mxu0 %v313
    %890 = vmatprep.subr.mxu0 0.0
    %891 = vmatpush1.msra.mxu0 %v312
    %892 = vmatprep.subr.mxu0 0.0
    %893 = vmatpush2.msra.mxu0 0.0
    %894 = vmatprep.subr.mxu0 0.0
    %895 = vmatpush2.msra.mxu0 0.0
    %896 = vmatprep.subr.mxu0 0.0
    %897 = vmatpush2.msra.mxu0 0.0
    %898 = vmatprep.subr.mxu0 0.0
    %899 = vmatpush2.msra.mxu0 0.0
    %900 = vmatprep.subr.mxu0 0.0
    %901 = vmatpush2.msra.mxu0 0.0
    %902 = vmatprep.subr.mxu0 0.0
    %903 = vmatpush2.msra.mxu0 0.0
    %904 = vmatprep.subr.mxu0 0.0
    %905 = vmatpush2.msra.mxu0 0.0
    %906 = vmatprep.subr.mxu0 0.0
    %907 = vmatpush2.msra.mxu0 0.0
    %908 = vmatprep.subr.mxu0 0.0
    %909 = vmatpush2.msra.mxu0 0.0
    %910 = vmatprep.subr.mxu0 0.0
    %911 = vmatpush2.msra.mxu0 0.0
    %912 = vmatprep.subr.mxu0 0.0
    %913 = vmatpush2.msra.mxu0 0.0
    %914 = vmatprep.subr.mxu0 0.0
    %915 = vmatpush2.msra.mxu0 0.0
    %916 = vmatprep.subr.mxu0 0.0
    %917 = vmatpush2.msra.mxu0 0.0
    %918 = vmatprep.subr.mxu0 0.0
    %919 = vmatpush2.msra.mxu0 0.0
    %920 = vmatprep.subr.mxu0 0.0
    %921 = vmatpush2.msra.mxu0 0.0
    %922 = vmatprep.subr.mxu0 0.0
    %923 = vmatpush2.msra.mxu0 0.0
    %924 = vmatprep.mubr.f32.mxu0 0.0
    %925 = vmatmul.mubr.f32.gmra.mxu0 %v858
    %v926 = vpop.f32.mrf.mxu0
    %v927 = vadd.f32 0.0, %v926
    %v928 = vpop.f32.mrf.mxu0
    %929 = vdwg.mxu0
    %v931 = vrot.slane %v927, 6
    %v933 = vadd.f32 %v309, %v931
    %v934 = vxor.u32 %v933, 2147483648
    %v935 = vmul.f32 %v934, 1.442695
    %v936 = vpow.pop %v935
    %v937 = vadd.f32 %v936, 1.0
    %v938 = vrcp.pop %v937
    %v939 = vmul.f32 1.0, %v938
    %v940 = vadd.f32 %v927, %v403
    %v942 = vrot.slane %v940, 6
    %943 = vrot.lane.b32.xlu0 %v942, 64
    %v944 = vpop.permute.xlu0 %943
    %v946 = vmul.f32 %v939, %v944
    %948 = vrot.lane.b32.xlu0 %v946, 64
    %v949 = vpop.permute.xlu0 %948
    %v951 = vadd.f32 %v309, %v949
    %v952 = vtanh.pop %v951
    %v953 = vsub.f32 1.0, %v939
    %955 = vrot.lane.b32.xlu0 %v952, 96
    %v956 = vpop.permute.xlu0 %955
    %v958 = vmul.f32 %v953, %v956
    %v959 = vrot.slane %v854, 6
    %v961 = vmul.f32 %v939, %v959
    %v962 = vadd.f32 %v958, %v961
    %v964 = vrot.slane %v962, 2
    %965 = vrot.lane.b32.xlu0 %v964, 96
    %v966 = vpop.permute.xlu0 %965
    %v967 = vsel %vm230, %v966, 0
    %969 = vmatprep.subr.mxu0 0.0
    %970 = vmatpush1.msra.mxu0 0.0
    %971 = vmatprep.subr.mxu0 0.0
    %972 = vmatpush1.msra.mxu0 0.0
    %973 = vmatprep.subr.mxu0 0.0
    %974 = vmatpush1.msra.mxu0 0.0
    %975 = vmatprep.subr.mxu0 0.0
    %976 = vmatpush1.msra.mxu0 0.0
    %977 = vmatprep.subr.mxu0 0.0
    %978 = vmatpush1.msra.mxu0 0.0
    %979 = vmatprep.subr.mxu0 0.0
    %980 = vmatpush1.msra.mxu0 0.0
    %981 = vmatprep.subr.mxu0 0.0
    %982 = vmatpush1.msra.mxu0 0.0
    %983 = vmatprep.subr.mxu0 0.0
    %984 = vmatpush1.msra.mxu0 0.0
    %985 = vmatprep.subr.mxu0 0.0
    %986 = vmatpush1.msra.mxu0 0.0
    %987 = vmatprep.subr.mxu0 0.0
    %988 = vmatpush1.msra.mxu0 0.0
    %989 = vmatprep.subr.mxu0 0.0
    %990 = vmatpush1.msra.mxu0 0.0
    %991 = vmatprep.subr.mxu0 0.0
    %992 = vmatpush1.msra.mxu0 0.0
    %993 = vmatprep.subr.mxu0 0.0
    %994 = vmatpush1.msra.mxu0 %v315
    %995 = vmatprep.subr.mxu0 0.0
    %996 = vmatpush1.msra.mxu0 %v314
    %997 = vmatprep.subr.mxu0 0.0
    %998 = vmatpush1.msra.mxu0 %v313
    %999 = vmatprep.subr.mxu0 0.0
    %1000 = vmatpush1.msra.mxu0 %v312
    %1001 = vmatprep.subr.mxu0 0.0
    %1002 = vmatpush2.msra.mxu0 0.0
    %1003 = vmatprep.subr.mxu0 0.0
    %1004 = vmatpush2.msra.mxu0 0.0
    %1005 = vmatprep.subr.mxu0 0.0
    %1006 = vmatpush2.msra.mxu0 0.0
    %1007 = vmatprep.subr.mxu0 0.0
    %1008 = vmatpush2.msra.mxu0 0.0
    %1009 = vmatprep.subr.mxu0 0.0
    %1010 = vmatpush2.msra.mxu0 0.0
    %1011 = vmatprep.subr.mxu0 0.0
    %1012 = vmatpush2.msra.mxu0 0.0
    %1013 = vmatprep.subr.mxu0 0.0
    %1014 = vmatpush2.msra.mxu0 0.0
    %1015 = vmatprep.subr.mxu0 0.0
    %1016 = vmatpush2.msra.mxu0 0.0
    %1017 = vmatprep.subr.mxu0 0.0
    %1018 = vmatpush2.msra.mxu0 0.0
    %1019 = vmatprep.subr.mxu0 0.0
    %1020 = vmatpush2.msra.mxu0 0.0
    %1021 = vmatprep.subr.mxu0 0.0
    %1022 = vmatpush2.msra.mxu0 0.0
    %1023 = vmatprep.subr.mxu0 0.0
    %1024 = vmatpush2.msra.mxu0 0.0
    %1025 = vmatprep.subr.mxu0 0.0
    %1026 = vmatpush2.msra.mxu0 0.0
    %1027 = vmatprep.subr.mxu0 0.0
    %1028 = vmatpush2.msra.mxu0 0.0
    %1029 = vmatprep.subr.mxu0 0.0
    %1030 = vmatpush2.msra.mxu0 0.0
    %1031 = vmatprep.subr.mxu0 0.0
    %1032 = vmatpush2.msra.mxu0 0.0
    %1033 = vmatprep.mubr.f32.mxu0 0.0
    %1034 = vmatmul.mubr.f32.gmra.mxu0 %v967
    %v1035 = vpop.f32.mrf.mxu0
    %v1036 = vadd.f32 0.0, %v1035
    %v1037 = vpop.f32.mrf.mxu0
    %1038 = vdwg.mxu0
    %v1040 = vrot.slane %v1036, 4
    %v1042 = vadd.f32 %v309, %v1040
    %v1043 = vxor.u32 %v1042, 2147483648
    %v1044 = vmul.f32 %v1043, 1.442695
    %v1045 = vpow.pop %v1044
    %v1046 = vadd.f32 %v1045, 1.0
    %v1047 = vrcp.pop %v1046
    %v1048 = vmul.f32 1.0, %v1047
    %v1049 = vadd.f32 %v1036, %v403
    %v1051 = vrot.slane %v1049, 4
    %1052 = vrot.lane.b32.xlu0 %v1051, 64
    %v1053 = vpop.permute.xlu0 %1052
    %v1055 = vmul.f32 %v1048, %v1053
    %1057 = vrot.lane.b32.xlu0 %v1055, 64
    %v1058 = vpop.permute.xlu0 %1057
    %v1060 = vadd.f32 %v309, %v1058
    %v1061 = vtanh.pop %v1060
    %v1062 = vsub.f32 1.0, %v1048
    %1064 = vrot.lane.b32.xlu0 %v1061, 96
    %v1065 = vpop.permute.xlu0 %1064
    %v1067 = vmul.f32 %v1062, %v1065
    %v1068 = vrot.slane %v962, 6
    %v1070 = vmul.f32 %v1048, %v1068
    %v1071 = vadd.f32 %v1067, %v1070
    %v1073 = vrot.slane %v1071, 4
    %1074 = vrot.lane.b32.xlu0 %v1073, 96
    %v1075 = vpop.permute.xlu0 %1074
    %v1076 = vsel %vm230, %v1075, 0
    %1078 = vmatprep.subr.mxu0 0.0
    %1079 = vmatpush1.msra.mxu0 0.0
    %1080 = vmatprep.subr.mxu0 0.0
    %1081 = vmatpush1.msra.mxu0 0.0
    %1082 = vmatprep.subr.mxu0 0.0
    %1083 = vmatpush1.msra.mxu0 0.0
    %1084 = vmatprep.subr.mxu0 0.0
    %1085 = vmatpush1.msra.mxu0 0.0
    %1086 = vmatprep.subr.mxu0 0.0
    %1087 = vmatpush1.msra.mxu0 0.0
    %1088 = vmatprep.subr.mxu0 0.0
    %1089 = vmatpush1.msra.mxu0 0.0
    %1090 = vmatprep.subr.mxu0 0.0
    %1091 = vmatpush1.msra.mxu0 0.0
    %1092 = vmatprep.subr.mxu0 0.0
    %1093 = vmatpush1.msra.mxu0 0.0
    %1094 = vmatprep.subr.mxu0 0.0
    %1095 = vmatpush1.msra.mxu0 0.0
    %1096 = vmatprep.subr.mxu0 0.0
    %1097 = vmatpush1.msra.mxu0 0.0
    %1098 = vmatprep.subr.mxu0 0.0
    %1099 = vmatpush1.msra.mxu0 0.0
    %1100 = vmatprep.subr.mxu0 0.0
    %1101 = vmatpush1.msra.mxu0 0.0
    %1102 = vmatprep.subr.mxu0 0.0
    %1103 = vmatpush1.msra.mxu0 %v315
    %1104 = vmatprep.subr.mxu0 0.0
    %1105 = vmatpush1.msra.mxu0 %v314
    %1106 = vmatprep.subr.mxu0 0.0
    %1107 = vmatpush1.msra.mxu0 %v313
    %1108 = vmatprep.subr.mxu0 0.0
    %1109 = vmatpush1.msra.mxu0 %v312
    %1110 = vmatprep.subr.mxu0 0.0
    %1111 = vmatpush2.msra.mxu0 0.0
    %1112 = vmatprep.subr.mxu0 0.0
    %1113 = vmatpush2.msra.mxu0 0.0
    %1114 = vmatprep.subr.mxu0 0.0
    %1115 = vmatpush2.msra.mxu0 0.0
    %1116 = vmatprep.subr.mxu0 0.0
    %1117 = vmatpush2.msra.mxu0 0.0
    %1118 = vmatprep.subr.mxu0 0.0
    %1119 = vmatpush2.msra.mxu0 0.0
    %1120 = vmatprep.subr.mxu0 0.0
    %1121 = vmatpush2.msra.mxu0 0.0
    %1122 = vmatprep.subr.mxu0 0.0
    %1123 = vmatpush2.msra.mxu0 0.0
    %1124 = vmatprep.subr.mxu0 0.0
    %1125 = vmatpush2.msra.mxu0 0.0
    %1126 = vmatprep.subr.mxu0 0.0
    %1127 = vmatpush2.msra.mxu0 0.0
    %1128 = vmatprep.subr.mxu0 0.0
    %1129 = vmatpush2.msra.mxu0 0.0
    %1130 = vmatprep.subr.mxu0 0.0
    %1131 = vmatpush2.msra.mxu0 0.0
    %1132 = vmatprep.subr.mxu0 0.0
    %1133 = vmatpush2.msra.mxu0 0.0
    %1134 = vmatprep.subr.mxu0 0.0
    %1135 = vmatpush2.msra.mxu0 0.0
    %1136 = vmatprep.subr.mxu0 0.0
    %1137 = vmatpush2.msra.mxu0 0.0
    %1138 = vmatprep.subr.mxu0 0.0
    %1139 = vmatpush2.msra.mxu0 0.0
    %1140 = vmatprep.subr.mxu0 0.0
    %1141 = vmatpush2.msra.mxu0 0.0
    %1142 = vmatprep.mubr.f32.mxu0 0.0
    %1143 = vmatmul.mubr.f32.gmra.mxu0 %v1076
    %v1144 = vpop.f32.mrf.mxu0
    %v1145 = vadd.f32 0.0, %v1144
    %v1146 = vpop.f32.mrf.mxu0
    %1147 = vdwg.mxu0
    %v1149 = vrot.slane %v1145, 2
    %v1151 = vadd.f32 %v309, %v1149
    %v1152 = vxor.u32 %v1151, 2147483648
    %v1153 = vmul.f32 %v1152, 1.442695
    %v1154 = vpow.pop %v1153
    %v1155 = vadd.f32 %v1154, 1.0
    %v1156 = vrcp.pop %v1155
    %v1157 = vmul.f32 1.0, %v1156
    %v1158 = vadd.f32 %v1145, %v403
    %v1160 = vrot.slane %v1158, 2
    %1161 = vrot.lane.b32.xlu0 %v1160, 64
    %v1162 = vpop.permute.xlu0 %1161
    %v1164 = vmul.f32 %v1157, %v1162
    %1166 = vrot.lane.b32.xlu0 %v1164, 64
    %v1167 = vpop.permute.xlu0 %1166
    %v1169 = vadd.f32 %v309, %v1167
    %v1170 = vtanh.pop %v1169
    %v1171 = vsub.f32 1.0, %v1157
    %1173 = vrot.lane.b32.xlu0 %v1170, 96
    %v1174 = vpop.permute.xlu0 %1173
    %v1176 = vmul.f32 %v1171, %v1174
    %v1177 = vrot.slane %v1071, 6
    %v1179 = vmul.f32 %v1157, %v1177
    %v1180 = vadd.f32 %v1176, %v1179
    %v1181 = vsel %vm140, %v424, %v532
    %vm1182 = vcmask 1043456
    %v1183 = vsel %vm1182, %v1181, %v641
    %vm1184 = vcmask 1045504
    %v1185 = vsel %vm1184, %v1183, %v750
    %v1186 = vsel %vm140, %v854, %v962
    %v1187 = vsel %vm1182, %v1186, %v1071
    %v1188 = vsel %vm1184, %v1187, %v1180
    %v1189 = vld [vmem:[%s6] sm:$0xff]
    %v1190 = vld [vmem:[%s6 + $0x8] sm:$0xff]
    %v1191 = vld [vmem:[%s6 + $0x10] sm:$0xff]
    %v1192 = vld [vmem:[%s6 + $0x18] sm:$0xff]
    %v1193 = vld [vmem:[%s8] sm:$0x1]
    %v1195 = vlaneseq
    %v1196 = vshrl.u32 %v1195, 7
    %v1197 = vsub.s32 0, %v1196
    %v1198 = vrot.slane %v1193, %v1197
    %1202 = vrot.lane.b32.xlu0 %v1185, 96
    %v1203 = vpop.permute.xlu0 %1202
    %1204 = vrot.lane.b32.xlu0 %v1188, 96
    %v1205 = vpop.permute.xlu0 %1204
    %v1206 = vsel %vm230, %v1203, 0
    %v1208 = vsel %vm230, %v1205, 0
    %1210 = vmatprep.subr.mxu0 0.0
    %1211 = vmatpush1.msra.mxu0 0.0
    %1212 = vmatprep.subr.mxu0 0.0
    %1213 = vmatpush1.msra.mxu0 0.0
    %1214 = vmatprep.subr.mxu0 0.0
    %1215 = vmatpush1.msra.mxu0 0.0
    %1216 = vmatprep.subr.mxu0 0.0
    %1217 = vmatpush1.msra.mxu0 0.0
    %1218 = vmatprep.subr.mxu0 0.0
    %1219 = vmatpush1.msra.mxu0 0.0
    %1220 = vmatprep.subr.mxu0 0.0
    %1221 = vmatpush1.msra.mxu0 0.0
    %1222 = vmatprep.subr.mxu0 0.0
    %1223 = vmatpush1.msra.mxu0 0.0
    %1224 = vmatprep.subr.mxu0 0.0
    %1225 = vmatpush1.msra.mxu0 0.0
    %1226 = vmatprep.subr.mxu0 0.0
    %1227 = vmatpush1.msra.mxu0 0.0
    %1228 = vmatprep.subr.mxu0 0.0
    %1229 = vmatpush1.msra.mxu0 0.0
    %1230 = vmatprep.subr.mxu0 0.0
    %1231 = vmatpush1.msra.mxu0 0.0
    %1232 = vmatprep.subr.mxu0 0.0
    %1233 = vmatpush1.msra.mxu0 0.0
    %1234 = vmatprep.subr.mxu0 0.0
    %1235 = vmatpush1.msra.mxu0 %v1192
    %1236 = vmatprep.subr.mxu0 0.0
    %1237 = vmatpush1.msra.mxu0 %v1191
    %1238 = vmatprep.subr.mxu0 0.0
    %1239 = vmatpush1.msra.mxu0 %v1190
    %1240 = vmatprep.subr.mxu0 0.0
    %1241 = vmatpush1.msra.mxu0 %v1189
    %1242 = vmatprep.subr.mxu0 0.0
    %1243 = vmatpush2.msra.mxu0 0.0
    %1244 = vmatprep.subr.mxu0 0.0
    %1245 = vmatpush2.msra.mxu0 0.0
    %1246 = vmatprep.subr.mxu0 0.0
    %1247 = vmatpush2.msra.mxu0 0.0
    %1248 = vmatprep.subr.mxu0 0.0
    %1249 = vmatpush2.msra.mxu0 0.0
    %1250 = vmatprep.subr.mxu0 0.0
    %1251 = vmatpush2.msra.mxu0 0.0
    %1252 = vmatprep.subr.mxu0 0.0
    %1253 = vmatpush2.msra.mxu0 0.0
    %1254 = vmatprep.subr.mxu0 0.0
    %1255 = vmatpush2.msra.mxu0 0.0
    %1256 = vmatprep.subr.mxu0 0.0
    %1257 = vmatpush2.msra.mxu0 0.0
    %1258 = vmatprep.subr.mxu0 0.0
    %1259 = vmatpush2.msra.mxu0 0.0
    %1260 = vmatprep.subr.mxu0 0.0
    %1261 = vmatpush2.msra.mxu0 0.0
    %1262 = vmatprep.subr.mxu0 0.0
    %1263 = vmatpush2.msra.mxu0 0.0
    %1264 = vmatprep.subr.mxu0 0.0
    %1265 = vmatpush2.msra.mxu0 0.0
    %1266 = vmatprep.subr.mxu0 0.0
    %1267 = vmatpush2.msra.mxu0 0.0
    %1268 = vmatprep.subr.mxu0 0.0
    %1269 = vmatpush2.msra.mxu0 0.0
    %1270 = vmatprep.subr.mxu0 0.0
    %1271 = vmatpush2.msra.mxu0 0.0
    %1272 = vmatprep.subr.mxu0 0.0
    %1273 = vmatpush2.msra.mxu0 0.0
    %1274 = vmatprep.mubr.f32.mxu0 0.0
    %1275 = vmatmul.mubr.f32.gmra.mxu0 %v1206
    %v1276 = vpop.f32.mrf.mxu0
    %v1277 = vadd.f32 %v1198, %v1276
    %v1278 = vpop.f32.mrf.mxu0
    %1279 = vmatprep.mubr.f32.mxu0 0.0
    %1280 = vmatmul.mubr.f32.gmra.mxu0 %v1208
    %v1281 = vpop.f32.mrf.mxu0
    %v1282 = vadd.f32 %v1198, %v1281
    %v1283 = vpop.f32.mrf.mxu0
    %1284 = vdwg.mxu0
    %v1285 = vld [vmem:[%s7] sm:$0xff]
    %v1286 = vld [vmem:[%s7 + $0x8] sm:$0xff]
    %v1287 = vld [vmem:[%s7 + $0x10] sm:$0xff]
    %v1288 = vld [vmem:[%s7 + $0x18] sm:$0xff]
    %v1289 = vld [vmem:[%s9] sm:$0x1]
    %1290 = vmatprep.subr.mxu0 0.0
    %1291 = vmatpush1.msra.mxu0 0.0
    %1292 = vmatprep.subr.mxu0 0.0
    %1293 = vmatpush1.msra.mxu0 0.0
    %1294 = vmatprep.subr.mxu0 0.0
    %1295 = vmatpush1.msra.mxu0 0.0
    %1296 = vmatprep.subr.mxu0 0.0
    %1297 = vmatpush1.msra.mxu0 0.0
    %1298 = vmatprep.subr.mxu0 0.0
    %1299 = vmatpush1.msra.mxu0 0.0
    %1300 = vmatprep.subr.mxu0 0.0
    %1301 = vmatpush1.msra.mxu0 0.0
    %1302 = vmatprep.subr.mxu0 0.0
    %1303 = vmatpush1.msra.mxu0 0.0
    %1304 = vmatprep.subr.mxu0 0.0
    %1305 = vmatpush1.msra.mxu0 0.0
    %1306 = vmatprep.subr.mxu0 0.0
    %1307 = vmatpush1.msra.mxu0 0.0
    %1308 = vmatprep.subr.mxu0 0.0
    %1309 = vmatpush1.msra.mxu0 0.0
    %1310 = vmatprep.subr.mxu0 0.0
    %1311 = vmatpush1.msra.mxu0 0.0
    %1312 = vmatprep.subr.mxu0 0.0
    %1313 = vmatpush1.msra.mxu0 0.0
    %1314 = vmatprep.subr.mxu0 0.0
    %1315 = vmatpush1.msra.mxu0 %v1288
    %1316 = vmatprep.subr.mxu0 0.0
    %1317 = vmatpush1.msra.mxu0 %v1287
    %1318 = vmatprep.subr.mxu0 0.0
    %1319 = vmatpush1.msra.mxu0 %v1286
    %1320 = vmatprep.subr.mxu0 0.0
    %1321 = vmatpush1.msra.mxu0 %v1285
    %1322 = vmatprep.subr.mxu0 0.0
    %1323 = vmatpush2.msra.mxu0 0.0
    %1324 = vmatprep.subr.mxu0 0.0
    %1325 = vmatpush2.msra.mxu0 0.0
    %1326 = vmatprep.subr.mxu0 0.0
    %1327 = vmatpush2.msra.mxu0 0.0
    %1328 = vmatprep.subr.mxu0 0.0
    %1329 = vmatpush2.msra.mxu0 0.0
    %1330 = vmatprep.subr.mxu0 0.0
    %1331 = vmatpush2.msra.mxu0 0.0
    %1332 = vmatprep.subr.mxu0 0.0
    %1333 = vmatpush2.msra.mxu0 0.0
    %1334 = vmatprep.subr.mxu0 0.0
    %1335 = vmatpush2.msra.mxu0 0.0
    %1336 = vmatprep.subr.mxu0 0.0
    %1337 = vmatpush2.msra.mxu0 0.0
    %1338 = vmatprep.subr.mxu0 0.0
    %1339 = vmatpush2.msra.mxu0 0.0
    %1340 = vmatprep.subr.mxu0 0.0
    %1341 = vmatpush2.msra.mxu0 0.0
    %1342 = vmatprep.subr.mxu0 0.0
    %1343 = vmatpush2.msra.mxu0 0.0
    %1344 = vmatprep.subr.mxu0 0.0
    %1345 = vmatpush2.msra.mxu0 0.0
    %1346 = vmatprep.subr.mxu0 0.0
    %1347 = vmatpush2.msra.mxu0 0.0
    %1348 = vmatprep.subr.mxu0 0.0
    %1349 = vmatpush2.msra.mxu0 0.0
    %1350 = vmatprep.subr.mxu0 0.0
    %1351 = vmatpush2.msra.mxu0 0.0
    %1352 = vmatprep.subr.mxu0 0.0
    %1353 = vmatpush2.msra.mxu0 0.0
    %1354 = vmatprep.mubr.f32.mxu0 0.0
    %1355 = vmatmul.mubr.f32.gmra.mxu0 %v318
    %v1356 = vpop.f32.mrf.mxu0
    %v1357 = vadd.f32 0.0, %v1356
    %v1358 = vpop.f32.mrf.mxu0
    %1359 = vdwg.mxu0
    %v1360 = vadd.f32 %v1277, %v1357
    %v1361 = vxor.u32 %v1360, 2147483648
    %v1362 = vmul.f32 %v1361, 1.442695
    %v1363 = vpow.pop %v1362
    %v1364 = vadd.f32 %v1363, 1.0
    %v1365 = vrcp.pop %v1364
    %v1366 = vmul.f32 1.0, %v1365
    %v1368 = vlaneseq
    %v1369 = vshrl.u32 %v1368, 7
    %v1370 = vsub.s32 0, %v1369
    %v1371 = vrot.slane %v1289, %v1370
    %1372 = vrot.lane.b32.xlu0 %v1371, 64
    %v1373 = vpop.permute.xlu0 %1372
    %v1375 = vadd.f32 %v1357, %v1373
    %1377 = vrot.lane.b32.xlu0 %v1375, 64
    %v1378 = vpop.permute.xlu0 %1377
    %v1380 = vmul.f32 %v1366, %v1378
    %1382 = vrot.lane.b32.xlu0 %v1380, 64
    %v1383 = vpop.permute.xlu0 %1382
    %v1385 = vadd.f32 %v1277, %v1383
    %v1386 = vtanh.pop %v1385
    %v1387 = vsub.f32 1.0, %v1366
    %1389 = vrot.lane.b32.xlu0 %v1386, 96
    %v1390 = vpop.permute.xlu0 %1389
    %v1392 = vmul.f32 %v1387, %v1390
    %v1393 = vmul.f32 %v1366, 0.0
    %v1394 = vadd.f32 %v1392, %v1393
    %1396 = vrot.lane.b32.xlu0 %v1394, 96
    %v1397 = vpop.permute.xlu0 %1396
    %v1398 = vsel %vm230, %v1397, 0
    %1400 = vmatprep.subr.mxu0 0.0
    %1401 = vmatpush1.msra.mxu0 0.0
    %1402 = vmatprep.subr.mxu0 0.0
    %1403 = vmatpush1.msra.mxu0 0.0
    %1404 = vmatprep.subr.mxu0 0.0
    %1405 = vmatpush1.msra.mxu0 0.0
    %1406 = vmatprep.subr.mxu0 0.0
    %1407 = vmatpush1.msra.mxu0 0.0
    %1408 = vmatprep.subr.mxu0 0.0
    %1409 = vmatpush1.msra.mxu0 0.0
    %1410 = vmatprep.subr.mxu0 0.0
    %1411 = vmatpush1.msra.mxu0 0.0
    %1412 = vmatprep.subr.mxu0 0.0
    %1413 = vmatpush1.msra.mxu0 0.0
    %1414 = vmatprep.subr.mxu0 0.0
    %1415 = vmatpush1.msra.mxu0 0.0
    %1416 = vmatprep.subr.mxu0 0.0
    %1417 = vmatpush1.msra.mxu0 0.0
    %1418 = vmatprep.subr.mxu0 0.0
    %1419 = vmatpush1.msra.mxu0 0.0
    %1420 = vmatprep.subr.mxu0 0.0
    %1421 = vmatpush1.msra.mxu0 0.0
    %1422 = vmatprep.subr.mxu0 0.0
    %1423 = vmatpush1.msra.mxu0 0.0
    %1424 = vmatprep.subr.mxu0 0.0
    %1425 = vmatpush1.msra.mxu0 %v1288
    %1426 = vmatprep.subr.mxu0 0.0
    %1427 = vmatpush1.msra.mxu0 %v1287
    %1428 = vmatprep.subr.mxu0 0.0
    %1429 = vmatpush1.msra.mxu0 %v1286
    %1430 = vmatprep.subr.mxu0 0.0
    %1431 = vmatpush1.msra.mxu0 %v1285
    %1432 = vmatprep.subr.mxu0 0.0
    %1433 = vmatpush2.msra.mxu0 0.0
    %1434 = vmatprep.subr.mxu0 0.0
    %1435 = vmatpush2.msra.mxu0 0.0
    %1436 = vmatprep.subr.mxu0 0.0
    %1437 = vmatpush2.msra.mxu0 0.0
    %1438 = vmatprep.subr.mxu0 0.0
    %1439 = vmatpush2.msra.mxu0 0.0
    %1440 = vmatprep.subr.mxu0 0.0
    %1441 = vmatpush2.msra.mxu0 0.0
    %1442 = vmatprep.subr.mxu0 0.0
    %1443 = vmatpush2.msra.mxu0 0.0
    %1444 = vmatprep.subr.mxu0 0.0
    %1445 = vmatpush2.msra.mxu0 0.0
    %1446 = vmatprep.subr.mxu0 0.0
    %1447 = vmatpush2.msra.mxu0 0.0
    %1448 = vmatprep.subr.mxu0 0.0
    %1449 = vmatpush2.msra.mxu0 0.0
    %1450 = vmatprep.subr.mxu0 0.0
    %1451 = vmatpush2.msra.mxu0 0.0
    %1452 = vmatprep.subr.mxu0 0.0
    %1453 = vmatpush2.msra.mxu0 0.0
    %1454 = vmatprep.subr.mxu0 0.0
    %1455 = vmatpush2.msra.mxu0 0.0
    %1456 = vmatprep.subr.mxu0 0.0
    %1457 = vmatpush2.msra.mxu0 0.0
    %1458 = vmatprep.subr.mxu0 0.0
    %1459 = vmatpush2.msra.mxu0 0.0
    %1460 = vmatprep.subr.mxu0 0.0
    %1461 = vmatpush2.msra.mxu0 0.0
    %1462 = vmatprep.subr.mxu0 0.0
    %1463 = vmatpush2.msra.mxu0 0.0
    %1464 = vmatprep.mubr.f32.mxu0 0.0
    %1465 = vmatmul.mubr.f32.gmra.mxu0 %v1398
    %v1466 = vpop.f32.mrf.mxu0
    %v1467 = vadd.f32 0.0, %v1466
    %v1468 = vpop.f32.mrf.mxu0
    %1469 = vdwg.mxu0
    %v1471 = vrot.slane %v1467, 6
    %v1473 = vadd.f32 %v1277, %v1471
    %v1474 = vxor.u32 %v1473, 2147483648
    %v1475 = vmul.f32 %v1474, 1.442695
    %v1476 = vpow.pop %v1475
    %v1477 = vadd.f32 %v1476, 1.0
    %v1478 = vrcp.pop %v1477
    %v1479 = vmul.f32 1.0, %v1478
    %v1480 = vadd.f32 %v1467, %v1373
    %v1482 = vrot.slane %v1480, 6
    %1483 = vrot.lane.b32.xlu0 %v1482, 64
    %v1484 = vpop.permute.xlu0 %1483
    %v1486 = vmul.f32 %v1479, %v1484
    %1488 = vrot.lane.b32.xlu0 %v1486, 64
    %v1489 = vpop.permute.xlu0 %1488
    %v1491 = vadd.f32 %v1277, %v1489
    %v1492 = vtanh.pop %v1491
    %v1493 = vsub.f32 1.0, %v1479
    %1495 = vrot.lane.b32.xlu0 %v1492, 96
    %v1496 = vpop.permute.xlu0 %1495
    %v1498 = vmul.f32 %v1493, %v1496
    %v1499 = vrot.slane %v1394, 6
    %v1501 = vmul.f32 %v1479, %v1499
    %v1502 = vadd.f32 %v1498, %v1501
    %v1504 = vrot.slane %v1502, 2
    %1505 = vrot.lane.b32.xlu0 %v1504, 96
    %v1506 = vpop.permute.xlu0 %1505
    %v1507 = vsel %vm230, %v1506, 0
    %1509 = vmatprep.subr.mxu0 0.0
    %1510 = vmatpush1.msra.mxu0 0.0
    %1511 = vmatprep.subr.mxu0 0.0
    %1512 = vmatpush1.msra.mxu0 0.0
    %1513 = vmatprep.subr.mxu0 0.0
    %1514 = vmatpush1.msra.mxu0 0.0
    %1515 = vmatprep.subr.mxu0 0.0
    %1516 = vmatpush1.msra.mxu0 0.0
    %1517 = vmatprep.subr.mxu0 0.0
    %1518 = vmatpush1.msra.mxu0 0.0
    %1519 = vmatprep.subr.mxu0 0.0
    %1520 = vmatpush1.msra.mxu0 0.0
    %1521 = vmatprep.subr.mxu0 0.0
    %1522 = vmatpush1.msra.mxu0 0.0
    %1523 = vmatprep.subr.mxu0 0.0
    %1524 = vmatpush1.msra.mxu0 0.0
    %1525 = vmatprep.subr.mxu0 0.0
    %1526 = vmatpush1.msra.mxu0 0.0
    %1527 = vmatprep.subr.mxu0 0.0
    %1528 = vmatpush1.msra.mxu0 0.0
    %1529 = vmatprep.subr.mxu0 0.0
    %1530 = vmatpush1.msra.mxu0 0.0
    %1531 = vmatprep.subr.mxu0 0.0
    %1532 = vmatpush1.msra.mxu0 0.0
    %1533 = vmatprep.subr.mxu0 0.0
    %1534 = vmatpush1.msra.mxu0 %v1288
    %1535 = vmatprep.subr.mxu0 0.0
    %1536 = vmatpush1.msra.mxu0 %v1287
    %1537 = vmatprep.subr.mxu0 0.0
    %1538 = vmatpush1.msra.mxu0 %v1286
    %1539 = vmatprep.subr.mxu0 0.0
    %1540 = vmatpush1.msra.mxu0 %v1285
    %1541 = vmatprep.subr.mxu0 0.0
    %1542 = vmatpush2.msra.mxu0 0.0
    %1543 = vmatprep.subr.mxu0 0.0
    %1544 = vmatpush2.msra.mxu0 0.0
    %1545 = vmatprep.subr.mxu0 0.0
    %1546 = vmatpush2.msra.mxu0 0.0
    %1547 = vmatprep.subr.mxu0 0.0
    %1548 = vmatpush2.msra.mxu0 0.0
    %1549 = vmatprep.subr.mxu0 0.0
    %1550 = vmatpush2.msra.mxu0 0.0
    %1551 = vmatprep.subr.mxu0 0.0
    %1552 = vmatpush2.msra.mxu0 0.0
    %1553 = vmatprep.subr.mxu0 0.0
    %1554 = vmatpush2.msra.mxu0 0.0
    %1555 = vmatprep.subr.mxu0 0.0
    %1556 = vmatpush2.msra.mxu0 0.0
    %1557 = vmatprep.subr.mxu0 0.0
    %1558 = vmatpush2.msra.mxu0 0.0
    %1559 = vmatprep.subr.mxu0 0.0
    %1560 = vmatpush2.msra.mxu0 0.0
    %1561 = vmatprep.subr.mxu0 0.0
    %1562 = vmatpush2.msra.mxu0 0.0
    %1563 = vmatprep.subr.mxu0 0.0
    %1564 = vmatpush2.msra.mxu0 0.0
    %1565 = vmatprep.subr.mxu0 0.0
    %1566 = vmatpush2.msra.mxu0 0.0
    %1567 = vmatprep.subr.mxu0 0.0
    %1568 = vmatpush2.msra.mxu0 0.0
    %1569 = vmatprep.subr.mxu0 0.0
    %1570 = vmatpush2.msra.mxu0 0.0
    %1571 = vmatprep.subr.mxu0 0.0
    %1572 = vmatpush2.msra.mxu0 0.0
    %1573 = vmatprep.mubr.f32.mxu0 0.0
    %1574 = vmatmul.mubr.f32.gmra.mxu0 %v1507
    %v1575 = vpop.f32.mrf.mxu0
    %v1576 = vadd.f32 0.0, %v1575
    %v1577 = vpop.f32.mrf.mxu0
    %1578 = vdwg.mxu0
    %v1580 = vrot.slane %v1576, 4
    %v1582 = vadd.f32 %v1277, %v1580
    %v1583 = vxor.u32 %v1582, 2147483648
    %v1584 = vmul.f32 %v1583, 1.442695
    %v1585 = vpow.pop %v1584
    %v1586 = vadd.f32 %v1585, 1.0
    %v1587 = vrcp.pop %v1586
    %v1588 = vmul.f32 1.0, %v1587
    %v1589 = vadd.f32 %v1576, %v1373
    %v1591 = vrot.slane %v1589, 4
    %1592 = vrot.lane.b32.xlu0 %v1591, 64
    %v1593 = vpop.permute.xlu0 %1592
    %v1595 = vmul.f32 %v1588, %v1593
    %1597 = vrot.lane.b32.xlu0 %v1595, 64
    %v1598 = vpop.permute.xlu0 %1597
    %v1600 = vadd.f32 %v1277, %v1598
    %v1601 = vtanh.pop %v1600
    %v1602 = vsub.f32 1.0, %v1588
    %1604 = vrot.lane.b32.xlu0 %v1601, 96
    %v1605 = vpop.permute.xlu0 %1604
    %v1607 = vmul.f32 %v1602, %v1605
    %v1608 = vrot.slane %v1502, 6
    %v1610 = vmul.f32 %v1588, %v1608
    %v1611 = vadd.f32 %v1607, %v1610
    %v1613 = vrot.slane %v1611, 4
    %1614 = vrot.lane.b32.xlu0 %v1613, 96
    %v1615 = vpop.permute.xlu0 %1614
    %v1616 = vsel %vm230, %v1615, 0
    %1618 = vmatprep.subr.mxu0 0.0
    %1619 = vmatpush1.msra.mxu0 0.0
    %1620 = vmatprep.subr.mxu0 0.0
    %1621 = vmatpush1.msra.mxu0 0.0
    %1622 = vmatprep.subr.mxu0 0.0
    %1623 = vmatpush1.msra.mxu0 0.0
    %1624 = vmatprep.subr.mxu0 0.0
    %1625 = vmatpush1.msra.mxu0 0.0
    %1626 = vmatprep.subr.mxu0 0.0
    %1627 = vmatpush1.msra.mxu0 0.0
    %1628 = vmatprep.subr.mxu0 0.0
    %1629 = vmatpush1.msra.mxu0 0.0
    %1630 = vmatprep.subr.mxu0 0.0
    %1631 = vmatpush1.msra.mxu0 0.0
    %1632 = vmatprep.subr.mxu0 0.0
    %1633 = vmatpush1.msra.mxu0 0.0
    %1634 = vmatprep.subr.mxu0 0.0
    %1635 = vmatpush1.msra.mxu0 0.0
    %1636 = vmatprep.subr.mxu0 0.0
    %1637 = vmatpush1.msra.mxu0 0.0
    %1638 = vmatprep.subr.mxu0 0.0
    %1639 = vmatpush1.msra.mxu0 0.0
    %1640 = vmatprep.subr.mxu0 0.0
    %1641 = vmatpush1.msra.mxu0 0.0
    %1642 = vmatprep.subr.mxu0 0.0
    %1643 = vmatpush1.msra.mxu0 %v1288
    %1644 = vmatprep.subr.mxu0 0.0
    %1645 = vmatpush1.msra.mxu0 %v1287
    %1646 = vmatprep.subr.mxu0 0.0
    %1647 = vmatpush1.msra.mxu0 %v1286
    %1648 = vmatprep.subr.mxu0 0.0
    %1649 = vmatpush1.msra.mxu0 %v1285
    %1650 = vmatprep.subr.mxu0 0.0
    %1651 = vmatpush2.msra.mxu0 0.0
    %1652 = vmatprep.subr.mxu0 0.0
    %1653 = vmatpush2.msra.mxu0 0.0
    %1654 = vmatprep.subr.mxu0 0.0
    %1655 = vmatpush2.msra.mxu0 0.0
    %1656 = vmatprep.subr.mxu0 0.0
    %1657 = vmatpush2.msra.mxu0 0.0
    %1658 = vmatprep.subr.mxu0 0.0
    %1659 = vmatpush2.msra.mxu0 0.0
    %1660 = vmatprep.subr.mxu0 0.0
    %1661 = vmatpush2.msra.mxu0 0.0
    %1662 = vmatprep.subr.mxu0 0.0
    %1663 = vmatpush2.msra.mxu0 0.0
    %1664 = vmatprep.subr.mxu0 0.0
    %1665 = vmatpush2.msra.mxu0 0.0
    %1666 = vmatprep.subr.mxu0 0.0
    %1667 = vmatpush2.msra.mxu0 0.0
    %1668 = vmatprep.subr.mxu0 0.0
    %1669 = vmatpush2.msra.mxu0 0.0
    %1670 = vmatprep.subr.mxu0 0.0
    %1671 = vmatpush2.msra.mxu0 0.0
    %1672 = vmatprep.subr.mxu0 0.0
    %1673 = vmatpush2.msra.mxu0 0.0
    %1674 = vmatprep.subr.mxu0 0.0
    %1675 = vmatpush2.msra.mxu0 0.0
    %1676 = vmatprep.subr.mxu0 0.0
    %1677 = vmatpush2.msra.mxu0 0.0
    %1678 = vmatprep.subr.mxu0 0.0
    %1679 = vmatpush2.msra.mxu0 0.0
    %1680 = vmatprep.subr.mxu0 0.0
    %1681 = vmatpush2.msra.mxu0 0.0
    %1682 = vmatprep.mubr.f32.mxu0 0.0
    %1683 = vmatmul.mubr.f32.gmra.mxu0 %v1616
    %v1684 = vpop.f32.mrf.mxu0
    %v1685 = vadd.f32 0.0, %v1684
    %v1686 = vpop.f32.mrf.mxu0
    %1687 = vdwg.mxu0
    %v1689 = vrot.slane %v1685, 2
    %v1691 = vadd.f32 %v1277, %v1689
    %v1692 = vxor.u32 %v1691, 2147483648
    %v1693 = vmul.f32 %v1692, 1.442695
    %v1694 = vpow.pop %v1693
    %v1695 = vadd.f32 %v1694, 1.0
    %v1696 = vrcp.pop %v1695
    %v1697 = vmul.f32 1.0, %v1696
    %v1698 = vadd.f32 %v1685, %v1373
    %v1700 = vrot.slane %v1698, 2
    %1701 = vrot.lane.b32.xlu0 %v1700, 64
    %v1702 = vpop.permute.xlu0 %1701
    %v1704 = vmul.f32 %v1697, %v1702
    %1706 = vrot.lane.b32.xlu0 %v1704, 64
    %v1707 = vpop.permute.xlu0 %1706
    %v1709 = vadd.f32 %v1277, %v1707
    %v1710 = vtanh.pop %v1709
    %v1711 = vsub.f32 1.0, %v1697
    %1713 = vrot.lane.b32.xlu0 %v1710, 96
    %v1714 = vpop.permute.xlu0 %1713
    %v1716 = vmul.f32 %v1711, %v1714
    %v1717 = vrot.slane %v1611, 6
    %v1719 = vmul.f32 %v1697, %v1717
    %v1720 = vadd.f32 %v1716, %v1719
    %v1722 = vrot.slane %v1720, 6
    %1723 = vrot.lane.b32.xlu0 %v1722, 96
    %v1724 = vpop.permute.xlu0 %1723
    %v1725 = vsel %vm230, %v1724, 0
    %1727 = vmatprep.subr.mxu0 0.0
    %1728 = vmatpush1.msra.mxu0 0.0
    %1729 = vmatprep.subr.mxu0 0.0
    %1730 = vmatpush1.msra.mxu0 0.0
    %1731 = vmatprep.subr.mxu0 0.0
    %1732 = vmatpush1.msra.mxu0 0.0
    %1733 = vmatprep.subr.mxu0 0.0
    %1734 = vmatpush1.msra.mxu0 0.0
    %1735 = vmatprep.subr.mxu0 0.0
    %1736 = vmatpush1.msra.mxu0 0.0
    %1737 = vmatprep.subr.mxu0 0.0
    %1738 = vmatpush1.msra.mxu0 0.0
    %1739 = vmatprep.subr.mxu0 0.0
    %1740 = vmatpush1.msra.mxu0 0.0
    %1741 = vmatprep.subr.mxu0 0.0
    %1742 = vmatpush1.msra.mxu0 0.0
    %1743 = vmatprep.subr.mxu0 0.0
    %1744 = vmatpush1.msra.mxu0 0.0
    %1745 = vmatprep.subr.mxu0 0.0
    %1746 = vmatpush1.msra.mxu0 0.0
    %1747 = vmatprep.subr.mxu0 0.0
    %1748 = vmatpush1.msra.mxu0 0.0
    %1749 = vmatprep.subr.mxu0 0.0
    %1750 = vmatpush1.msra.mxu0 0.0
    %1751 = vmatprep.subr.mxu0 0.0
    %1752 = vmatpush1.msra.mxu0 %v1288
    %1753 = vmatprep.subr.mxu0 0.0
    %1754 = vmatpush1.msra.mxu0 %v1287
    %1755 = vmatprep.subr.mxu0 0.0
    %1756 = vmatpush1.msra.mxu0 %v1286
    %1757 = vmatprep.subr.mxu0 0.0
    %1758 = vmatpush1.msra.mxu0 %v1285
    %1759 = vmatprep.subr.mxu0 0.0
    %1760 = vmatpush2.msra.mxu0 0.0
    %1761 = vmatprep.subr.mxu0 0.0
    %1762 = vmatpush2.msra.mxu0 0.0
    %1763 = vmatprep.subr.mxu0 0.0
    %1764 = vmatpush2.msra.mxu0 0.0
    %1765 = vmatprep.subr.mxu0 0.0
    %1766 = vmatpush2.msra.mxu0 0.0
    %1767 = vmatprep.subr.mxu0 0.0
    %1768 = vmatpush2.msra.mxu0 0.0
    %1769 = vmatprep.subr.mxu0 0.0
    %1770 = vmatpush2.msra.mxu0 0.0
    %1771 = vmatprep.subr.mxu0 0.0
    %1772 = vmatpush2.msra.mxu0 0.0
    %1773 = vmatprep.subr.mxu0 0.0
    %1774 = vmatpush2.msra.mxu0 0.0
    %1775 = vmatprep.subr.mxu0 0.0
    %1776 = vmatpush2.msra.mxu0 0.0
    %1777 = vmatprep.subr.mxu0 0.0
    %1778 = vmatpush2.msra.mxu0 0.0
    %1779 = vmatprep.subr.mxu0 0.0
    %1780 = vmatpush2.msra.mxu0 0.0
    %1781 = vmatprep.subr.mxu0 0.0
    %1782 = vmatpush2.msra.mxu0 0.0
    %1783 = vmatprep.subr.mxu0 0.0
    %1784 = vmatpush2.msra.mxu0 0.0
    %1785 = vmatprep.subr.mxu0 0.0
    %1786 = vmatpush2.msra.mxu0 0.0
    %1787 = vmatprep.subr.mxu0 0.0
    %1788 = vmatpush2.msra.mxu0 0.0
    %1789 = vmatprep.subr.mxu0 0.0
    %1790 = vmatpush2.msra.mxu0 0.0
    %1791 = vmatprep.mubr.f32.mxu0 0.0
    %1792 = vmatmul.mubr.f32.gmra.mxu0 %v1725
    %v1793 = vpop.f32.mrf.mxu0
    %v1794 = vadd.f32 0.0, %v1793
    %v1795 = vpop.f32.mrf.mxu0
    %1796 = vdwg.mxu0
    %v1797 = vadd.f32 %v1282, %v1794
    %v1798 = vxor.u32 %v1797, 2147483648
    %v1799 = vmul.f32 %v1798, 1.442695
    %v1800 = vpow.pop %v1799
    %v1801 = vadd.f32 %v1800, 1.0
    %v1802 = vrcp.pop %v1801
    %v1803 = vmul.f32 1.0, %v1802
    %v1804 = vadd.f32 %v1794, %v1373
    %1806 = vrot.lane.b32.xlu0 %v1804, 64
    %v1807 = vpop.permute.xlu0 %1806
    %v1809 = vmul.f32 %v1803, %v1807
    %1811 = vrot.lane.b32.xlu0 %v1809, 64
    %v1812 = vpop.permute.xlu0 %1811
    %v1814 = vadd.f32 %v1282, %v1812
    %v1815 = vtanh.pop %v1814
    %v1816 = vsub.f32 1.0, %v1803
    %1818 = vrot.lane.b32.xlu0 %v1815, 96
    %v1819 = vpop.permute.xlu0 %1818
    %v1821 = vmul.f32 %v1816, %v1819
    %v1823 = vmul.f32 %v1803, %v1722
    %v1824 = vadd.f32 %v1821, %v1823
    %1826 = vrot.lane.b32.xlu0 %v1824, 96
    %v1827 = vpop.permute.xlu0 %1826
    %v1828 = vsel %vm230, %v1827, 0
    %1830 = vmatprep.subr.mxu0 0.0
    %1831 = vmatpush1.msra.mxu0 0.0
    %1832 = vmatprep.subr.mxu0 0.0
    %1833 = vmatpush1.msra.mxu0 0.0
    %1834 = vmatprep.subr.mxu0 0.0
    %1835 = vmatpush1.msra.mxu0 0.0
    %1836 = vmatprep.subr.mxu0 0.0
    %1837 = vmatpush1.msra.mxu0 0.0
    %1838 = vmatprep.subr.mxu0 0.0
    %1839 = vmatpush1.msra.mxu0 0.0
    %1840 = vmatprep.subr.mxu0 0.0
    %1841 = vmatpush1.msra.mxu0 0.0
    %1842 = vmatprep.subr.mxu0 0.0
    %1843 = vmatpush1.msra.mxu0 0.0
    %1844 = vmatprep.subr.mxu0 0.0
    %1845 = vmatpush1.msra.mxu0 0.0
    %1846 = vmatprep.subr.mxu0 0.0
    %1847 = vmatpush1.msra.mxu0 0.0
    %1848 = vmatprep.subr.mxu0 0.0
    %1849 = vmatpush1.msra.mxu0 0.0
    %1850 = vmatprep.subr.mxu0 0.0
    %1851 = vmatpush1.msra.mxu0 0.0
    %1852 = vmatprep.subr.mxu0 0.0
    %1853 = vmatpush1.msra.mxu0 0.0
    %1854 = vmatprep.subr.mxu0 0.0
    %1855 = vmatpush1.msra.mxu0 %v1288
    %1856 = vmatprep.subr.mxu0 0.0
    %1857 = vmatpush1.msra.mxu0 %v1287
    %1858 = vmatprep.subr.mxu0 0.0
    %1859 = vmatpush1.msra.mxu0 %v1286
    %1860 = vmatprep.subr.mxu0 0.0
    %1861 = vmatpush1.msra.mxu0 %v1285
    %1862 = vmatprep.subr.mxu0 0.0
    %1863 = vmatpush2.msra.mxu0 0.0
    %1864 = vmatprep.subr.mxu0 0.0
    %1865 = vmatpush2.msra.mxu0 0.0
    %1866 = vmatprep.subr.mxu0 0.0
    %1867 = vmatpush2.msra.mxu0 0.0
    %1868 = vmatprep.subr.mxu0 0.0
    %1869 = vmatpush2.msra.mxu0 0.0
    %1870 = vmatprep.subr.mxu0 0.0
    %1871 = vmatpush2.msra.mxu0 0.0
    %1872 = vmatprep.subr.mxu0 0.0
    %1873 = vmatpush2.msra.mxu0 0.0
    %1874 = vmatprep.subr.mxu0 0.0
    %1875 = vmatpush2.msra.mxu0 0.0
    %1876 = vmatprep.subr.mxu0 0.0
    %1877 = vmatpush2.msra.mxu0 0.0
    %1878 = vmatprep.subr.mxu0 0.0
    %1879 = vmatpush2.msra.mxu0 0.0
    %1880 = vmatprep.subr.mxu0 0.0
    %1881 = vmatpush2.msra.mxu0 0.0
    %1882 = vmatprep.subr.mxu0 0.0
    %1883 = vmatpush2.msra.mxu0 0.0
    %1884 = vmatprep.subr.mxu0 0.0
    %1885 = vmatpush2.msra.mxu0 0.0
    %1886 = vmatprep.subr.mxu0 0.0
    %1887 = vmatpush2.msra.mxu0 0.0
    %1888 = vmatprep.subr.mxu0 0.0
    %1889 = vmatpush2.msra.mxu0 0.0
    %1890 = vmatprep.subr.mxu0 0.0
    %1891 = vmatpush2.msra.mxu0 0.0
    %1892 = vmatprep.subr.mxu0 0.0
    %1893 = vmatpush2.msra.mxu0 0.0
    %1894 = vmatprep.mubr.f32.mxu0 0.0
    %1895 = vmatmul.mubr.f32.gmra.mxu0 %v1828
    %v1896 = vpop.f32.mrf.mxu0
    %v1897 = vadd.f32 0.0, %v1896
    %v1898 = vpop.f32.mrf.mxu0
    %1899 = vdwg.mxu0
    %v1901 = vrot.slane %v1897, 6
    %v1903 = vadd.f32 %v1282, %v1901
    %v1904 = vxor.u32 %v1903, 2147483648
    %v1905 = vmul.f32 %v1904, 1.442695
    %v1906 = vpow.pop %v1905
    %v1907 = vadd.f32 %v1906, 1.0
    %v1908 = vrcp.pop %v1907
    %v1909 = vmul.f32 1.0, %v1908
    %v1910 = vadd.f32 %v1897, %v1373
    %v1912 = vrot.slane %v1910, 6
    %1913 = vrot.lane.b32.xlu0 %v1912, 64
    %v1914 = vpop.permute.xlu0 %1913
    %v1916 = vmul.f32 %v1909, %v1914
    %1918 = vrot.lane.b32.xlu0 %v1916, 64
    %v1919 = vpop.permute.xlu0 %1918
    %v1921 = vadd.f32 %v1282, %v1919
    %v1922 = vtanh.pop %v1921
    %v1923 = vsub.f32 1.0, %v1909
    %1925 = vrot.lane.b32.xlu0 %v1922, 96
    %v1926 = vpop.permute.xlu0 %1925
    %v1928 = vmul.f32 %v1923, %v1926
    %v1929 = vrot.slane %v1824, 6
    %v1931 = vmul.f32 %v1909, %v1929
    %v1932 = vadd.f32 %v1928, %v1931
    %v1934 = vrot.slane %v1932, 2
    %1935 = vrot.lane.b32.xlu0 %v1934, 96
    %v1936 = vpop.permute.xlu0 %1935
    %v1937 = vsel %vm230, %v1936, 0
    %1939 = vmatprep.subr.mxu0 0.0
    %1940 = vmatpush1.msra.mxu0 0.0
    %1941 = vmatprep.subr.mxu0 0.0
    %1942 = vmatpush1.msra.mxu0 0.0
    %1943 = vmatprep.subr.mxu0 0.0
    %1944 = vmatpush1.msra.mxu0 0.0
    %1945 = vmatprep.subr.mxu0 0.0
    %1946 = vmatpush1.msra.mxu0 0.0
    %1947 = vmatprep.subr.mxu0 0.0
    %1948 = vmatpush1.msra.mxu0 0.0
    %1949 = vmatprep.subr.mxu0 0.0
    %1950 = vmatpush1.msra.mxu0 0.0
    %1951 = vmatprep.subr.mxu0 0.0
    %1952 = vmatpush1.msra.mxu0 0.0
    %1953 = vmatprep.subr.mxu0 0.0
    %1954 = vmatpush1.msra.mxu0 0.0
    %1955 = vmatprep.subr.mxu0 0.0
    %1956 = vmatpush1.msra.mxu0 0.0
    %1957 = vmatprep.subr.mxu0 0.0
    %1958 = vmatpush1.msra.mxu0 0.0
    %1959 = vmatprep.subr.mxu0 0.0
    %1960 = vmatpush1.msra.mxu0 0.0
    %1961 = vmatprep.subr.mxu0 0.0
    %1962 = vmatpush1.msra.mxu0 0.0
    %1963 = vmatprep.subr.mxu0 0.0
    %1964 = vmatpush1.msra.mxu0 %v1288
    %1965 = vmatprep.subr.mxu0 0.0
    %1966 = vmatpush1.msra.mxu0 %v1287
    %1967 = vmatprep.subr.mxu0 0.0
    %1968 = vmatpush1.msra.mxu0 %v1286
    %1969 = vmatprep.subr.mxu0 0.0
    %1970 = vmatpush1.msra.mxu0 %v1285
    %1971 = vmatprep.subr.mxu0 0.0
    %1972 = vmatpush2.msra.mxu0 0.0
    %1973 = vmatprep.subr.mxu0 0.0
    %1974 = vmatpush2.msra.mxu0 0.0
    %1975 = vmatprep.subr.mxu0 0.0
    %1976 = vmatpush2.msra.mxu0 0.0
    %1977 = vmatprep.subr.mxu0 0.0
    %1978 = vmatpush2.msra.mxu0 0.0
    %1979 = vmatprep.subr.mxu0 0.0
    %1980 = vmatpush2.msra.mxu0 0.0
    %1981 = vmatprep.subr.mxu0 0.0
    %1982 = vmatpush2.msra.mxu0 0.0
    %1983 = vmatprep.subr.mxu0 0.0
    %1984 = vmatpush2.msra.mxu0 0.0
    %1985 = vmatprep.subr.mxu0 0.0
    %1986 = vmatpush2.msra.mxu0 0.0
    %1987 = vmatprep.subr.mxu0 0.0
    %1988 = vmatpush2.msra.mxu0 0.0
    %1989 = vmatprep.subr.mxu0 0.0
    %1990 = vmatpush2.msra.mxu0 0.0
    %1991 = vmatprep.subr.mxu0 0.0
    %1992 = vmatpush2.msra.mxu0 0.0
    %1993 = vmatprep.subr.mxu0 0.0
    %1994 = vmatpush2.msra.mxu0 0.0
    %1995 = vmatprep.subr.mxu0 0.0
    %1996 = vmatpush2.msra.mxu0 0.0
    %1997 = vmatprep.subr.mxu0 0.0
    %1998 = vmatpush2.msra.mxu0 0.0
    %1999 = vmatprep.subr.mxu0 0.0
    %2000 = vmatpush2.msra.mxu0 0.0
    %2001 = vmatprep.subr.mxu0 0.0
    %2002 = vmatpush2.msra.mxu0 0.0
    %2003 = vmatprep.mubr.f32.mxu0 0.0
    %2004 = vmatmul.mubr.f32.gmra.mxu0 %v1937
    %v2005 = vpop.f32.mrf.mxu0
    %v2006 = vadd.f32 0.0, %v2005
    %v2007 = vpop.f32.mrf.mxu0
    %2008 = vdwg.mxu0
    %v2010 = vrot.slane %v2006, 4
    %v2012 = vadd.f32 %v1282, %v2010
    %v2013 = vxor.u32 %v2012, 2147483648
    %v2014 = vmul.f32 %v2013, 1.442695
    %v2015 = vpow.pop %v2014
    %v2016 = vadd.f32 %v2015, 1.0
    %v2017 = vrcp.pop %v2016
    %v2018 = vmul.f32 1.0, %v2017
    %v2019 = vadd.f32 %v2006, %v1373
    %v2021 = vrot.slane %v2019, 4
    %2022 = vrot.lane.b32.xlu0 %v2021, 64
    %v2023 = vpop.permute.xlu0 %2022
    %v2025 = vmul.f32 %v2018, %v2023
    %2027 = vrot.lane.b32.xlu0 %v2025, 64
    %v2028 = vpop.permute.xlu0 %2027
    %v2030 = vadd.f32 %v1282, %v2028
    %v2031 = vtanh.pop %v2030
    %v2032 = vsub.f32 1.0, %v2018
    %2034 = vrot.lane.b32.xlu0 %v2031, 96
    %v2035 = vpop.permute.xlu0 %2034
    %v2037 = vmul.f32 %v2032, %v2035
    %v2038 = vrot.slane %v1932, 6
    %v2040 = vmul.f32 %v2018, %v2038
    %v2041 = vadd.f32 %v2037, %v2040
    %v2043 = vrot.slane %v2041, 4
    %2044 = vrot.lane.b32.xlu0 %v2043, 96
    %v2045 = vpop.permute.xlu0 %2044
    %v2046 = vsel %vm230, %v2045, 0
    %2048 = vmatprep.subr.mxu0 0.0
    %2049 = vmatpush1.msra.mxu0 0.0
    %2050 = vmatprep.subr.mxu0 0.0
    %2051 = vmatpush1.msra.mxu0 0.0
    %2052 = vmatprep.subr.mxu0 0.0
    %2053 = vmatpush1.msra.mxu0 0.0
    %2054 = vmatprep.subr.mxu0 0.0
    %2055 = vmatpush1.msra.mxu0 0.0
    %2056 = vmatprep.subr.mxu0 0.0
    %2057 = vmatpush1.msra.mxu0 0.0
    %2058 = vmatprep.subr.mxu0 0.0
    %2059 = vmatpush1.msra.mxu0 0.0
    %2060 = vmatprep.subr.mxu0 0.0
    %2061 = vmatpush1.msra.mxu0 0.0
    %2062 = vmatprep.subr.mxu0 0.0
    %2063 = vmatpush1.msra.mxu0 0.0
    %2064 = vmatprep.subr.mxu0 0.0
    %2065 = vmatpush1.msra.mxu0 0.0
    %2066 = vmatprep.subr.mxu0 0.0
    %2067 = vmatpush1.msra.mxu0 0.0
    %2068 = vmatprep.subr.mxu0 0.0
    %2069 = vmatpush1.msra.mxu0 0.0
    %2070 = vmatprep.subr.mxu0 0.0
    %2071 = vmatpush1.msra.mxu0 0.0
    %2072 = vmatprep.subr.mxu0 0.0
    %2073 = vmatpush1.msra.mxu0 %v1288
    %2074 = vmatprep.subr.mxu0 0.0
    %2075 = vmatpush1.msra.mxu0 %v1287
    %2076 = vmatprep.subr.mxu0 0.0
    %2077 = vmatpush1.msra.mxu0 %v1286
    %2078 = vmatprep.subr.mxu0 0.0
    %2079 = vmatpush1.msra.mxu0 %v1285
    %2080 = vmatprep.subr.mxu0 0.0
    %2081 = vmatpush2.msra.mxu0 0.0
    %2082 = vmatprep.subr.mxu0 0.0
    %2083 = vmatpush2.msra.mxu0 0.0
    %2084 = vmatprep.subr.mxu0 0.0
    %2085 = vmatpush2.msra.mxu0 0.0
    %2086 = vmatprep.subr.mxu0 0.0
    %2087 = vmatpush2.msra.mxu0 0.0
    %2088 = vmatprep.subr.mxu0 0.0
    %2089 = vmatpush2.msra.mxu0 0.0
    %2090 = vmatprep.subr.mxu0 0.0
    %2091 = vmatpush2.msra.mxu0 0.0
    %2092 = vmatprep.subr.mxu0 0.0
    %2093 = vmatpush2.msra.mxu0 0.0
    %2094 = vmatprep.subr.mxu0 0.0
    %2095 = vmatpush2.msra.mxu0 0.0
    %2096 = vmatprep.subr.mxu0 0.0
    %2097 = vmatpush2.msra.mxu0 0.0
    %2098 = vmatprep.subr.mxu0 0.0
    %2099 = vmatpush2.msra.mxu0 0.0
    %2100 = vmatprep.subr.mxu0 0.0
    %2101 = vmatpush2.msra.mxu0 0.0
    %2102 = vmatprep.subr.mxu0 0.0
    %2103 = vmatpush2.msra.mxu0 0.0
    %2104 = vmatprep.subr.mxu0 0.0
    %2105 = vmatpush2.msra.mxu0 0.0
    %2106 = vmatprep.subr.mxu0 0.0
    %2107 = vmatpush2.msra.mxu0 0.0
    %2108 = vmatprep.subr.mxu0 0.0
    %2109 = vmatpush2.msra.mxu0 0.0
    %2110 = vmatprep.subr.mxu0 0.0
    %2111 = vmatpush2.msra.mxu0 0.0
    %2112 = vmatprep.mubr.f32.mxu0 0.0
    %2113 = vmatmul.mubr.f32.gmra.mxu0 %v2046
    %v2114 = vpop.f32.mrf.mxu0
    %v2115 = vadd.f32 0.0, %v2114
    %v2116 = vpop.f32.mrf.mxu0
    %2117 = vdwg.mxu0
    %v2119 = vrot.slane %v2115, 2
    %v2121 = vadd.f32 %v1282, %v2119
    %v2122 = vxor.u32 %v2121, 2147483648
    %v2123 = vmul.f32 %v2122, 1.442695
    %v2124 = vpow.pop %v2123
    %v2125 = vadd.f32 %v2124, 1.0
    %v2126 = vrcp.pop %v2125
    %v2127 = vmul.f32 1.0, %v2126
    %v2128 = vadd.f32 %v2115, %v1373
    %v2130 = vrot.slane %v2128, 2
    %2131 = vrot.lane.b32.xlu0 %v2130, 64
    %v2132 = vpop.permute.xlu0 %2131
    %v2134 = vmul.f32 %v2127, %v2132
    %2136 = vrot.lane.b32.xlu0 %v2134, 64
    %v2137 = vpop.permute.xlu0 %2136
    %v2139 = vadd.f32 %v1282, %v2137
    %v2140 = vtanh.pop %v2139
    %v2141 = vsub.f32 1.0, %v2127
    %2143 = vrot.lane.b32.xlu0 %v2140, 96
    %v2144 = vpop.permute.xlu0 %2143
    %v2146 = vmul.f32 %v2141, %v2144
    %v2147 = vrot.slane %v2041, 6
    %v2149 = vmul.f32 %v2127, %v2147
    %v2150 = vadd.f32 %v2146, %v2149
    %v2151 = vld [vmem:[%s10] sm:$0xff]
    %v2152 = vld [vmem:[%s10 + $0x8] sm:$0xff]
    %v2153 = vld [vmem:[%s10 + $0x10] sm:$0xff]
    %v2154 = vld [vmem:[%s10 + $0x18] sm:$0xff]
    %v2155 = vld [vmem:[%s11] sm:$0x1]
    %v2157 = vlaneseq
    %v2158 = vshrl.u32 %v2157, 7
    %v2159 = vsub.s32 0, %v2158
    %v2160 = vrot.slane %v2155, %v2159
    %v2163 = vrot.slane %v2150, 6
    %2164 = vrot.lane.b32.xlu0 %v2163, 96
    %v2165 = vpop.permute.xlu0 %2164
    %v2166 = vsel %vm230, %v2165, 0
    %2168 = vmatprep.subr.mxu0 0.0
    %2169 = vmatpush1.msra.mxu0 0.0
    %2170 = vmatprep.subr.mxu0 0.0
    %2171 = vmatpush1.msra.mxu0 0.0
    %2172 = vmatprep.subr.mxu0 0.0
    %2173 = vmatpush1.msra.mxu0 0.0
    %2174 = vmatprep.subr.mxu0 0.0
    %2175 = vmatpush1.msra.mxu0 0.0
    %2176 = vmatprep.subr.mxu0 0.0
    %2177 = vmatpush1.msra.mxu0 0.0
    %2178 = vmatprep.subr.mxu0 0.0
    %2179 = vmatpush1.msra.mxu0 0.0
    %2180 = vmatprep.subr.mxu0 0.0
    %2181 = vmatpush1.msra.mxu0 0.0
    %2182 = vmatprep.subr.mxu0 0.0
    %2183 = vmatpush1.msra.mxu0 0.0
    %2184 = vmatprep.subr.mxu0 0.0
    %2185 = vmatpush1.msra.mxu0 0.0
    %2186 = vmatprep.subr.mxu0 0.0
    %2187 = vmatpush1.msra.mxu0 0.0
    %2188 = vmatprep.subr.mxu0 0.0
    %2189 = vmatpush1.msra.mxu0 0.0
    %2190 = vmatprep.subr.mxu0 0.0
    %2191 = vmatpush1.msra.mxu0 0.0
    %2192 = vmatprep.subr.mxu0 0.0
    %2193 = vmatpush1.msra.mxu0 %v2154
    %2194 = vmatprep.subr.mxu0 0.0
    %2195 = vmatpush1.msra.mxu0 %v2153
    %2196 = vmatprep.subr.mxu0 0.0
    %2197 = vmatpush1.msra.mxu0 %v2152
    %2198 = vmatprep.subr.mxu0 0.0
    %2199 = vmatpush1.msra.mxu0 %v2151
    %2200 = vmatprep.subr.mxu0 0.0
    %2201 = vmatpush2.msra.mxu0 0.0
    %2202 = vmatprep.subr.mxu0 0.0
    %2203 = vmatpush2.msra.mxu0 0.0
    %2204 = vmatprep.subr.mxu0 0.0
    %2205 = vmatpush2.msra.mxu0 0.0
    %2206 = vmatprep.subr.mxu0 0.0
    %2207 = vmatpush2.msra.mxu0 0.0
    %2208 = vmatprep.subr.mxu0 0.0
    %2209 = vmatpush2.msra.mxu0 0.0
    %2210 = vmatprep.subr.mxu0 0.0
    %2211 = vmatpush2.msra.mxu0 0.0
    %2212 = vmatprep.subr.mxu0 0.0
    %2213 = vmatpush2.msra.mxu0 0.0
    %2214 = vmatprep.subr.mxu0 0.0
    %2215 = vmatpush2.msra.mxu0 0.0
    %2216 = vmatprep.subr.mxu0 0.0
    %2217 = vmatpush2.msra.mxu0 0.0
    %2218 = vmatprep.subr.mxu0 0.0
    %2219 = vmatpush2.msra.mxu0 0.0
    %2220 = vmatprep.subr.mxu0 0.0
    %2221 = vmatpush2.msra.mxu0 0.0
    %2222 = vmatprep.subr.mxu0 0.0
    %2223 = vmatpush2.msra.mxu0 0.0
    %2224 = vmatprep.subr.mxu0 0.0
    %2225 = vmatpush2.msra.mxu0 0.0
    %2226 = vmatprep.subr.mxu0 0.0
    %2227 = vmatpush2.msra.mxu0 0.0
    %2228 = vmatprep.subr.mxu0 0.0
    %2229 = vmatpush2.msra.mxu0 0.0
    %2230 = vmatprep.subr.mxu0 0.0
    %2231 = vmatpush2.msra.mxu0 0.0
    %2232 = vmatprep.mubr.f32.mxu0 0.0
    %2233 = vmatmul.mubr.f32.gmra.mxu0 %v2166
    %v2234 = vpop.f32.mrf.mxu0
    %v2235 = vadd.f32 %v2160, %v2234
    %v2236 = vpop.f32.mrf.mxu0
    %2237 = vdwg.mxu0
    %v2238 = vld [vmem:[%s12] sm:$0xff]
    %v2239 = vld [vmem:[%s12 + $0x8] sm:$0xff]
    %v2240 = vld [vmem:[%s12 + $0x10] sm:$0xff]
    %2241 = vset.pattern.permute.xlu0 0
    %2242 = vperm.xlu0 %2241, %v2238
    %v2243 = vpop.permute.xlu0 %2242
    %2244 = vset.pattern.permute.xlu0 0
    %2245 = vperm.xlu0 %2244, %v2239
    %v2246 = vpop.permute.xlu0 %2245
    %2247 = vset.pattern.permute.xlu0 0
    %2248 = vperm.xlu0 %2247, %v2240
    %v2249 = vpop.permute.xlu0 %2248
    %vm2250 = vcmp.eq.s32.totalorder %v113, %v2243
    %vm2251 = vcmp.eq.s32.totalorder %v113, %v2246
    %vm2252 = vcmp.eq.s32.totalorder %v113, %v2249
    %v2253 = vsel %vm2250, 1, 0
    %v2254 = vsel %vm2251, 1, 0
    %v2255 = vsel %vm2252, 1, 0
    %v2256 = vcvt.s32.f32 %v2253
    %v2257 = vcvt.s32.f32 %v2254
    %v2258 = vcvt.s32.f32 %v2255
    %v2259 = vld [vmem:[%s13] sm:$0xff]
    %v2260 = vld [vmem:[%s13 + $0x8] sm:$0xff]
    %v2261 = vld [vmem:[%s13 + $0x10] sm:$0xff]
    %v2262 = vld [vmem:[%s13 + $0x18] sm:$0xff]
    %v2263 = vld [vmem:[%s13 + $0x20] sm:$0xff]
    %v2264 = vld [vmem:[%s13 + $0x28] sm:$0xff]
    %v2265 = vld [vmem:[%s13 + $0x30] sm:$0xff]
    %v2266 = vld [vmem:[%s13 + $0x38] sm:$0xff]
    %v2267 = vld [vmem:[%s13 + $0x40] sm:$0xff]
    %v2268 = vld [vmem:[%s13 + $0x48] sm:$0xff]
    %vm2269 = vcmask 654336
    %v2271 = vsel %vm2269, %v2256, 0
    %v2274 = vsel %vm2269, %v2257, 0
    %v2277 = vsel %vm2269, %v2258, 0
    %2279 = vmatprep.subr.mxu0 0.0
    %2280 = vmatpush1.msra.mxu0 0.0
    %2281 = vmatprep.subr.mxu0 0.0
    %2282 = vmatpush1.msra.mxu0 0.0
    %2283 = vmatprep.subr.mxu0 0.0
    %2284 = vmatpush1.msra.mxu0 0.0
    %2285 = vmatprep.subr.mxu0 0.0
    %2286 = vmatpush1.msra.mxu0 0.0
    %2287 = vmatprep.subr.mxu0 0.0
    %2288 = vmatpush1.msra.mxu0 0.0
    %2289 = vmatprep.subr.mxu0 0.0
    %2290 = vmatpush1.msra.mxu0 0.0
    %2291 = vmatprep.subr.mxu0 0.0
    %2292 = vmatpush1.msra.mxu0 %v2268
    %2293 = vmatprep.subr.mxu0 0.0
    %2294 = vmatpush1.msra.mxu0 %v2267
    %2295 = vmatprep.subr.mxu0 0.0
    %2296 = vmatpush1.msra.mxu0 %v2266
    %2297 = vmatprep.subr.mxu0 0.0
    %2298 = vmatpush1.msra.mxu0 %v2265
    %2299 = vmatprep.subr.mxu0 0.0
    %2300 = vmatpush1.msra.mxu0 %v2264
    %2301 = vmatprep.subr.mxu0 0.0
    %2302 = vmatpush1.msra.mxu0 %v2263
    %2303 = vmatprep.subr.mxu0 0.0
    %2304 = vmatpush1.msra.mxu0 %v2262
    %2305 = vmatprep.subr.mxu0 0.0
    %2306 = vmatpush1.msra.mxu0 %v2261
    %2307 = vmatprep.subr.mxu0 0.0
    %2308 = vmatpush1.msra.mxu0 %v2260
    %2309 = vmatprep.subr.mxu0 0.0
    %2310 = vmatpush1.msra.mxu0 %v2259
    %2311 = vmatprep.subr.mxu0 0.0
    %2312 = vmatpush2.msra.mxu0 0.0
    %2313 = vmatprep.subr.mxu0 0.0
    %2314 = vmatpush2.msra.mxu0 0.0
    %2315 = vmatprep.subr.mxu0 0.0
    %2316 = vmatpush2.msra.mxu0 0.0
    %2317 = vmatprep.subr.mxu0 0.0
    %2318 = vmatpush2.msra.mxu0 0.0
    %2319 = vmatprep.subr.mxu0 0.0
    %2320 = vmatpush2.msra.mxu0 0.0
    %2321 = vmatprep.subr.mxu0 0.0
    %2322 = vmatpush2.msra.mxu0 0.0
    %2323 = vmatprep.subr.mxu0 0.0
    %2324 = vmatpush2.msra.mxu0 0.0
    %2325 = vmatprep.subr.mxu0 0.0
    %2326 = vmatpush2.msra.mxu0 0.0
    %2327 = vmatprep.subr.mxu0 0.0
    %2328 = vmatpush2.msra.mxu0 0.0
    %2329 = vmatprep.subr.mxu0 0.0
    %2330 = vmatpush2.msra.mxu0 0.0
    %2331 = vmatprep.subr.mxu0 0.0
    %2332 = vmatpush2.msra.mxu0 0.0
    %2333 = vmatprep.subr.mxu0 0.0
    %2334 = vmatpush2.msra.mxu0 0.0
    %2335 = vmatprep.subr.mxu0 0.0
    %2336 = vmatpush2.msra.mxu0 0.0
    %2337 = vmatprep.subr.mxu0 0.0
    %2338 = vmatpush2.msra.mxu0 0.0
    %2339 = vmatprep.subr.mxu0 0.0
    %2340 = vmatpush2.msra.mxu0 0.0
    %2341 = vmatprep.subr.mxu0 0.0
    %2342 = vmatpush2.msra.mxu0 0.0
    %2343 = vmatprep.mubr.f32.mxu0 0.0
    %2344 = vmatmul.mubr.f32.gmra.mxu0 %v2271
    %v2345 = vpop.f32.mrf.mxu0
    %v2346 = vadd.f32 0.0, %v2345
    %v2347 = vpop.f32.mrf.mxu0
    %2348 = vmatprep.mubr.f32.mxu0 0.0
    %2349 = vmatmul.mubr.f32.gmra.mxu0 %v2274
    %v2350 = vpop.f32.mrf.mxu0
    %v2351 = vadd.f32 0.0, %v2350
    %v2352 = vpop.f32.mrf.mxu0
    %2353 = vmatprep.mubr.f32.mxu0 0.0
    %2354 = vmatmul.mubr.f32.gmra.mxu0 %v2277
    %v2355 = vpop.f32.mrf.mxu0
    %v2356 = vadd.f32 0.0, %v2355
    %v2357 = vpop.f32.mrf.mxu0
    %2358 = vdwg.mxu0
    %v2359 = vld [vmem:[%s14] sm:$0xff]
    %v2360 = vld [vmem:[%s14 + $0x8] sm:$0xff]
    %v2361 = vld [vmem:[%s14 + $0x10] sm:$0xff]
    %v2362 = vld [vmem:[%s14 + $0x18] sm:$0xff]
    %v2363 = vld [vmem:[#allocation2] sm:$0x1]
    %v2365 = vlaneseq
    %v2366 = vshrl.u32 %v2365, 7
    %v2367 = vsub.s32 0, %v2366
    %v2368 = vrot.slane %v2363, %v2367
    %v2371 = vsel %vm230, %v2346, 0
    %v2374 = vsel %vm230, %v2351, 0
    %v2377 = vsel %vm230, %v2356, 0
    %2379 = vmatprep.subr.mxu0 0.0
    %2380 = vmatpush1.msra.mxu0 0.0
    %2381 = vmatprep.subr.mxu0 0.0
    %2382 = vmatpush1.msra.mxu0 0.0
    %2383 = vmatprep.subr.mxu0 0.0
    %2384 = vmatpush1.msra.mxu0 0.0
    %2385 = vmatprep.subr.mxu0 0.0
    %2386 = vmatpush1.msra.mxu0 0.0
    %2387 = vmatprep.subr.mxu0 0.0
    %2388 = vmatpush1.msra.mxu0 0.0
    %2389 = vmatprep.subr.mxu0 0.0
    %2390 = vmatpush1.msra.mxu0 0.0
    %2391 = vmatprep.subr.mxu0 0.0
    %2392 = vmatpush1.msra.mxu0 0.0
    %2393 = vmatprep.subr.mxu0 0.0
    %2394 = vmatpush1.msra.mxu0 0.0
    %2395 = vmatprep.subr.mxu0 0.0
    %2396 = vmatpush1.msra.mxu0 0.0
    %2397 = vmatprep.subr.mxu0 0.0
    %2398 = vmatpush1.msra.mxu0 0.0
    %2399 = vmatprep.subr.mxu0 0.0
    %2400 = vmatpush1.msra.mxu0 0.0
    %2401 = vmatprep.subr.mxu0 0.0
    %2402 = vmatpush1.msra.mxu0 0.0
    %2403 = vmatprep.subr.mxu0 0.0
    %2404 = vmatpush1.msra.mxu0 %v2362
    %2405 = vmatprep.subr.mxu0 0.0
    %2406 = vmatpush1.msra.mxu0 %v2361
    %2407 = vmatprep.subr.mxu0 0.0
    %2408 = vmatpush1.msra.mxu0 %v2360
    %2409 = vmatprep.subr.mxu0 0.0
    %2410 = vmatpush1.msra.mxu0 %v2359
    %2411 = vmatprep.subr.mxu0 0.0
    %2412 = vmatpush2.msra.mxu0 0.0
    %2413 = vmatprep.subr.mxu0 0.0
    %2414 = vmatpush2.msra.mxu0 0.0
    %2415 = vmatprep.subr.mxu0 0.0
    %2416 = vmatpush2.msra.mxu0 0.0
    %2417 = vmatprep.subr.mxu0 0.0
    %2418 = vmatpush2.msra.mxu0 0.0
    %2419 = vmatprep.subr.mxu0 0.0
    %2420 = vmatpush2.msra.mxu0 0.0
    %2421 = vmatprep.subr.mxu0 0.0
    %2422 = vmatpush2.msra.mxu0 0.0
    %2423 = vmatprep.subr.mxu0 0.0
    %2424 = vmatpush2.msra.mxu0 0.0
    %2425 = vmatprep.subr.mxu0 0.0
    %2426 = vmatpush2.msra.mxu0 0.0
    %2427 = vmatprep.subr.mxu0 0.0
    %2428 = vmatpush2.msra.mxu0 0.0
    %2429 = vmatprep.subr.mxu0 0.0
    %2430 = vmatpush2.msra.mxu0 0.0
    %2431 = vmatprep.subr.mxu0 0.0
    %2432 = vmatpush2.msra.mxu0 0.0
    %2433 = vmatprep.subr.mxu0 0.0
    %2434 = vmatpush2.msra.mxu0 0.0
    %2435 = vmatprep.subr.mxu0 0.0
    %2436 = vmatpush2.msra.mxu0 0.0
    %2437 = vmatprep.subr.mxu0 0.0
    %2438 = vmatpush2.msra.mxu0 0.0
    %2439 = vmatprep.subr.mxu0 0.0
    %2440 = vmatpush2.msra.mxu0 0.0
    %2441 = vmatprep.subr.mxu0 0.0
    %2442 = vmatpush2.msra.mxu0 0.0
    %2443 = vmatprep.mubr.f32.mxu0 0.0
    %2444 = vmatmul.mubr.f32.gmra.mxu0 %v2371
    %v2445 = vpop.f32.mrf.mxu0
    %v2446 = vadd.f32 %v2368, %v2445
    %v2447 = vpop.f32.mrf.mxu0
    %2448 = vmatprep.mubr.f32.mxu0 0.0
    %2449 = vmatmul.mubr.f32.gmra.mxu0 %v2374
    %v2450 = vpop.f32.mrf.mxu0
    %v2451 = vadd.f32 %v2368, %v2450
    %v2452 = vpop.f32.mrf.mxu0
    %2453 = vmatprep.mubr.f32.mxu0 0.0
    %2454 = vmatmul.mubr.f32.gmra.mxu0 %v2377
    %v2455 = vpop.f32.mrf.mxu0
    %v2456 = vadd.f32 %v2368, %v2455
    %v2457 = vpop.f32.mrf.mxu0
    %2458 = vdwg.mxu0
    %v2459 = vld [vmem:[%s15] sm:$0xff]
    %v2460 = vld [vmem:[%s15 + $0x8] sm:$0xff]
    %v2461 = vld [vmem:[%s15 + $0x10] sm:$0xff]
    %v2462 = vld [vmem:[%s15 + $0x18] sm:$0xff]
    %v2463 = vld [vmem:[%s17] sm:$0x1]
    %2464 = vmatprep.subr.mxu0 0.0
    %2465 = vmatpush1.msra.mxu0 0.0
    %2466 = vmatprep.subr.mxu0 0.0
    %2467 = vmatpush1.msra.mxu0 0.0
    %2468 = vmatprep.subr.mxu0 0.0
    %2469 = vmatpush1.msra.mxu0 0.0
    %2470 = vmatprep.subr.mxu0 0.0
    %2471 = vmatpush1.msra.mxu0 0.0
    %2472 = vmatprep.subr.mxu0 0.0
    %2473 = vmatpush1.msra.mxu0 0.0
    %2474 = vmatprep.subr.mxu0 0.0
    %2475 = vmatpush1.msra.mxu0 0.0
    %2476 = vmatprep.subr.mxu0 0.0
    %2477 = vmatpush1.msra.mxu0 0.0
    %2478 = vmatprep.subr.mxu0 0.0
    %2479 = vmatpush1.msra.mxu0 0.0
    %2480 = vmatprep.subr.mxu0 0.0
    %2481 = vmatpush1.msra.mxu0 0.0
    %2482 = vmatprep.subr.mxu0 0.0
    %2483 = vmatpush1.msra.mxu0 0.0
    %2484 = vmatprep.subr.mxu0 0.0
    %2485 = vmatpush1.msra.mxu0 0.0
    %2486 = vmatprep.subr.mxu0 0.0
    %2487 = vmatpush1.msra.mxu0 0.0
    %2488 = vmatprep.subr.mxu0 0.0
    %2489 = vmatpush1.msra.mxu0 %v2462
    %2490 = vmatprep.subr.mxu0 0.0
    %2491 = vmatpush1.msra.mxu0 %v2461
    %2492 = vmatprep.subr.mxu0 0.0
    %2493 = vmatpush1.msra.mxu0 %v2460
    %2494 = vmatprep.subr.mxu0 0.0
    %2495 = vmatpush1.msra.mxu0 %v2459
    %2496 = vmatprep.subr.mxu0 0.0
    %2497 = vmatpush2.msra.mxu0 0.0
    %2498 = vmatprep.subr.mxu0 0.0
    %2499 = vmatpush2.msra.mxu0 0.0
    %2500 = vmatprep.subr.mxu0 0.0
    %2501 = vmatpush2.msra.mxu0 0.0
    %2502 = vmatprep.subr.mxu0 0.0
    %2503 = vmatpush2.msra.mxu0 0.0
    %2504 = vmatprep.subr.mxu0 0.0
    %2505 = vmatpush2.msra.mxu0 0.0
    %2506 = vmatprep.subr.mxu0 0.0
    %2507 = vmatpush2.msra.mxu0 0.0
    %2508 = vmatprep.subr.mxu0 0.0
    %2509 = vmatpush2.msra.mxu0 0.0
    %2510 = vmatprep.subr.mxu0 0.0
    %2511 = vmatpush2.msra.mxu0 0.0
    %2512 = vmatprep.subr.mxu0 0.0
    %2513 = vmatpush2.msra.mxu0 0.0
    %2514 = vmatprep.subr.mxu0 0.0
    %2515 = vmatpush2.msra.mxu0 0.0
    %2516 = vmatprep.subr.mxu0 0.0
    %2517 = vmatpush2.msra.mxu0 0.0
    %2518 = vmatprep.subr.mxu0 0.0
    %2519 = vmatpush2.msra.mxu0 0.0
    %2520 = vmatprep.subr.mxu0 0.0
    %2521 = vmatpush2.msra.mxu0 0.0
    %2522 = vmatprep.subr.mxu0 0.0
    %2523 = vmatpush2.msra.mxu0 0.0
    %2524 = vmatprep.subr.mxu0 0.0
    %2525 = vmatpush2.msra.mxu0 0.0
    %2526 = vmatprep.subr.mxu0 0.0
    %2527 = vmatpush2.msra.mxu0 0.0
    %2528 = vmatprep.mubr.f32.mxu0 0.0
    %2529 = vmatmul.mubr.f32.gmra.mxu0 %v318
    %v2530 = vpop.f32.mrf.mxu0
    %v2531 = vadd.f32 0.0, %v2530
    %v2532 = vpop.f32.mrf.mxu0
    %2533 = vdwg.mxu0
    %v2534 = vadd.f32 %v2446, %v2531
    %v2535 = vxor.u32 %v2534, 2147483648
    %v2536 = vmul.f32 %v2535, 1.442695
    %v2537 = vpow.pop %v2536
    %v2538 = vadd.f32 %v2537, 1.0
    %v2539 = vrcp.pop %v2538
    %v2540 = vmul.f32 1.0, %v2539
    %v2542 = vlaneseq
    %v2543 = vshrl.u32 %v2542, 7
    %v2544 = vsub.s32 0, %v2543
    %v2545 = vrot.slane %v2463, %v2544
    %2546 = vrot.lane.b32.xlu0 %v2545, 64
    %v2547 = vpop.permute.xlu0 %2546
    %v2549 = vadd.f32 %v2531, %v2547
    %2551 = vrot.lane.b32.xlu0 %v2549, 64
    %v2552 = vpop.permute.xlu0 %2551
    %v2554 = vmul.f32 %v2540, %v2552
    %2556 = vrot.lane.b32.xlu0 %v2554, 64
    %v2557 = vpop.permute.xlu0 %2556
    %v2559 = vadd.f32 %v2446, %v2557
    %v2560 = vtanh.pop %v2559
    %v2561 = vsub.f32 1.0, %v2540
    %2563 = vrot.lane.b32.xlu0 %v2560, 96
    %v2564 = vpop.permute.xlu0 %2563
    %v2566 = vmul.f32 %v2561, %v2564
    %v2567 = vmul.f32 %v2540, 0.0
    %v2568 = vadd.f32 %v2566, %v2567
    %2570 = vrot.lane.b32.xlu0 %v2568, 96
    %v2571 = vpop.permute.xlu0 %2570
    %v2572 = vsel %vm230, %v2571, 0
    %2574 = vmatprep.subr.mxu0 0.0
    %2575 = vmatpush1.msra.mxu0 0.0
    %2576 = vmatprep.subr.mxu0 0.0
    %2577 = vmatpush1.msra.mxu0 0.0
    %2578 = vmatprep.subr.mxu0 0.0
    %2579 = vmatpush1.msra.mxu0 0.0
    %2580 = vmatprep.subr.mxu0 0.0
    %2581 = vmatpush1.msra.mxu0 0.0
    %2582 = vmatprep.subr.mxu0 0.0
    %2583 = vmatpush1.msra.mxu0 0.0
    %2584 = vmatprep.subr.mxu0 0.0
    %2585 = vmatpush1.msra.mxu0 0.0
    %2586 = vmatprep.subr.mxu0 0.0
    %2587 = vmatpush1.msra.mxu0 0.0
    %2588 = vmatprep.subr.mxu0 0.0
    %2589 = vmatpush1.msra.mxu0 0.0
    %2590 = vmatprep.subr.mxu0 0.0
    %2591 = vmatpush1.msra.mxu0 0.0
    %2592 = vmatprep.subr.mxu0 0.0
    %2593 = vmatpush1.msra.mxu0 0.0
    %2594 = vmatprep.subr.mxu0 0.0
    %2595 = vmatpush1.msra.mxu0 0.0
    %2596 = vmatprep.subr.mxu0 0.0
    %2597 = vmatpush1.msra.mxu0 0.0
    %2598 = vmatprep.subr.mxu0 0.0
    %2599 = vmatpush1.msra.mxu0 %v2462
    %2600 = vmatprep.subr.mxu0 0.0
    %2601 = vmatpush1.msra.mxu0 %v2461
    %2602 = vmatprep.subr.mxu0 0.0
    %2603 = vmatpush1.msra.mxu0 %v2460
    %2604 = vmatprep.subr.mxu0 0.0
    %2605 = vmatpush1.msra.mxu0 %v2459
    %2606 = vmatprep.subr.mxu0 0.0
    %2607 = vmatpush2.msra.mxu0 0.0
    %2608 = vmatprep.subr.mxu0 0.0
    %2609 = vmatpush2.msra.mxu0 0.0
    %2610 = vmatprep.subr.mxu0 0.0
    %2611 = vmatpush2.msra.mxu0 0.0
    %2612 = vmatprep.subr.mxu0 0.0
    %2613 = vmatpush2.msra.mxu0 0.0
    %2614 = vmatprep.subr.mxu0 0.0
    %2615 = vmatpush2.msra.mxu0 0.0
    %2616 = vmatprep.subr.mxu0 0.0
    %2617 = vmatpush2.msra.mxu0 0.0
    %2618 = vmatprep.subr.mxu0 0.0
    %2619 = vmatpush2.msra.mxu0 0.0
    %2620 = vmatprep.subr.mxu0 0.0
    %2621 = vmatpush2.msra.mxu0 0.0
    %2622 = vmatprep.subr.mxu0 0.0
    %2623 = vmatpush2.msra.mxu0 0.0
    %2624 = vmatprep.subr.mxu0 0.0
    %2625 = vmatpush2.msra.mxu0 0.0
    %2626 = vmatprep.subr.mxu0 0.0
    %2627 = vmatpush2.msra.mxu0 0.0
    %2628 = vmatprep.subr.mxu0 0.0
    %2629 = vmatpush2.msra.mxu0 0.0
    %2630 = vmatprep.subr.mxu0 0.0
    %2631 = vmatpush2.msra.mxu0 0.0
    %2632 = vmatprep.subr.mxu0 0.0
    %2633 = vmatpush2.msra.mxu0 0.0
    %2634 = vmatprep.subr.mxu0 0.0
    %2635 = vmatpush2.msra.mxu0 0.0
    %2636 = vmatprep.subr.mxu0 0.0
    %2637 = vmatpush2.msra.mxu0 0.0
    %2638 = vmatprep.mubr.f32.mxu0 0.0
    %2639 = vmatmul.mubr.f32.gmra.mxu0 %v2572
    %v2640 = vpop.f32.mrf.mxu0
    %v2641 = vadd.f32 0.0, %v2640
    %v2642 = vpop.f32.mrf.mxu0
    %2643 = vdwg.mxu0
    %v2645 = vrot.slane %v2641, 6
    %v2647 = vadd.f32 %v2446, %v2645
    %v2648 = vxor.u32 %v2647, 2147483648
    %v2649 = vmul.f32 %v2648, 1.442695
    %v2650 = vpow.pop %v2649
    %v2651 = vadd.f32 %v2650, 1.0
    %v2652 = vrcp.pop %v2651
    %v2653 = vmul.f32 1.0, %v2652
    %v2654 = vadd.f32 %v2641, %v2547
    %v2656 = vrot.slane %v2654, 6
    %2657 = vrot.lane.b32.xlu0 %v2656, 64
    %v2658 = vpop.permute.xlu0 %2657
    %v2660 = vmul.f32 %v2653, %v2658
    %2662 = vrot.lane.b32.xlu0 %v2660, 64
    %v2663 = vpop.permute.xlu0 %2662
    %v2665 = vadd.f32 %v2446, %v2663
    %v2666 = vtanh.pop %v2665
    %v2667 = vsub.f32 1.0, %v2653
    %2669 = vrot.lane.b32.xlu0 %v2666, 96
    %v2670 = vpop.permute.xlu0 %2669
    %v2672 = vmul.f32 %v2667, %v2670
    %v2673 = vrot.slane %v2568, 6
    %v2675 = vmul.f32 %v2653, %v2673
    %v2676 = vadd.f32 %v2672, %v2675
    %v2678 = vrot.slane %v2676, 2
    %2679 = vrot.lane.b32.xlu0 %v2678, 96
    %v2680 = vpop.permute.xlu0 %2679
    %v2681 = vsel %vm230, %v2680, 0
    %2683 = vmatprep.subr.mxu0 0.0
    %2684 = vmatpush1.msra.mxu0 0.0
    %2685 = vmatprep.subr.mxu0 0.0
    %2686 = vmatpush1.msra.mxu0 0.0
    %2687 = vmatprep.subr.mxu0 0.0
    %2688 = vmatpush1.msra.mxu0 0.0
    %2689 = vmatprep.subr.mxu0 0.0
    %2690 = vmatpush1.msra.mxu0 0.0
    %2691 = vmatprep.subr.mxu0 0.0
    %2692 = vmatpush1.msra.mxu0 0.0
    %2693 = vmatprep.subr.mxu0 0.0
    %2694 = vmatpush1.msra.mxu0 0.0
    %2695 = vmatprep.subr.mxu0 0.0
    %2696 = vmatpush1.msra.mxu0 0.0
    %2697 = vmatprep.subr.mxu0 0.0
    %2698 = vmatpush1.msra.mxu0 0.0
    %2699 = vmatprep.subr.mxu0 0.0
    %2700 = vmatpush1.msra.mxu0 0.0
    %2701 = vmatprep.subr.mxu0 0.0
    %2702 = vmatpush1.msra.mxu0 0.0
    %2703 = vmatprep.subr.mxu0 0.0
    %2704 = vmatpush1.msra.mxu0 0.0
    %2705 = vmatprep.subr.mxu0 0.0
    %2706 = vmatpush1.msra.mxu0 0.0
    %2707 = vmatprep.subr.mxu0 0.0
    %2708 = vmatpush1.msra.mxu0 %v2462
    %2709 = vmatprep.subr.mxu0 0.0
    %2710 = vmatpush1.msra.mxu0 %v2461
    %2711 = vmatprep.subr.mxu0 0.0
    %2712 = vmatpush1.msra.mxu0 %v2460
    %2713 = vmatprep.subr.mxu0 0.0
    %2714 = vmatpush1.msra.mxu0 %v2459
    %2715 = vmatprep.subr.mxu0 0.0
    %2716 = vmatpush2.msra.mxu0 0.0
    %2717 = vmatprep.subr.mxu0 0.0
    %2718 = vmatpush2.msra.mxu0 0.0
    %2719 = vmatprep.subr.mxu0 0.0
    %2720 = vmatpush2.msra.mxu0 0.0
    %2721 = vmatprep.subr.mxu0 0.0
    %2722 = vmatpush2.msra.mxu0 0.0
    %2723 = vmatprep.subr.mxu0 0.0
    %2724 = vmatpush2.msra.mxu0 0.0
    %2725 = vmatprep.subr.mxu0 0.0
    %2726 = vmatpush2.msra.mxu0 0.0
    %2727 = vmatprep.subr.mxu0 0.0
    %2728 = vmatpush2.msra.mxu0 0.0
    %2729 = vmatprep.subr.mxu0 0.0
    %2730 = vmatpush2.msra.mxu0 0.0
    %2731 = vmatprep.subr.mxu0 0.0
    %2732 = vmatpush2.msra.mxu0 0.0
    %2733 = vmatprep.subr.mxu0 0.0
    %2734 = vmatpush2.msra.mxu0 0.0
    %2735 = vmatprep.subr.mxu0 0.0
    %2736 = vmatpush2.msra.mxu0 0.0
    %2737 = vmatprep.subr.mxu0 0.0
    %2738 = vmatpush2.msra.mxu0 0.0
    %2739 = vmatprep.subr.mxu0 0.0
    %2740 = vmatpush2.msra.mxu0 0.0
    %2741 = vmatprep.subr.mxu0 0.0
    %2742 = vmatpush2.msra.mxu0 0.0
    %2743 = vmatprep.subr.mxu0 0.0
    %2744 = vmatpush2.msra.mxu0 0.0
    %2745 = vmatprep.subr.mxu0 0.0
    %2746 = vmatpush2.msra.mxu0 0.0
    %2747 = vmatprep.mubr.f32.mxu0 0.0
    %2748 = vmatmul.mubr.f32.gmra.mxu0 %v2681
    %v2749 = vpop.f32.mrf.mxu0
    %v2750 = vadd.f32 0.0, %v2749
    %v2751 = vpop.f32.mrf.mxu0
    %2752 = vdwg.mxu0
    %v2754 = vrot.slane %v2750, 4
    %v2756 = vadd.f32 %v2446, %v2754
    %v2757 = vxor.u32 %v2756, 2147483648
    %v2758 = vmul.f32 %v2757, 1.442695
    %v2759 = vpow.pop %v2758
    %v2760 = vadd.f32 %v2759, 1.0
    %v2761 = vrcp.pop %v2760
    %v2762 = vmul.f32 1.0, %v2761
    %v2763 = vadd.f32 %v2750, %v2547
    %v2765 = vrot.slane %v2763, 4
    %2766 = vrot.lane.b32.xlu0 %v2765, 64
    %v2767 = vpop.permute.xlu0 %2766
    %v2769 = vmul.f32 %v2762, %v2767
    %2771 = vrot.lane.b32.xlu0 %v2769, 64
    %v2772 = vpop.permute.xlu0 %2771
    %v2774 = vadd.f32 %v2446, %v2772
    %v2775 = vtanh.pop %v2774
    %v2776 = vsub.f32 1.0, %v2762
    %2778 = vrot.lane.b32.xlu0 %v2775, 96
    %v2779 = vpop.permute.xlu0 %2778
    %v2781 = vmul.f32 %v2776, %v2779
    %v2782 = vrot.slane %v2676, 6
    %v2784 = vmul.f32 %v2762, %v2782
    %v2785 = vadd.f32 %v2781, %v2784
    %v2787 = vrot.slane %v2785, 4
    %2788 = vrot.lane.b32.xlu0 %v2787, 96
    %v2789 = vpop.permute.xlu0 %2788
    %v2790 = vsel %vm230, %v2789, 0
    %2792 = vmatprep.subr.mxu0 0.0
    %2793 = vmatpush1.msra.mxu0 0.0
    %2794 = vmatprep.subr.mxu0 0.0
    %2795 = vmatpush1.msra.mxu0 0.0
    %2796 = vmatprep.subr.mxu0 0.0
    %2797 = vmatpush1.msra.mxu0 0.0
    %2798 = vmatprep.subr.mxu0 0.0
    %2799 = vmatpush1.msra.mxu0 0.0
    %2800 = vmatprep.subr.mxu0 0.0
    %2801 = vmatpush1.msra.mxu0 0.0
    %2802 = vmatprep.subr.mxu0 0.0
    %2803 = vmatpush1.msra.mxu0 0.0
    %2804 = vmatprep.subr.mxu0 0.0
    %2805 = vmatpush1.msra.mxu0 0.0
    %2806 = vmatprep.subr.mxu0 0.0
    %2807 = vmatpush1.msra.mxu0 0.0
    %2808 = vmatprep.subr.mxu0 0.0
    %2809 = vmatpush1.msra.mxu0 0.0
    %2810 = vmatprep.subr.mxu0 0.0
    %2811 = vmatpush1.msra.mxu0 0.0
    %2812 = vmatprep.subr.mxu0 0.0
    %2813 = vmatpush1.msra.mxu0 0.0
    %2814 = vmatprep.subr.mxu0 0.0
    %2815 = vmatpush1.msra.mxu0 0.0
    %2816 = vmatprep.subr.mxu0 0.0
    %2817 = vmatpush1.msra.mxu0 %v2462
    %2818 = vmatprep.subr.mxu0 0.0
    %2819 = vmatpush1.msra.mxu0 %v2461
    %2820 = vmatprep.subr.mxu0 0.0
    %2821 = vmatpush1.msra.mxu0 %v2460
    %2822 = vmatprep.subr.mxu0 0.0
    %2823 = vmatpush1.msra.mxu0 %v2459
    %2824 = vmatprep.subr.mxu0 0.0
    %2825 = vmatpush2.msra.mxu0 0.0
    %2826 = vmatprep.subr.mxu0 0.0
    %2827 = vmatpush2.msra.mxu0 0.0
    %2828 = vmatprep.subr.mxu0 0.0
    %2829 = vmatpush2.msra.mxu0 0.0
    %2830 = vmatprep.subr.mxu0 0.0
    %2831 = vmatpush2.msra.mxu0 0.0
    %2832 = vmatprep.subr.mxu0 0.0
    %2833 = vmatpush2.msra.mxu0 0.0
    %2834 = vmatprep.subr.mxu0 0.0
    %2835 = vmatpush2.msra.mxu0 0.0
    %2836 = vmatprep.subr.mxu0 0.0
    %2837 = vmatpush2.msra.mxu0 0.0
    %2838 = vmatprep.subr.mxu0 0.0
    %2839 = vmatpush2.msra.mxu0 0.0
    %2840 = vmatprep.subr.mxu0 0.0
    %2841 = vmatpush2.msra.mxu0 0.0
    %2842 = vmatprep.subr.mxu0 0.0
    %2843 = vmatpush2.msra.mxu0 0.0
    %2844 = vmatprep.subr.mxu0 0.0
    %2845 = vmatpush2.msra.mxu0 0.0
    %2846 = vmatprep.subr.mxu0 0.0
    %2847 = vmatpush2.msra.mxu0 0.0
    %2848 = vmatprep.subr.mxu0 0.0
    %2849 = vmatpush2.msra.mxu0 0.0
    %2850 = vmatprep.subr.mxu0 0.0
    %2851 = vmatpush2.msra.mxu0 0.0
    %2852 = vmatprep.subr.mxu0 0.0
    %2853 = vmatpush2.msra.mxu0 0.0
    %2854 = vmatprep.subr.mxu0 0.0
    %2855 = vmatpush2.msra.mxu0 0.0
    %2856 = vmatprep.mubr.f32.mxu0 0.0
    %2857 = vmatmul.mubr.f32.gmra.mxu0 %v2790
    %v2858 = vpop.f32.mrf.mxu0
    %v2859 = vadd.f32 0.0, %v2858
    %v2860 = vpop.f32.mrf.mxu0
    %2861 = vdwg.mxu0
    %v2863 = vrot.slane %v2859, 2
    %v2865 = vadd.f32 %v2446, %v2863
    %v2866 = vxor.u32 %v2865, 2147483648
    %v2867 = vmul.f32 %v2866, 1.442695
    %v2868 = vpow.pop %v2867
    %v2869 = vadd.f32 %v2868, 1.0
    %v2870 = vrcp.pop %v2869
    %v2871 = vmul.f32 1.0, %v2870
    %v2872 = vadd.f32 %v2859, %v2547
    %v2874 = vrot.slane %v2872, 2
    %2875 = vrot.lane.b32.xlu0 %v2874, 64
    %v2876 = vpop.permute.xlu0 %2875
    %v2878 = vmul.f32 %v2871, %v2876
    %2880 = vrot.lane.b32.xlu0 %v2878, 64
    %v2881 = vpop.permute.xlu0 %2880
    %v2883 = vadd.f32 %v2446, %v2881
    %v2884 = vtanh.pop %v2883
    %v2885 = vsub.f32 1.0, %v2871
    %2887 = vrot.lane.b32.xlu0 %v2884, 96
    %v2888 = vpop.permute.xlu0 %2887
    %v2890 = vmul.f32 %v2885, %v2888
    %v2891 = vrot.slane %v2785, 6
    %v2893 = vmul.f32 %v2871, %v2891
    %v2894 = vadd.f32 %v2890, %v2893
    %v2896 = vrot.slane %v2894, 6
    %2897 = vrot.lane.b32.xlu0 %v2896, 96
    %v2898 = vpop.permute.xlu0 %2897
    %v2899 = vsel %vm230, %v2898, 0
    %2901 = vmatprep.subr.mxu0 0.0
    %2902 = vmatpush1.msra.mxu0 0.0
    %2903 = vmatprep.subr.mxu0 0.0
    %2904 = vmatpush1.msra.mxu0 0.0
    %2905 = vmatprep.subr.mxu0 0.0
    %2906 = vmatpush1.msra.mxu0 0.0
    %2907 = vmatprep.subr.mxu0 0.0
    %2908 = vmatpush1.msra.mxu0 0.0
    %2909 = vmatprep.subr.mxu0 0.0
    %2910 = vmatpush1.msra.mxu0 0.0
    %2911 = vmatprep.subr.mxu0 0.0
    %2912 = vmatpush1.msra.mxu0 0.0
    %2913 = vmatprep.subr.mxu0 0.0
    %2914 = vmatpush1.msra.mxu0 0.0
    %2915 = vmatprep.subr.mxu0 0.0
    %2916 = vmatpush1.msra.mxu0 0.0
    %2917 = vmatprep.subr.mxu0 0.0
    %2918 = vmatpush1.msra.mxu0 0.0
    %2919 = vmatprep.subr.mxu0 0.0
    %2920 = vmatpush1.msra.mxu0 0.0
    %2921 = vmatprep.subr.mxu0 0.0
    %2922 = vmatpush1.msra.mxu0 0.0
    %2923 = vmatprep.subr.mxu0 0.0
    %2924 = vmatpush1.msra.mxu0 0.0
    %2925 = vmatprep.subr.mxu0 0.0
    %2926 = vmatpush1.msra.mxu0 %v2462
    %2927 = vmatprep.subr.mxu0 0.0
    %2928 = vmatpush1.msra.mxu0 %v2461
    %2929 = vmatprep.subr.mxu0 0.0
    %2930 = vmatpush1.msra.mxu0 %v2460
    %2931 = vmatprep.subr.mxu0 0.0
    %2932 = vmatpush1.msra.mxu0 %v2459
    %2933 = vmatprep.subr.mxu0 0.0
    %2934 = vmatpush2.msra.mxu0 0.0
    %2935 = vmatprep.subr.mxu0 0.0
    %2936 = vmatpush2.msra.mxu0 0.0
    %2937 = vmatprep.subr.mxu0 0.0
    %2938 = vmatpush2.msra.mxu0 0.0
    %2939 = vmatprep.subr.mxu0 0.0
    %2940 = vmatpush2.msra.mxu0 0.0
    %2941 = vmatprep.subr.mxu0 0.0
    %2942 = vmatpush2.msra.mxu0 0.0
    %2943 = vmatprep.subr.mxu0 0.0
    %2944 = vmatpush2.msra.mxu0 0.0
    %2945 = vmatprep.subr.mxu0 0.0
    %2946 = vmatpush2.msra.mxu0 0.0
    %2947 = vmatprep.subr.mxu0 0.0
    %2948 = vmatpush2.msra.mxu0 0.0
    %2949 = vmatprep.subr.mxu0 0.0
    %2950 = vmatpush2.msra.mxu0 0.0
    %2951 = vmatprep.subr.mxu0 0.0
    %2952 = vmatpush2.msra.mxu0 0.0
    %2953 = vmatprep.subr.mxu0 0.0
    %2954 = vmatpush2.msra.mxu0 0.0
    %2955 = vmatprep.subr.mxu0 0.0
    %2956 = vmatpush2.msra.mxu0 0.0
    %2957 = vmatprep.subr.mxu0 0.0
    %2958 = vmatpush2.msra.mxu0 0.0
    %2959 = vmatprep.subr.mxu0 0.0
    %2960 = vmatpush2.msra.mxu0 0.0
    %2961 = vmatprep.subr.mxu0 0.0
    %2962 = vmatpush2.msra.mxu0 0.0
    %2963 = vmatprep.subr.mxu0 0.0
    %2964 = vmatpush2.msra.mxu0 0.0
    %2965 = vmatprep.mubr.f32.mxu0 0.0
    %2966 = vmatmul.mubr.f32.gmra.mxu0 %v2899
    %v2967 = vpop.f32.mrf.mxu0
    %v2968 = vadd.f32 0.0, %v2967
    %v2969 = vpop.f32.mrf.mxu0
    %2970 = vdwg.mxu0
    %v2971 = vadd.f32 %v2451, %v2968
    %v2972 = vxor.u32 %v2971, 2147483648
    %v2973 = vmul.f32 %v2972, 1.442695
    %v2974 = vpow.pop %v2973
    %v2975 = vadd.f32 %v2974, 1.0
    %v2976 = vrcp.pop %v2975
    %v2977 = vmul.f32 1.0, %v2976
    %v2978 = vadd.f32 %v2968, %v2547
    %2980 = vrot.lane.b32.xlu0 %v2978, 64
    %v2981 = vpop.permute.xlu0 %2980
    %v2983 = vmul.f32 %v2977, %v2981
    %2985 = vrot.lane.b32.xlu0 %v2983, 64
    %v2986 = vpop.permute.xlu0 %2985
    %v2988 = vadd.f32 %v2451, %v2986
    %v2989 = vtanh.pop %v2988
    %v2990 = vsub.f32 1.0, %v2977
    %2992 = vrot.lane.b32.xlu0 %v2989, 96
    %v2993 = vpop.permute.xlu0 %2992
    %v2995 = vmul.f32 %v2990, %v2993
    %v2997 = vmul.f32 %v2977, %v2896
    %v2998 = vadd.f32 %v2995, %v2997
    %3000 = vrot.lane.b32.xlu0 %v2998, 96
    %v3001 = vpop.permute.xlu0 %3000
    %v3002 = vsel %vm230, %v3001, 0
    %3004 = vmatprep.subr.mxu0 0.0
    %3005 = vmatpush1.msra.mxu0 0.0
    %3006 = vmatprep.subr.mxu0 0.0
    %3007 = vmatpush1.msra.mxu0 0.0
    %3008 = vmatprep.subr.mxu0 0.0
    %3009 = vmatpush1.msra.mxu0 0.0
    %3010 = vmatprep.subr.mxu0 0.0
    %3011 = vmatpush1.msra.mxu0 0.0
    %3012 = vmatprep.subr.mxu0 0.0
    %3013 = vmatpush1.msra.mxu0 0.0
    %3014 = vmatprep.subr.mxu0 0.0
    %3015 = vmatpush1.msra.mxu0 0.0
    %3016 = vmatprep.subr.mxu0 0.0
    %3017 = vmatpush1.msra.mxu0 0.0
    %3018 = vmatprep.subr.mxu0 0.0
    %3019 = vmatpush1.msra.mxu0 0.0
    %3020 = vmatprep.subr.mxu0 0.0
    %3021 = vmatpush1.msra.mxu0 0.0
    %3022 = vmatprep.subr.mxu0 0.0
    %3023 = vmatpush1.msra.mxu0 0.0
    %3024 = vmatprep.subr.mxu0 0.0
    %3025 = vmatpush1.msra.mxu0 0.0
    %3026 = vmatprep.subr.mxu0 0.0
    %3027 = vmatpush1.msra.mxu0 0.0
    %3028 = vmatprep.subr.mxu0 0.0
    %3029 = vmatpush1.msra.mxu0 %v2462
    %3030 = vmatprep.subr.mxu0 0.0
    %3031 = vmatpush1.msra.mxu0 %v2461
    %3032 = vmatprep.subr.mxu0 0.0
    %3033 = vmatpush1.msra.mxu0 %v2460
    %3034 = vmatprep.subr.mxu0 0.0
    %3035 = vmatpush1.msra.mxu0 %v2459
    %3036 = vmatprep.subr.mxu0 0.0
    %3037 = vmatpush2.msra.mxu0 0.0
    %3038 = vmatprep.subr.mxu0 0.0
    %3039 = vmatpush2.msra.mxu0 0.0
    %3040 = vmatprep.subr.mxu0 0.0
    %3041 = vmatpush2.msra.mxu0 0.0
    %3042 = vmatprep.subr.mxu0 0.0
    %3043 = vmatpush2.msra.mxu0 0.0
    %3044 = vmatprep.subr.mxu0 0.0
    %3045 = vmatpush2.msra.mxu0 0.0
    %3046 = vmatprep.subr.mxu0 0.0
    %3047 = vmatpush2.msra.mxu0 0.0
    %3048 = vmatprep.subr.mxu0 0.0
    %3049 = vmatpush2.msra.mxu0 0.0
    %3050 = vmatprep.subr.mxu0 0.0
    %3051 = vmatpush2.msra.mxu0 0.0
    %3052 = vmatprep.subr.mxu0 0.0
    %3053 = vmatpush2.msra.mxu0 0.0
    %3054 = vmatprep.subr.mxu0 0.0
    %3055 = vmatpush2.msra.mxu0 0.0
    %3056 = vmatprep.subr.mxu0 0.0
    %3057 = vmatpush2.msra.mxu0 0.0
    %3058 = vmatprep.subr.mxu0 0.0
    %3059 = vmatpush2.msra.mxu0 0.0
    %3060 = vmatprep.subr.mxu0 0.0
    %3061 = vmatpush2.msra.mxu0 0.0
    %3062 = vmatprep.subr.mxu0 0.0
    %3063 = vmatpush2.msra.mxu0 0.0
    %3064 = vmatprep.subr.mxu0 0.0
    %3065 = vmatpush2.msra.mxu0 0.0
    %3066 = vmatprep.subr.mxu0 0.0
    %3067 = vmatpush2.msra.mxu0 0.0
    %3068 = vmatprep.mubr.f32.mxu0 0.0
    %3069 = vmatmul.mubr.f32.gmra.mxu0 %v3002
    %v3070 = vpop.f32.mrf.mxu0
    %v3071 = vadd.f32 0.0, %v3070
    %v3072 = vpop.f32.mrf.mxu0
    %3073 = vdwg.mxu0
    %v3075 = vrot.slane %v3071, 6
    %v3077 = vadd.f32 %v2451, %v3075
    %v3078 = vxor.u32 %v3077, 2147483648
    %v3079 = vmul.f32 %v3078, 1.442695
    %v3080 = vpow.pop %v3079
    %v3081 = vadd.f32 %v3080, 1.0
    %v3082 = vrcp.pop %v3081
    %v3083 = vmul.f32 1.0, %v3082
    %v3084 = vadd.f32 %v3071, %v2547
    %v3086 = vrot.slane %v3084, 6
    %3087 = vrot.lane.b32.xlu0 %v3086, 64
    %v3088 = vpop.permute.xlu0 %3087
    %v3090 = vmul.f32 %v3083, %v3088
    %3092 = vrot.lane.b32.xlu0 %v3090, 64
    %v3093 = vpop.permute.xlu0 %3092
    %v3095 = vadd.f32 %v2451, %v3093
    %v3096 = vtanh.pop %v3095
    %v3097 = vsub.f32 1.0, %v3083
    %3099 = vrot.lane.b32.xlu0 %v3096, 96
    %v3100 = vpop.permute.xlu0 %3099
    %v3102 = vmul.f32 %v3097, %v3100
    %v3103 = vrot.slane %v2998, 6
    %v3105 = vmul.f32 %v3083, %v3103
    %v3106 = vadd.f32 %v3102, %v3105
    %v3108 = vrot.slane %v3106, 2
    %3109 = vrot.lane.b32.xlu0 %v3108, 96
    %v3110 = vpop.permute.xlu0 %3109
    %v3111 = vsel %vm230, %v3110, 0
    %3113 = vmatprep.subr.mxu0 0.0
    %3114 = vmatpush1.msra.mxu0 0.0
    %3115 = vmatprep.subr.mxu0 0.0
    %3116 = vmatpush1.msra.mxu0 0.0
    %3117 = vmatprep.subr.mxu0 0.0
    %3118 = vmatpush1.msra.mxu0 0.0
    %3119 = vmatprep.subr.mxu0 0.0
    %3120 = vmatpush1.msra.mxu0 0.0
    %3121 = vmatprep.subr.mxu0 0.0
    %3122 = vmatpush1.msra.mxu0 0.0
    %3123 = vmatprep.subr.mxu0 0.0
    %3124 = vmatpush1.msra.mxu0 0.0
    %3125 = vmatprep.subr.mxu0 0.0
    %3126 = vmatpush1.msra.mxu0 0.0
    %3127 = vmatprep.subr.mxu0 0.0
    %3128 = vmatpush1.msra.mxu0 0.0
    %3129 = vmatprep.subr.mxu0 0.0
    %3130 = vmatpush1.msra.mxu0 0.0
    %3131 = vmatprep.subr.mxu0 0.0
    %3132 = vmatpush1.msra.mxu0 0.0
    %3133 = vmatprep.subr.mxu0 0.0
    %3134 = vmatpush1.msra.mxu0 0.0
    %3135 = vmatprep.subr.mxu0 0.0
    %3136 = vmatpush1.msra.mxu0 0.0
    %3137 = vmatprep.subr.mxu0 0.0
    %3138 = vmatpush1.msra.mxu0 %v2462
    %3139 = vmatprep.subr.mxu0 0.0
    %3140 = vmatpush1.msra.mxu0 %v2461
    %3141 = vmatprep.subr.mxu0 0.0
    %3142 = vmatpush1.msra.mxu0 %v2460
    %3143 = vmatprep.subr.mxu0 0.0
    %3144 = vmatpush1.msra.mxu0 %v2459
    %3145 = vmatprep.subr.mxu0 0.0
    %3146 = vmatpush2.msra.mxu0 0.0
    %3147 = vmatprep.subr.mxu0 0.0
    %3148 = vmatpush2.msra.mxu0 0.0
    %3149 = vmatprep.subr.mxu0 0.0
    %3150 = vmatpush2.msra.mxu0 0.0
    %3151 = vmatprep.subr.mxu0 0.0
    %3152 = vmatpush2.msra.mxu0 0.0
    %3153 = vmatprep.subr.mxu0 0.0
    %3154 = vmatpush2.msra.mxu0 0.0
    %3155 = vmatprep.subr.mxu0 0.0
    %3156 = vmatpush2.msra.mxu0 0.0
    %3157 = vmatprep.subr.mxu0 0.0
    %3158 = vmatpush2.msra.mxu0 0.0
    %3159 = vmatprep.subr.mxu0 0.0
    %3160 = vmatpush2.msra.mxu0 0.0
    %3161 = vmatprep.subr.mxu0 0.0
    %3162 = vmatpush2.msra.mxu0 0.0
    %3163 = vmatprep.subr.mxu0 0.0
    %3164 = vmatpush2.msra.mxu0 0.0
    %3165 = vmatprep.subr.mxu0 0.0
    %3166 = vmatpush2.msra.mxu0 0.0
    %3167 = vmatprep.subr.mxu0 0.0
    %3168 = vmatpush2.msra.mxu0 0.0
    %3169 = vmatprep.subr.mxu0 0.0
    %3170 = vmatpush2.msra.mxu0 0.0
    %3171 = vmatprep.subr.mxu0 0.0
    %3172 = vmatpush2.msra.mxu0 0.0
    %3173 = vmatprep.subr.mxu0 0.0
    %3174 = vmatpush2.msra.mxu0 0.0
    %3175 = vmatprep.subr.mxu0 0.0
    %3176 = vmatpush2.msra.mxu0 0.0
    %3177 = vmatprep.mubr.f32.mxu0 0.0
    %3178 = vmatmul.mubr.f32.gmra.mxu0 %v3111
    %v3179 = vpop.f32.mrf.mxu0
    %v3180 = vadd.f32 0.0, %v3179
    %v3181 = vpop.f32.mrf.mxu0
    %3182 = vdwg.mxu0
    %v3184 = vrot.slane %v3180, 4
    %v3186 = vadd.f32 %v2451, %v3184
    %v3187 = vxor.u32 %v3186, 2147483648
    %v3188 = vmul.f32 %v3187, 1.442695
    %v3189 = vpow.pop %v3188
    %v3190 = vadd.f32 %v3189, 1.0
    %v3191 = vrcp.pop %v3190
    %v3192 = vmul.f32 1.0, %v3191
    %v3193 = vadd.f32 %v3180, %v2547
    %v3195 = vrot.slane %v3193, 4
    %3196 = vrot.lane.b32.xlu0 %v3195, 64
    %v3197 = vpop.permute.xlu0 %3196
    %v3199 = vmul.f32 %v3192, %v3197
    %3201 = vrot.lane.b32.xlu0 %v3199, 64
    %v3202 = vpop.permute.xlu0 %3201
    %v3204 = vadd.f32 %v2451, %v3202
    %v3205 = vtanh.pop %v3204
    %v3206 = vsub.f32 1.0, %v3192
    %3208 = vrot.lane.b32.xlu0 %v3205, 96
    %v3209 = vpop.permute.xlu0 %3208
    %v3211 = vmul.f32 %v3206, %v3209
    %v3212 = vrot.slane %v3106, 6
    %v3214 = vmul.f32 %v3192, %v3212
    %v3215 = vadd.f32 %v3211, %v3214
    %v3217 = vrot.slane %v3215, 4
    %3218 = vrot.lane.b32.xlu0 %v3217, 96
    %v3219 = vpop.permute.xlu0 %3218
    %v3220 = vsel %vm230, %v3219, 0
    %3222 = vmatprep.subr.mxu0 0.0
    %3223 = vmatpush1.msra.mxu0 0.0
    %3224 = vmatprep.subr.mxu0 0.0
    %3225 = vmatpush1.msra.mxu0 0.0
    %3226 = vmatprep.subr.mxu0 0.0
    %3227 = vmatpush1.msra.mxu0 0.0
    %3228 = vmatprep.subr.mxu0 0.0
    %3229 = vmatpush1.msra.mxu0 0.0
    %3230 = vmatprep.subr.mxu0 0.0
    %3231 = vmatpush1.msra.mxu0 0.0
    %3232 = vmatprep.subr.mxu0 0.0
    %3233 = vmatpush1.msra.mxu0 0.0
    %3234 = vmatprep.subr.mxu0 0.0
    %3235 = vmatpush1.msra.mxu0 0.0
    %3236 = vmatprep.subr.mxu0 0.0
    %3237 = vmatpush1.msra.mxu0 0.0
    %3238 = vmatprep.subr.mxu0 0.0
    %3239 = vmatpush1.msra.mxu0 0.0
    %3240 = vmatprep.subr.mxu0 0.0
    %3241 = vmatpush1.msra.mxu0 0.0
    %3242 = vmatprep.subr.mxu0 0.0
    %3243 = vmatpush1.msra.mxu0 0.0
    %3244 = vmatprep.subr.mxu0 0.0
    %3245 = vmatpush1.msra.mxu0 0.0
    %3246 = vmatprep.subr.mxu0 0.0
    %3247 = vmatpush1.msra.mxu0 %v2462
    %3248 = vmatprep.subr.mxu0 0.0
    %3249 = vmatpush1.msra.mxu0 %v2461
    %3250 = vmatprep.subr.mxu0 0.0
    %3251 = vmatpush1.msra.mxu0 %v2460
    %3252 = vmatprep.subr.mxu0 0.0
    %3253 = vmatpush1.msra.mxu0 %v2459
    %3254 = vmatprep.subr.mxu0 0.0
    %3255 = vmatpush2.msra.mxu0 0.0
    %3256 = vmatprep.subr.mxu0 0.0
    %3257 = vmatpush2.msra.mxu0 0.0
    %3258 = vmatprep.subr.mxu0 0.0
    %3259 = vmatpush2.msra.mxu0 0.0
    %3260 = vmatprep.subr.mxu0 0.0
    %3261 = vmatpush2.msra.mxu0 0.0
    %3262 = vmatprep.subr.mxu0 0.0
    %3263 = vmatpush2.msra.mxu0 0.0
    %3264 = vmatprep.subr.mxu0 0.0
    %3265 = vmatpush2.msra.mxu0 0.0
    %3266 = vmatprep.subr.mxu0 0.0
    %3267 = vmatpush2.msra.mxu0 0.0
    %3268 = vmatprep.subr.mxu0 0.0
    %3269 = vmatpush2.msra.mxu0 0.0
    %3270 = vmatprep.subr.mxu0 0.0
    %3271 = vmatpush2.msra.mxu0 0.0
    %3272 = vmatprep.subr.mxu0 0.0
    %3273 = vmatpush2.msra.mxu0 0.0
    %3274 = vmatprep.subr.mxu0 0.0
    %3275 = vmatpush2.msra.mxu0 0.0
    %3276 = vmatprep.subr.mxu0 0.0
    %3277 = vmatpush2.msra.mxu0 0.0
    %3278 = vmatprep.subr.mxu0 0.0
    %3279 = vmatpush2.msra.mxu0 0.0
    %3280 = vmatprep.subr.mxu0 0.0
    %3281 = vmatpush2.msra.mxu0 0.0
    %3282 = vmatprep.subr.mxu0 0.0
    %3283 = vmatpush2.msra.mxu0 0.0
    %3284 = vmatprep.subr.mxu0 0.0
    %3285 = vmatpush2.msra.mxu0 0.0
    %3286 = vmatprep.mubr.f32.mxu0 0.0
    %3287 = vmatmul.mubr.f32.gmra.mxu0 %v3220
    %v3288 = vpop.f32.mrf.mxu0
    %v3289 = vadd.f32 0.0, %v3288
    %v3290 = vpop.f32.mrf.mxu0
    %3291 = vdwg.mxu0
    %v3293 = vrot.slane %v3289, 2
    %v3295 = vadd.f32 %v2451, %v3293
    %v3296 = vxor.u32 %v3295, 2147483648
    %v3297 = vmul.f32 %v3296, 1.442695
    %v3298 = vpow.pop %v3297
    %v3299 = vadd.f32 %v3298, 1.0
    %v3300 = vrcp.pop %v3299
    %v3301 = vmul.f32 1.0, %v3300
    %v3302 = vadd.f32 %v3289, %v2547
    %v3304 = vrot.slane %v3302, 2
    %3305 = vrot.lane.b32.xlu0 %v3304, 64
    %v3306 = vpop.permute.xlu0 %3305
    %v3308 = vmul.f32 %v3301, %v3306
    %3310 = vrot.lane.b32.xlu0 %v3308, 64
    %v3311 = vpop.permute.xlu0 %3310
    %v3313 = vadd.f32 %v2451, %v3311
    %v3314 = vtanh.pop %v3313
    %v3315 = vsub.f32 1.0, %v3301
    %3317 = vrot.lane.b32.xlu0 %v3314, 96
    %v3318 = vpop.permute.xlu0 %3317
    %v3320 = vmul.f32 %v3315, %v3318
    %v3321 = vrot.slane %v3215, 6
    %v3323 = vmul.f32 %v3301, %v3321
    %v3324 = vadd.f32 %v3320, %v3323
    %v3326 = vrot.slane %v3324, 6
    %3327 = vrot.lane.b32.xlu0 %v3326, 96
    %v3328 = vpop.permute.xlu0 %3327
    %v3329 = vsel %vm230, %v3328, 0
    %3331 = vmatprep.subr.mxu0 0.0
    %3332 = vmatpush1.msra.mxu0 0.0
    %3333 = vmatprep.subr.mxu0 0.0
    %3334 = vmatpush1.msra.mxu0 0.0
    %3335 = vmatprep.subr.mxu0 0.0
    %3336 = vmatpush1.msra.mxu0 0.0
    %3337 = vmatprep.subr.mxu0 0.0
    %3338 = vmatpush1.msra.mxu0 0.0
    %3339 = vmatprep.subr.mxu0 0.0
    %3340 = vmatpush1.msra.mxu0 0.0
    %3341 = vmatprep.subr.mxu0 0.0
    %3342 = vmatpush1.msra.mxu0 0.0
    %3343 = vmatprep.subr.mxu0 0.0
    %3344 = vmatpush1.msra.mxu0 0.0
    %3345 = vmatprep.subr.mxu0 0.0
    %3346 = vmatpush1.msra.mxu0 0.0
    %3347 = vmatprep.subr.mxu0 0.0
    %3348 = vmatpush1.msra.mxu0 0.0
    %3349 = vmatprep.subr.mxu0 0.0
    %3350 = vmatpush1.msra.mxu0 0.0
    %3351 = vmatprep.subr.mxu0 0.0
    %3352 = vmatpush1.msra.mxu0 0.0
    %3353 = vmatprep.subr.mxu0 0.0
    %3354 = vmatpush1.msra.mxu0 0.0
    %3355 = vmatprep.subr.mxu0 0.0
    %3356 = vmatpush1.msra.mxu0 %v2462
    %3357 = vmatprep.subr.mxu0 0.0
    %3358 = vmatpush1.msra.mxu0 %v2461
    %3359 = vmatprep.subr.mxu0 0.0
    %3360 = vmatpush1.msra.mxu0 %v2460
    %3361 = vmatprep.subr.mxu0 0.0
    %3362 = vmatpush1.msra.mxu0 %v2459
    %3363 = vmatprep.subr.mxu0 0.0
    %3364 = vmatpush2.msra.mxu0 0.0
    %3365 = vmatprep.subr.mxu0 0.0
    %3366 = vmatpush2.msra.mxu0 0.0
    %3367 = vmatprep.subr.mxu0 0.0
    %3368 = vmatpush2.msra.mxu0 0.0
    %3369 = vmatprep.subr.mxu0 0.0
    %3370 = vmatpush2.msra.mxu0 0.0
    %3371 = vmatprep.subr.mxu0 0.0
    %3372 = vmatpush2.msra.mxu0 0.0
    %3373 = vmatprep.subr.mxu0 0.0
    %3374 = vmatpush2.msra.mxu0 0.0
    %3375 = vmatprep.subr.mxu0 0.0
    %3376 = vmatpush2.msra.mxu0 0.0
    %3377 = vmatprep.subr.mxu0 0.0
    %3378 = vmatpush2.msra.mxu0 0.0
    %3379 = vmatprep.subr.mxu0 0.0
    %3380 = vmatpush2.msra.mxu0 0.0
    %3381 = vmatprep.subr.mxu0 0.0
    %3382 = vmatpush2.msra.mxu0 0.0
    %3383 = vmatprep.subr.mxu0 0.0
    %3384 = vmatpush2.msra.mxu0 0.0
    %3385 = vmatprep.subr.mxu0 0.0
    %3386 = vmatpush2.msra.mxu0 0.0
    %3387 = vmatprep.subr.mxu0 0.0
    %3388 = vmatpush2.msra.mxu0 0.0
    %3389 = vmatprep.subr.mxu0 0.0
    %3390 = vmatpush2.msra.mxu0 0.0
    %3391 = vmatprep.subr.mxu0 0.0
    %3392 = vmatpush2.msra.mxu0 0.0
    %3393 = vmatprep.subr.mxu0 0.0
    %3394 = vmatpush2.msra.mxu0 0.0
    %3395 = vmatprep.mubr.f32.mxu0 0.0
    %3396 = vmatmul.mubr.f32.gmra.mxu0 %v3329
    %v3397 = vpop.f32.mrf.mxu0
    %v3398 = vadd.f32 0.0, %v3397
    %v3399 = vpop.f32.mrf.mxu0
    %3400 = vdwg.mxu0
    %v3401 = vadd.f32 %v2456, %v3398
    %v3402 = vxor.u32 %v3401, 2147483648
    %v3403 = vmul.f32 %v3402, 1.442695
    %v3404 = vpow.pop %v3403
    %v3405 = vadd.f32 %v3404, 1.0
    %v3406 = vrcp.pop %v3405
    %v3407 = vmul.f32 1.0, %v3406
    %v3408 = vadd.f32 %v3398, %v2547
    %3410 = vrot.lane.b32.xlu0 %v3408, 64
    %v3411 = vpop.permute.xlu0 %3410
    %v3413 = vmul.f32 %v3407, %v3411
    %3415 = vrot.lane.b32.xlu0 %v3413, 64
    %v3416 = vpop.permute.xlu0 %3415
    %v3418 = vadd.f32 %v2456, %v3416
    %v3419 = vtanh.pop %v3418
    %v3420 = vsub.f32 1.0, %v3407
    %3422 = vrot.lane.b32.xlu0 %v3419, 96
    %v3423 = vpop.permute.xlu0 %3422
    %v3425 = vmul.f32 %v3420, %v3423
    %v3427 = vmul.f32 %v3407, %v3326
    %v3428 = vadd.f32 %v3425, %v3427
    %3430 = vrot.lane.b32.xlu0 %v3428, 96
    %v3431 = vpop.permute.xlu0 %3430
    %v3432 = vsel %vm230, %v3431, 0
    %3434 = vmatprep.subr.mxu0 0.0
    %3435 = vmatpush1.msra.mxu0 0.0
    %3436 = vmatprep.subr.mxu0 0.0
    %3437 = vmatpush1.msra.mxu0 0.0
    %3438 = vmatprep.subr.mxu0 0.0
    %3439 = vmatpush1.msra.mxu0 0.0
    %3440 = vmatprep.subr.mxu0 0.0
    %3441 = vmatpush1.msra.mxu0 0.0
    %3442 = vmatprep.subr.mxu0 0.0
    %3443 = vmatpush1.msra.mxu0 0.0
    %3444 = vmatprep.subr.mxu0 0.0
    %3445 = vmatpush1.msra.mxu0 0.0
    %3446 = vmatprep.subr.mxu0 0.0
    %3447 = vmatpush1.msra.mxu0 0.0
    %3448 = vmatprep.subr.mxu0 0.0
    %3449 = vmatpush1.msra.mxu0 0.0
    %3450 = vmatprep.subr.mxu0 0.0
    %3451 = vmatpush1.msra.mxu0 0.0
    %3452 = vmatprep.subr.mxu0 0.0
    %3453 = vmatpush1.msra.mxu0 0.0
    %3454 = vmatprep.subr.mxu0 0.0
    %3455 = vmatpush1.msra.mxu0 0.0
    %3456 = vmatprep.subr.mxu0 0.0
    %3457 = vmatpush1.msra.mxu0 0.0
    %3458 = vmatprep.subr.mxu0 0.0
    %3459 = vmatpush1.msra.mxu0 %v2462
    %3460 = vmatprep.subr.mxu0 0.0
    %3461 = vmatpush1.msra.mxu0 %v2461
    %3462 = vmatprep.subr.mxu0 0.0
    %3463 = vmatpush1.msra.mxu0 %v2460
    %3464 = vmatprep.subr.mxu0 0.0
    %3465 = vmatpush1.msra.mxu0 %v2459
    %3466 = vmatprep.subr.mxu0 0.0
    %3467 = vmatpush2.msra.mxu0 0.0
    %3468 = vmatprep.subr.mxu0 0.0
    %3469 = vmatpush2.msra.mxu0 0.0
    %3470 = vmatprep.subr.mxu0 0.0
    %3471 = vmatpush2.msra.mxu0 0.0
    %3472 = vmatprep.subr.mxu0 0.0
    %3473 = vmatpush2.msra.mxu0 0.0
    %3474 = vmatprep.subr.mxu0 0.0
    %3475 = vmatpush2.msra.mxu0 0.0
    %3476 = vmatprep.subr.mxu0 0.0
    %3477 = vmatpush2.msra.mxu0 0.0
    %3478 = vmatprep.subr.mxu0 0.0
    %3479 = vmatpush2.msra.mxu0 0.0
    %3480 = vmatprep.subr.mxu0 0.0
    %3481 = vmatpush2.msra.mxu0 0.0
    %3482 = vmatprep.subr.mxu0 0.0
    %3483 = vmatpush2.msra.mxu0 0.0
    %3484 = vmatprep.subr.mxu0 0.0
    %3485 = vmatpush2.msra.mxu0 0.0
    %3486 = vmatprep.subr.mxu0 0.0
    %3487 = vmatpush2.msra.mxu0 0.0
    %3488 = vmatprep.subr.mxu0 0.0
    %3489 = vmatpush2.msra.mxu0 0.0
    %3490 = vmatprep.subr.mxu0 0.0
    %3491 = vmatpush2.msra.mxu0 0.0
    %3492 = vmatprep.subr.mxu0 0.0
    %3493 = vmatpush2.msra.mxu0 0.0
    %3494 = vmatprep.subr.mxu0 0.0
    %3495 = vmatpush2.msra.mxu0 0.0
    %3496 = vmatprep.subr.mxu0 0.0
    %3497 = vmatpush2.msra.mxu0 0.0
    %3498 = vmatprep.mubr.f32.mxu0 0.0
    %3499 = vmatmul.mubr.f32.gmra.mxu0 %v3432
    %v3500 = vpop.f32.mrf.mxu0
    %v3501 = vadd.f32 0.0, %v3500
    %v3502 = vpop.f32.mrf.mxu0
    %3503 = vdwg.mxu0
    %v3505 = vrot.slane %v3501, 6
    %v3507 = vadd.f32 %v2456, %v3505
    %v3508 = vxor.u32 %v3507, 2147483648
    %v3509 = vmul.f32 %v3508, 1.442695
    %v3510 = vpow.pop %v3509
    %v3511 = vadd.f32 %v3510, 1.0
    %v3512 = vrcp.pop %v3511
    %v3513 = vmul.f32 1.0, %v3512
    %v3514 = vadd.f32 %v3501, %v2547
    %v3516 = vrot.slane %v3514, 6
    %3517 = vrot.lane.b32.xlu0 %v3516, 64
    %v3518 = vpop.permute.xlu0 %3517
    %v3520 = vmul.f32 %v3513, %v3518
    %3522 = vrot.lane.b32.xlu0 %v3520, 64
    %v3523 = vpop.permute.xlu0 %3522
    %v3525 = vadd.f32 %v2456, %v3523
    %v3526 = vtanh.pop %v3525
    %v3527 = vsub.f32 1.0, %v3513
    %3529 = vrot.lane.b32.xlu0 %v3526, 96
    %v3530 = vpop.permute.xlu0 %3529
    %v3532 = vmul.f32 %v3527, %v3530
    %v3533 = vrot.slane %v3428, 6
    %v3535 = vmul.f32 %v3513, %v3533
    %v3536 = vadd.f32 %v3532, %v3535
    %v3538 = vrot.slane %v3536, 2
    %3539 = vrot.lane.b32.xlu0 %v3538, 96
    %v3540 = vpop.permute.xlu0 %3539
    %v3541 = vsel %vm230, %v3540, 0
    %3543 = vmatprep.subr.mxu0 0.0
    %3544 = vmatpush1.msra.mxu0 0.0
    %3545 = vmatprep.subr.mxu0 0.0
    %3546 = vmatpush1.msra.mxu0 0.0
    %3547 = vmatprep.subr.mxu0 0.0
    %3548 = vmatpush1.msra.mxu0 0.0
    %3549 = vmatprep.subr.mxu0 0.0
    %3550 = vmatpush1.msra.mxu0 0.0
    %3551 = vmatprep.subr.mxu0 0.0
    %3552 = vmatpush1.msra.mxu0 0.0
    %3553 = vmatprep.subr.mxu0 0.0
    %3554 = vmatpush1.msra.mxu0 0.0
    %3555 = vmatprep.subr.mxu0 0.0
    %3556 = vmatpush1.msra.mxu0 0.0
    %3557 = vmatprep.subr.mxu0 0.0
    %3558 = vmatpush1.msra.mxu0 0.0
    %3559 = vmatprep.subr.mxu0 0.0
    %3560 = vmatpush1.msra.mxu0 0.0
    %3561 = vmatprep.subr.mxu0 0.0
    %3562 = vmatpush1.msra.mxu0 0.0
    %3563 = vmatprep.subr.mxu0 0.0
    %3564 = vmatpush1.msra.mxu0 0.0
    %3565 = vmatprep.subr.mxu0 0.0
    %3566 = vmatpush1.msra.mxu0 0.0
    %3567 = vmatprep.subr.mxu0 0.0
    %3568 = vmatpush1.msra.mxu0 %v2462
    %3569 = vmatprep.subr.mxu0 0.0
    %3570 = vmatpush1.msra.mxu0 %v2461
    %3571 = vmatprep.subr.mxu0 0.0
    %3572 = vmatpush1.msra.mxu0 %v2460
    %3573 = vmatprep.subr.mxu0 0.0
    %3574 = vmatpush1.msra.mxu0 %v2459
    %3575 = vmatprep.subr.mxu0 0.0
    %3576 = vmatpush2.msra.mxu0 0.0
    %3577 = vmatprep.subr.mxu0 0.0
    %3578 = vmatpush2.msra.mxu0 0.0
    %3579 = vmatprep.subr.mxu0 0.0
    %3580 = vmatpush2.msra.mxu0 0.0
    %3581 = vmatprep.subr.mxu0 0.0
    %3582 = vmatpush2.msra.mxu0 0.0
    %3583 = vmatprep.subr.mxu0 0.0
    %3584 = vmatpush2.msra.mxu0 0.0
    %3585 = vmatprep.subr.mxu0 0.0
    %3586 = vmatpush2.msra.mxu0 0.0
    %3587 = vmatprep.subr.mxu0 0.0
    %3588 = vmatpush2.msra.mxu0 0.0
    %3589 = vmatprep.subr.mxu0 0.0
    %3590 = vmatpush2.msra.mxu0 0.0
    %3591 = vmatprep.subr.mxu0 0.0
    %3592 = vmatpush2.msra.mxu0 0.0
    %3593 = vmatprep.subr.mxu0 0.0
    %3594 = vmatpush2.msra.mxu0 0.0
    %3595 = vmatprep.subr.mxu0 0.0
    %3596 = vmatpush2.msra.mxu0 0.0
    %3597 = vmatprep.subr.mxu0 0.0
    %3598 = vmatpush2.msra.mxu0 0.0
    %3599 = vmatprep.subr.mxu0 0.0
    %3600 = vmatpush2.msra.mxu0 0.0
    %3601 = vmatprep.subr.mxu0 0.0
    %3602 = vmatpush2.msra.mxu0 0.0
    %3603 = vmatprep.subr.mxu0 0.0
    %3604 = vmatpush2.msra.mxu0 0.0
    %3605 = vmatprep.subr.mxu0 0.0
    %3606 = vmatpush2.msra.mxu0 0.0
    %3607 = vmatprep.mubr.f32.mxu0 0.0
    %3608 = vmatmul.mubr.f32.gmra.mxu0 %v3541
    %v3609 = vpop.f32.mrf.mxu0
    %v3610 = vadd.f32 0.0, %v3609
    %v3611 = vpop.f32.mrf.mxu0
    %3612 = vdwg.mxu0
    %v3614 = vrot.slane %v3610, 4
    %v3616 = vadd.f32 %v2456, %v3614
    %v3617 = vxor.u32 %v3616, 2147483648
    %v3618 = vmul.f32 %v3617, 1.442695
    %v3619 = vpow.pop %v3618
    %v3620 = vadd.f32 %v3619, 1.0
    %v3621 = vrcp.pop %v3620
    %v3622 = vmul.f32 1.0, %v3621
    %v3623 = vadd.f32 %v3610, %v2547
    %v3625 = vrot.slane %v3623, 4
    %3626 = vrot.lane.b32.xlu0 %v3625, 64
    %v3627 = vpop.permute.xlu0 %3626
    %v3629 = vmul.f32 %v3622, %v3627
    %3631 = vrot.lane.b32.xlu0 %v3629, 64
    %v3632 = vpop.permute.xlu0 %3631
    %v3634 = vadd.f32 %v2456, %v3632
    %v3635 = vtanh.pop %v3634
    %v3636 = vsub.f32 1.0, %v3622
    %3638 = vrot.lane.b32.xlu0 %v3635, 96
    %v3639 = vpop.permute.xlu0 %3638
    %v3641 = vmul.f32 %v3636, %v3639
    %v3642 = vrot.slane %v3536, 6
    %v3644 = vmul.f32 %v3622, %v3642
    %v3645 = vadd.f32 %v3641, %v3644
    %v3647 = vrot.slane %v3645, 4
    %3648 = vrot.lane.b32.xlu0 %v3647, 96
    %v3649 = vpop.permute.xlu0 %3648
    %v3650 = vsel %vm230, %v3649, 0
    %3652 = vmatprep.subr.mxu0 0.0
    %3653 = vmatpush1.msra.mxu0 0.0
    %3654 = vmatprep.subr.mxu0 0.0
    %3655 = vmatpush1.msra.mxu0 0.0
    %3656 = vmatprep.subr.mxu0 0.0
    %3657 = vmatpush1.msra.mxu0 0.0
    %3658 = vmatprep.subr.mxu0 0.0
    %3659 = vmatpush1.msra.mxu0 0.0
    %3660 = vmatprep.subr.mxu0 0.0
    %3661 = vmatpush1.msra.mxu0 0.0
    %3662 = vmatprep.subr.mxu0 0.0
    %3663 = vmatpush1.msra.mxu0 0.0
    %3664 = vmatprep.subr.mxu0 0.0
    %3665 = vmatpush1.msra.mxu0 0.0
    %3666 = vmatprep.subr.mxu0 0.0
    %3667 = vmatpush1.msra.mxu0 0.0
    %3668 = vmatprep.subr.mxu0 0.0
    %3669 = vmatpush1.msra.mxu0 0.0
    %3670 = vmatprep.subr.mxu0 0.0
    %3671 = vmatpush1.msra.mxu0 0.0
    %3672 = vmatprep.subr.mxu0 0.0
    %3673 = vmatpush1.msra.mxu0 0.0
    %3674 = vmatprep.subr.mxu0 0.0
    %3675 = vmatpush1.msra.mxu0 0.0
    %3676 = vmatprep.subr.mxu0 0.0
    %3677 = vmatpush1.msra.mxu0 %v2462
    %3678 = vmatprep.subr.mxu0 0.0
    %3679 = vmatpush1.msra.mxu0 %v2461
    %3680 = vmatprep.subr.mxu0 0.0
    %3681 = vmatpush1.msra.mxu0 %v2460
    %3682 = vmatprep.subr.mxu0 0.0
    %3683 = vmatpush1.msra.mxu0 %v2459
    %3684 = vmatprep.subr.mxu0 0.0
    %3685 = vmatpush2.msra.mxu0 0.0
    %3686 = vmatprep.subr.mxu0 0.0
    %3687 = vmatpush2.msra.mxu0 0.0
    %3688 = vmatprep.subr.mxu0 0.0
    %3689 = vmatpush2.msra.mxu0 0.0
    %3690 = vmatprep.subr.mxu0 0.0
    %3691 = vmatpush2.msra.mxu0 0.0
    %3692 = vmatprep.subr.mxu0 0.0
    %3693 = vmatpush2.msra.mxu0 0.0
    %3694 = vmatprep.subr.mxu0 0.0
    %3695 = vmatpush2.msra.mxu0 0.0
    %3696 = vmatprep.subr.mxu0 0.0
    %3697 = vmatpush2.msra.mxu0 0.0
    %3698 = vmatprep.subr.mxu0 0.0
    %3699 = vmatpush2.msra.mxu0 0.0
    %3700 = vmatprep.subr.mxu0 0.0
    %3701 = vmatpush2.msra.mxu0 0.0
    %3702 = vmatprep.subr.mxu0 0.0
    %3703 = vmatpush2.msra.mxu0 0.0
    %3704 = vmatprep.subr.mxu0 0.0
    %3705 = vmatpush2.msra.mxu0 0.0
    %3706 = vmatprep.subr.mxu0 0.0
    %3707 = vmatpush2.msra.mxu0 0.0
    %3708 = vmatprep.subr.mxu0 0.0
    %3709 = vmatpush2.msra.mxu0 0.0
    %3710 = vmatprep.subr.mxu0 0.0
    %3711 = vmatpush2.msra.mxu0 0.0
    %3712 = vmatprep.subr.mxu0 0.0
    %3713 = vmatpush2.msra.mxu0 0.0
    %3714 = vmatprep.subr.mxu0 0.0
    %3715 = vmatpush2.msra.mxu0 0.0
    %3716 = vmatprep.mubr.f32.mxu0 0.0
    %3717 = vmatmul.mubr.f32.gmra.mxu0 %v3650
    %v3718 = vpop.f32.mrf.mxu0
    %v3719 = vadd.f32 0.0, %v3718
    %v3720 = vpop.f32.mrf.mxu0
    %3721 = vdwg.mxu0
    %v3723 = vrot.slane %v3719, 2
    %v3725 = vadd.f32 %v2456, %v3723
    %v3726 = vxor.u32 %v3725, 2147483648
    %v3727 = vmul.f32 %v3726, 1.442695
    %v3728 = vpow.pop %v3727
    %v3729 = vadd.f32 %v3728, 1.0
    %v3730 = vrcp.pop %v3729
    %v3731 = vmul.f32 1.0, %v3730
    %v3732 = vadd.f32 %v3719, %v2547
    %v3734 = vrot.slane %v3732, 2
    %3735 = vrot.lane.b32.xlu0 %v3734, 64
    %v3736 = vpop.permute.xlu0 %3735
    %v3738 = vmul.f32 %v3731, %v3736
    %3740 = vrot.lane.b32.xlu0 %v3738, 64
    %v3741 = vpop.permute.xlu0 %3740
    %v3743 = vadd.f32 %v2456, %v3741
    %v3744 = vtanh.pop %v3743
    %v3745 = vsub.f32 1.0, %v3731
    %3747 = vrot.lane.b32.xlu0 %v3744, 96
    %v3748 = vpop.permute.xlu0 %3747
    %v3750 = vmul.f32 %v3745, %v3748
    %v3751 = vrot.slane %v3645, 6
    %v3753 = vmul.f32 %v3731, %v3751
    %v3754 = vadd.f32 %v3750, %v3753
    %v3755 = vsel %vm140, %v2568, %v2676
    %v3756 = vsel %vm1182, %v3755, %v2785
    %v3757 = vsel %vm1184, %v3756, %v2894
    %v3758 = vsel %vm140, %v2998, %v3106
    %v3759 = vsel %vm1182, %v3758, %v3215
    %v3760 = vsel %vm1184, %v3759, %v3324
    %v3761 = vsel %vm140, %v3428, %v3536
    %v3762 = vsel %vm1182, %v3761, %v3645
    %v3763 = vsel %vm1184, %v3762, %v3754
    %v3764 = vld [vmem:[%s18] sm:$0xff]
    %v3765 = vld [vmem:[%s18 + $0x8] sm:$0xff]
    %v3766 = vld [vmem:[%s18 + $0x10] sm:$0xff]
    %v3767 = vld [vmem:[%s18 + $0x18] sm:$0xff]
    %v3768 = vld [vmem:[%s20] sm:$0x1]
    %v3770 = vlaneseq
    %v3771 = vshrl.u32 %v3770, 7
    %v3772 = vsub.s32 0, %v3771
    %v3773 = vrot.slane %v3768, %v3772
    %3778 = vrot.lane.b32.xlu0 %v3757, 96
    %v3779 = vpop.permute.xlu0 %3778
    %3780 = vrot.lane.b32.xlu0 %v3760, 96
    %v3781 = vpop.permute.xlu0 %3780
    %3782 = vrot.lane.b32.xlu0 %v3763, 96
    %v3783 = vpop.permute.xlu0 %3782
    %v3784 = vsel %vm230, %v3779, 0
    %v3786 = vsel %vm230, %v3781, 0
    %v3788 = vsel %vm230, %v3783, 0
    %3790 = vmatprep.subr.mxu0 0.0
    %3791 = vmatpush1.msra.mxu0 0.0
    %3792 = vmatprep.subr.mxu0 0.0
    %3793 = vmatpush1.msra.mxu0 0.0
    %3794 = vmatprep.subr.mxu0 0.0
    %3795 = vmatpush1.msra.mxu0 0.0
    %3796 = vmatprep.subr.mxu0 0.0
    %3797 = vmatpush1.msra.mxu0 0.0
    %3798 = vmatprep.subr.mxu0 0.0
    %3799 = vmatpush1.msra.mxu0 0.0
    %3800 = vmatprep.subr.mxu0 0.0
    %3801 = vmatpush1.msra.mxu0 0.0
    %3802 = vmatprep.subr.mxu0 0.0
    %3803 = vmatpush1.msra.mxu0 0.0
    %3804 = vmatprep.subr.mxu0 0.0
    %3805 = vmatpush1.msra.mxu0 0.0
    %3806 = vmatprep.subr.mxu0 0.0
    %3807 = vmatpush1.msra.mxu0 0.0
    %3808 = vmatprep.subr.mxu0 0.0
    %3809 = vmatpush1.msra.mxu0 0.0
    %3810 = vmatprep.subr.mxu0 0.0
    %3811 = vmatpush1.msra.mxu0 0.0
    %3812 = vmatprep.subr.mxu0 0.0
    %3813 = vmatpush1.msra.mxu0 0.0
    %3814 = vmatprep.subr.mxu0 0.0
    %3815 = vmatpush1.msra.mxu0 %v3767
    %3816 = vmatprep.subr.mxu0 0.0
    %3817 = vmatpush1.msra.mxu0 %v3766
    %3818 = vmatprep.subr.mxu0 0.0
    %3819 = vmatpush1.msra.mxu0 %v3765
    %3820 = vmatprep.subr.mxu0 0.0
    %3821 = vmatpush1.msra.mxu0 %v3764
    %3822 = vmatprep.subr.mxu0 0.0
    %3823 = vmatpush2.msra.mxu0 0.0
    %3824 = vmatprep.subr.mxu0 0.0
    %3825 = vmatpush2.msra.mxu0 0.0
    %3826 = vmatprep.subr.mxu0 0.0
    %3827 = vmatpush2.msra.mxu0 0.0
    %3828 = vmatprep.subr.mxu0 0.0
    %3829 = vmatpush2.msra.mxu0 0.0
    %3830 = vmatprep.subr.mxu0 0.0
    %3831 = vmatpush2.msra.mxu0 0.0
    %3832 = vmatprep.subr.mxu0 0.0
    %3833 = vmatpush2.msra.mxu0 0.0
    %3834 = vmatprep.subr.mxu0 0.0
    %3835 = vmatpush2.msra.mxu0 0.0
    %3836 = vmatprep.subr.mxu0 0.0
    %3837 = vmatpush2.msra.mxu0 0.0
    %3838 = vmatprep.subr.mxu0 0.0
    %3839 = vmatpush2.msra.mxu0 0.0
    %3840 = vmatprep.subr.mxu0 0.0
    %3841 = vmatpush2.msra.mxu0 0.0
    %3842 = vmatprep.subr.mxu0 0.0
    %3843 = vmatpush2.msra.mxu0 0.0
    %3844 = vmatprep.subr.mxu0 0.0
    %3845 = vmatpush2.msra.mxu0 0.0
    %3846 = vmatprep.subr.mxu0 0.0
    %3847 = vmatpush2.msra.mxu0 0.0
    %3848 = vmatprep.subr.mxu0 0.0
    %3849 = vmatpush2.msra.mxu0 0.0
    %3850 = vmatprep.subr.mxu0 0.0
    %3851 = vmatpush2.msra.mxu0 0.0
    %3852 = vmatprep.subr.mxu0 0.0
    %3853 = vmatpush2.msra.mxu0 0.0
    %3854 = vmatprep.mubr.f32.mxu0 0.0
    %3855 = vmatmul.mubr.f32.gmra.mxu0 %v3784
    %v3856 = vpop.f32.mrf.mxu0
    %v3857 = vadd.f32 %v3773, %v3856
    %v3858 = vpop.f32.mrf.mxu0
    %3859 = vmatprep.mubr.f32.mxu0 0.0
    %3860 = vmatmul.mubr.f32.gmra.mxu0 %v3786
    %v3861 = vpop.f32.mrf.mxu0
    %v3862 = vadd.f32 %v3773, %v3861
    %v3863 = vpop.f32.mrf.mxu0
    %3864 = vmatprep.mubr.f32.mxu0 0.0
    %3865 = vmatmul.mubr.f32.gmra.mxu0 %v3788
    %v3866 = vpop.f32.mrf.mxu0
    %v3867 = vadd.f32 %v3773, %v3866
    %v3868 = vpop.f32.mrf.mxu0
    %3869 = vdwg.mxu0
    %v3870 = vld [vmem:[%s19] sm:$0xff]
    %v3871 = vld [vmem:[%s19 + $0x8] sm:$0xff]
    %v3872 = vld [vmem:[%s19 + $0x10] sm:$0xff]
    %v3873 = vld [vmem:[%s19 + $0x18] sm:$0xff]
    %v3874 = vld [vmem:[%s21] sm:$0x1]
    %3875 = vmatprep.subr.mxu0 0.0
    %3876 = vmatpush1.msra.mxu0 0.0
    %3877 = vmatprep.subr.mxu0 0.0
    %3878 = vmatpush1.msra.mxu0 0.0
    %3879 = vmatprep.subr.mxu0 0.0
    %3880 = vmatpush1.msra.mxu0 0.0
    %3881 = vmatprep.subr.mxu0 0.0
    %3882 = vmatpush1.msra.mxu0 0.0
    %3883 = vmatprep.subr.mxu0 0.0
    %3884 = vmatpush1.msra.mxu0 0.0
    %3885 = vmatprep.subr.mxu0 0.0
    %3886 = vmatpush1.msra.mxu0 0.0
    %3887 = vmatprep.subr.mxu0 0.0
    %3888 = vmatpush1.msra.mxu0 0.0
    %3889 = vmatprep.subr.mxu0 0.0
    %3890 = vmatpush1.msra.mxu0 0.0
    %3891 = vmatprep.subr.mxu0 0.0
    %3892 = vmatpush1.msra.mxu0 0.0
    %3893 = vmatprep.subr.mxu0 0.0
    %3894 = vmatpush1.msra.mxu0 0.0
    %3895 = vmatprep.subr.mxu0 0.0
    %3896 = vmatpush1.msra.mxu0 0.0
    %3897 = vmatprep.subr.mxu0 0.0
    %3898 = vmatpush1.msra.mxu0 0.0
    %3899 = vmatprep.subr.mxu0 0.0
    %3900 = vmatpush1.msra.mxu0 %v3873
    %3901 = vmatprep.subr.mxu0 0.0
    %3902 = vmatpush1.msra.mxu0 %v3872
    %3903 = vmatprep.subr.mxu0 0.0
    %3904 = vmatpush1.msra.mxu0 %v3871
    %3905 = vmatprep.subr.mxu0 0.0
    %3906 = vmatpush1.msra.mxu0 %v3870
    %3907 = vmatprep.subr.mxu0 0.0
    %3908 = vmatpush2.msra.mxu0 0.0
    %3909 = vmatprep.subr.mxu0 0.0
    %3910 = vmatpush2.msra.mxu0 0.0
    %3911 = vmatprep.subr.mxu0 0.0
    %3912 = vmatpush2.msra.mxu0 0.0
    %3913 = vmatprep.subr.mxu0 0.0
    %3914 = vmatpush2.msra.mxu0 0.0
    %3915 = vmatprep.subr.mxu0 0.0
    %3916 = vmatpush2.msra.mxu0 0.0
    %3917 = vmatprep.subr.mxu0 0.0
    %3918 = vmatpush2.msra.mxu0 0.0
    %3919 = vmatprep.subr.mxu0 0.0
    %3920 = vmatpush2.msra.mxu0 0.0
    %3921 = vmatprep.subr.mxu0 0.0
    %3922 = vmatpush2.msra.mxu0 0.0
    %3923 = vmatprep.subr.mxu0 0.0
    %3924 = vmatpush2.msra.mxu0 0.0
    %3925 = vmatprep.subr.mxu0 0.0
    %3926 = vmatpush2.msra.mxu0 0.0
    %3927 = vmatprep.subr.mxu0 0.0
    %3928 = vmatpush2.msra.mxu0 0.0
    %3929 = vmatprep.subr.mxu0 0.0
    %3930 = vmatpush2.msra.mxu0 0.0
    %3931 = vmatprep.subr.mxu0 0.0
    %3932 = vmatpush2.msra.mxu0 0.0
    %3933 = vmatprep.subr.mxu0 0.0
    %3934 = vmatpush2.msra.mxu0 0.0
    %3935 = vmatprep.subr.mxu0 0.0
    %3936 = vmatpush2.msra.mxu0 0.0
    %3937 = vmatprep.subr.mxu0 0.0
    %3938 = vmatpush2.msra.mxu0 0.0
    %3939 = vmatprep.mubr.f32.mxu0 0.0
    %3940 = vmatmul.mubr.f32.gmra.mxu0 %v318
    %v3941 = vpop.f32.mrf.mxu0
    %v3942 = vadd.f32 0.0, %v3941
    %v3943 = vpop.f32.mrf.mxu0
    %3944 = vdwg.mxu0
    %v3945 = vadd.f32 %v3857, %v3942
    %v3946 = vxor.u32 %v3945, 2147483648
    %v3947 = vmul.f32 %v3946, 1.442695
    %v3948 = vpow.pop %v3947
    %v3949 = vadd.f32 %v3948, 1.0
    %v3950 = vrcp.pop %v3949
    %v3951 = vmul.f32 1.0, %v3950
    %v3953 = vlaneseq
    %v3954 = vshrl.u32 %v3953, 7
    %v3955 = vsub.s32 0, %v3954
    %v3956 = vrot.slane %v3874, %v3955
    %3957 = vrot.lane.b32.xlu0 %v3956, 64
    %v3958 = vpop.permute.xlu0 %3957
    %v3960 = vadd.f32 %v3942, %v3958
    %3962 = vrot.lane.b32.xlu0 %v3960, 64
    %v3963 = vpop.permute.xlu0 %3962
    %v3965 = vmul.f32 %v3951, %v3963
    %3967 = vrot.lane.b32.xlu0 %v3965, 64
    %v3968 = vpop.permute.xlu0 %3967
    %v3970 = vadd.f32 %v3857, %v3968
    %v3971 = vtanh.pop %v3970
    %v3972 = vsub.f32 1.0, %v3951
    %3974 = vrot.lane.b32.xlu0 %v3971, 96
    %v3975 = vpop.permute.xlu0 %3974
    %v3977 = vmul.f32 %v3972, %v3975
    %v3978 = vmul.f32 %v3951, 0.0
    %v3979 = vadd.f32 %v3977, %v3978
    %3981 = vrot.lane.b32.xlu0 %v3979, 96
    %v3982 = vpop.permute.xlu0 %3981
    %v3983 = vsel %vm230, %v3982, 0
    %3985 = vmatprep.subr.mxu0 0.0
    %3986 = vmatpush1.msra.mxu0 0.0
    %3987 = vmatprep.subr.mxu0 0.0
    %3988 = vmatpush1.msra.mxu0 0.0
    %3989 = vmatprep.subr.mxu0 0.0
    %3990 = vmatpush1.msra.mxu0 0.0
    %3991 = vmatprep.subr.mxu0 0.0
    %3992 = vmatpush1.msra.mxu0 0.0
    %3993 = vmatprep.subr.mxu0 0.0
    %3994 = vmatpush1.msra.mxu0 0.0
    %3995 = vmatprep.subr.mxu0 0.0
    %3996 = vmatpush1.msra.mxu0 0.0
    %3997 = vmatprep.subr.mxu0 0.0
    %3998 = vmatpush1.msra.mxu0 0.0
    %3999 = vmatprep.subr.mxu0 0.0
    %4000 = vmatpush1.msra.mxu0 0.0
    %4001 = vmatprep.subr.mxu0 0.0
    %4002 = vmatpush1.msra.mxu0 0.0
    %4003 = vmatprep.subr.mxu0 0.0
    %4004 = vmatpush1.msra.mxu0 0.0
    %4005 = vmatprep.subr.mxu0 0.0
    %4006 = vmatpush1.msra.mxu0 0.0
    %4007 = vmatprep.subr.mxu0 0.0
    %4008 = vmatpush1.msra.mxu0 0.0
    %4009 = vmatprep.subr.mxu0 0.0
    %4010 = vmatpush1.msra.mxu0 %v3873
    %4011 = vmatprep.subr.mxu0 0.0
    %4012 = vmatpush1.msra.mxu0 %v3872
    %4013 = vmatprep.subr.mxu0 0.0
    %4014 = vmatpush1.msra.mxu0 %v3871
    %4015 = vmatprep.subr.mxu0 0.0
    %4016 = vmatpush1.msra.mxu0 %v3870
    %4017 = vmatprep.subr.mxu0 0.0
    %4018 = vmatpush2.msra.mxu0 0.0
    %4019 = vmatprep.subr.mxu0 0.0
    %4020 = vmatpush2.msra.mxu0 0.0
    %4021 = vmatprep.subr.mxu0 0.0
    %4022 = vmatpush2.msra.mxu0 0.0
    %4023 = vmatprep.subr.mxu0 0.0
    %4024 = vmatpush2.msra.mxu0 0.0
    %4025 = vmatprep.subr.mxu0 0.0
    %4026 = vmatpush2.msra.mxu0 0.0
    %4027 = vmatprep.subr.mxu0 0.0
    %4028 = vmatpush2.msra.mxu0 0.0
    %4029 = vmatprep.subr.mxu0 0.0
    %4030 = vmatpush2.msra.mxu0 0.0
    %4031 = vmatprep.subr.mxu0 0.0
    %4032 = vmatpush2.msra.mxu0 0.0
    %4033 = vmatprep.subr.mxu0 0.0
    %4034 = vmatpush2.msra.mxu0 0.0
    %4035 = vmatprep.subr.mxu0 0.0
    %4036 = vmatpush2.msra.mxu0 0.0
    %4037 = vmatprep.subr.mxu0 0.0
    %4038 = vmatpush2.msra.mxu0 0.0
    %4039 = vmatprep.subr.mxu0 0.0
    %4040 = vmatpush2.msra.mxu0 0.0
    %4041 = vmatprep.subr.mxu0 0.0
    %4042 = vmatpush2.msra.mxu0 0.0
    %4043 = vmatprep.subr.mxu0 0.0
    %4044 = vmatpush2.msra.mxu0 0.0
    %4045 = vmatprep.subr.mxu0 0.0
    %4046 = vmatpush2.msra.mxu0 0.0
    %4047 = vmatprep.subr.mxu0 0.0
    %4048 = vmatpush2.msra.mxu0 0.0
    %4049 = vmatprep.mubr.f32.mxu0 0.0
    %4050 = vmatmul.mubr.f32.gmra.mxu0 %v3983
    %v4051 = vpop.f32.mrf.mxu0
    %v4052 = vadd.f32 0.0, %v4051
    %v4053 = vpop.f32.mrf.mxu0
    %4054 = vdwg.mxu0
    %v4056 = vrot.slane %v4052, 6
    %v4058 = vadd.f32 %v3857, %v4056
    %v4059 = vxor.u32 %v4058, 2147483648
    %v4060 = vmul.f32 %v4059, 1.442695
    %v4061 = vpow.pop %v4060
    %v4062 = vadd.f32 %v4061, 1.0
    %v4063 = vrcp.pop %v4062
    %v4064 = vmul.f32 1.0, %v4063
    %v4065 = vadd.f32 %v4052, %v3958
    %v4067 = vrot.slane %v4065, 6
    %4068 = vrot.lane.b32.xlu0 %v4067, 64
    %v4069 = vpop.permute.xlu0 %4068
    %v4071 = vmul.f32 %v4064, %v4069
    %4073 = vrot.lane.b32.xlu0 %v4071, 64
    %v4074 = vpop.permute.xlu0 %4073
    %v4076 = vadd.f32 %v3857, %v4074
    %v4077 = vtanh.pop %v4076
    %v4078 = vsub.f32 1.0, %v4064
    %4080 = vrot.lane.b32.xlu0 %v4077, 96
    %v4081 = vpop.permute.xlu0 %4080
    %v4083 = vmul.f32 %v4078, %v4081
    %v4084 = vrot.slane %v3979, 6
    %v4086 = vmul.f32 %v4064, %v4084
    %v4087 = vadd.f32 %v4083, %v4086
    %v4089 = vrot.slane %v4087, 2
    %4090 = vrot.lane.b32.xlu0 %v4089, 96
    %v4091 = vpop.permute.xlu0 %4090
    %v4092 = vsel %vm230, %v4091, 0
    %4094 = vmatprep.subr.mxu0 0.0
    %4095 = vmatpush1.msra.mxu0 0.0
    %4096 = vmatprep.subr.mxu0 0.0
    %4097 = vmatpush1.msra.mxu0 0.0
    %4098 = vmatprep.subr.mxu0 0.0
    %4099 = vmatpush1.msra.mxu0 0.0
    %4100 = vmatprep.subr.mxu0 0.0
    %4101 = vmatpush1.msra.mxu0 0.0
    %4102 = vmatprep.subr.mxu0 0.0
    %4103 = vmatpush1.msra.mxu0 0.0
    %4104 = vmatprep.subr.mxu0 0.0
    %4105 = vmatpush1.msra.mxu0 0.0
    %4106 = vmatprep.subr.mxu0 0.0
    %4107 = vmatpush1.msra.mxu0 0.0
    %4108 = vmatprep.subr.mxu0 0.0
    %4109 = vmatpush1.msra.mxu0 0.0
    %4110 = vmatprep.subr.mxu0 0.0
    %4111 = vmatpush1.msra.mxu0 0.0
    %4112 = vmatprep.subr.mxu0 0.0
    %4113 = vmatpush1.msra.mxu0 0.0
    %4114 = vmatprep.subr.mxu0 0.0
    %4115 = vmatpush1.msra.mxu0 0.0
    %4116 = vmatprep.subr.mxu0 0.0
    %4117 = vmatpush1.msra.mxu0 0.0
    %4118 = vmatprep.subr.mxu0 0.0
    %4119 = vmatpush1.msra.mxu0 %v3873
    %4120 = vmatprep.subr.mxu0 0.0
    %4121 = vmatpush1.msra.mxu0 %v3872
    %4122 = vmatprep.subr.mxu0 0.0
    %4123 = vmatpush1.msra.mxu0 %v3871
    %4124 = vmatprep.subr.mxu0 0.0
    %4125 = vmatpush1.msra.mxu0 %v3870
    %4126 = vmatprep.subr.mxu0 0.0
    %4127 = vmatpush2.msra.mxu0 0.0
    %4128 = vmatprep.subr.mxu0 0.0
    %4129 = vmatpush2.msra.mxu0 0.0
    %4130 = vmatprep.subr.mxu0 0.0
    %4131 = vmatpush2.msra.mxu0 0.0
    %4132 = vmatprep.subr.mxu0 0.0
    %4133 = vmatpush2.msra.mxu0 0.0
    %4134 = vmatprep.subr.mxu0 0.0
    %4135 = vmatpush2.msra.mxu0 0.0
    %4136 = vmatprep.subr.mxu0 0.0
    %4137 = vmatpush2.msra.mxu0 0.0
    %4138 = vmatprep.subr.mxu0 0.0
    %4139 = vmatpush2.msra.mxu0 0.0
    %4140 = vmatprep.subr.mxu0 0.0
    %4141 = vmatpush2.msra.mxu0 0.0
    %4142 = vmatprep.subr.mxu0 0.0
    %4143 = vmatpush2.msra.mxu0 0.0
    %4144 = vmatprep.subr.mxu0 0.0
    %4145 = vmatpush2.msra.mxu0 0.0
    %4146 = vmatprep.subr.mxu0 0.0
    %4147 = vmatpush2.msra.mxu0 0.0
    %4148 = vmatprep.subr.mxu0 0.0
    %4149 = vmatpush2.msra.mxu0 0.0
    %4150 = vmatprep.subr.mxu0 0.0
    %4151 = vmatpush2.msra.mxu0 0.0
    %4152 = vmatprep.subr.mxu0 0.0
    %4153 = vmatpush2.msra.mxu0 0.0
    %4154 = vmatprep.subr.mxu0 0.0
    %4155 = vmatpush2.msra.mxu0 0.0
    %4156 = vmatprep.subr.mxu0 0.0
    %4157 = vmatpush2.msra.mxu0 0.0
    %4158 = vmatprep.mubr.f32.mxu0 0.0
    %4159 = vmatmul.mubr.f32.gmra.mxu0 %v4092
    %v4160 = vpop.f32.mrf.mxu0
    %v4161 = vadd.f32 0.0, %v4160
    %v4162 = vpop.f32.mrf.mxu0
    %4163 = vdwg.mxu0
    %v4165 = vrot.slane %v4161, 4
    %v4167 = vadd.f32 %v3857, %v4165
    %v4168 = vxor.u32 %v4167, 2147483648
    %v4169 = vmul.f32 %v4168, 1.442695
    %v4170 = vpow.pop %v4169
    %v4171 = vadd.f32 %v4170, 1.0
    %v4172 = vrcp.pop %v4171
    %v4173 = vmul.f32 1.0, %v4172
    %v4174 = vadd.f32 %v4161, %v3958
    %v4176 = vrot.slane %v4174, 4
    %4177 = vrot.lane.b32.xlu0 %v4176, 64
    %v4178 = vpop.permute.xlu0 %4177
    %v4180 = vmul.f32 %v4173, %v4178
    %4182 = vrot.lane.b32.xlu0 %v4180, 64
    %v4183 = vpop.permute.xlu0 %4182
    %v4185 = vadd.f32 %v3857, %v4183
    %v4186 = vtanh.pop %v4185
    %v4187 = vsub.f32 1.0, %v4173
    %4189 = vrot.lane.b32.xlu0 %v4186, 96
    %v4190 = vpop.permute.xlu0 %4189
    %v4192 = vmul.f32 %v4187, %v4190
    %v4193 = vrot.slane %v4087, 6
    %v4195 = vmul.f32 %v4173, %v4193
    %v4196 = vadd.f32 %v4192, %v4195
    %v4198 = vrot.slane %v4196, 4
    %4199 = vrot.lane.b32.xlu0 %v4198, 96
    %v4200 = vpop.permute.xlu0 %4199
    %v4201 = vsel %vm230, %v4200, 0
    %4203 = vmatprep.subr.mxu0 0.0
    %4204 = vmatpush1.msra.mxu0 0.0
    %4205 = vmatprep.subr.mxu0 0.0
    %4206 = vmatpush1.msra.mxu0 0.0
    %4207 = vmatprep.subr.mxu0 0.0
    %4208 = vmatpush1.msra.mxu0 0.0
    %4209 = vmatprep.subr.mxu0 0.0
    %4210 = vmatpush1.msra.mxu0 0.0
    %4211 = vmatprep.subr.mxu0 0.0
    %4212 = vmatpush1.msra.mxu0 0.0
    %4213 = vmatprep.subr.mxu0 0.0
    %4214 = vmatpush1.msra.mxu0 0.0
    %4215 = vmatprep.subr.mxu0 0.0
    %4216 = vmatpush1.msra.mxu0 0.0
    %4217 = vmatprep.subr.mxu0 0.0
    %4218 = vmatpush1.msra.mxu0 0.0
    %4219 = vmatprep.subr.mxu0 0.0
    %4220 = vmatpush1.msra.mxu0 0.0
    %4221 = vmatprep.subr.mxu0 0.0
    %4222 = vmatpush1.msra.mxu0 0.0
    %4223 = vmatprep.subr.mxu0 0.0
    %4224 = vmatpush1.msra.mxu0 0.0
    %4225 = vmatprep.subr.mxu0 0.0
    %4226 = vmatpush1.msra.mxu0 0.0
    %4227 = vmatprep.subr.mxu0 0.0
    %4228 = vmatpush1.msra.mxu0 %v3873
    %4229 = vmatprep.subr.mxu0 0.0
    %4230 = vmatpush1.msra.mxu0 %v3872
    %4231 = vmatprep.subr.mxu0 0.0
    %4232 = vmatpush1.msra.mxu0 %v3871
    %4233 = vmatprep.subr.mxu0 0.0
    %4234 = vmatpush1.msra.mxu0 %v3870
    %4235 = vmatprep.subr.mxu0 0.0
    %4236 = vmatpush2.msra.mxu0 0.0
    %4237 = vmatprep.subr.mxu0 0.0
    %4238 = vmatpush2.msra.mxu0 0.0
    %4239 = vmatprep.subr.mxu0 0.0
    %4240 = vmatpush2.msra.mxu0 0.0
    %4241 = vmatprep.subr.mxu0 0.0
    %4242 = vmatpush2.msra.mxu0 0.0
    %4243 = vmatprep.subr.mxu0 0.0
    %4244 = vmatpush2.msra.mxu0 0.0
    %4245 = vmatprep.subr.mxu0 0.0
    %4246 = vmatpush2.msra.mxu0 0.0
    %4247 = vmatprep.subr.mxu0 0.0
    %4248 = vmatpush2.msra.mxu0 0.0
    %4249 = vmatprep.subr.mxu0 0.0
    %4250 = vmatpush2.msra.mxu0 0.0
    %4251 = vmatprep.subr.mxu0 0.0
    %4252 = vmatpush2.msra.mxu0 0.0
    %4253 = vmatprep.subr.mxu0 0.0
    %4254 = vmatpush2.msra.mxu0 0.0
    %4255 = vmatprep.subr.mxu0 0.0
    %4256 = vmatpush2.msra.mxu0 0.0
    %4257 = vmatprep.subr.mxu0 0.0
    %4258 = vmatpush2.msra.mxu0 0.0
    %4259 = vmatprep.subr.mxu0 0.0
    %4260 = vmatpush2.msra.mxu0 0.0
    %4261 = vmatprep.subr.mxu0 0.0
    %4262 = vmatpush2.msra.mxu0 0.0
    %4263 = vmatprep.subr.mxu0 0.0
    %4264 = vmatpush2.msra.mxu0 0.0
    %4265 = vmatprep.subr.mxu0 0.0
    %4266 = vmatpush2.msra.mxu0 0.0
    %4267 = vmatprep.mubr.f32.mxu0 0.0
    %4268 = vmatmul.mubr.f32.gmra.mxu0 %v4201
    %v4269 = vpop.f32.mrf.mxu0
    %v4270 = vadd.f32 0.0, %v4269
    %v4271 = vpop.f32.mrf.mxu0
    %4272 = vdwg.mxu0
    %v4274 = vrot.slane %v4270, 2
    %v4276 = vadd.f32 %v3857, %v4274
    %v4277 = vxor.u32 %v4276, 2147483648
    %v4278 = vmul.f32 %v4277, 1.442695
    %v4279 = vpow.pop %v4278
    %v4280 = vadd.f32 %v4279, 1.0
    %v4281 = vrcp.pop %v4280
    %v4282 = vmul.f32 1.0, %v4281
    %v4283 = vadd.f32 %v4270, %v3958
    %v4285 = vrot.slane %v4283, 2
    %4286 = vrot.lane.b32.xlu0 %v4285, 64
    %v4287 = vpop.permute.xlu0 %4286
    %v4289 = vmul.f32 %v4282, %v4287
    %4291 = vrot.lane.b32.xlu0 %v4289, 64
    %v4292 = vpop.permute.xlu0 %4291
    %v4294 = vadd.f32 %v3857, %v4292
    %v4295 = vtanh.pop %v4294
    %v4296 = vsub.f32 1.0, %v4282
    %4298 = vrot.lane.b32.xlu0 %v4295, 96
    %v4299 = vpop.permute.xlu0 %4298
    %v4301 = vmul.f32 %v4296, %v4299
    %v4302 = vrot.slane %v4196, 6
    %v4304 = vmul.f32 %v4282, %v4302
    %v4305 = vadd.f32 %v4301, %v4304
    %v4307 = vrot.slane %v4305, 6
    %4308 = vrot.lane.b32.xlu0 %v4307, 96
    %v4309 = vpop.permute.xlu0 %4308
    %v4310 = vsel %vm230, %v4309, 0
    %4312 = vmatprep.subr.mxu0 0.0
    %4313 = vmatpush1.msra.mxu0 0.0
    %4314 = vmatprep.subr.mxu0 0.0
    %4315 = vmatpush1.msra.mxu0 0.0
    %4316 = vmatprep.subr.mxu0 0.0
    %4317 = vmatpush1.msra.mxu0 0.0
    %4318 = vmatprep.subr.mxu0 0.0
    %4319 = vmatpush1.msra.mxu0 0.0
    %4320 = vmatprep.subr.mxu0 0.0
    %4321 = vmatpush1.msra.mxu0 0.0
    %4322 = vmatprep.subr.mxu0 0.0
    %4323 = vmatpush1.msra.mxu0 0.0
    %4324 = vmatprep.subr.mxu0 0.0
    %4325 = vmatpush1.msra.mxu0 0.0
    %4326 = vmatprep.subr.mxu0 0.0
    %4327 = vmatpush1.msra.mxu0 0.0
    %4328 = vmatprep.subr.mxu0 0.0
    %4329 = vmatpush1.msra.mxu0 0.0
    %4330 = vmatprep.subr.mxu0 0.0
    %4331 = vmatpush1.msra.mxu0 0.0
    %4332 = vmatprep.subr.mxu0 0.0
    %4333 = vmatpush1.msra.mxu0 0.0
    %4334 = vmatprep.subr.mxu0 0.0
    %4335 = vmatpush1.msra.mxu0 0.0
    %4336 = vmatprep.subr.mxu0 0.0
    %4337 = vmatpush1.msra.mxu0 %v3873
    %4338 = vmatprep.subr.mxu0 0.0
    %4339 = vmatpush1.msra.mxu0 %v3872
    %4340 = vmatprep.subr.mxu0 0.0
    %4341 = vmatpush1.msra.mxu0 %v3871
    %4342 = vmatprep.subr.mxu0 0.0
    %4343 = vmatpush1.msra.mxu0 %v3870
    %4344 = vmatprep.subr.mxu0 0.0
    %4345 = vmatpush2.msra.mxu0 0.0
    %4346 = vmatprep.subr.mxu0 0.0
    %4347 = vmatpush2.msra.mxu0 0.0
    %4348 = vmatprep.subr.mxu0 0.0
    %4349 = vmatpush2.msra.mxu0 0.0
    %4350 = vmatprep.subr.mxu0 0.0
    %4351 = vmatpush2.msra.mxu0 0.0
    %4352 = vmatprep.subr.mxu0 0.0
    %4353 = vmatpush2.msra.mxu0 0.0
    %4354 = vmatprep.subr.mxu0 0.0
    %4355 = vmatpush2.msra.mxu0 0.0
    %4356 = vmatprep.subr.mxu0 0.0
    %4357 = vmatpush2.msra.mxu0 0.0
    %4358 = vmatprep.subr.mxu0 0.0
    %4359 = vmatpush2.msra.mxu0 0.0
    %4360 = vmatprep.subr.mxu0 0.0
    %4361 = vmatpush2.msra.mxu0 0.0
    %4362 = vmatprep.subr.mxu0 0.0
    %4363 = vmatpush2.msra.mxu0 0.0
    %4364 = vmatprep.subr.mxu0 0.0
    %4365 = vmatpush2.msra.mxu0 0.0
    %4366 = vmatprep.subr.mxu0 0.0
    %4367 = vmatpush2.msra.mxu0 0.0
    %4368 = vmatprep.subr.mxu0 0.0
    %4369 = vmatpush2.msra.mxu0 0.0
    %4370 = vmatprep.subr.mxu0 0.0
    %4371 = vmatpush2.msra.mxu0 0.0
    %4372 = vmatprep.subr.mxu0 0.0
    %4373 = vmatpush2.msra.mxu0 0.0
    %4374 = vmatprep.subr.mxu0 0.0
    %4375 = vmatpush2.msra.mxu0 0.0
    %4376 = vmatprep.mubr.f32.mxu0 0.0
    %4377 = vmatmul.mubr.f32.gmra.mxu0 %v4310
    %v4378 = vpop.f32.mrf.mxu0
    %v4379 = vadd.f32 0.0, %v4378
    %v4380 = vpop.f32.mrf.mxu0
    %4381 = vdwg.mxu0
    %v4382 = vadd.f32 %v3862, %v4379
    %v4383 = vxor.u32 %v4382, 2147483648
    %v4384 = vmul.f32 %v4383, 1.442695
    %v4385 = vpow.pop %v4384
    %v4386 = vadd.f32 %v4385, 1.0
    %v4387 = vrcp.pop %v4386
    %v4388 = vmul.f32 1.0, %v4387
    %v4389 = vadd.f32 %v4379, %v3958
    %4391 = vrot.lane.b32.xlu0 %v4389, 64
    %v4392 = vpop.permute.xlu0 %4391
    %v4394 = vmul.f32 %v4388, %v4392
    %4396 = vrot.lane.b32.xlu0 %v4394, 64
    %v4397 = vpop.permute.xlu0 %4396
    %v4399 = vadd.f32 %v3862, %v4397
    %v4400 = vtanh.pop %v4399
    %v4401 = vsub.f32 1.0, %v4388
    %4403 = vrot.lane.b32.xlu0 %v4400, 96
    %v4404 = vpop.permute.xlu0 %4403
    %v4406 = vmul.f32 %v4401, %v4404
    %v4408 = vmul.f32 %v4388, %v4307
    %v4409 = vadd.f32 %v4406, %v4408
    %4411 = vrot.lane.b32.xlu0 %v4409, 96
    %v4412 = vpop.permute.xlu0 %4411
    %v4413 = vsel %vm230, %v4412, 0
    %4415 = vmatprep.subr.mxu0 0.0
    %4416 = vmatpush1.msra.mxu0 0.0
    %4417 = vmatprep.subr.mxu0 0.0
    %4418 = vmatpush1.msra.mxu0 0.0
    %4419 = vmatprep.subr.mxu0 0.0
    %4420 = vmatpush1.msra.mxu0 0.0
    %4421 = vmatprep.subr.mxu0 0.0
    %4422 = vmatpush1.msra.mxu0 0.0
    %4423 = vmatprep.subr.mxu0 0.0
    %4424 = vmatpush1.msra.mxu0 0.0
    %4425 = vmatprep.subr.mxu0 0.0
    %4426 = vmatpush1.msra.mxu0 0.0
    %4427 = vmatprep.subr.mxu0 0.0
    %4428 = vmatpush1.msra.mxu0 0.0
    %4429 = vmatprep.subr.mxu0 0.0
    %4430 = vmatpush1.msra.mxu0 0.0
    %4431 = vmatprep.subr.mxu0 0.0
    %4432 = vmatpush1.msra.mxu0 0.0
    %4433 = vmatprep.subr.mxu0 0.0
    %4434 = vmatpush1.msra.mxu0 0.0
    %4435 = vmatprep.subr.mxu0 0.0
    %4436 = vmatpush1.msra.mxu0 0.0
    %4437 = vmatprep.subr.mxu0 0.0
    %4438 = vmatpush1.msra.mxu0 0.0
    %4439 = vmatprep.subr.mxu0 0.0
    %4440 = vmatpush1.msra.mxu0 %v3873
    %4441 = vmatprep.subr.mxu0 0.0
    %4442 = vmatpush1.msra.mxu0 %v3872
    %4443 = vmatprep.subr.mxu0 0.0
    %4444 = vmatpush1.msra.mxu0 %v3871
    %4445 = vmatprep.subr.mxu0 0.0
    %4446 = vmatpush1.msra.mxu0 %v3870
    %4447 = vmatprep.subr.mxu0 0.0
    %4448 = vmatpush2.msra.mxu0 0.0
    %4449 = vmatprep.subr.mxu0 0.0
    %4450 = vmatpush2.msra.mxu0 0.0
    %4451 = vmatprep.subr.mxu0 0.0
    %4452 = vmatpush2.msra.mxu0 0.0
    %4453 = vmatprep.subr.mxu0 0.0
    %4454 = vmatpush2.msra.mxu0 0.0
    %4455 = vmatprep.subr.mxu0 0.0
    %4456 = vmatpush2.msra.mxu0 0.0
    %4457 = vmatprep.subr.mxu0 0.0
    %4458 = vmatpush2.msra.mxu0 0.0
    %4459 = vmatprep.subr.mxu0 0.0
    %4460 = vmatpush2.msra.mxu0 0.0
    %4461 = vmatprep.subr.mxu0 0.0
    %4462 = vmatpush2.msra.mxu0 0.0
    %4463 = vmatprep.subr.mxu0 0.0
    %4464 = vmatpush2.msra.mxu0 0.0
    %4465 = vmatprep.subr.mxu0 0.0
    %4466 = vmatpush2.msra.mxu0 0.0
    %4467 = vmatprep.subr.mxu0 0.0
    %4468 = vmatpush2.msra.mxu0 0.0
    %4469 = vmatprep.subr.mxu0 0.0
    %4470 = vmatpush2.msra.mxu0 0.0
    %4471 = vmatprep.subr.mxu0 0.0
    %4472 = vmatpush2.msra.mxu0 0.0
    %4473 = vmatprep.subr.mxu0 0.0
    %4474 = vmatpush2.msra.mxu0 0.0
    %4475 = vmatprep.subr.mxu0 0.0
    %4476 = vmatpush2.msra.mxu0 0.0
    %4477 = vmatprep.subr.mxu0 0.0
    %4478 = vmatpush2.msra.mxu0 0.0
    %4479 = vmatprep.mubr.f32.mxu0 0.0
    %4480 = vmatmul.mubr.f32.gmra.mxu0 %v4413
    %v4481 = vpop.f32.mrf.mxu0
    %v4482 = vadd.f32 0.0, %v4481
    %v4483 = vpop.f32.mrf.mxu0
    %4484 = vdwg.mxu0
    %v4486 = vrot.slane %v4482, 6
    %v4488 = vadd.f32 %v3862, %v4486
    %v4489 = vxor.u32 %v4488, 2147483648
    %v4490 = vmul.f32 %v4489, 1.442695
    %v4491 = vpow.pop %v4490
    %v4492 = vadd.f32 %v4491, 1.0
    %v4493 = vrcp.pop %v4492
    %v4494 = vmul.f32 1.0, %v4493
    %v4495 = vadd.f32 %v4482, %v3958
    %v4497 = vrot.slane %v4495, 6
    %4498 = vrot.lane.b32.xlu0 %v4497, 64
    %v4499 = vpop.permute.xlu0 %4498
    %v4501 = vmul.f32 %v4494, %v4499
    %4503 = vrot.lane.b32.xlu0 %v4501, 64
    %v4504 = vpop.permute.xlu0 %4503
    %v4506 = vadd.f32 %v3862, %v4504
    %v4507 = vtanh.pop %v4506
    %v4508 = vsub.f32 1.0, %v4494
    %4510 = vrot.lane.b32.xlu0 %v4507, 96
    %v4511 = vpop.permute.xlu0 %4510
    %v4513 = vmul.f32 %v4508, %v4511
    %v4514 = vrot.slane %v4409, 6
    %v4516 = vmul.f32 %v4494, %v4514
    %v4517 = vadd.f32 %v4513, %v4516
    %v4519 = vrot.slane %v4517, 2
    %4520 = vrot.lane.b32.xlu0 %v4519, 96
    %v4521 = vpop.permute.xlu0 %4520
    %v4522 = vsel %vm230, %v4521, 0
    %4524 = vmatprep.subr.mxu0 0.0
    %4525 = vmatpush1.msra.mxu0 0.0
    %4526 = vmatprep.subr.mxu0 0.0
    %4527 = vmatpush1.msra.mxu0 0.0
    %4528 = vmatprep.subr.mxu0 0.0
    %4529 = vmatpush1.msra.mxu0 0.0
    %4530 = vmatprep.subr.mxu0 0.0
    %4531 = vmatpush1.msra.mxu0 0.0
    %4532 = vmatprep.subr.mxu0 0.0
    %4533 = vmatpush1.msra.mxu0 0.0
    %4534 = vmatprep.subr.mxu0 0.0
    %4535 = vmatpush1.msra.mxu0 0.0
    %4536 = vmatprep.subr.mxu0 0.0
    %4537 = vmatpush1.msra.mxu0 0.0
    %4538 = vmatprep.subr.mxu0 0.0
    %4539 = vmatpush1.msra.mxu0 0.0
    %4540 = vmatprep.subr.mxu0 0.0
    %4541 = vmatpush1.msra.mxu0 0.0
    %4542 = vmatprep.subr.mxu0 0.0
    %4543 = vmatpush1.msra.mxu0 0.0
    %4544 = vmatprep.subr.mxu0 0.0
    %4545 = vmatpush1.msra.mxu0 0.0
    %4546 = vmatprep.subr.mxu0 0.0
    %4547 = vmatpush1.msra.mxu0 0.0
    %4548 = vmatprep.subr.mxu0 0.0
    %4549 = vmatpush1.msra.mxu0 %v3873
    %4550 = vmatprep.subr.mxu0 0.0
    %4551 = vmatpush1.msra.mxu0 %v3872
    %4552 = vmatprep.subr.mxu0 0.0
    %4553 = vmatpush1.msra.mxu0 %v3871
    %4554 = vmatprep.subr.mxu0 0.0
    %4555 = vmatpush1.msra.mxu0 %v3870
    %4556 = vmatprep.subr.mxu0 0.0
    %4557 = vmatpush2.msra.mxu0 0.0
    %4558 = vmatprep.subr.mxu0 0.0
    %4559 = vmatpush2.msra.mxu0 0.0
    %4560 = vmatprep.subr.mxu0 0.0
    %4561 = vmatpush2.msra.mxu0 0.0
    %4562 = vmatprep.subr.mxu0 0.0
    %4563 = vmatpush2.msra.mxu0 0.0
    %4564 = vmatprep.subr.mxu0 0.0
    %4565 = vmatpush2.msra.mxu0 0.0
    %4566 = vmatprep.subr.mxu0 0.0
    %4567 = vmatpush2.msra.mxu0 0.0
    %4568 = vmatprep.subr.mxu0 0.0
    %4569 = vmatpush2.msra.mxu0 0.0
    %4570 = vmatprep.subr.mxu0 0.0
    %4571 = vmatpush2.msra.mxu0 0.0
    %4572 = vmatprep.subr.mxu0 0.0
    %4573 = vmatpush2.msra.mxu0 0.0
    %4574 = vmatprep.subr.mxu0 0.0
    %4575 = vmatpush2.msra.mxu0 0.0
    %4576 = vmatprep.subr.mxu0 0.0
    %4577 = vmatpush2.msra.mxu0 0.0
    %4578 = vmatprep.subr.mxu0 0.0
    %4579 = vmatpush2.msra.mxu0 0.0
    %4580 = vmatprep.subr.mxu0 0.0
    %4581 = vmatpush2.msra.mxu0 0.0
    %4582 = vmatprep.subr.mxu0 0.0
    %4583 = vmatpush2.msra.mxu0 0.0
    %4584 = vmatprep.subr.mxu0 0.0
    %4585 = vmatpush2.msra.mxu0 0.0
    %4586 = vmatprep.subr.mxu0 0.0
    %4587 = vmatpush2.msra.mxu0 0.0
    %4588 = vmatprep.mubr.f32.mxu0 0.0
    %4589 = vmatmul.mubr.f32.gmra.mxu0 %v4522
    %v4590 = vpop.f32.mrf.mxu0
    %v4591 = vadd.f32 0.0, %v4590
    %v4592 = vpop.f32.mrf.mxu0
    %4593 = vdwg.mxu0
    %v4595 = vrot.slane %v4591, 4
    %v4597 = vadd.f32 %v3862, %v4595
    %v4598 = vxor.u32 %v4597, 2147483648
    %v4599 = vmul.f32 %v4598, 1.442695
    %v4600 = vpow.pop %v4599
    %v4601 = vadd.f32 %v4600, 1.0
    %v4602 = vrcp.pop %v4601
    %v4603 = vmul.f32 1.0, %v4602
    %v4604 = vadd.f32 %v4591, %v3958
    %v4606 = vrot.slane %v4604, 4
    %4607 = vrot.lane.b32.xlu0 %v4606, 64
    %v4608 = vpop.permute.xlu0 %4607
    %v4610 = vmul.f32 %v4603, %v4608
    %4612 = vrot.lane.b32.xlu0 %v4610, 64
    %v4613 = vpop.permute.xlu0 %4612
    %v4615 = vadd.f32 %v3862, %v4613
    %v4616 = vtanh.pop %v4615
    %v4617 = vsub.f32 1.0, %v4603
    %4619 = vrot.lane.b32.xlu0 %v4616, 96
    %v4620 = vpop.permute.xlu0 %4619
    %v4622 = vmul.f32 %v4617, %v4620
    %v4623 = vrot.slane %v4517, 6
    %v4625 = vmul.f32 %v4603, %v4623
    %v4626 = vadd.f32 %v4622, %v4625
    %v4628 = vrot.slane %v4626, 4
    %4629 = vrot.lane.b32.xlu0 %v4628, 96
    %v4630 = vpop.permute.xlu0 %4629
    %v4631 = vsel %vm230, %v4630, 0
    %4633 = vmatprep.subr.mxu0 0.0
    %4634 = vmatpush1.msra.mxu0 0.0
    %4635 = vmatprep.subr.mxu0 0.0
    %4636 = vmatpush1.msra.mxu0 0.0
    %4637 = vmatprep.subr.mxu0 0.0
    %4638 = vmatpush1.msra.mxu0 0.0
    %4639 = vmatprep.subr.mxu0 0.0
    %4640 = vmatpush1.msra.mxu0 0.0
    %4641 = vmatprep.subr.mxu0 0.0
    %4642 = vmatpush1.msra.mxu0 0.0
    %4643 = vmatprep.subr.mxu0 0.0
    %4644 = vmatpush1.msra.mxu0 0.0
    %4645 = vmatprep.subr.mxu0 0.0
    %4646 = vmatpush1.msra.mxu0 0.0
    %4647 = vmatprep.subr.mxu0 0.0
    %4648 = vmatpush1.msra.mxu0 0.0
    %4649 = vmatprep.subr.mxu0 0.0
    %4650 = vmatpush1.msra.mxu0 0.0
    %4651 = vmatprep.subr.mxu0 0.0
    %4652 = vmatpush1.msra.mxu0 0.0
    %4653 = vmatprep.subr.mxu0 0.0
    %4654 = vmatpush1.msra.mxu0 0.0
    %4655 = vmatprep.subr.mxu0 0.0
    %4656 = vmatpush1.msra.mxu0 0.0
    %4657 = vmatprep.subr.mxu0 0.0
    %4658 = vmatpush1.msra.mxu0 %v3873
    %4659 = vmatprep.subr.mxu0 0.0
    %4660 = vmatpush1.msra.mxu0 %v3872
    %4661 = vmatprep.subr.mxu0 0.0
    %4662 = vmatpush1.msra.mxu0 %v3871
    %4663 = vmatprep.subr.mxu0 0.0
    %4664 = vmatpush1.msra.mxu0 %v3870
    %4665 = vmatprep.subr.mxu0 0.0
    %4666 = vmatpush2.msra.mxu0 0.0
    %4667 = vmatprep.subr.mxu0 0.0
    %4668 = vmatpush2.msra.mxu0 0.0
    %4669 = vmatprep.subr.mxu0 0.0
    %4670 = vmatpush2.msra.mxu0 0.0
    %4671 = vmatprep.subr.mxu0 0.0
    %4672 = vmatpush2.msra.mxu0 0.0
    %4673 = vmatprep.subr.mxu0 0.0
    %4674 = vmatpush2.msra.mxu0 0.0
    %4675 = vmatprep.subr.mxu0 0.0
    %4676 = vmatpush2.msra.mxu0 0.0
    %4677 = vmatprep.subr.mxu0 0.0
    %4678 = vmatpush2.msra.mxu0 0.0
    %4679 = vmatprep.subr.mxu0 0.0
    %4680 = vmatpush2.msra.mxu0 0.0
    %4681 = vmatprep.subr.mxu0 0.0
    %4682 = vmatpush2.msra.mxu0 0.0
    %4683 = vmatprep.subr.mxu0 0.0
    %4684 = vmatpush2.msra.mxu0 0.0
    %4685 = vmatprep.subr.mxu0 0.0
    %4686 = vmatpush2.msra.mxu0 0.0
    %4687 = vmatprep.subr.mxu0 0.0
    %4688 = vmatpush2.msra.mxu0 0.0
    %4689 = vmatprep.subr.mxu0 0.0
    %4690 = vmatpush2.msra.mxu0 0.0
    %4691 = vmatprep.subr.mxu0 0.0
    %4692 = vmatpush2.msra.mxu0 0.0
    %4693 = vmatprep.subr.mxu0 0.0
    %4694 = vmatpush2.msra.mxu0 0.0
    %4695 = vmatprep.subr.mxu0 0.0
    %4696 = vmatpush2.msra.mxu0 0.0
    %4697 = vmatprep.mubr.f32.mxu0 0.0
    %4698 = vmatmul.mubr.f32.gmra.mxu0 %v4631
    %v4699 = vpop.f32.mrf.mxu0
    %v4700 = vadd.f32 0.0, %v4699
    %v4701 = vpop.f32.mrf.mxu0
    %4702 = vdwg.mxu0
    %v4704 = vrot.slane %v4700, 2
    %v4706 = vadd.f32 %v3862, %v4704
    %v4707 = vxor.u32 %v4706, 2147483648
    %v4708 = vmul.f32 %v4707, 1.442695
    %v4709 = vpow.pop %v4708
    %v4710 = vadd.f32 %v4709, 1.0
    %v4711 = vrcp.pop %v4710
    %v4712 = vmul.f32 1.0, %v4711
    %v4713 = vadd.f32 %v4700, %v3958
    %v4715 = vrot.slane %v4713, 2
    %4716 = vrot.lane.b32.xlu0 %v4715, 64
    %v4717 = vpop.permute.xlu0 %4716
    %v4719 = vmul.f32 %v4712, %v4717
    %4721 = vrot.lane.b32.xlu0 %v4719, 64
    %v4722 = vpop.permute.xlu0 %4721
    %v4724 = vadd.f32 %v3862, %v4722
    %v4725 = vtanh.pop %v4724
    %v4726 = vsub.f32 1.0, %v4712
    %4728 = vrot.lane.b32.xlu0 %v4725, 96
    %v4729 = vpop.permute.xlu0 %4728
    %v4731 = vmul.f32 %v4726, %v4729
    %v4732 = vrot.slane %v4626, 6
    %v4734 = vmul.f32 %v4712, %v4732
    %v4735 = vadd.f32 %v4731, %v4734
    %v4737 = vrot.slane %v4735, 6
    %4738 = vrot.lane.b32.xlu0 %v4737, 96
    %v4739 = vpop.permute.xlu0 %4738
    %v4740 = vsel %vm230, %v4739, 0
    %4742 = vmatprep.subr.mxu0 0.0
    %4743 = vmatpush1.msra.mxu0 0.0
    %4744 = vmatprep.subr.mxu0 0.0
    %4745 = vmatpush1.msra.mxu0 0.0
    %4746 = vmatprep.subr.mxu0 0.0
    %4747 = vmatpush1.msra.mxu0 0.0
    %4748 = vmatprep.subr.mxu0 0.0
    %4749 = vmatpush1.msra.mxu0 0.0
    %4750 = vmatprep.subr.mxu0 0.0
    %4751 = vmatpush1.msra.mxu0 0.0
    %4752 = vmatprep.subr.mxu0 0.0
    %4753 = vmatpush1.msra.mxu0 0.0
    %4754 = vmatprep.subr.mxu0 0.0
    %4755 = vmatpush1.msra.mxu0 0.0
    %4756 = vmatprep.subr.mxu0 0.0
    %4757 = vmatpush1.msra.mxu0 0.0
    %4758 = vmatprep.subr.mxu0 0.0
    %4759 = vmatpush1.msra.mxu0 0.0
    %4760 = vmatprep.subr.mxu0 0.0
    %4761 = vmatpush1.msra.mxu0 0.0
    %4762 = vmatprep.subr.mxu0 0.0
    %4763 = vmatpush1.msra.mxu0 0.0
    %4764 = vmatprep.subr.mxu0 0.0
    %4765 = vmatpush1.msra.mxu0 0.0
    %4766 = vmatprep.subr.mxu0 0.0
    %4767 = vmatpush1.msra.mxu0 %v3873
    %4768 = vmatprep.subr.mxu0 0.0
    %4769 = vmatpush1.msra.mxu0 %v3872
    %4770 = vmatprep.subr.mxu0 0.0
    %4771 = vmatpush1.msra.mxu0 %v3871
    %4772 = vmatprep.subr.mxu0 0.0
    %4773 = vmatpush1.msra.mxu0 %v3870
    %4774 = vmatprep.subr.mxu0 0.0
    %4775 = vmatpush2.msra.mxu0 0.0
    %4776 = vmatprep.subr.mxu0 0.0
    %4777 = vmatpush2.msra.mxu0 0.0
    %4778 = vmatprep.subr.mxu0 0.0
    %4779 = vmatpush2.msra.mxu0 0.0
    %4780 = vmatprep.subr.mxu0 0.0
    %4781 = vmatpush2.msra.mxu0 0.0
    %4782 = vmatprep.subr.mxu0 0.0
    %4783 = vmatpush2.msra.mxu0 0.0
    %4784 = vmatprep.subr.mxu0 0.0
    %4785 = vmatpush2.msra.mxu0 0.0
    %4786 = vmatprep.subr.mxu0 0.0
    %4787 = vmatpush2.msra.mxu0 0.0
    %4788 = vmatprep.subr.mxu0 0.0
    %4789 = vmatpush2.msra.mxu0 0.0
    %4790 = vmatprep.subr.mxu0 0.0
    %4791 = vmatpush2.msra.mxu0 0.0
    %4792 = vmatprep.subr.mxu0 0.0
    %4793 = vmatpush2.msra.mxu0 0.0
    %4794 = vmatprep.subr.mxu0 0.0
    %4795 = vmatpush2.msra.mxu0 0.0
    %4796 = vmatprep.subr.mxu0 0.0
    %4797 = vmatpush2.msra.mxu0 0.0
    %4798 = vmatprep.subr.mxu0 0.0
    %4799 = vmatpush2.msra.mxu0 0.0
    %4800 = vmatprep.subr.mxu0 0.0
    %4801 = vmatpush2.msra.mxu0 0.0
    %4802 = vmatprep.subr.mxu0 0.0
    %4803 = vmatpush2.msra.mxu0 0.0
    %4804 = vmatprep.subr.mxu0 0.0
    %4805 = vmatpush2.msra.mxu0 0.0
    %4806 = vmatprep.mubr.f32.mxu0 0.0
    %4807 = vmatmul.mubr.f32.gmra.mxu0 %v4740
    %v4808 = vpop.f32.mrf.mxu0
    %v4809 = vadd.f32 0.0, %v4808
    %v4810 = vpop.f32.mrf.mxu0
    %4811 = vdwg.mxu0
    %v4812 = vadd.f32 %v3867, %v4809
    %v4813 = vxor.u32 %v4812, 2147483648
    %v4814 = vmul.f32 %v4813, 1.442695
    %v4815 = vpow.pop %v4814
    %v4816 = vadd.f32 %v4815, 1.0
    %v4817 = vrcp.pop %v4816
    %v4818 = vmul.f32 1.0, %v4817
    %v4819 = vadd.f32 %v4809, %v3958
    %4821 = vrot.lane.b32.xlu0 %v4819, 64
    %v4822 = vpop.permute.xlu0 %4821
    %v4824 = vmul.f32 %v4818, %v4822
    %4826 = vrot.lane.b32.xlu0 %v4824, 64
    %v4827 = vpop.permute.xlu0 %4826
    %v4829 = vadd.f32 %v3867, %v4827
    %v4830 = vtanh.pop %v4829
    %v4831 = vsub.f32 1.0, %v4818
    %4833 = vrot.lane.b32.xlu0 %v4830, 96
    %v4834 = vpop.permute.xlu0 %4833
    %v4836 = vmul.f32 %v4831, %v4834
    %v4838 = vmul.f32 %v4818, %v4737
    %v4839 = vadd.f32 %v4836, %v4838
    %4841 = vrot.lane.b32.xlu0 %v4839, 96
    %v4842 = vpop.permute.xlu0 %4841
    %v4843 = vsel %vm230, %v4842, 0
    %4845 = vmatprep.subr.mxu0 0.0
    %4846 = vmatpush1.msra.mxu0 0.0
    %4847 = vmatprep.subr.mxu0 0.0
    %4848 = vmatpush1.msra.mxu0 0.0
    %4849 = vmatprep.subr.mxu0 0.0
    %4850 = vmatpush1.msra.mxu0 0.0
    %4851 = vmatprep.subr.mxu0 0.0
    %4852 = vmatpush1.msra.mxu0 0.0
    %4853 = vmatprep.subr.mxu0 0.0
    %4854 = vmatpush1.msra.mxu0 0.0
    %4855 = vmatprep.subr.mxu0 0.0
    %4856 = vmatpush1.msra.mxu0 0.0
    %4857 = vmatprep.subr.mxu0 0.0
    %4858 = vmatpush1.msra.mxu0 0.0
    %4859 = vmatprep.subr.mxu0 0.0
    %4860 = vmatpush1.msra.mxu0 0.0
    %4861 = vmatprep.subr.mxu0 0.0
    %4862 = vmatpush1.msra.mxu0 0.0
    %4863 = vmatprep.subr.mxu0 0.0
    %4864 = vmatpush1.msra.mxu0 0.0
    %4865 = vmatprep.subr.mxu0 0.0
    %4866 = vmatpush1.msra.mxu0 0.0
    %4867 = vmatprep.subr.mxu0 0.0
    %4868 = vmatpush1.msra.mxu0 0.0
    %4869 = vmatprep.subr.mxu0 0.0
    %4870 = vmatpush1.msra.mxu0 %v3873
    %4871 = vmatprep.subr.mxu0 0.0
    %4872 = vmatpush1.msra.mxu0 %v3872
    %4873 = vmatprep.subr.mxu0 0.0
    %4874 = vmatpush1.msra.mxu0 %v3871
    %4875 = vmatprep.subr.mxu0 0.0
    %4876 = vmatpush1.msra.mxu0 %v3870
    %4877 = vmatprep.subr.mxu0 0.0
    %4878 = vmatpush2.msra.mxu0 0.0
    %4879 = vmatprep.subr.mxu0 0.0
    %4880 = vmatpush2.msra.mxu0 0.0
    %4881 = vmatprep.subr.mxu0 0.0
    %4882 = vmatpush2.msra.mxu0 0.0
    %4883 = vmatprep.subr.mxu0 0.0
    %4884 = vmatpush2.msra.mxu0 0.0
    %4885 = vmatprep.subr.mxu0 0.0
    %4886 = vmatpush2.msra.mxu0 0.0
    %4887 = vmatprep.subr.mxu0 0.0
    %4888 = vmatpush2.msra.mxu0 0.0
    %4889 = vmatprep.subr.mxu0 0.0
    %4890 = vmatpush2.msra.mxu0 0.0
    %4891 = vmatprep.subr.mxu0 0.0
    %4892 = vmatpush2.msra.mxu0 0.0
    %4893 = vmatprep.subr.mxu0 0.0
    %4894 = vmatpush2.msra.mxu0 0.0
    %4895 = vmatprep.subr.mxu0 0.0
    %4896 = vmatpush2.msra.mxu0 0.0
    %4897 = vmatprep.subr.mxu0 0.0
    %4898 = vmatpush2.msra.mxu0 0.0
    %4899 = vmatprep.subr.mxu0 0.0
    %4900 = vmatpush2.msra.mxu0 0.0
    %4901 = vmatprep.subr.mxu0 0.0
    %4902 = vmatpush2.msra.mxu0 0.0
    %4903 = vmatprep.subr.mxu0 0.0
    %4904 = vmatpush2.msra.mxu0 0.0
    %4905 = vmatprep.subr.mxu0 0.0
    %4906 = vmatpush2.msra.mxu0 0.0
    %4907 = vmatprep.subr.mxu0 0.0
    %4908 = vmatpush2.msra.mxu0 0.0
    %4909 = vmatprep.mubr.f32.mxu0 0.0
    %4910 = vmatmul.mubr.f32.gmra.mxu0 %v4843
    %v4911 = vpop.f32.mrf.mxu0
    %v4912 = vadd.f32 0.0, %v4911
    %v4913 = vpop.f32.mrf.mxu0
    %4914 = vdwg.mxu0
    %v4916 = vrot.slane %v4912, 6
    %v4918 = vadd.f32 %v3867, %v4916
    %v4919 = vxor.u32 %v4918, 2147483648
    %v4920 = vmul.f32 %v4919, 1.442695
    %v4921 = vpow.pop %v4920
    %v4922 = vadd.f32 %v4921, 1.0
    %v4923 = vrcp.pop %v4922
    %v4924 = vmul.f32 1.0, %v4923
    %v4925 = vadd.f32 %v4912, %v3958
    %v4927 = vrot.slane %v4925, 6
    %4928 = vrot.lane.b32.xlu0 %v4927, 64
    %v4929 = vpop.permute.xlu0 %4928
    %v4931 = vmul.f32 %v4924, %v4929
    %4933 = vrot.lane.b32.xlu0 %v4931, 64
    %v4934 = vpop.permute.xlu0 %4933
    %v4936 = vadd.f32 %v3867, %v4934
    %v4937 = vtanh.pop %v4936
    %v4938 = vsub.f32 1.0, %v4924
    %4940 = vrot.lane.b32.xlu0 %v4937, 96
    %v4941 = vpop.permute.xlu0 %4940
    %v4943 = vmul.f32 %v4938, %v4941
    %v4944 = vrot.slane %v4839, 6
    %v4946 = vmul.f32 %v4924, %v4944
    %v4947 = vadd.f32 %v4943, %v4946
    %v4949 = vrot.slane %v4947, 2
    %4950 = vrot.lane.b32.xlu0 %v4949, 96
    %v4951 = vpop.permute.xlu0 %4950
    %v4952 = vsel %vm230, %v4951, 0
    %4954 = vmatprep.subr.mxu0 0.0
    %4955 = vmatpush1.msra.mxu0 0.0
    %4956 = vmatprep.subr.mxu0 0.0
    %4957 = vmatpush1.msra.mxu0 0.0
    %4958 = vmatprep.subr.mxu0 0.0
    %4959 = vmatpush1.msra.mxu0 0.0
    %4960 = vmatprep.subr.mxu0 0.0
    %4961 = vmatpush1.msra.mxu0 0.0
    %4962 = vmatprep.subr.mxu0 0.0
    %4963 = vmatpush1.msra.mxu0 0.0
    %4964 = vmatprep.subr.mxu0 0.0
    %4965 = vmatpush1.msra.mxu0 0.0
    %4966 = vmatprep.subr.mxu0 0.0
    %4967 = vmatpush1.msra.mxu0 0.0
    %4968 = vmatprep.subr.mxu0 0.0
    %4969 = vmatpush1.msra.mxu0 0.0
    %4970 = vmatprep.subr.mxu0 0.0
    %4971 = vmatpush1.msra.mxu0 0.0
    %4972 = vmatprep.subr.mxu0 0.0
    %4973 = vmatpush1.msra.mxu0 0.0
    %4974 = vmatprep.subr.mxu0 0.0
    %4975 = vmatpush1.msra.mxu0 0.0
    %4976 = vmatprep.subr.mxu0 0.0
    %4977 = vmatpush1.msra.mxu0 0.0
    %4978 = vmatprep.subr.mxu0 0.0
    %4979 = vmatpush1.msra.mxu0 %v3873
    %4980 = vmatprep.subr.mxu0 0.0
    %4981 = vmatpush1.msra.mxu0 %v3872
    %4982 = vmatprep.subr.mxu0 0.0
    %4983 = vmatpush1.msra.mxu0 %v3871
    %4984 = vmatprep.subr.mxu0 0.0
    %4985 = vmatpush1.msra.mxu0 %v3870
    %4986 = vmatprep.subr.mxu0 0.0
    %4987 = vmatpush2.msra.mxu0 0.0
    %4988 = vmatprep.subr.mxu0 0.0
    %4989 = vmatpush2.msra.mxu0 0.0
    %4990 = vmatprep.subr.mxu0 0.0
    %4991 = vmatpush2.msra.mxu0 0.0
    %4992 = vmatprep.subr.mxu0 0.0
    %4993 = vmatpush2.msra.mxu0 0.0
    %4994 = vmatprep.subr.mxu0 0.0
    %4995 = vmatpush2.msra.mxu0 0.0
    %4996 = vmatprep.subr.mxu0 0.0
    %4997 = vmatpush2.msra.mxu0 0.0
    %4998 = vmatprep.subr.mxu0 0.0
    %4999 = vmatpush2.msra.mxu0 0.0
    %5000 = vmatprep.subr.mxu0 0.0
    %5001 = vmatpush2.msra.mxu0 0.0
    %5002 = vmatprep.subr.mxu0 0.0
    %5003 = vmatpush2.msra.mxu0 0.0
    %5004 = vmatprep.subr.mxu0 0.0
    %5005 = vmatpush2.msra.mxu0 0.0
    %5006 = vmatprep.subr.mxu0 0.0
    %5007 = vmatpush2.msra.mxu0 0.0
    %5008 = vmatprep.subr.mxu0 0.0
    %5009 = vmatpush2.msra.mxu0 0.0
    %5010 = vmatprep.subr.mxu0 0.0
    %5011 = vmatpush2.msra.mxu0 0.0
    %5012 = vmatprep.subr.mxu0 0.0
    %5013 = vmatpush2.msra.mxu0 0.0
    %5014 = vmatprep.subr.mxu0 0.0
    %5015 = vmatpush2.msra.mxu0 0.0
    %5016 = vmatprep.subr.mxu0 0.0
    %5017 = vmatpush2.msra.mxu0 0.0
    %5018 = vmatprep.mubr.f32.mxu0 0.0
    %5019 = vmatmul.mubr.f32.gmra.mxu0 %v4952
    %v5020 = vpop.f32.mrf.mxu0
    %v5021 = vadd.f32 0.0, %v5020
    %v5022 = vpop.f32.mrf.mxu0
    %5023 = vdwg.mxu0
    %v5025 = vrot.slane %v5021, 4
    %v5027 = vadd.f32 %v3867, %v5025
    %v5028 = vxor.u32 %v5027, 2147483648
    %v5029 = vmul.f32 %v5028, 1.442695
    %v5030 = vpow.pop %v5029
    %v5031 = vadd.f32 %v5030, 1.0
    %v5032 = vrcp.pop %v5031
    %v5033 = vmul.f32 1.0, %v5032
    %v5034 = vadd.f32 %v5021, %v3958
    %v5036 = vrot.slane %v5034, 4
    %5037 = vrot.lane.b32.xlu0 %v5036, 64
    %v5038 = vpop.permute.xlu0 %5037
    %v5040 = vmul.f32 %v5033, %v5038
    %5042 = vrot.lane.b32.xlu0 %v5040, 64
    %v5043 = vpop.permute.xlu0 %5042
    %v5045 = vadd.f32 %v3867, %v5043
    %v5046 = vtanh.pop %v5045
    %v5047 = vsub.f32 1.0, %v5033
    %5049 = vrot.lane.b32.xlu0 %v5046, 96
    %v5050 = vpop.permute.xlu0 %5049
    %v5052 = vmul.f32 %v5047, %v5050
    %v5053 = vrot.slane %v4947, 6
    %v5055 = vmul.f32 %v5033, %v5053
    %v5056 = vadd.f32 %v5052, %v5055
    %v5058 = vrot.slane %v5056, 4
    %5059 = vrot.lane.b32.xlu0 %v5058, 96
    %v5060 = vpop.permute.xlu0 %5059
    %v5061 = vsel %vm230, %v5060, 0
    %5063 = vmatprep.subr.mxu0 0.0
    %5064 = vmatpush1.msra.mxu0 0.0
    %5065 = vmatprep.subr.mxu0 0.0
    %5066 = vmatpush1.msra.mxu0 0.0
    %5067 = vmatprep.subr.mxu0 0.0
    %5068 = vmatpush1.msra.mxu0 0.0
    %5069 = vmatprep.subr.mxu0 0.0
    %5070 = vmatpush1.msra.mxu0 0.0
    %5071 = vmatprep.subr.mxu0 0.0
    %5072 = vmatpush1.msra.mxu0 0.0
    %5073 = vmatprep.subr.mxu0 0.0
    %5074 = vmatpush1.msra.mxu0 0.0
    %5075 = vmatprep.subr.mxu0 0.0
    %5076 = vmatpush1.msra.mxu0 0.0
    %5077 = vmatprep.subr.mxu0 0.0
    %5078 = vmatpush1.msra.mxu0 0.0
    %5079 = vmatprep.subr.mxu0 0.0
    %5080 = vmatpush1.msra.mxu0 0.0
    %5081 = vmatprep.subr.mxu0 0.0
    %5082 = vmatpush1.msra.mxu0 0.0
    %5083 = vmatprep.subr.mxu0 0.0
    %5084 = vmatpush1.msra.mxu0 0.0
    %5085 = vmatprep.subr.mxu0 0.0
    %5086 = vmatpush1.msra.mxu0 0.0
    %5087 = vmatprep.subr.mxu0 0.0
    %5088 = vmatpush1.msra.mxu0 %v3873
    %5089 = vmatprep.subr.mxu0 0.0
    %5090 = vmatpush1.msra.mxu0 %v3872
    %5091 = vmatprep.subr.mxu0 0.0
    %5092 = vmatpush1.msra.mxu0 %v3871
    %5093 = vmatprep.subr.mxu0 0.0
    %5094 = vmatpush1.msra.mxu0 %v3870
    %5095 = vmatprep.subr.mxu0 0.0
    %5096 = vmatpush2.msra.mxu0 0.0
    %5097 = vmatprep.subr.mxu0 0.0
    %5098 = vmatpush2.msra.mxu0 0.0
    %5099 = vmatprep.subr.mxu0 0.0
    %5100 = vmatpush2.msra.mxu0 0.0
    %5101 = vmatprep.subr.mxu0 0.0
    %5102 = vmatpush2.msra.mxu0 0.0
    %5103 = vmatprep.subr.mxu0 0.0
    %5104 = vmatpush2.msra.mxu0 0.0
    %5105 = vmatprep.subr.mxu0 0.0
    %5106 = vmatpush2.msra.mxu0 0.0
    %5107 = vmatprep.subr.mxu0 0.0
    %5108 = vmatpush2.msra.mxu0 0.0
    %5109 = vmatprep.subr.mxu0 0.0
    %5110 = vmatpush2.msra.mxu0 0.0
    %5111 = vmatprep.subr.mxu0 0.0
    %5112 = vmatpush2.msra.mxu0 0.0
    %5113 = vmatprep.subr.mxu0 0.0
    %5114 = vmatpush2.msra.mxu0 0.0
    %5115 = vmatprep.subr.mxu0 0.0
    %5116 = vmatpush2.msra.mxu0 0.0
    %5117 = vmatprep.subr.mxu0 0.0
    %5118 = vmatpush2.msra.mxu0 0.0
    %5119 = vmatprep.subr.mxu0 0.0
    %5120 = vmatpush2.msra.mxu0 0.0
    %5121 = vmatprep.subr.mxu0 0.0
    %5122 = vmatpush2.msra.mxu0 0.0
    %5123 = vmatprep.subr.mxu0 0.0
    %5124 = vmatpush2.msra.mxu0 0.0
    %5125 = vmatprep.subr.mxu0 0.0
    %5126 = vmatpush2.msra.mxu0 0.0
    %5127 = vmatprep.mubr.f32.mxu0 0.0
    %5128 = vmatmul.mubr.f32.gmra.mxu0 %v5061
    %v5129 = vpop.f32.mrf.mxu0
    %v5130 = vadd.f32 0.0, %v5129
    %v5131 = vpop.f32.mrf.mxu0
    %5132 = vdwg.mxu0
    %v5134 = vrot.slane %v5130, 2
    %v5136 = vadd.f32 %v3867, %v5134
    %v5137 = vxor.u32 %v5136, 2147483648
    %v5138 = vmul.f32 %v5137, 1.442695
    %v5139 = vpow.pop %v5138
    %v5140 = vadd.f32 %v5139, 1.0
    %v5141 = vrcp.pop %v5140
    %v5142 = vmul.f32 1.0, %v5141
    %v5143 = vadd.f32 %v5130, %v3958
    %v5145 = vrot.slane %v5143, 2
    %5146 = vrot.lane.b32.xlu0 %v5145, 64
    %v5147 = vpop.permute.xlu0 %5146
    %v5149 = vmul.f32 %v5142, %v5147
    %5151 = vrot.lane.b32.xlu0 %v5149, 64
    %v5152 = vpop.permute.xlu0 %5151
    %v5154 = vadd.f32 %v3867, %v5152
    %v5155 = vtanh.pop %v5154
    %v5156 = vsub.f32 1.0, %v5142
    %5158 = vrot.lane.b32.xlu0 %v5155, 96
    %v5159 = vpop.permute.xlu0 %5158
    %v5161 = vmul.f32 %v5156, %v5159
    %v5162 = vrot.slane %v5056, 6
    %v5164 = vmul.f32 %v5142, %v5162
    %v5165 = vadd.f32 %v5161, %v5164
    %v5166 = vld [vmem:[#allocation5] sm:$0xff]
    %v5167 = vld [vmem:[#allocation5 + $0x8] sm:$0xff]
    %v5168 = vld [vmem:[#allocation5 + $0x10] sm:$0xff]
    %v5169 = vld [vmem:[#allocation5 + $0x18] sm:$0xff]
    %v5170 = vld [vmem:[%s23] sm:$0x1]
    %v5172 = vlaneseq
    %v5173 = vshrl.u32 %v5172, 7
    %v5174 = vsub.s32 0, %v5173
    %v5175 = vrot.slane %v5170, %v5174
    %v5178 = vrot.slane %v5165, 6
    %5179 = vrot.lane.b32.xlu0 %v5178, 96
    %v5180 = vpop.permute.xlu0 %5179
    %v5181 = vsel %vm230, %v5180, 0
    %5183 = vmatprep.subr.mxu0 0.0
    %5184 = vmatpush1.msra.mxu0 0.0
    %5185 = vmatprep.subr.mxu0 0.0
    %5186 = vmatpush1.msra.mxu0 0.0
    %5187 = vmatprep.subr.mxu0 0.0
    %5188 = vmatpush1.msra.mxu0 0.0
    %5189 = vmatprep.subr.mxu0 0.0
    %5190 = vmatpush1.msra.mxu0 0.0
    %5191 = vmatprep.subr.mxu0 0.0
    %5192 = vmatpush1.msra.mxu0 0.0
    %5193 = vmatprep.subr.mxu0 0.0
    %5194 = vmatpush1.msra.mxu0 0.0
    %5195 = vmatprep.subr.mxu0 0.0
    %5196 = vmatpush1.msra.mxu0 0.0
    %5197 = vmatprep.subr.mxu0 0.0
    %5198 = vmatpush1.msra.mxu0 0.0
    %5199 = vmatprep.subr.mxu0 0.0
    %5200 = vmatpush1.msra.mxu0 0.0
    %5201 = vmatprep.subr.mxu0 0.0
    %5202 = vmatpush1.msra.mxu0 0.0
    %5203 = vmatprep.subr.mxu0 0.0
    %5204 = vmatpush1.msra.mxu0 0.0
    %5205 = vmatprep.subr.mxu0 0.0
    %5206 = vmatpush1.msra.mxu0 0.0
    %5207 = vmatprep.subr.mxu0 0.0
    %5208 = vmatpush1.msra.mxu0 %v5169
    %5209 = vmatprep.subr.mxu0 0.0
    %5210 = vmatpush1.msra.mxu0 %v5168
    %5211 = vmatprep.subr.mxu0 0.0
    %5212 = vmatpush1.msra.mxu0 %v5167
    %5213 = vmatprep.subr.mxu0 0.0
    %5214 = vmatpush1.msra.mxu0 %v5166
    %5215 = vmatprep.subr.mxu0 0.0
    %5216 = vmatpush2.msra.mxu0 0.0
    %5217 = vmatprep.subr.mxu0 0.0
    %5218 = vmatpush2.msra.mxu0 0.0
    %5219 = vmatprep.subr.mxu0 0.0
    %5220 = vmatpush2.msra.mxu0 0.0
    %5221 = vmatprep.subr.mxu0 0.0
    %5222 = vmatpush2.msra.mxu0 0.0
    %5223 = vmatprep.subr.mxu0 0.0
    %5224 = vmatpush2.msra.mxu0 0.0
    %5225 = vmatprep.subr.mxu0 0.0
    %5226 = vmatpush2.msra.mxu0 0.0
    %5227 = vmatprep.subr.mxu0 0.0
    %5228 = vmatpush2.msra.mxu0 0.0
    %5229 = vmatprep.subr.mxu0 0.0
    %5230 = vmatpush2.msra.mxu0 0.0
    %5231 = vmatprep.subr.mxu0 0.0
    %5232 = vmatpush2.msra.mxu0 0.0
    %5233 = vmatprep.subr.mxu0 0.0
    %5234 = vmatpush2.msra.mxu0 0.0
    %5235 = vmatprep.subr.mxu0 0.0
    %5236 = vmatpush2.msra.mxu0 0.0
    %5237 = vmatprep.subr.mxu0 0.0
    %5238 = vmatpush2.msra.mxu0 0.0
    %5239 = vmatprep.subr.mxu0 0.0
    %5240 = vmatpush2.msra.mxu0 0.0
    %5241 = vmatprep.subr.mxu0 0.0
    %5242 = vmatpush2.msra.mxu0 0.0
    %5243 = vmatprep.subr.mxu0 0.0
    %5244 = vmatpush2.msra.mxu0 0.0
    %5245 = vmatprep.subr.mxu0 0.0
    %5246 = vmatpush2.msra.mxu0 0.0
    %5247 = vmatprep.mubr.f32.mxu0 0.0
    %5248 = vmatmul.mubr.f32.gmra.mxu0 %v5181
    %v5249 = vpop.f32.mrf.mxu0
    %v5250 = vadd.f32 %v5175, %v5249
    %v5251 = vpop.f32.mrf.mxu0
    %5252 = vdwg.mxu0
    %5254 = vrot.lane.b32.xlu0 %v5250, 32
    %v5255 = vpop.permute.xlu0 %5254
    %v5257 = vsel %vm230, %v2235, %v5255
    %v5258 = vld [vmem:[%s24] sm:$0xff]
    %v5259 = vld [vmem:[%s24 + $0x8] sm:$0xff]
    %v5260 = vld [vmem:[%s24 + $0x10] sm:$0xff]
    %v5261 = vld [vmem:[%s24 + $0x18] sm:$0xff]
    %v5262 = vld [vmem:[%s24 + $0x20] sm:$0xff]
    %v5263 = vld [vmem:[%s24 + $0x28] sm:$0xff]
    %v5264 = vld [vmem:[%s24 + $0x30] sm:$0xff]
    %v5265 = vld [vmem:[%s24 + $0x38] sm:$0xff]
    %v5266 = vld [vmem:[%s25] sm:$0x1]
    %v5268 = vlaneseq
    %v5269 = vshrl.u32 %v5268, 7
    %v5270 = vsub.s32 0, %v5269
    %v5271 = vrot.slane %v5266, %v5270
    %vm5273 = vcmask 523264
    %v5275 = vsel %vm5273, %v5257, 0
    %5277 = vmatprep.subr.mxu0 0.0
    %5278 = vmatpush1.msra.mxu0 0.0
    %5279 = vmatprep.subr.mxu0 0.0
    %5280 = vmatpush1.msra.mxu0 0.0
    %5281 = vmatprep.subr.mxu0 0.0
    %5282 = vmatpush1.msra.mxu0 0.0
    %5283 = vmatprep.subr.mxu0 0.0
    %5284 = vmatpush1.msra.mxu0 0.0
    %5285 = vmatprep.subr.mxu0 0.0
    %5286 = vmatpush1.msra.mxu0 0.0
    %5287 = vmatprep.subr.mxu0 0.0
    %5288 = vmatpush1.msra.mxu0 0.0
    %5289 = vmatprep.subr.mxu0 0.0
    %5290 = vmatpush1.msra.mxu0 0.0
    %5291 = vmatprep.subr.mxu0 0.0
    %5292 = vmatpush1.msra.mxu0 0.0
    %5293 = vmatprep.subr.mxu0 0.0
    %5294 = vmatpush1.msra.mxu0 %v5265
    %5295 = vmatprep.subr.mxu0 0.0
    %5296 = vmatpush1.msra.mxu0 %v5264
    %5297 = vmatprep.subr.mxu0 0.0
    %5298 = vmatpush1.msra.mxu0 %v5263
    %5299 = vmatprep.subr.mxu0 0.0
    %5300 = vmatpush1.msra.mxu0 %v5262
    %5301 = vmatprep.subr.mxu0 0.0
    %5302 = vmatpush1.msra.mxu0 %v5261
    %5303 = vmatprep.subr.mxu0 0.0
    %5304 = vmatpush1.msra.mxu0 %v5260
    %5305 = vmatprep.subr.mxu0 0.0
    %5306 = vmatpush1.msra.mxu0 %v5259
    %5307 = vmatprep.subr.mxu0 0.0
    %5308 = vmatpush1.msra.mxu0 %v5258
    %5309 = vmatprep.subr.mxu0 0.0
    %5310 = vmatpush2.msra.mxu0 0.0
    %5311 = vmatprep.subr.mxu0 0.0
    %5312 = vmatpush2.msra.mxu0 0.0
    %5313 = vmatprep.subr.mxu0 0.0
    %5314 = vmatpush2.msra.mxu0 0.0
    %5315 = vmatprep.subr.mxu0 0.0
    %5316 = vmatpush2.msra.mxu0 0.0
    %5317 = vmatprep.subr.mxu0 0.0
    %5318 = vmatpush2.msra.mxu0 0.0
    %5319 = vmatprep.subr.mxu0 0.0
    %5320 = vmatpush2.msra.mxu0 0.0
    %5321 = vmatprep.subr.mxu0 0.0
    %5322 = vmatpush2.msra.mxu0 0.0
    %5323 = vmatprep.subr.mxu0 0.0
    %5324 = vmatpush2.msra.mxu0 0.0
    %5325 = vmatprep.subr.mxu0 0.0
    %5326 = vmatpush2.msra.mxu0 0.0
    %5327 = vmatprep.subr.mxu0 0.0
    %5328 = vmatpush2.msra.mxu0 0.0
    %5329 = vmatprep.subr.mxu0 0.0
    %5330 = vmatpush2.msra.mxu0 0.0
    %5331 = vmatprep.subr.mxu0 0.0
    %5332 = vmatpush2.msra.mxu0 0.0
    %5333 = vmatprep.subr.mxu0 0.0
    %5334 = vmatpush2.msra.mxu0 0.0
    %5335 = vmatprep.subr.mxu0 0.0
    %5336 = vmatpush2.msra.mxu0 0.0
    %5337 = vmatprep.subr.mxu0 0.0
    %5338 = vmatpush2.msra.mxu0 0.0
    %5339 = vmatprep.subr.mxu0 0.0
    %5340 = vmatpush2.msra.mxu0 0.0
    %5341 = vmatprep.mubr.f32.mxu0 0.0
    %5342 = vmatmul.mubr.f32.gmra.mxu0 %v5275
    %v5343 = vpop.f32.mrf.mxu0
    %v5344 = vadd.f32 %v5271, %v5343
    %v5345 = vpop.f32.mrf.mxu0
    %5346 = vdwg.mxu0
    %vm5347 = vcmask 25600
    %5348 = vst.msk [vmem:[#allocation7] sm:$0x3] %vm5347, %v5344
    // Predicated region
    $region114: #{classifier_forward.1} parent=1 // pred_check
      _
    $region115: #{classifier_forward.1} parent=1 // pred_check_branch
      %5350 = sbr.rel (0) target = $region117
    $region116: #{classifier_forward.1} parent=1 // pred_region
      %s5352 = ssub.s32 32, 32
      %5353 = vsyncadd [#allocation4], %s5352
      %s5355 = sshll.u32 [#allocation7], 4
      %s5356 = int_to_ptr.vmem [resolvable:$true] %s5355
      %5358 = dma.vmem_to_hbm [thread:$0]  %s5356, 32, %s26, [#allocation4]
    $region117: #{classifier_forward.1} parent=1 // pred_fallthru
      _
    // Predicated region
    $region118: #{classifier_forward.1} parent=1 // pred_check
      _
    $region119: #{classifier_forward.1} parent=1 // pred_check_branch
      %5360 = sbr.rel (0) target = $region121
    $region120: #{classifier_forward.1} parent=1 // pred_region
      %5361 = dma.done [#allocation4], 32
    $region121: #{classifier_forward.1} parent=1 // pred_fallthru
      _
    %5362 = vsyncpa [#allocation3], 1
    %5363 = vsyncpa [#allocation6], 1
    %5364 = vsyncpa [#allocation4], 1

</llo_original>
